<compile_context>
chip_gen: v7x
topology: tpu7x:2x2x1
jax: 0.10.0
libtpu: 0.0.40
codegen_flags: <defaults>
</compile_context>

<pallas_src>
import functools

import jax
import jax.numpy as jnp
from jax import lax
from jax.experimental import pallas as pl
from jax.experimental.pallas import tpu as pltpu


# ----------------------------------------------------------------------------
# Fused whole-forward kernel (one grid step == one batch element)
# ----------------------------------------------------------------------------
def _gwnet_kernel(
    x_ref,        # (1, T*N, 2)   start-conv input, rows t-major (t*N + n)
    adj_t_ref,    # (1, N, N)     sampled_adj^T
    dyg_t_ref,    # (S_dyg, N, N) fixed supports, pre-transposed
    n1t_ref,      # (10, N)       nodevec1^T
    n2t_ref,      # (N, 10)       nodevec2^T
    hid_ref,      # (1, N, 16)
    start_w_ref,  # (2, Cr)
    start_b_ref,  # (1, Cr)
    wfg_ref,      # (L, 2*Cr, 2*Cd)   [[wf_tap0|wg_tap0],[wf_tap1|wg_tap1]]
    bfg_ref,      # (L, 1, 2*Cd)
    ws_ref,       # (L, Cd, Cs)
    bs_ref,       # (L, 1, Cs)
    wgcn_ref,     # (L, (1+S*order)*Cd, Cr)
    bgcn_ref,     # (L, 1, Cr)
    bns_ref,      # (L, 1, Cr)    folded BN scale  (gamma * rsqrt(var+eps))
    bnb_ref,      # (L, 1, Cr)    folded BN shift  (beta - mean*scale)
    fc1_w_ref, fc1_b_ref, fc2_w_ref, fc2_b_ref,
    e1_w_ref, e1_b_ref, e2_w_ref, e2_b_ref,
    out_ref,      # (1, N, out_dim)
    *, dilations, order,
):
    f32 = jnp.float32
    n = adj_t_ref.shape[1]
    n_dyg = dyg_t_ref.shape[0]
    cd = wfg_ref.shape[2] // 2

    # ---------------- supports (kept transposed: diffusion is A^T @ x) -----
    a_t = adj_t_ref[0]                                   # A^T
    row = lax.broadcasted_iota(jnp.int32, (n, n), 0)
    col = lax.broadcasted_iota(jnp.int32, (n, n), 1)
    eye = (row == col).astype(f32)
    a_t = a_t + eye                                      # (A + I)^T
    d = jnp.sum(a_t, axis=0, keepdims=True)              # row sums of (A + I)
    d_inv = 1.0 / d
    d_inv = jnp.where(jnp.isinf(d_inv), jnp.zeros_like(d_inv), d_inv)
    rw_t = a_t * d_inv                                   # (D^{-1}(A+I))^T

    m_t = jnp.dot(n2t_ref[...], n1t_ref[...], preferred_element_type=f32)
    m_t = jnp.maximum(m_t, 0.0)                          # relu(n1@n2)^T
    m_t = m_t - jnp.max(m_t, axis=0, keepdims=True)
    e_t = jnp.exp(m_t)
    adp_t = e_t / jnp.sum(e_t, axis=0, keepdims=True)    # softmax(.., dim=1)^T

    sups_t = [rw_t] + [dyg_t_ref[s] for s in range(n_dyg)] + [adp_t]
    n_sup = len(sups_t)
    a_stack = jnp.concatenate(sups_t, axis=0)            # (S*N, N)
    zero_nn = jnp.zeros((n, n), f32)
    a_blk = jnp.concatenate(
        [jnp.concatenate([sups_t[s] if j == s else zero_nn for j in range(n_sup)],
                         axis=1)
         for s in range(n_sup)],
        axis=0)                                          # block-diag (S*N, S*N)

    # ---------------- start conv (1x1, K=2) folded into the fused kernel ---
    x_all = (jnp.dot(x_ref[0], start_w_ref[...], preferred_element_type=f32)
             + start_b_ref[...])                         # (T*N, Cr)

    # ---------------- dilated gated conv + GCN + BN layers -----------------
    skip_acc = None
    t_cur = x_ref.shape[1] // n
    n_layers = len(dilations)
    for li, dil in enumerate(dilations):
        t_out = t_cur - dil
        m_rows = t_out * n
        x_lo = x_all[:m_rows, :]                         # input times [0, t_out)
        x_hi = x_all[dil * n:, :]                        # == residual[..., -t_out:]

        # single (M, 64) @ (64, 64) matmul for filter+gate (both taps)
        xlh = jnp.concatenate([x_lo, x_hi], axis=1)
        fg = jnp.dot(xlh, wfg_ref[li], preferred_element_type=f32) + bfg_ref[li]
        gated = jnp.tanh(fg[:, :cd]) * jax.nn.sigmoid(fg[:, cd:2 * cd])   # (M, Cd)

        # skip branch: only the last time step survives to the head (T_final==1)
        s_last = (jnp.dot(gated[(t_out - 1) * n:, :], ws_ref[li],
                          preferred_element_type=f32) + bs_ref[li])       # (N, Cs)
        skip_acc = s_last if skip_acc is None else skip_acc + s_last

        if li < n_layers - 1:      # last layer's x is dead code in the reference
            h_rows = []
            for t in range(t_out):
                xt = gated[t * n:(t + 1) * n, :]                          # (N, Cd)
                diff = [jnp.dot(a_stack, xt, preferred_element_type=f32)] # (S*N, Cd)
                for _ in range(order - 1):
                    diff.append(jnp.dot(a_blk, diff[-1],
                                        preferred_element_type=f32))
                terms = [xt]
                for s in range(n_sup):
                    for k in range(order):
                        terms.append(diff[k][s * n:(s + 1) * n, :])
                h_rows.append(jnp.concatenate(terms, axis=1))             # (N, gcn_cin)
            h_cat = jnp.concatenate(h_rows, axis=0)                       # (M, gcn_cin)
            xg = (jnp.dot(h_cat, wgcn_ref[li], preferred_element_type=f32)
                  + bgcn_ref[li])                                         # (M, Cr)
            # residual add + eval-mode BatchNorm (folded scale/shift)
            x_all = (xg + x_hi) * bns_ref[li] + bnb_ref[li]
        t_cur = t_out

    # ---------------- head -------------------------------------------------
    h = jnp.maximum(jnp.dot(hid_ref[0], fc1_w_ref[...],
                            preferred_element_type=f32) + fc1_b_ref[...], 0.0)
    h = jnp.maximum(jnp.dot(h, fc2_w_ref[...],
                            preferred_element_type=f32) + fc2_b_ref[...], 0.0)
    z = jnp.maximum(skip_acc + h, 0.0)
    z = jnp.maximum(jnp.dot(z, e1_w_ref[...],
                            preferred_element_type=f32) + e1_b_ref[...], 0.0)
    out_ref[0] = (jnp.dot(z, e2_w_ref[...], preferred_element_type=f32)
                  + e2_b_ref[...])


# ----------------------------------------------------------------------------
# BlockSpec helpers
# ----------------------------------------------------------------------------
def _batch_spec(shape):
    nd = len(shape) - 1
    return pl.BlockSpec((1,) + tuple(shape[1:]),
                        lambda b, _nd=nd: (b,) + (0,) * _nd)


def _shared_spec(shape):
    nd = len(shape)
    return pl.BlockSpec(tuple(shape), lambda b, _nd=nd: (0,) * _nd)


# ----------------------------------------------------------------------------
# parameters
# ----------------------------------------------------------------------------
def init_params(key, cfg):
    n_nodes = cfg["num_nodes"]
    cin, cres = cfg["in_dim"], cfg["residual_channels"]
    cdil, cskip, cend = (cfg["dilation_channels"], cfg["skip_channels"],
                         cfg["end_channels"])
    n_layers = cfg["blocks"] * cfg["layers"]
    s_total = cfg["support_len"] + 1                 # +1 for adaptive adjacency
    gcn_cin = (cfg["order"] * s_total + 1) * cdil
    keys = iter(jax.random.split(key, 64))

    def w(shape, fan_in):
        return (jax.random.normal(next(keys), shape, jnp.float32)
                / jnp.sqrt(float(fan_in)))

    def stack_w(shape, fan_in):
        return (jax.random.normal(next(keys), (n_layers,) + shape, jnp.float32)
                / jnp.sqrt(float(fan_in)))

    # TODO(synk): the reference loads adj_dyg from
    # 'datasets/DYG_doz/adj_DYG_doz.pkl' ('doubletransition' -> 2 matrices);
    # synthesize deterministic row-stochastic matrices instead.
    a = jax.random.uniform(next(keys), (cfg["support_len"] - 1, n_nodes, n_nodes),
                           jnp.float32) + 0.1
    adj_dyg = a / jnp.sum(a, axis=2, keepdims=True)

    return {
        "start_w": w((cin, cres), cin),
        "start_b": jnp.zeros((1, cres), jnp.float32),
        "nodevec1": jax.random.normal(next(keys), (n_nodes, 10), jnp.float32),
        "nodevec2": jax.random.normal(next(keys), (10, n_nodes), jnp.float32),
        "adj_dyg": adj_dyg,
        # per-layer stacks (rows 0:Cr = tap applied to x_lo, rows Cr: = x_hi;
        # cols 0:Cd = filter conv, cols Cd: = gate conv)
        "wfg": stack_w((2 * cres, 2 * cdil), 2 * cres),
        "bfg": jnp.zeros((n_layers, 1, 2 * cdil), jnp.float32),
        "ws": stack_w((cdil, cskip), cdil),
        "bs": jnp.zeros((n_layers, 1, cskip), jnp.float32),
        "wgcn": stack_w((gcn_cin, cres), gcn_cin),
        "bgcn": jnp.zeros((n_layers, 1, cres), jnp.float32),
        "bn_gamma": jnp.ones((n_layers, 1, cres), jnp.float32),
        "bn_beta": jnp.zeros((n_layers, 1, cres), jnp.float32),
        "bn_mean": jnp.zeros((n_layers, 1, cres), jnp.float32),
        "bn_var": jnp.ones((n_layers, 1, cres), jnp.float32),
        # fc_his = Linear(16,512) -> ReLU -> Linear(512,256) -> ReLU
        "fc1_w": w((16, 512), 16), "fc1_b": jnp.zeros((1, 512), jnp.float32),
        "fc2_w": w((512, cskip), 512), "fc2_b": jnp.zeros((1, cskip), jnp.float32),
        "end1_w": w((cskip, cend), cskip), "end1_b": jnp.zeros((1, cend), jnp.float32),
        "end2_w": w((cend, cfg["out_dim"]), cend),
        "end2_b": jnp.zeros((1, cfg["out_dim"]), jnp.float32),
    }


# ----------------------------------------------------------------------------
# forward pass (one fused pallas_call)
# ----------------------------------------------------------------------------
def graphwavenet_forward(params, inp, hidden_states, sampled_adj, cfg):
    b, _, n, _ = inp.shape
    rf = cfg["receptive_field"]
    out_dim = cfg["out_dim"]

    # input.transpose(1,3); F.pad(.., (1,0,0,0)); [:, :2]; pad to receptive field
    x = jnp.pad(inp, ((0, 0), (1, 0), (0, 0), (0, 0)))[..., :2]
    if x.shape[1] < rf:
        x = jnp.pad(x, ((0, 0), (rf - x.shape[1], 0), (0, 0), (0, 0)))
    t_total = x.shape[1]

    dilations = []
    for _ in range(cfg["blocks"]):
        d = 1
        for _ in range(cfg["layers"]):
            dilations.append(d)
            d *= 2
    assert t_total - sum(dilations) == 1, "final temporal length must be 1"

    x_flat = x.reshape(b, t_total * n, 2)                  # rows t-major
    adj_t = jnp.transpose(sampled_adj, (0, 2, 1))
    dyg_t = jnp.transpose(params["adj_dyg"], (0, 2, 1))
    n1t = params["nodevec1"].T
    n2t = params["nodevec2"].T

    # eval-mode BatchNorm folded to scale/shift
    bn_scale = params["bn_gamma"] * lax.rsqrt(params["bn_var"] + 1e-5)
    bn_shift = params["bn_beta"] - params["bn_mean"] * bn_scale

    args = (x_flat, adj_t, dyg_t, n1t, n2t, hidden_states,
            params["start_w"], params["start_b"],
            params["wfg"], params["bfg"], params["ws"], params["bs"],
            params["wgcn"], params["bgcn"], bn_scale, bn_shift,
            params["fc1_w"], params["fc1_b"], params["fc2_w"], params["fc2_b"],
            params["end1_w"], params["end1_b"], params["end2_w"], params["end2_b"])

    batched = {0, 1, 5}   # x_flat, adj_t, hidden_states
    in_specs = [_batch_spec(a.shape) if i in batched else _shared_spec(a.shape)
                for i, a in enumerate(args)]

    return pl.pallas_call(
        functools.partial(_gwnet_kernel, dilations=tuple(dilations),
                          order=cfg["order"]),
        out_shape=jax.ShapeDtypeStruct((b, n, out_dim), jnp.float32),
        grid=(b,),
        in_specs=in_specs,
        out_specs=pl.BlockSpec((1, n, out_dim), lambda i: (i, 0, 0)),
        compiler_params=pltpu.CompilerParams(
            dimension_semantics=("parallel",),        # both TCs on v7x
            vmem_limit_bytes=32 * 1024 * 1024),       # working set ~4 MB
    )(*args)


# ----------------------------------------------------------------------------
# main
# ----------------------------------------------------------------------------
if __name__ == "__main__":
    cfg = dict(num_nodes=16, support_len=3, in_dim=2, out_dim=12,
               residual_channels=32, dilation_channels=32,
               skip_channels=256, end_channels=512,
               kernel_size=2, blocks=2, layers=2, order=2)

    # receptive field exactly as in the reference __init__
    rf = 1
    for _ in range(cfg["blocks"]):
        asc = cfg["kernel_size"] - 1
        for _ in range(cfg["layers"]):
            rf += asc
            asc *= 2
    cfg["receptive_field"] = rf

    key = jax.random.PRNGKey(0)
    k_par, k_in, k_hid, k_adj = jax.random.split(key, 4)
    params = init_params(k_par, cfg)

    B, T, N = 2, 6, cfg["num_nodes"]
    inp = jax.random.normal(k_in, (B, T, N, cfg["in_dim"]), jnp.float32)   # (B,T,N,C)
    hidden_states = jax.random.normal(k_hid, (B, N, 16), jnp.float32)      # (B,N,16)
    sampled_adj = jax.random.uniform(k_adj, (B, N, N), jnp.float32)        # (B,N,N)

    fwd = jax.jit(functools.partial(graphwavenet_forward, cfg=cfg))
    out = fwd(params, inp, hidden_states, sampled_adj)
    out = jax.block_until_ready(out)
    assert out.shape == (B, N, cfg["out_dim"]), out.shape
    assert bool(jnp.all(jnp.isfinite(out)))
    print("KERNEL_OK")
</pallas_src>

<mosaic_0001>
module attributes {stable_mosaic.version = 11 : i64} {
  func.func @_gwnet_kernel(%arg0: i32, %arg1: memref<1x112x2xf32, #tpu.memory_space<vmem>>, %arg2: memref<1x16x16xf32, #tpu.memory_space<vmem>>, %arg3: memref<2x16x16xf32, #tpu.memory_space<vmem>>, %arg4: memref<10x16xf32, #tpu.memory_space<vmem>>, %arg5: memref<16x10xf32, #tpu.memory_space<vmem>>, %arg6: memref<1x16x16xf32, #tpu.memory_space<vmem>>, %arg7: memref<2x32xf32, #tpu.memory_space<vmem>>, %arg8: memref<1x32xf32, #tpu.memory_space<vmem>>, %arg9: memref<4x64x64xf32, #tpu.memory_space<vmem>>, %arg10: memref<4x1x64xf32, #tpu.memory_space<vmem>>, %arg11: memref<4x32x256xf32, #tpu.memory_space<vmem>>, %arg12: memref<4x1x256xf32, #tpu.memory_space<vmem>>, %arg13: memref<4x288x32xf32, #tpu.memory_space<vmem>>, %arg14: memref<4x1x32xf32, #tpu.memory_space<vmem>>, %arg15: memref<4x1x32xf32, #tpu.memory_space<vmem>>, %arg16: memref<4x1x32xf32, #tpu.memory_space<vmem>>, %arg17: memref<16x512xf32, #tpu.memory_space<vmem>>, %arg18: memref<1x512xf32, #tpu.memory_space<vmem>>, %arg19: memref<512x256xf32, #tpu.memory_space<vmem>>, %arg20: memref<1x256xf32, #tpu.memory_space<vmem>>, %arg21: memref<256x512xf32, #tpu.memory_space<vmem>>, %arg22: memref<1x512xf32, #tpu.memory_space<vmem>>, %arg23: memref<512x12xf32, #tpu.memory_space<vmem>>, %arg24: memref<1x12xf32, #tpu.memory_space<vmem>>, %arg25: memref<1x16x12xf32, #tpu.memory_space<vmem>>) attributes {dimension_semantics = [#tpu.dimension_semantics<parallel>], iteration_bounds = array<i64: 2>, scalar_prefetch = 0 : i64, scratch_operands = 0 : i64, tpu.core_type = #tpu.core_type<tc>, window_params = [{transform_indices = @transform_0, window_bounds = array<i64: 1, 112, 2>}, {transform_indices = @transform_1, window_bounds = array<i64: 1, 16, 16>}, {pipeline_mode = #tpu.pipeline_mode<synchronous>, transform_indices = @transform_2, window_bounds = array<i64: 2, 16, 16>}, {pipeline_mode = #tpu.pipeline_mode<synchronous>, transform_indices = @transform_3, window_bounds = array<i64: 10, 16>}, {pipeline_mode = #tpu.pipeline_mode<synchronous>, transform_indices = @transform_4, window_bounds = array<i64: 16, 10>}, {transform_indices = @transform_5, window_bounds = array<i64: 1, 16, 16>}, {pipeline_mode = #tpu.pipeline_mode<synchronous>, transform_indices = @transform_6, window_bounds = array<i64: 2, 32>}, {pipeline_mode = #tpu.pipeline_mode<synchronous>, transform_indices = @transform_7, window_bounds = array<i64: 1, 32>}, {pipeline_mode = #tpu.pipeline_mode<synchronous>, transform_indices = @transform_8, window_bounds = array<i64: 4, 64, 64>}, {pipeline_mode = #tpu.pipeline_mode<synchronous>, transform_indices = @transform_9, window_bounds = array<i64: 4, 1, 64>}, {pipeline_mode = #tpu.pipeline_mode<synchronous>, transform_indices = @transform_10, window_bounds = array<i64: 4, 32, 256>}, {pipeline_mode = #tpu.pipeline_mode<synchronous>, transform_indices = @transform_11, window_bounds = array<i64: 4, 1, 256>}, {pipeline_mode = #tpu.pipeline_mode<synchronous>, transform_indices = @transform_12, window_bounds = array<i64: 4, 288, 32>}, {pipeline_mode = #tpu.pipeline_mode<synchronous>, transform_indices = @transform_13, window_bounds = array<i64: 4, 1, 32>}, {pipeline_mode = #tpu.pipeline_mode<synchronous>, transform_indices = @transform_14, window_bounds = array<i64: 4, 1, 32>}, {pipeline_mode = #tpu.pipeline_mode<synchronous>, transform_indices = @transform_15, window_bounds = array<i64: 4, 1, 32>}, {pipeline_mode = #tpu.pipeline_mode<synchronous>, transform_indices = @transform_16, window_bounds = array<i64: 16, 512>}, {pipeline_mode = #tpu.pipeline_mode<synchronous>, transform_indices = @transform_17, window_bounds = array<i64: 1, 512>}, {pipeline_mode = #tpu.pipeline_mode<synchronous>, transform_indices = @transform_18, window_bounds = array<i64: 512, 256>}, {pipeline_mode = #tpu.pipeline_mode<synchronous>, transform_indices = @transform_19, window_bounds = array<i64: 1, 256>}, {pipeline_mode = #tpu.pipeline_mode<synchronous>, transform_indices = @transform_20, window_bounds = array<i64: 256, 512>}, {pipeline_mode = #tpu.pipeline_mode<synchronous>, transform_indices = @transform_21, window_bounds = array<i64: 1, 512>}, {pipeline_mode = #tpu.pipeline_mode<synchronous>, transform_indices = @transform_22, window_bounds = array<i64: 512, 12>}, {pipeline_mode = #tpu.pipeline_mode<synchronous>, transform_indices = @transform_23, window_bounds = array<i64: 1, 12>}, {transform_indices = @transform_24, window_bounds = array<i64: 1, 16, 12>}]} {
    %c0 = arith.constant 0 : index
    %c0_0 = arith.constant 0 : index
    %c0_1 = arith.constant 0 : index
    %0 = vector.load %arg2[%c0, %c0_0, %c0_1] : memref<1x16x16xf32, #tpu.memory_space<vmem>>, vector<1x16x16xf32>
    %1 = vector.shape_cast %0 : vector<1x16x16xf32> to vector<16x16xf32>
    %2 = tpu.iota {dimensions = array<i32: 0>} : vector<16x16xi32>
    %3 = tpu.iota {dimensions = array<i32: 1>} : vector<16x16xi32>
    %4 = arith.cmpi eq, %2, %3 : vector<16x16xi32>
    %5 = arith.extui %4 : vector<16x16xi1> to vector<16x16xi32>
    %6 = arith.sitofp %5 : vector<16x16xi32> to vector<16x16xf32>
    %7 = arith.addf %1, %6 : vector<16x16xf32>
    %cst = arith.constant dense<0.000000e+00> : vector<16xf32>
    %8 = vector.multi_reduction <add>, %7, %cst [0] : vector<16x16xf32> to vector<16xf32>
    %9 = vector.shape_cast %8 : vector<16xf32> to vector<1x16xf32>
    %cst_2 = arith.constant 1.000000e+00 : f32
    %10 = vector.broadcast %cst_2 : f32 to vector<1x16xf32>
    %11 = arith.divf %10, %9 : vector<1x16xf32>
    %12 = math.absf %11 : vector<1x16xf32>
    %cst_3 = arith.constant 0x7F800000 : f32
    %13 = vector.broadcast %cst_3 : f32 to vector<1x16xf32>
    %14 = arith.cmpf oeq, %12, %13 : vector<1x16xf32>
    %cst_4 = arith.constant 0.000000e+00 : f32
    %15 = vector.broadcast %cst_4 : f32 to vector<1x16xf32>
    %16 = arith.select %14, %15, %11 : vector<1x16xi1>, vector<1x16xf32>
    %17 = vector.broadcast %16 : vector<1x16xf32> to vector<16x16xf32>
    %18 = arith.mulf %7, %17 : vector<16x16xf32>
    %c0_5 = arith.constant 0 : index
    %c0_6 = arith.constant 0 : index
    %19 = vector.load %arg5[%c0_5, %c0_6] : memref<16x10xf32, #tpu.memory_space<vmem>>, vector<16x10xf32>
    %c0_7 = arith.constant 0 : index
    %c0_8 = arith.constant 0 : index
    %20 = vector.load %arg4[%c0_7, %c0_8] : memref<10x16xf32, #tpu.memory_space<vmem>>, vector<10x16xf32>
    %cst_9 = arith.constant dense<0.000000e+00> : vector<16x16xf32>
    %21 = tpu.matmul %19, %20, %cst_9 {dimension_numbers = #tpu.dot_dimension_numbers<[1], [0], [0], [1], [0, 0, 1, 1], [], []>} : vector<16x10xf32>, vector<10x16xf32>, vector<16x16xf32> -> vector<16x16xf32>
    %cst_10 = arith.constant 0.000000e+00 : f32
    %22 = vector.broadcast %cst_10 : f32 to vector<16x16xf32>
    %23 = arith.maximumf %21, %22 : vector<16x16xf32>
    %cst_11 = arith.constant dense<0xFF800000> : vector<16xf32>
    %24 = vector.multi_reduction <maximumf>, %23, %cst_11 [0] : vector<16x16xf32> to vector<16xf32>
    %25 = vector.shape_cast %24 : vector<16xf32> to vector<1x16xf32>
    %26 = vector.broadcast %25 : vector<1x16xf32> to vector<16x16xf32>
    %27 = arith.subf %23, %26 : vector<16x16xf32>
    %28 = math.exp %27 : vector<16x16xf32>
    %cst_12 = arith.constant dense<0.000000e+00> : vector<16xf32>
    %29 = vector.multi_reduction <add>, %28, %cst_12 [0] : vector<16x16xf32> to vector<16xf32>
    %30 = vector.shape_cast %29 : vector<16xf32> to vector<1x16xf32>
    %31 = vector.broadcast %30 : vector<1x16xf32> to vector<16x16xf32>
    %32 = arith.divf %28, %31 : vector<16x16xf32>
    %c0_13 = arith.constant 0 : index
    %c0_14 = arith.constant 0 : index
    %c0_15 = arith.constant 0 : index
    %33 = vector.load %arg3[%c0_13, %c0_14, %c0_15] : memref<2x16x16xf32, #tpu.memory_space<vmem>>, vector<1x16x16xf32>
    %34 = vector.shape_cast %33 : vector<1x16x16xf32> to vector<16x16xf32>
    %c1 = arith.constant 1 : index
    %c0_16 = arith.constant 0 : index
    %c0_17 = arith.constant 0 : index
    %35 = vector.load %arg3[%c1, %c0_16, %c0_17] : memref<2x16x16xf32, #tpu.memory_space<vmem>>, vector<1x16x16xf32>
    %36 = vector.shape_cast %35 : vector<1x16x16xf32> to vector<16x16xf32>
    %37 = tpu.concatenate %18, %34, %36, %32 in 0 : vector<16x16xf32>, vector<16x16xf32>, vector<16x16xf32>, vector<16x16xf32> -> vector<64x16xf32>
    %cst_18 = arith.constant 0.000000e+00 : f32
    %38 = vector.broadcast %cst_18 : f32 to vector<16x16xf32>
    %39 = tpu.concatenate %18, %38, %38, %38 in 1 : vector<16x16xf32>, vector<16x16xf32>, vector<16x16xf32>, vector<16x16xf32> -> vector<16x64xf32>
    %40 = tpu.concatenate %38, %34, %38, %38 in 1 : vector<16x16xf32>, vector<16x16xf32>, vector<16x16xf32>, vector<16x16xf32> -> vector<16x64xf32>
    %41 = tpu.concatenate %38, %38, %36, %38 in 1 : vector<16x16xf32>, vector<16x16xf32>, vector<16x16xf32>, vector<16x16xf32> -> vector<16x64xf32>
    %42 = tpu.concatenate %38, %38, %38, %32 in 1 : vector<16x16xf32>, vector<16x16xf32>, vector<16x16xf32>, vector<16x16xf32> -> vector<16x64xf32>
    %43 = tpu.concatenate %39, %40, %41, %42 in 0 : vector<16x64xf32>, vector<16x64xf32>, vector<16x64xf32>, vector<16x64xf32> -> vector<64x64xf32>
    %c0_19 = arith.constant 0 : index
    %c0_20 = arith.constant 0 : index
    %c0_21 = arith.constant 0 : index
    %44 = vector.load %arg1[%c0_19, %c0_20, %c0_21] : memref<1x112x2xf32, #tpu.memory_space<vmem>>, vector<1x112x2xf32>
    %45 = vector.shape_cast %44 : vector<1x112x2xf32> to vector<112x2xf32>
    %c0_22 = arith.constant 0 : index
    %c0_23 = arith.constant 0 : index
    %46 = vector.load %arg7[%c0_22, %c0_23] : memref<2x32xf32, #tpu.memory_space<vmem>>, vector<2x32xf32>
    %cst_24 = arith.constant dense<0.000000e+00> : vector<112x32xf32>
    %47 = tpu.matmul %45, %46, %cst_24 {dimension_numbers = #tpu.dot_dimension_numbers<[1], [0], [0], [1], [0, 0, 1, 1], [], []>} : vector<112x2xf32>, vector<2x32xf32>, vector<112x32xf32> -> vector<112x32xf32>
    %c0_25 = arith.constant 0 : index
    %c0_26 = arith.constant 0 : index
    %48 = vector.load %arg8[%c0_25, %c0_26] : memref<1x32xf32, #tpu.memory_space<vmem>>, vector<1x32xf32>
    %49 = vector.broadcast %48 : vector<1x32xf32> to vector<112x32xf32>
    %50 = arith.addf %47, %49 : vector<112x32xf32>
    %51 = vector.extract_strided_slice %50 {offsets = [0, 0], sizes = [96, 32], strides = [1, 1]} : vector<112x32xf32> to vector<96x32xf32>
    %52 = vector.extract_strided_slice %50 {offsets = [16, 0], sizes = [96, 32], strides = [1, 1]} : vector<112x32xf32> to vector<96x32xf32>
    %53 = tpu.concatenate %51, %52 in 1 : vector<96x32xf32>, vector<96x32xf32> -> vector<96x64xf32>
    %c0_27 = arith.constant 0 : index
    %c0_28 = arith.constant 0 : index
    %c0_29 = arith.constant 0 : index
    %54 = vector.load %arg9[%c0_27, %c0_28, %c0_29] : memref<4x64x64xf32, #tpu.memory_space<vmem>>, vector<1x64x64xf32>
    %55 = vector.shape_cast %54 : vector<1x64x64xf32> to vector<64x64xf32>
    %cst_30 = arith.constant dense<0.000000e+00> : vector<96x64xf32>
    %56 = tpu.matmul %53, %55, %cst_30 {dimension_numbers = #tpu.dot_dimension_numbers<[1], [0], [0], [1], [0, 0, 1, 1], [], []>} : vector<96x64xf32>, vector<64x64xf32>, vector<96x64xf32> -> vector<96x64xf32>
    %c0_31 = arith.constant 0 : index
    %c0_32 = arith.constant 0 : index
    %c0_33 = arith.constant 0 : index
    %57 = vector.load %arg10[%c0_31, %c0_32, %c0_33] : memref<4x1x64xf32, #tpu.memory_space<vmem>>, vector<1x1x64xf32>
    %58 = vector.shape_cast %57 : vector<1x1x64xf32> to vector<1x64xf32>
    %59 = vector.broadcast %58 : vector<1x64xf32> to vector<96x64xf32>
    %60 = arith.addf %56, %59 : vector<96x64xf32>
    %61 = vector.extract_strided_slice %60 {offsets = [0, 0], sizes = [96, 32], strides = [1, 1]} : vector<96x64xf32> to vector<96x32xf32>
    %62 = math.tanh %61 : vector<96x32xf32>
    %63 = vector.extract_strided_slice %60 {offsets = [0, 32], sizes = [96, 32], strides = [1, 1]} : vector<96x64xf32> to vector<96x32xf32>
    %64 = arith.negf %63 : vector<96x32xf32>
    %65 = math.exp %64 : vector<96x32xf32>
    %cst_34 = arith.constant 1.000000e+00 : f32
    %66 = vector.broadcast %cst_34 : f32 to vector<96x32xf32>
    %67 = arith.addf %66, %65 : vector<96x32xf32>
    %68 = arith.divf %66, %67 : vector<96x32xf32>
    %69 = arith.mulf %62, %68 : vector<96x32xf32>
    %70 = vector.extract_strided_slice %69 {offsets = [80, 0], sizes = [16, 32], strides = [1, 1]} : vector<96x32xf32> to vector<16x32xf32>
    %c0_35 = arith.constant 0 : index
    %c0_36 = arith.constant 0 : index
    %c0_37 = arith.constant 0 : index
    %71 = vector.load %arg11[%c0_35, %c0_36, %c0_37] : memref<4x32x256xf32, #tpu.memory_space<vmem>>, vector<1x32x256xf32>
    %72 = vector.shape_cast %71 : vector<1x32x256xf32> to vector<32x256xf32>
    %cst_38 = arith.constant dense<0.000000e+00> : vector<16x256xf32>
    %73 = tpu.matmul %70, %72, %cst_38 {dimension_numbers = #tpu.dot_dimension_numbers<[1], [0], [0], [1], [0, 0, 1, 1], [], []>} : vector<16x32xf32>, vector<32x256xf32>, vector<16x256xf32> -> vector<16x256xf32>
    %c0_39 = arith.constant 0 : index
    %c0_40 = arith.constant 0 : index
    %c0_41 = arith.constant 0 : index
    %74 = vector.load %arg12[%c0_39, %c0_40, %c0_41] : memref<4x1x256xf32, #tpu.memory_space<vmem>>, vector<1x1x256xf32>
    %75 = vector.shape_cast %74 : vector<1x1x256xf32> to vector<1x256xf32>
    %76 = vector.broadcast %75 : vector<1x256xf32> to vector<16x256xf32>
    %77 = arith.addf %73, %76 : vector<16x256xf32>
    %78 = vector.extract_strided_slice %69 {offsets = [0, 0], sizes = [16, 32], strides = [1, 1]} : vector<96x32xf32> to vector<16x32xf32>
    %cst_42 = arith.constant dense<0.000000e+00> : vector<64x32xf32>
    %79 = tpu.matmul %37, %78, %cst_42 {dimension_numbers = #tpu.dot_dimension_numbers<[1], [0], [0], [1], [0, 0, 1, 1], [], []>} : vector<64x16xf32>, vector<16x32xf32>, vector<64x32xf32> -> vector<64x32xf32>
    %cst_43 = arith.constant dense<0.000000e+00> : vector<64x32xf32>
    %80 = tpu.matmul %43, %79, %cst_43 {dimension_numbers = #tpu.dot_dimension_numbers<[1], [0], [0], [1], [0, 0, 1, 1], [], []>} : vector<64x64xf32>, vector<64x32xf32>, vector<64x32xf32> -> vector<64x32xf32>
    %81 = vector.extract_strided_slice %79 {offsets = [0, 0], sizes = [16, 32], strides = [1, 1]} : vector<64x32xf32> to vector<16x32xf32>
    %82 = vector.extract_strided_slice %80 {offsets = [0, 0], sizes = [16, 32], strides = [1, 1]} : vector<64x32xf32> to vector<16x32xf32>
    %83 = vector.extract_strided_slice %79 {offsets = [16, 0], sizes = [16, 32], strides = [1, 1]} : vector<64x32xf32> to vector<16x32xf32>
    %84 = vector.extract_strided_slice %80 {offsets = [16, 0], sizes = [16, 32], strides = [1, 1]} : vector<64x32xf32> to vector<16x32xf32>
    %85 = vector.extract_strided_slice %79 {offsets = [32, 0], sizes = [16, 32], strides = [1, 1]} : vector<64x32xf32> to vector<16x32xf32>
    %86 = vector.extract_strided_slice %80 {offsets = [32, 0], sizes = [16, 32], strides = [1, 1]} : vector<64x32xf32> to vector<16x32xf32>
    %87 = vector.extract_strided_slice %79 {offsets = [48, 0], sizes = [16, 32], strides = [1, 1]} : vector<64x32xf32> to vector<16x32xf32>
    %88 = vector.extract_strided_slice %80 {offsets = [48, 0], sizes = [16, 32], strides = [1, 1]} : vector<64x32xf32> to vector<16x32xf32>
    %89 = tpu.concatenate %78, %81, %82, %83, %84, %85, %86, %87, %88 in 1 : vector<16x32xf32>, vector<16x32xf32>, vector<16x32xf32>, vector<16x32xf32>, vector<16x32xf32>, vector<16x32xf32>, vector<16x32xf32>, vector<16x32xf32>, vector<16x32xf32> -> vector<16x288xf32>
    %90 = vector.extract_strided_slice %69 {offsets = [16, 0], sizes = [16, 32], strides = [1, 1]} : vector<96x32xf32> to vector<16x32xf32>
    %cst_44 = arith.constant dense<0.000000e+00> : vector<64x32xf32>
    %91 = tpu.matmul %37, %90, %cst_44 {dimension_numbers = #tpu.dot_dimension_numbers<[1], [0], [0], [1], [0, 0, 1, 1], [], []>} : vector<64x16xf32>, vector<16x32xf32>, vector<64x32xf32> -> vector<64x32xf32>
    %cst_45 = arith.constant dense<0.000000e+00> : vector<64x32xf32>
    %92 = tpu.matmul %43, %91, %cst_45 {dimension_numbers = #tpu.dot_dimension_numbers<[1], [0], [0], [1], [0, 0, 1, 1], [], []>} : vector<64x64xf32>, vector<64x32xf32>, vector<64x32xf32> -> vector<64x32xf32>
    %93 = vector.extract_strided_slice %91 {offsets = [0, 0], sizes = [16, 32], strides = [1, 1]} : vector<64x32xf32> to vector<16x32xf32>
    %94 = vector.extract_strided_slice %92 {offsets = [0, 0], sizes = [16, 32], strides = [1, 1]} : vector<64x32xf32> to vector<16x32xf32>
    %95 = vector.extract_strided_slice %91 {offsets = [16, 0], sizes = [16, 32], strides = [1, 1]} : vector<64x32xf32> to vector<16x32xf32>
    %96 = vector.extract_strided_slice %92 {offsets = [16, 0], sizes = [16, 32], strides = [1, 1]} : vector<64x32xf32> to vector<16x32xf32>
    %97 = vector.extract_strided_slice %91 {offsets = [32, 0], sizes = [16, 32], strides = [1, 1]} : vector<64x32xf32> to vector<16x32xf32>
    %98 = vector.extract_strided_slice %92 {offsets = [32, 0], sizes = [16, 32], strides = [1, 1]} : vector<64x32xf32> to vector<16x32xf32>
    %99 = vector.extract_strided_slice %91 {offsets = [48, 0], sizes = [16, 32], strides = [1, 1]} : vector<64x32xf32> to vector<16x32xf32>
    %100 = vector.extract_strided_slice %92 {offsets = [48, 0], sizes = [16, 32], strides = [1, 1]} : vector<64x32xf32> to vector<16x32xf32>
    %101 = tpu.concatenate %90, %93, %94, %95, %96, %97, %98, %99, %100 in 1 : vector<16x32xf32>, vector<16x32xf32>, vector<16x32xf32>, vector<16x32xf32>, vector<16x32xf32>, vector<16x32xf32>, vector<16x32xf32>, vector<16x32xf32>, vector<16x32xf32> -> vector<16x288xf32>
    %102 = vector.extract_strided_slice %69 {offsets = [32, 0], sizes = [16, 32], strides = [1, 1]} : vector<96x32xf32> to vector<16x32xf32>
    %cst_46 = arith.constant dense<0.000000e+00> : vector<64x32xf32>
    %103 = tpu.matmul %37, %102, %cst_46 {dimension_numbers = #tpu.dot_dimension_numbers<[1], [0], [0], [1], [0, 0, 1, 1], [], []>} : vector<64x16xf32>, vector<16x32xf32>, vector<64x32xf32> -> vector<64x32xf32>
    %cst_47 = arith.constant dense<0.000000e+00> : vector<64x32xf32>
    %104 = tpu.matmul %43, %103, %cst_47 {dimension_numbers = #tpu.dot_dimension_numbers<[1], [0], [0], [1], [0, 0, 1, 1], [], []>} : vector<64x64xf32>, vector<64x32xf32>, vector<64x32xf32> -> vector<64x32xf32>
    %105 = vector.extract_strided_slice %103 {offsets = [0, 0], sizes = [16, 32], strides = [1, 1]} : vector<64x32xf32> to vector<16x32xf32>
    %106 = vector.extract_strided_slice %104 {offsets = [0, 0], sizes = [16, 32], strides = [1, 1]} : vector<64x32xf32> to vector<16x32xf32>
    %107 = vector.extract_strided_slice %103 {offsets = [16, 0], sizes = [16, 32], strides = [1, 1]} : vector<64x32xf32> to vector<16x32xf32>
    %108 = vector.extract_strided_slice %104 {offsets = [16, 0], sizes = [16, 32], strides = [1, 1]} : vector<64x32xf32> to vector<16x32xf32>
    %109 = vector.extract_strided_slice %103 {offsets = [32, 0], sizes = [16, 32], strides = [1, 1]} : vector<64x32xf32> to vector<16x32xf32>
    %110 = vector.extract_strided_slice %104 {offsets = [32, 0], sizes = [16, 32], strides = [1, 1]} : vector<64x32xf32> to vector<16x32xf32>
    %111 = vector.extract_strided_slice %103 {offsets = [48, 0], sizes = [16, 32], strides = [1, 1]} : vector<64x32xf32> to vector<16x32xf32>
    %112 = vector.extract_strided_slice %104 {offsets = [48, 0], sizes = [16, 32], strides = [1, 1]} : vector<64x32xf32> to vector<16x32xf32>
    %113 = tpu.concatenate %102, %105, %106, %107, %108, %109, %110, %111, %112 in 1 : vector<16x32xf32>, vector<16x32xf32>, vector<16x32xf32>, vector<16x32xf32>, vector<16x32xf32>, vector<16x32xf32>, vector<16x32xf32>, vector<16x32xf32>, vector<16x32xf32> -> vector<16x288xf32>
    %114 = vector.extract_strided_slice %69 {offsets = [48, 0], sizes = [16, 32], strides = [1, 1]} : vector<96x32xf32> to vector<16x32xf32>
    %cst_48 = arith.constant dense<0.000000e+00> : vector<64x32xf32>
    %115 = tpu.matmul %37, %114, %cst_48 {dimension_numbers = #tpu.dot_dimension_numbers<[1], [0], [0], [1], [0, 0, 1, 1], [], []>} : vector<64x16xf32>, vector<16x32xf32>, vector<64x32xf32> -> vector<64x32xf32>
    %cst_49 = arith.constant dense<0.000000e+00> : vector<64x32xf32>
    %116 = tpu.matmul %43, %115, %cst_49 {dimension_numbers = #tpu.dot_dimension_numbers<[1], [0], [0], [1], [0, 0, 1, 1], [], []>} : vector<64x64xf32>, vector<64x32xf32>, vector<64x32xf32> -> vector<64x32xf32>
    %117 = vector.extract_strided_slice %115 {offsets = [0, 0], sizes = [16, 32], strides = [1, 1]} : vector<64x32xf32> to vector<16x32xf32>
    %118 = vector.extract_strided_slice %116 {offsets = [0, 0], sizes = [16, 32], strides = [1, 1]} : vector<64x32xf32> to vector<16x32xf32>
    %119 = vector.extract_strided_slice %115 {offsets = [16, 0], sizes = [16, 32], strides = [1, 1]} : vector<64x32xf32> to vector<16x32xf32>
    %120 = vector.extract_strided_slice %116 {offsets = [16, 0], sizes = [16, 32], strides = [1, 1]} : vector<64x32xf32> to vector<16x32xf32>
    %121 = vector.extract_strided_slice %115 {offsets = [32, 0], sizes = [16, 32], strides = [1, 1]} : vector<64x32xf32> to vector<16x32xf32>
    %122 = vector.extract_strided_slice %116 {offsets = [32, 0], sizes = [16, 32], strides = [1, 1]} : vector<64x32xf32> to vector<16x32xf32>
    %123 = vector.extract_strided_slice %115 {offsets = [48, 0], sizes = [16, 32], strides = [1, 1]} : vector<64x32xf32> to vector<16x32xf32>
    %124 = vector.extract_strided_slice %116 {offsets = [48, 0], sizes = [16, 32], strides = [1, 1]} : vector<64x32xf32> to vector<16x32xf32>
    %125 = tpu.concatenate %114, %117, %118, %119, %120, %121, %122, %123, %124 in 1 : vector<16x32xf32>, vector<16x32xf32>, vector<16x32xf32>, vector<16x32xf32>, vector<16x32xf32>, vector<16x32xf32>, vector<16x32xf32>, vector<16x32xf32>, vector<16x32xf32> -> vector<16x288xf32>
    %126 = vector.extract_strided_slice %69 {offsets = [64, 0], sizes = [16, 32], strides = [1, 1]} : vector<96x32xf32> to vector<16x32xf32>
    %cst_50 = arith.constant dense<0.000000e+00> : vector<64x32xf32>
    %127 = tpu.matmul %37, %126, %cst_50 {dimension_numbers = #tpu.dot_dimension_numbers<[1], [0], [0], [1], [0, 0, 1, 1], [], []>} : vector<64x16xf32>, vector<16x32xf32>, vector<64x32xf32> -> vector<64x32xf32>
    %cst_51 = arith.constant dense<0.000000e+00> : vector<64x32xf32>
    %128 = tpu.matmul %43, %127, %cst_51 {dimension_numbers = #tpu.dot_dimension_numbers<[1], [0], [0], [1], [0, 0, 1, 1], [], []>} : vector<64x64xf32>, vector<64x32xf32>, vector<64x32xf32> -> vector<64x32xf32>
    %129 = vector.extract_strided_slice %127 {offsets = [0, 0], sizes = [16, 32], strides = [1, 1]} : vector<64x32xf32> to vector<16x32xf32>
    %130 = vector.extract_strided_slice %128 {offsets = [0, 0], sizes = [16, 32], strides = [1, 1]} : vector<64x32xf32> to vector<16x32xf32>
    %131 = vector.extract_strided_slice %127 {offsets = [16, 0], sizes = [16, 32], strides = [1, 1]} : vector<64x32xf32> to vector<16x32xf32>
    %132 = vector.extract_strided_slice %128 {offsets = [16, 0], sizes = [16, 32], strides = [1, 1]} : vector<64x32xf32> to vector<16x32xf32>
    %133 = vector.extract_strided_slice %127 {offsets = [32, 0], sizes = [16, 32], strides = [1, 1]} : vector<64x32xf32> to vector<16x32xf32>
    %134 = vector.extract_strided_slice %128 {offsets = [32, 0], sizes = [16, 32], strides = [1, 1]} : vector<64x32xf32> to vector<16x32xf32>
    %135 = vector.extract_strided_slice %127 {offsets = [48, 0], sizes = [16, 32], strides = [1, 1]} : vector<64x32xf32> to vector<16x32xf32>
    %136 = vector.extract_strided_slice %128 {offsets = [48, 0], sizes = [16, 32], strides = [1, 1]} : vector<64x32xf32> to vector<16x32xf32>
    %137 = tpu.concatenate %126, %129, %130, %131, %132, %133, %134, %135, %136 in 1 : vector<16x32xf32>, vector<16x32xf32>, vector<16x32xf32>, vector<16x32xf32>, vector<16x32xf32>, vector<16x32xf32>, vector<16x32xf32>, vector<16x32xf32>, vector<16x32xf32> -> vector<16x288xf32>
    %138 = vector.extract_strided_slice %69 {offsets = [80, 0], sizes = [16, 32], strides = [1, 1]} : vector<96x32xf32> to vector<16x32xf32>
    %cst_52 = arith.constant dense<0.000000e+00> : vector<64x32xf32>
    %139 = tpu.matmul %37, %138, %cst_52 {dimension_numbers = #tpu.dot_dimension_numbers<[1], [0], [0], [1], [0, 0, 1, 1], [], []>} : vector<64x16xf32>, vector<16x32xf32>, vector<64x32xf32> -> vector<64x32xf32>
    %cst_53 = arith.constant dense<0.000000e+00> : vector<64x32xf32>
    %140 = tpu.matmul %43, %139, %cst_53 {dimension_numbers = #tpu.dot_dimension_numbers<[1], [0], [0], [1], [0, 0, 1, 1], [], []>} : vector<64x64xf32>, vector<64x32xf32>, vector<64x32xf32> -> vector<64x32xf32>
    %141 = vector.extract_strided_slice %139 {offsets = [0, 0], sizes = [16, 32], strides = [1, 1]} : vector<64x32xf32> to vector<16x32xf32>
    %142 = vector.extract_strided_slice %140 {offsets = [0, 0], sizes = [16, 32], strides = [1, 1]} : vector<64x32xf32> to vector<16x32xf32>
    %143 = vector.extract_strided_slice %139 {offsets = [16, 0], sizes = [16, 32], strides = [1, 1]} : vector<64x32xf32> to vector<16x32xf32>
    %144 = vector.extract_strided_slice %140 {offsets = [16, 0], sizes = [16, 32], strides = [1, 1]} : vector<64x32xf32> to vector<16x32xf32>
    %145 = vector.extract_strided_slice %139 {offsets = [32, 0], sizes = [16, 32], strides = [1, 1]} : vector<64x32xf32> to vector<16x32xf32>
    %146 = vector.extract_strided_slice %140 {offsets = [32, 0], sizes = [16, 32], strides = [1, 1]} : vector<64x32xf32> to vector<16x32xf32>
    %147 = vector.extract_strided_slice %139 {offsets = [48, 0], sizes = [16, 32], strides = [1, 1]} : vector<64x32xf32> to vector<16x32xf32>
    %148 = vector.extract_strided_slice %140 {offsets = [48, 0], sizes = [16, 32], strides = [1, 1]} : vector<64x32xf32> to vector<16x32xf32>
    %149 = tpu.concatenate %138, %141, %142, %143, %144, %145, %146, %147, %148 in 1 : vector<16x32xf32>, vector<16x32xf32>, vector<16x32xf32>, vector<16x32xf32>, vector<16x32xf32>, vector<16x32xf32>, vector<16x32xf32>, vector<16x32xf32>, vector<16x32xf32> -> vector<16x288xf32>
    %150 = tpu.concatenate %89, %101, %113, %125, %137, %149 in 0 : vector<16x288xf32>, vector<16x288xf32>, vector<16x288xf32>, vector<16x288xf32>, vector<16x288xf32>, vector<16x288xf32> -> vector<96x288xf32>
    %c0_54 = arith.constant 0 : index
    %c0_55 = arith.constant 0 : index
    %c0_56 = arith.constant 0 : index
    %151 = vector.load %arg13[%c0_54, %c0_55, %c0_56] : memref<4x288x32xf32, #tpu.memory_space<vmem>>, vector<1x288x32xf32>
    %152 = vector.shape_cast %151 : vector<1x288x32xf32> to vector<288x32xf32>
    %cst_57 = arith.constant dense<0.000000e+00> : vector<96x32xf32>
    %153 = tpu.matmul %150, %152, %cst_57 {dimension_numbers = #tpu.dot_dimension_numbers<[1], [0], [0], [1], [0, 0, 1, 1], [], []>} : vector<96x288xf32>, vector<288x32xf32>, vector<96x32xf32> -> vector<96x32xf32>
    %c0_58 = arith.constant 0 : index
    %c0_59 = arith.constant 0 : index
    %c0_60 = arith.constant 0 : index
    %154 = vector.load %arg14[%c0_58, %c0_59, %c0_60] : memref<4x1x32xf32, #tpu.memory_space<vmem>>, vector<1x1x32xf32>
    %155 = vector.shape_cast %154 : vector<1x1x32xf32> to vector<1x32xf32>
    %156 = vector.broadcast %155 : vector<1x32xf32> to vector<96x32xf32>
    %157 = arith.addf %153, %156 : vector<96x32xf32>
    %158 = arith.addf %157, %52 : vector<96x32xf32>
    %c0_61 = arith.constant 0 : index
    %c0_62 = arith.constant 0 : index
    %c0_63 = arith.constant 0 : index
    %159 = vector.load %arg15[%c0_61, %c0_62, %c0_63] : memref<4x1x32xf32, #tpu.memory_space<vmem>>, vector<1x1x32xf32>
    %160 = vector.shape_cast %159 : vector<1x1x32xf32> to vector<1x32xf32>
    %161 = vector.broadcast %160 : vector<1x32xf32> to vector<96x32xf32>
    %162 = arith.mulf %158, %161 : vector<96x32xf32>
    %c0_64 = arith.constant 0 : index
    %c0_65 = arith.constant 0 : index
    %c0_66 = arith.constant 0 : index
    %163 = vector.load %arg16[%c0_64, %c0_65, %c0_66] : memref<4x1x32xf32, #tpu.memory_space<vmem>>, vector<1x1x32xf32>
    %164 = vector.shape_cast %163 : vector<1x1x32xf32> to vector<1x32xf32>
    %165 = vector.broadcast %164 : vector<1x32xf32> to vector<96x32xf32>
    %166 = arith.addf %162, %165 : vector<96x32xf32>
    %167 = vector.extract_strided_slice %166 {offsets = [0, 0], sizes = [64, 32], strides = [1, 1]} : vector<96x32xf32> to vector<64x32xf32>
    %168 = vector.extract_strided_slice %166 {offsets = [32, 0], sizes = [64, 32], strides = [1, 1]} : vector<96x32xf32> to vector<64x32xf32>
    %169 = tpu.concatenate %167, %168 in 1 : vector<64x32xf32>, vector<64x32xf32> -> vector<64x64xf32>
    %c1_67 = arith.constant 1 : index
    %c0_68 = arith.constant 0 : index
    %c0_69 = arith.constant 0 : index
    %170 = vector.load %arg9[%c1_67, %c0_68, %c0_69] : memref<4x64x64xf32, #tpu.memory_space<vmem>>, vector<1x64x64xf32>
    %171 = vector.shape_cast %170 : vector<1x64x64xf32> to vector<64x64xf32>
    %cst_70 = arith.constant dense<0.000000e+00> : vector<64x64xf32>
    %172 = tpu.matmul %169, %171, %cst_70 {dimension_numbers = #tpu.dot_dimension_numbers<[1], [0], [0], [1], [0, 0, 1, 1], [], []>} : vector<64x64xf32>, vector<64x64xf32>, vector<64x64xf32> -> vector<64x64xf32>
    %c1_71 = arith.constant 1 : index
    %c0_72 = arith.constant 0 : index
    %c0_73 = arith.constant 0 : index
    %173 = vector.load %arg10[%c1_71, %c0_72, %c0_73] : memref<4x1x64xf32, #tpu.memory_space<vmem>>, vector<1x1x64xf32>
    %174 = vector.shape_cast %173 : vector<1x1x64xf32> to vector<1x64xf32>
    %175 = vector.broadcast %174 : vector<1x64xf32> to vector<64x64xf32>
    %176 = arith.addf %172, %175 : vector<64x64xf32>
    %177 = vector.extract_strided_slice %176 {offsets = [0, 0], sizes = [64, 32], strides = [1, 1]} : vector<64x64xf32> to vector<64x32xf32>
    %178 = math.tanh %177 : vector<64x32xf32>
    %179 = vector.extract_strided_slice %176 {offsets = [0, 32], sizes = [64, 32], strides = [1, 1]} : vector<64x64xf32> to vector<64x32xf32>
    %180 = arith.negf %179 : vector<64x32xf32>
    %181 = math.exp %180 : vector<64x32xf32>
    %cst_74 = arith.constant 1.000000e+00 : f32
    %182 = vector.broadcast %cst_74 : f32 to vector<64x32xf32>
    %183 = arith.addf %182, %181 : vector<64x32xf32>
    %184 = arith.divf %182, %183 : vector<64x32xf32>
    %185 = arith.mulf %178, %184 : vector<64x32xf32>
    %186 = vector.extract_strided_slice %185 {offsets = [48, 0], sizes = [16, 32], strides = [1, 1]} : vector<64x32xf32> to vector<16x32xf32>
    %c1_75 = arith.constant 1 : index
    %c0_76 = arith.constant 0 : index
    %c0_77 = arith.constant 0 : index
    %187 = vector.load %arg11[%c1_75, %c0_76, %c0_77] : memref<4x32x256xf32, #tpu.memory_space<vmem>>, vector<1x32x256xf32>
    %188 = vector.shape_cast %187 : vector<1x32x256xf32> to vector<32x256xf32>
    %cst_78 = arith.constant dense<0.000000e+00> : vector<16x256xf32>
    %189 = tpu.matmul %186, %188, %cst_78 {dimension_numbers = #tpu.dot_dimension_numbers<[1], [0], [0], [1], [0, 0, 1, 1], [], []>} : vector<16x32xf32>, vector<32x256xf32>, vector<16x256xf32> -> vector<16x256xf32>
    %c1_79 = arith.constant 1 : index
    %c0_80 = arith.constant 0 : index
    %c0_81 = arith.constant 0 : index
    %190 = vector.load %arg12[%c1_79, %c0_80, %c0_81] : memref<4x1x256xf32, #tpu.memory_space<vmem>>, vector<1x1x256xf32>
    %191 = vector.shape_cast %190 : vector<1x1x256xf32> to vector<1x256xf32>
    %192 = vector.broadcast %191 : vector<1x256xf32> to vector<16x256xf32>
    %193 = arith.addf %189, %192 : vector<16x256xf32>
    %194 = arith.addf %77, %193 : vector<16x256xf32>
    %195 = vector.extract_strided_slice %185 {offsets = [0, 0], sizes = [16, 32], strides = [1, 1]} : vector<64x32xf32> to vector<16x32xf32>
    %cst_82 = arith.constant dense<0.000000e+00> : vector<64x32xf32>
    %196 = tpu.matmul %37, %195, %cst_82 {dimension_numbers = #tpu.dot_dimension_numbers<[1], [0], [0], [1], [0, 0, 1, 1], [], []>} : vector<64x16xf32>, vector<16x32xf32>, vector<64x32xf32> -> vector<64x32xf32>
    %cst_83 = arith.constant dense<0.000000e+00> : vector<64x32xf32>
    %197 = tpu.matmul %43, %196, %cst_83 {dimension_numbers = #tpu.dot_dimension_numbers<[1], [0], [0], [1], [0, 0, 1, 1], [], []>} : vector<64x64xf32>, vector<64x32xf32>, vector<64x32xf32> -> vector<64x32xf32>
    %198 = vector.extract_strided_slice %196 {offsets = [0, 0], sizes = [16, 32], strides = [1, 1]} : vector<64x32xf32> to vector<16x32xf32>
    %199 = vector.extract_strided_slice %197 {offsets = [0, 0], sizes = [16, 32], strides = [1, 1]} : vector<64x32xf32> to vector<16x32xf32>
    %200 = vector.extract_strided_slice %196 {offsets = [16, 0], sizes = [16, 32], strides = [1, 1]} : vector<64x32xf32> to vector<16x32xf32>
    %201 = vector.extract_strided_slice %197 {offsets = [16, 0], sizes = [16, 32], strides = [1, 1]} : vector<64x32xf32> to vector<16x32xf32>
    %202 = vector.extract_strided_slice %196 {offsets = [32, 0], sizes = [16, 32], strides = [1, 1]} : vector<64x32xf32> to vector<16x32xf32>
    %203 = vector.extract_strided_slice %197 {offsets = [32, 0], sizes = [16, 32], strides = [1, 1]} : vector<64x32xf32> to vector<16x32xf32>
    %204 = vector.extract_strided_slice %196 {offsets = [48, 0], sizes = [16, 32], strides = [1, 1]} : vector<64x32xf32> to vector<16x32xf32>
    %205 = vector.extract_strided_slice %197 {offsets = [48, 0], sizes = [16, 32], strides = [1, 1]} : vector<64x32xf32> to vector<16x32xf32>
    %206 = tpu.concatenate %195, %198, %199, %200, %201, %202, %203, %204, %205 in 1 : vector<16x32xf32>, vector<16x32xf32>, vector<16x32xf32>, vector<16x32xf32>, vector<16x32xf32>, vector<16x32xf32>, vector<16x32xf32>, vector<16x32xf32>, vector<16x32xf32> -> vector<16x288xf32>
    %207 = vector.extract_strided_slice %185 {offsets = [16, 0], sizes = [16, 32], strides = [1, 1]} : vector<64x32xf32> to vector<16x32xf32>
    %cst_84 = arith.constant dense<0.000000e+00> : vector<64x32xf32>
    %208 = tpu.matmul %37, %207, %cst_84 {dimension_numbers = #tpu.dot_dimension_numbers<[1], [0], [0], [1], [0, 0, 1, 1], [], []>} : vector<64x16xf32>, vector<16x32xf32>, vector<64x32xf32> -> vector<64x32xf32>
    %cst_85 = arith.constant dense<0.000000e+00> : vector<64x32xf32>
    %209 = tpu.matmul %43, %208, %cst_85 {dimension_numbers = #tpu.dot_dimension_numbers<[1], [0], [0], [1], [0, 0, 1, 1], [], []>} : vector<64x64xf32>, vector<64x32xf32>, vector<64x32xf32> -> vector<64x32xf32>
    %210 = vector.extract_strided_slice %208 {offsets = [0, 0], sizes = [16, 32], strides = [1, 1]} : vector<64x32xf32> to vector<16x32xf32>
    %211 = vector.extract_strided_slice %209 {offsets = [0, 0], sizes = [16, 32], strides = [1, 1]} : vector<64x32xf32> to vector<16x32xf32>
    %212 = vector.extract_strided_slice %208 {offsets = [16, 0], sizes = [16, 32], strides = [1, 1]} : vector<64x32xf32> to vector<16x32xf32>
    %213 = vector.extract_strided_slice %209 {offsets = [16, 0], sizes = [16, 32], strides = [1, 1]} : vector<64x32xf32> to vector<16x32xf32>
    %214 = vector.extract_strided_slice %208 {offsets = [32, 0], sizes = [16, 32], strides = [1, 1]} : vector<64x32xf32> to vector<16x32xf32>
    %215 = vector.extract_strided_slice %209 {offsets = [32, 0], sizes = [16, 32], strides = [1, 1]} : vector<64x32xf32> to vector<16x32xf32>
    %216 = vector.extract_strided_slice %208 {offsets = [48, 0], sizes = [16, 32], strides = [1, 1]} : vector<64x32xf32> to vector<16x32xf32>
    %217 = vector.extract_strided_slice %209 {offsets = [48, 0], sizes = [16, 32], strides = [1, 1]} : vector<64x32xf32> to vector<16x32xf32>
    %218 = tpu.concatenate %207, %210, %211, %212, %213, %214, %215, %216, %217 in 1 : vector<16x32xf32>, vector<16x32xf32>, vector<16x32xf32>, vector<16x32xf32>, vector<16x32xf32>, vector<16x32xf32>, vector<16x32xf32>, vector<16x32xf32>, vector<16x32xf32> -> vector<16x288xf32>
    %219 = vector.extract_strided_slice %185 {offsets = [32, 0], sizes = [16, 32], strides = [1, 1]} : vector<64x32xf32> to vector<16x32xf32>
    %cst_86 = arith.constant dense<0.000000e+00> : vector<64x32xf32>
    %220 = tpu.matmul %37, %219, %cst_86 {dimension_numbers = #tpu.dot_dimension_numbers<[1], [0], [0], [1], [0, 0, 1, 1], [], []>} : vector<64x16xf32>, vector<16x32xf32>, vector<64x32xf32> -> vector<64x32xf32>
    %cst_87 = arith.constant dense<0.000000e+00> : vector<64x32xf32>
    %221 = tpu.matmul %43, %220, %cst_87 {dimension_numbers = #tpu.dot_dimension_numbers<[1], [0], [0], [1], [0, 0, 1, 1], [], []>} : vector<64x64xf32>, vector<64x32xf32>, vector<64x32xf32> -> vector<64x32xf32>
    %222 = vector.extract_strided_slice %220 {offsets = [0, 0], sizes = [16, 32], strides = [1, 1]} : vector<64x32xf32> to vector<16x32xf32>
    %223 = vector.extract_strided_slice %221 {offsets = [0, 0], sizes = [16, 32], strides = [1, 1]} : vector<64x32xf32> to vector<16x32xf32>
    %224 = vector.extract_strided_slice %220 {offsets = [16, 0], sizes = [16, 32], strides = [1, 1]} : vector<64x32xf32> to vector<16x32xf32>
    %225 = vector.extract_strided_slice %221 {offsets = [16, 0], sizes = [16, 32], strides = [1, 1]} : vector<64x32xf32> to vector<16x32xf32>
    %226 = vector.extract_strided_slice %220 {offsets = [32, 0], sizes = [16, 32], strides = [1, 1]} : vector<64x32xf32> to vector<16x32xf32>
    %227 = vector.extract_strided_slice %221 {offsets = [32, 0], sizes = [16, 32], strides = [1, 1]} : vector<64x32xf32> to vector<16x32xf32>
    %228 = vector.extract_strided_slice %220 {offsets = [48, 0], sizes = [16, 32], strides = [1, 1]} : vector<64x32xf32> to vector<16x32xf32>
    %229 = vector.extract_strided_slice %221 {offsets = [48, 0], sizes = [16, 32], strides = [1, 1]} : vector<64x32xf32> to vector<16x32xf32>
    %230 = tpu.concatenate %219, %222, %223, %224, %225, %226, %227, %228, %229 in 1 : vector<16x32xf32>, vector<16x32xf32>, vector<16x32xf32>, vector<16x32xf32>, vector<16x32xf32>, vector<16x32xf32>, vector<16x32xf32>, vector<16x32xf32>, vector<16x32xf32> -> vector<16x288xf32>
    %231 = vector.extract_strided_slice %185 {offsets = [48, 0], sizes = [16, 32], strides = [1, 1]} : vector<64x32xf32> to vector<16x32xf32>
    %cst_88 = arith.constant dense<0.000000e+00> : vector<64x32xf32>
    %232 = tpu.matmul %37, %231, %cst_88 {dimension_numbers = #tpu.dot_dimension_numbers<[1], [0], [0], [1], [0, 0, 1, 1], [], []>} : vector<64x16xf32>, vector<16x32xf32>, vector<64x32xf32> -> vector<64x32xf32>
    %cst_89 = arith.constant dense<0.000000e+00> : vector<64x32xf32>
    %233 = tpu.matmul %43, %232, %cst_89 {dimension_numbers = #tpu.dot_dimension_numbers<[1], [0], [0], [1], [0, 0, 1, 1], [], []>} : vector<64x64xf32>, vector<64x32xf32>, vector<64x32xf32> -> vector<64x32xf32>
    %234 = vector.extract_strided_slice %232 {offsets = [0, 0], sizes = [16, 32], strides = [1, 1]} : vector<64x32xf32> to vector<16x32xf32>
    %235 = vector.extract_strided_slice %233 {offsets = [0, 0], sizes = [16, 32], strides = [1, 1]} : vector<64x32xf32> to vector<16x32xf32>
    %236 = vector.extract_strided_slice %232 {offsets = [16, 0], sizes = [16, 32], strides = [1, 1]} : vector<64x32xf32> to vector<16x32xf32>
    %237 = vector.extract_strided_slice %233 {offsets = [16, 0], sizes = [16, 32], strides = [1, 1]} : vector<64x32xf32> to vector<16x32xf32>
    %238 = vector.extract_strided_slice %232 {offsets = [32, 0], sizes = [16, 32], strides = [1, 1]} : vector<64x32xf32> to vector<16x32xf32>
    %239 = vector.extract_strided_slice %233 {offsets = [32, 0], sizes = [16, 32], strides = [1, 1]} : vector<64x32xf32> to vector<16x32xf32>
    %240 = vector.extract_strided_slice %232 {offsets = [48, 0], sizes = [16, 32], strides = [1, 1]} : vector<64x32xf32> to vector<16x32xf32>
    %241 = vector.extract_strided_slice %233 {offsets = [48, 0], sizes = [16, 32], strides = [1, 1]} : vector<64x32xf32> to vector<16x32xf32>
    %242 = tpu.concatenate %231, %234, %235, %236, %237, %238, %239, %240, %241 in 1 : vector<16x32xf32>, vector<16x32xf32>, vector<16x32xf32>, vector<16x32xf32>, vector<16x32xf32>, vector<16x32xf32>, vector<16x32xf32>, vector<16x32xf32>, vector<16x32xf32> -> vector<16x288xf32>
    %243 = tpu.concatenate %206, %218, %230, %242 in 0 : vector<16x288xf32>, vector<16x288xf32>, vector<16x288xf32>, vector<16x288xf32> -> vector<64x288xf32>
    %c1_90 = arith.constant 1 : index
    %c0_91 = arith.constant 0 : index
    %c0_92 = arith.constant 0 : index
    %244 = vector.load %arg13[%c1_90, %c0_91, %c0_92] : memref<4x288x32xf32, #tpu.memory_space<vmem>>, vector<1x288x32xf32>
    %245 = vector.shape_cast %244 : vector<1x288x32xf32> to vector<288x32xf32>
    %cst_93 = arith.constant dense<0.000000e+00> : vector<64x32xf32>
    %246 = tpu.matmul %243, %245, %cst_93 {dimension_numbers = #tpu.dot_dimension_numbers<[1], [0], [0], [1], [0, 0, 1, 1], [], []>} : vector<64x288xf32>, vector<288x32xf32>, vector<64x32xf32> -> vector<64x32xf32>
    %c1_94 = arith.constant 1 : index
    %c0_95 = arith.constant 0 : index
    %c0_96 = arith.constant 0 : index
    %247 = vector.load %arg14[%c1_94, %c0_95, %c0_96] : memref<4x1x32xf32, #tpu.memory_space<vmem>>, vector<1x1x32xf32>
    %248 = vector.shape_cast %247 : vector<1x1x32xf32> to vector<1x32xf32>
    %249 = vector.broadcast %248 : vector<1x32xf32> to vector<64x32xf32>
    %250 = arith.addf %246, %249 : vector<64x32xf32>
    %251 = arith.addf %250, %168 : vector<64x32xf32>
    %c1_97 = arith.constant 1 : index
    %c0_98 = arith.constant 0 : index
    %c0_99 = arith.constant 0 : index
    %252 = vector.load %arg15[%c1_97, %c0_98, %c0_99] : memref<4x1x32xf32, #tpu.memory_space<vmem>>, vector<1x1x32xf32>
    %253 = vector.shape_cast %252 : vector<1x1x32xf32> to vector<1x32xf32>
    %254 = vector.broadcast %253 : vector<1x32xf32> to vector<64x32xf32>
    %255 = arith.mulf %251, %254 : vector<64x32xf32>
    %c1_100 = arith.constant 1 : index
    %c0_101 = arith.constant 0 : index
    %c0_102 = arith.constant 0 : index
    %256 = vector.load %arg16[%c1_100, %c0_101, %c0_102] : memref<4x1x32xf32, #tpu.memory_space<vmem>>, vector<1x1x32xf32>
    %257 = vector.shape_cast %256 : vector<1x1x32xf32> to vector<1x32xf32>
    %258 = vector.broadcast %257 : vector<1x32xf32> to vector<64x32xf32>
    %259 = arith.addf %255, %258 : vector<64x32xf32>
    %260 = vector.extract_strided_slice %259 {offsets = [0, 0], sizes = [48, 32], strides = [1, 1]} : vector<64x32xf32> to vector<48x32xf32>
    %261 = vector.extract_strided_slice %259 {offsets = [16, 0], sizes = [48, 32], strides = [1, 1]} : vector<64x32xf32> to vector<48x32xf32>
    %262 = tpu.concatenate %260, %261 in 1 : vector<48x32xf32>, vector<48x32xf32> -> vector<48x64xf32>
    %c2 = arith.constant 2 : index
    %c0_103 = arith.constant 0 : index
    %c0_104 = arith.constant 0 : index
    %263 = vector.load %arg9[%c2, %c0_103, %c0_104] : memref<4x64x64xf32, #tpu.memory_space<vmem>>, vector<1x64x64xf32>
    %264 = vector.shape_cast %263 : vector<1x64x64xf32> to vector<64x64xf32>
    %cst_105 = arith.constant dense<0.000000e+00> : vector<48x64xf32>
    %265 = tpu.matmul %262, %264, %cst_105 {dimension_numbers = #tpu.dot_dimension_numbers<[1], [0], [0], [1], [0, 0, 1, 1], [], []>} : vector<48x64xf32>, vector<64x64xf32>, vector<48x64xf32> -> vector<48x64xf32>
    %c2_106 = arith.constant 2 : index
    %c0_107 = arith.constant 0 : index
    %c0_108 = arith.constant 0 : index
    %266 = vector.load %arg10[%c2_106, %c0_107, %c0_108] : memref<4x1x64xf32, #tpu.memory_space<vmem>>, vector<1x1x64xf32>
    %267 = vector.shape_cast %266 : vector<1x1x64xf32> to vector<1x64xf32>
    %268 = vector.broadcast %267 : vector<1x64xf32> to vector<48x64xf32>
    %269 = arith.addf %265, %268 : vector<48x64xf32>
    %270 = vector.extract_strided_slice %269 {offsets = [0, 0], sizes = [48, 32], strides = [1, 1]} : vector<48x64xf32> to vector<48x32xf32>
    %271 = math.tanh %270 : vector<48x32xf32>
    %272 = vector.extract_strided_slice %269 {offsets = [0, 32], sizes = [48, 32], strides = [1, 1]} : vector<48x64xf32> to vector<48x32xf32>
    %273 = arith.negf %272 : vector<48x32xf32>
    %274 = math.exp %273 : vector<48x32xf32>
    %cst_109 = arith.constant 1.000000e+00 : f32
    %275 = vector.broadcast %cst_109 : f32 to vector<48x32xf32>
    %276 = arith.addf %275, %274 : vector<48x32xf32>
    %277 = arith.divf %275, %276 : vector<48x32xf32>
    %278 = arith.mulf %271, %277 : vector<48x32xf32>
    %279 = vector.extract_strided_slice %278 {offsets = [32, 0], sizes = [16, 32], strides = [1, 1]} : vector<48x32xf32> to vector<16x32xf32>
    %c2_110 = arith.constant 2 : index
    %c0_111 = arith.constant 0 : index
    %c0_112 = arith.constant 0 : index
    %280 = vector.load %arg11[%c2_110, %c0_111, %c0_112] : memref<4x32x256xf32, #tpu.memory_space<vmem>>, vector<1x32x256xf32>
    %281 = vector.shape_cast %280 : vector<1x32x256xf32> to vector<32x256xf32>
    %cst_113 = arith.constant dense<0.000000e+00> : vector<16x256xf32>
    %282 = tpu.matmul %279, %281, %cst_113 {dimension_numbers = #tpu.dot_dimension_numbers<[1], [0], [0], [1], [0, 0, 1, 1], [], []>} : vector<16x32xf32>, vector<32x256xf32>, vector<16x256xf32> -> vector<16x256xf32>
    %c2_114 = arith.constant 2 : index
    %c0_115 = arith.constant 0 : index
    %c0_116 = arith.constant 0 : index
    %283 = vector.load %arg12[%c2_114, %c0_115, %c0_116] : memref<4x1x256xf32, #tpu.memory_space<vmem>>, vector<1x1x256xf32>
    %284 = vector.shape_cast %283 : vector<1x1x256xf32> to vector<1x256xf32>
    %285 = vector.broadcast %284 : vector<1x256xf32> to vector<16x256xf32>
    %286 = arith.addf %282, %285 : vector<16x256xf32>
    %287 = arith.addf %194, %286 : vector<16x256xf32>
    %288 = vector.extract_strided_slice %278 {offsets = [0, 0], sizes = [16, 32], strides = [1, 1]} : vector<48x32xf32> to vector<16x32xf32>
    %cst_117 = arith.constant dense<0.000000e+00> : vector<64x32xf32>
    %289 = tpu.matmul %37, %288, %cst_117 {dimension_numbers = #tpu.dot_dimension_numbers<[1], [0], [0], [1], [0, 0, 1, 1], [], []>} : vector<64x16xf32>, vector<16x32xf32>, vector<64x32xf32> -> vector<64x32xf32>
    %cst_118 = arith.constant dense<0.000000e+00> : vector<64x32xf32>
    %290 = tpu.matmul %43, %289, %cst_118 {dimension_numbers = #tpu.dot_dimension_numbers<[1], [0], [0], [1], [0, 0, 1, 1], [], []>} : vector<64x64xf32>, vector<64x32xf32>, vector<64x32xf32> -> vector<64x32xf32>
    %291 = vector.extract_strided_slice %289 {offsets = [0, 0], sizes = [16, 32], strides = [1, 1]} : vector<64x32xf32> to vector<16x32xf32>
    %292 = vector.extract_strided_slice %290 {offsets = [0, 0], sizes = [16, 32], strides = [1, 1]} : vector<64x32xf32> to vector<16x32xf32>
    %293 = vector.extract_strided_slice %289 {offsets = [16, 0], sizes = [16, 32], strides = [1, 1]} : vector<64x32xf32> to vector<16x32xf32>
    %294 = vector.extract_strided_slice %290 {offsets = [16, 0], sizes = [16, 32], strides = [1, 1]} : vector<64x32xf32> to vector<16x32xf32>
    %295 = vector.extract_strided_slice %289 {offsets = [32, 0], sizes = [16, 32], strides = [1, 1]} : vector<64x32xf32> to vector<16x32xf32>
    %296 = vector.extract_strided_slice %290 {offsets = [32, 0], sizes = [16, 32], strides = [1, 1]} : vector<64x32xf32> to vector<16x32xf32>
    %297 = vector.extract_strided_slice %289 {offsets = [48, 0], sizes = [16, 32], strides = [1, 1]} : vector<64x32xf32> to vector<16x32xf32>
    %298 = vector.extract_strided_slice %290 {offsets = [48, 0], sizes = [16, 32], strides = [1, 1]} : vector<64x32xf32> to vector<16x32xf32>
    %299 = tpu.concatenate %288, %291, %292, %293, %294, %295, %296, %297, %298 in 1 : vector<16x32xf32>, vector<16x32xf32>, vector<16x32xf32>, vector<16x32xf32>, vector<16x32xf32>, vector<16x32xf32>, vector<16x32xf32>, vector<16x32xf32>, vector<16x32xf32> -> vector<16x288xf32>
    %300 = vector.extract_strided_slice %278 {offsets = [16, 0], sizes = [16, 32], strides = [1, 1]} : vector<48x32xf32> to vector<16x32xf32>
    %cst_119 = arith.constant dense<0.000000e+00> : vector<64x32xf32>
    %301 = tpu.matmul %37, %300, %cst_119 {dimension_numbers = #tpu.dot_dimension_numbers<[1], [0], [0], [1], [0, 0, 1, 1], [], []>} : vector<64x16xf32>, vector<16x32xf32>, vector<64x32xf32> -> vector<64x32xf32>
    %cst_120 = arith.constant dense<0.000000e+00> : vector<64x32xf32>
    %302 = tpu.matmul %43, %301, %cst_120 {dimension_numbers = #tpu.dot_dimension_numbers<[1], [0], [0], [1], [0, 0, 1, 1], [], []>} : vector<64x64xf32>, vector<64x32xf32>, vector<64x32xf32> -> vector<64x32xf32>
    %303 = vector.extract_strided_slice %301 {offsets = [0, 0], sizes = [16, 32], strides = [1, 1]} : vector<64x32xf32> to vector<16x32xf32>
    %304 = vector.extract_strided_slice %302 {offsets = [0, 0], sizes = [16, 32], strides = [1, 1]} : vector<64x32xf32> to vector<16x32xf32>
    %305 = vector.extract_strided_slice %301 {offsets = [16, 0], sizes = [16, 32], strides = [1, 1]} : vector<64x32xf32> to vector<16x32xf32>
    %306 = vector.extract_strided_slice %302 {offsets = [16, 0], sizes = [16, 32], strides = [1, 1]} : vector<64x32xf32> to vector<16x32xf32>
    %307 = vector.extract_strided_slice %301 {offsets = [32, 0], sizes = [16, 32], strides = [1, 1]} : vector<64x32xf32> to vector<16x32xf32>
    %308 = vector.extract_strided_slice %302 {offsets = [32, 0], sizes = [16, 32], strides = [1, 1]} : vector<64x32xf32> to vector<16x32xf32>
    %309 = vector.extract_strided_slice %301 {offsets = [48, 0], sizes = [16, 32], strides = [1, 1]} : vector<64x32xf32> to vector<16x32xf32>
    %310 = vector.extract_strided_slice %302 {offsets = [48, 0], sizes = [16, 32], strides = [1, 1]} : vector<64x32xf32> to vector<16x32xf32>
    %311 = tpu.concatenate %300, %303, %304, %305, %306, %307, %308, %309, %310 in 1 : vector<16x32xf32>, vector<16x32xf32>, vector<16x32xf32>, vector<16x32xf32>, vector<16x32xf32>, vector<16x32xf32>, vector<16x32xf32>, vector<16x32xf32>, vector<16x32xf32> -> vector<16x288xf32>
    %312 = vector.extract_strided_slice %278 {offsets = [32, 0], sizes = [16, 32], strides = [1, 1]} : vector<48x32xf32> to vector<16x32xf32>
    %cst_121 = arith.constant dense<0.000000e+00> : vector<64x32xf32>
    %313 = tpu.matmul %37, %312, %cst_121 {dimension_numbers = #tpu.dot_dimension_numbers<[1], [0], [0], [1], [0, 0, 1, 1], [], []>} : vector<64x16xf32>, vector<16x32xf32>, vector<64x32xf32> -> vector<64x32xf32>
    %cst_122 = arith.constant dense<0.000000e+00> : vector<64x32xf32>
    %314 = tpu.matmul %43, %313, %cst_122 {dimension_numbers = #tpu.dot_dimension_numbers<[1], [0], [0], [1], [0, 0, 1, 1], [], []>} : vector<64x64xf32>, vector<64x32xf32>, vector<64x32xf32> -> vector<64x32xf32>
    %315 = vector.extract_strided_slice %313 {offsets = [0, 0], sizes = [16, 32], strides = [1, 1]} : vector<64x32xf32> to vector<16x32xf32>
    %316 = vector.extract_strided_slice %314 {offsets = [0, 0], sizes = [16, 32], strides = [1, 1]} : vector<64x32xf32> to vector<16x32xf32>
    %317 = vector.extract_strided_slice %313 {offsets = [16, 0], sizes = [16, 32], strides = [1, 1]} : vector<64x32xf32> to vector<16x32xf32>
    %318 = vector.extract_strided_slice %314 {offsets = [16, 0], sizes = [16, 32], strides = [1, 1]} : vector<64x32xf32> to vector<16x32xf32>
    %319 = vector.extract_strided_slice %313 {offsets = [32, 0], sizes = [16, 32], strides = [1, 1]} : vector<64x32xf32> to vector<16x32xf32>
    %320 = vector.extract_strided_slice %314 {offsets = [32, 0], sizes = [16, 32], strides = [1, 1]} : vector<64x32xf32> to vector<16x32xf32>
    %321 = vector.extract_strided_slice %313 {offsets = [48, 0], sizes = [16, 32], strides = [1, 1]} : vector<64x32xf32> to vector<16x32xf32>
    %322 = vector.extract_strided_slice %314 {offsets = [48, 0], sizes = [16, 32], strides = [1, 1]} : vector<64x32xf32> to vector<16x32xf32>
    %323 = tpu.concatenate %312, %315, %316, %317, %318, %319, %320, %321, %322 in 1 : vector<16x32xf32>, vector<16x32xf32>, vector<16x32xf32>, vector<16x32xf32>, vector<16x32xf32>, vector<16x32xf32>, vector<16x32xf32>, vector<16x32xf32>, vector<16x32xf32> -> vector<16x288xf32>
    %324 = tpu.concatenate %299, %311, %323 in 0 : vector<16x288xf32>, vector<16x288xf32>, vector<16x288xf32> -> vector<48x288xf32>
    %c2_123 = arith.constant 2 : index
    %c0_124 = arith.constant 0 : index
    %c0_125 = arith.constant 0 : index
    %325 = vector.load %arg13[%c2_123, %c0_124, %c0_125] : memref<4x288x32xf32, #tpu.memory_space<vmem>>, vector<1x288x32xf32>
    %326 = vector.shape_cast %325 : vector<1x288x32xf32> to vector<288x32xf32>
    %cst_126 = arith.constant dense<0.000000e+00> : vector<48x32xf32>
    %327 = tpu.matmul %324, %326, %cst_126 {dimension_numbers = #tpu.dot_dimension_numbers<[1], [0], [0], [1], [0, 0, 1, 1], [], []>} : vector<48x288xf32>, vector<288x32xf32>, vector<48x32xf32> -> vector<48x32xf32>
    %c2_127 = arith.constant 2 : index
    %c0_128 = arith.constant 0 : index
    %c0_129 = arith.constant 0 : index
    %328 = vector.load %arg14[%c2_127, %c0_128, %c0_129] : memref<4x1x32xf32, #tpu.memory_space<vmem>>, vector<1x1x32xf32>
    %329 = vector.shape_cast %328 : vector<1x1x32xf32> to vector<1x32xf32>
    %330 = vector.broadcast %329 : vector<1x32xf32> to vector<48x32xf32>
    %331 = arith.addf %327, %330 : vector<48x32xf32>
    %332 = arith.addf %331, %261 : vector<48x32xf32>
    %c2_130 = arith.constant 2 : index
    %c0_131 = arith.constant 0 : index
    %c0_132 = arith.constant 0 : index
    %333 = vector.load %arg15[%c2_130, %c0_131, %c0_132] : memref<4x1x32xf32, #tpu.memory_space<vmem>>, vector<1x1x32xf32>
    %334 = vector.shape_cast %333 : vector<1x1x32xf32> to vector<1x32xf32>
    %335 = vector.broadcast %334 : vector<1x32xf32> to vector<48x32xf32>
    %336 = arith.mulf %332, %335 : vector<48x32xf32>
    %c2_133 = arith.constant 2 : index
    %c0_134 = arith.constant 0 : index
    %c0_135 = arith.constant 0 : index
    %337 = vector.load %arg16[%c2_133, %c0_134, %c0_135] : memref<4x1x32xf32, #tpu.memory_space<vmem>>, vector<1x1x32xf32>
    %338 = vector.shape_cast %337 : vector<1x1x32xf32> to vector<1x32xf32>
    %339 = vector.broadcast %338 : vector<1x32xf32> to vector<48x32xf32>
    %340 = arith.addf %336, %339 : vector<48x32xf32>
    %341 = vector.extract_strided_slice %340 {offsets = [0, 0], sizes = [16, 32], strides = [1, 1]} : vector<48x32xf32> to vector<16x32xf32>
    %342 = vector.extract_strided_slice %340 {offsets = [32, 0], sizes = [16, 32], strides = [1, 1]} : vector<48x32xf32> to vector<16x32xf32>
    %343 = tpu.concatenate %341, %342 in 1 : vector<16x32xf32>, vector<16x32xf32> -> vector<16x64xf32>
    %c3 = arith.constant 3 : index
    %c0_136 = arith.constant 0 : index
    %c0_137 = arith.constant 0 : index
    %344 = vector.load %arg9[%c3, %c0_136, %c0_137] : memref<4x64x64xf32, #tpu.memory_space<vmem>>, vector<1x64x64xf32>
    %345 = vector.shape_cast %344 : vector<1x64x64xf32> to vector<64x64xf32>
    %cst_138 = arith.constant dense<0.000000e+00> : vector<16x64xf32>
    %346 = tpu.matmul %343, %345, %cst_138 {dimension_numbers = #tpu.dot_dimension_numbers<[1], [0], [0], [1], [0, 0, 1, 1], [], []>} : vector<16x64xf32>, vector<64x64xf32>, vector<16x64xf32> -> vector<16x64xf32>
    %c3_139 = arith.constant 3 : index
    %c0_140 = arith.constant 0 : index
    %c0_141 = arith.constant 0 : index
    %347 = vector.load %arg10[%c3_139, %c0_140, %c0_141] : memref<4x1x64xf32, #tpu.memory_space<vmem>>, vector<1x1x64xf32>
    %348 = vector.shape_cast %347 : vector<1x1x64xf32> to vector<1x64xf32>
    %349 = vector.broadcast %348 : vector<1x64xf32> to vector<16x64xf32>
    %350 = arith.addf %346, %349 : vector<16x64xf32>
    %351 = vector.extract_strided_slice %350 {offsets = [0, 0], sizes = [16, 32], strides = [1, 1]} : vector<16x64xf32> to vector<16x32xf32>
    %352 = math.tanh %351 : vector<16x32xf32>
    %353 = vector.extract_strided_slice %350 {offsets = [0, 32], sizes = [16, 32], strides = [1, 1]} : vector<16x64xf32> to vector<16x32xf32>
    %354 = arith.negf %353 : vector<16x32xf32>
    %355 = math.exp %354 : vector<16x32xf32>
    %cst_142 = arith.constant 1.000000e+00 : f32
    %356 = vector.broadcast %cst_142 : f32 to vector<16x32xf32>
    %357 = arith.addf %356, %355 : vector<16x32xf32>
    %358 = arith.divf %356, %357 : vector<16x32xf32>
    %359 = arith.mulf %352, %358 : vector<16x32xf32>
    %c3_143 = arith.constant 3 : index
    %c0_144 = arith.constant 0 : index
    %c0_145 = arith.constant 0 : index
    %360 = vector.load %arg11[%c3_143, %c0_144, %c0_145] : memref<4x32x256xf32, #tpu.memory_space<vmem>>, vector<1x32x256xf32>
    %361 = vector.shape_cast %360 : vector<1x32x256xf32> to vector<32x256xf32>
    %cst_146 = arith.constant dense<0.000000e+00> : vector<16x256xf32>
    %362 = tpu.matmul %359, %361, %cst_146 {dimension_numbers = #tpu.dot_dimension_numbers<[1], [0], [0], [1], [0, 0, 1, 1], [], []>} : vector<16x32xf32>, vector<32x256xf32>, vector<16x256xf32> -> vector<16x256xf32>
    %c3_147 = arith.constant 3 : index
    %c0_148 = arith.constant 0 : index
    %c0_149 = arith.constant 0 : index
    %363 = vector.load %arg12[%c3_147, %c0_148, %c0_149] : memref<4x1x256xf32, #tpu.memory_space<vmem>>, vector<1x1x256xf32>
    %364 = vector.shape_cast %363 : vector<1x1x256xf32> to vector<1x256xf32>
    %365 = vector.broadcast %364 : vector<1x256xf32> to vector<16x256xf32>
    %366 = arith.addf %362, %365 : vector<16x256xf32>
    %367 = arith.addf %287, %366 : vector<16x256xf32>
    %c0_150 = arith.constant 0 : index
    %c0_151 = arith.constant 0 : index
    %c0_152 = arith.constant 0 : index
    %368 = vector.load %arg6[%c0_150, %c0_151, %c0_152] : memref<1x16x16xf32, #tpu.memory_space<vmem>>, vector<1x16x16xf32>
    %369 = vector.shape_cast %368 : vector<1x16x16xf32> to vector<16x16xf32>
    %c0_153 = arith.constant 0 : index
    %c0_154 = arith.constant 0 : index
    %370 = vector.load %arg17[%c0_153, %c0_154] : memref<16x512xf32, #tpu.memory_space<vmem>>, vector<16x512xf32>
    %cst_155 = arith.constant dense<0.000000e+00> : vector<16x512xf32>
    %371 = tpu.matmul %369, %370, %cst_155 {dimension_numbers = #tpu.dot_dimension_numbers<[1], [0], [0], [1], [0, 0, 1, 1], [], []>} : vector<16x16xf32>, vector<16x512xf32>, vector<16x512xf32> -> vector<16x512xf32>
    %c0_156 = arith.constant 0 : index
    %c0_157 = arith.constant 0 : index
    %372 = vector.load %arg18[%c0_156, %c0_157] : memref<1x512xf32, #tpu.memory_space<vmem>>, vector<1x512xf32>
    %373 = vector.broadcast %372 : vector<1x512xf32> to vector<16x512xf32>
    %374 = arith.addf %371, %373 : vector<16x512xf32>
    %cst_158 = arith.constant 0.000000e+00 : f32
    %375 = vector.broadcast %cst_158 : f32 to vector<16x512xf32>
    %376 = arith.maximumf %374, %375 : vector<16x512xf32>
    %c0_159 = arith.constant 0 : index
    %c0_160 = arith.constant 0 : index
    %377 = vector.load %arg19[%c0_159, %c0_160] : memref<512x256xf32, #tpu.memory_space<vmem>>, vector<512x256xf32>
    %cst_161 = arith.constant dense<0.000000e+00> : vector<16x256xf32>
    %378 = tpu.matmul %376, %377, %cst_161 {dimension_numbers = #tpu.dot_dimension_numbers<[1], [0], [0], [1], [0, 0, 1, 1], [], []>} : vector<16x512xf32>, vector<512x256xf32>, vector<16x256xf32> -> vector<16x256xf32>
    %c0_162 = arith.constant 0 : index
    %c0_163 = arith.constant 0 : index
    %379 = vector.load %arg20[%c0_162, %c0_163] : memref<1x256xf32, #tpu.memory_space<vmem>>, vector<1x256xf32>
    %380 = vector.broadcast %379 : vector<1x256xf32> to vector<16x256xf32>
    %381 = arith.addf %378, %380 : vector<16x256xf32>
    %cst_164 = arith.constant 0.000000e+00 : f32
    %382 = vector.broadcast %cst_164 : f32 to vector<16x256xf32>
    %383 = arith.maximumf %381, %382 : vector<16x256xf32>
    %384 = arith.addf %367, %383 : vector<16x256xf32>
    %cst_165 = arith.constant 0.000000e+00 : f32
    %385 = vector.broadcast %cst_165 : f32 to vector<16x256xf32>
    %386 = arith.maximumf %384, %385 : vector<16x256xf32>
    %c0_166 = arith.constant 0 : index
    %c0_167 = arith.constant 0 : index
    %387 = vector.load %arg21[%c0_166, %c0_167] : memref<256x512xf32, #tpu.memory_space<vmem>>, vector<256x512xf32>
    %cst_168 = arith.constant dense<0.000000e+00> : vector<16x512xf32>
    %388 = tpu.matmul %386, %387, %cst_168 {dimension_numbers = #tpu.dot_dimension_numbers<[1], [0], [0], [1], [0, 0, 1, 1], [], []>} : vector<16x256xf32>, vector<256x512xf32>, vector<16x512xf32> -> vector<16x512xf32>
    %c0_169 = arith.constant 0 : index
    %c0_170 = arith.constant 0 : index
    %389 = vector.load %arg22[%c0_169, %c0_170] : memref<1x512xf32, #tpu.memory_space<vmem>>, vector<1x512xf32>
    %390 = vector.broadcast %389 : vector<1x512xf32> to vector<16x512xf32>
    %391 = arith.addf %388, %390 : vector<16x512xf32>
    %cst_171 = arith.constant 0.000000e+00 : f32
    %392 = vector.broadcast %cst_171 : f32 to vector<16x512xf32>
    %393 = arith.maximumf %391, %392 : vector<16x512xf32>
    %c0_172 = arith.constant 0 : index
    %c0_173 = arith.constant 0 : index
    %394 = vector.load %arg23[%c0_172, %c0_173] : memref<512x12xf32, #tpu.memory_space<vmem>>, vector<512x12xf32>
    %cst_174 = arith.constant dense<0.000000e+00> : vector<16x12xf32>
    %395 = tpu.matmul %393, %394, %cst_174 {dimension_numbers = #tpu.dot_dimension_numbers<[1], [0], [0], [1], [0, 0, 1, 1], [], []>} : vector<16x512xf32>, vector<512x12xf32>, vector<16x12xf32> -> vector<16x12xf32>
    %c0_175 = arith.constant 0 : index
    %c0_176 = arith.constant 0 : index
    %396 = vector.load %arg24[%c0_175, %c0_176] : memref<1x12xf32, #tpu.memory_space<vmem>>, vector<1x12xf32>
    %397 = vector.broadcast %396 : vector<1x12xf32> to vector<16x12xf32>
    %398 = arith.addf %395, %397 : vector<16x12xf32>
    %c0_177 = arith.constant 0 : index
    %c0_178 = arith.constant 0 : index
    %c0_179 = arith.constant 0 : index
    %399 = vector.load %arg25[%c0_177, %c0_178, %c0_179] : memref<1x16x12xf32, #tpu.memory_space<vmem>>, vector<1x16x12xf32>
    %400 = vector.shape_cast %399 : vector<1x16x12xf32> to vector<16x12xf32>
    %401 = vector.shape_cast %398 : vector<16x12xf32> to vector<1x16x12xf32>
    tpu.vector_store %arg25[%c0_177, %c0_178, %c0_179], %401 {strides = array<i32>} : memref<1x16x12xf32, #tpu.memory_space<vmem>>, vector<1x16x12xf32>,
    return
  }
  func.func @transform_0(%arg0: i32) -> (i32, i32, i32) {
    %c0_i32 = arith.constant 0 : i32
    %c0_i32_0 = arith.constant 0 : i32
    %c0_i32_1 = arith.constant 0 : i32
    return %arg0, %c0_i32, %c0_i32_0 : i32, i32, i32
  }
  func.func @transform_1(%arg0: i32) -> (i32, i32, i32) {
    %c0_i32 = arith.constant 0 : i32
    %c0_i32_0 = arith.constant 0 : i32
    %c0_i32_1 = arith.constant 0 : i32
    return %arg0, %c0_i32, %c0_i32_0 : i32, i32, i32
  }
  func.func @transform_2(%arg0: i32) -> (i32, i32, i32) {
    %c0_i32 = arith.constant 0 : i32
    %c0_i32_0 = arith.constant 0 : i32
    %c0_i32_1 = arith.constant 0 : i32
    %c0_i32_2 = arith.constant 0 : i32
    return %c0_i32, %c0_i32_0, %c0_i32_1 : i32, i32, i32
  }
  func.func @transform_3(%arg0: i32) -> (i32, i32) {
    %c0_i32 = arith.constant 0 : i32
    %c0_i32_0 = arith.constant 0 : i32
    %c0_i32_1 = arith.constant 0 : i32
    return %c0_i32, %c0_i32_0 : i32, i32
  }
  func.func @transform_4(%arg0: i32) -> (i32, i32) {
    %c0_i32 = arith.constant 0 : i32
    %c0_i32_0 = arith.constant 0 : i32
    %c0_i32_1 = arith.constant 0 : i32
    return %c0_i32, %c0_i32_0 : i32, i32
  }
  func.func @transform_5(%arg0: i32) -> (i32, i32, i32) {
    %c0_i32 = arith.constant 0 : i32
    %c0_i32_0 = arith.constant 0 : i32
    %c0_i32_1 = arith.constant 0 : i32
    return %arg0, %c0_i32, %c0_i32_0 : i32, i32, i32
  }
  func.func @transform_6(%arg0: i32) -> (i32, i32) {
    %c0_i32 = arith.constant 0 : i32
    %c0_i32_0 = arith.constant 0 : i32
    %c0_i32_1 = arith.constant 0 : i32
    return %c0_i32, %c0_i32_0 : i32, i32
  }
  func.func @transform_7(%arg0: i32) -> (i32, i32) {
    %c0_i32 = arith.constant 0 : i32
    %c0_i32_0 = arith.constant 0 : i32
    %c0_i32_1 = arith.constant 0 : i32
    return %c0_i32, %c0_i32_0 : i32, i32
  }
  func.func @transform_8(%arg0: i32) -> (i32, i32, i32) {
    %c0_i32 = arith.constant 0 : i32
    %c0_i32_0 = arith.constant 0 : i32
    %c0_i32_1 = arith.constant 0 : i32
    %c0_i32_2 = arith.constant 0 : i32
    return %c0_i32, %c0_i32_0, %c0_i32_1 : i32, i32, i32
  }
  func.func @transform_9(%arg0: i32) -> (i32, i32, i32) {
    %c0_i32 = arith.constant 0 : i32
    %c0_i32_0 = arith.constant 0 : i32
    %c0_i32_1 = arith.constant 0 : i32
    %c0_i32_2 = arith.constant 0 : i32
    return %c0_i32, %c0_i32_0, %c0_i32_1 : i32, i32, i32
  }
  func.func @transform_10(%arg0: i32) -> (i32, i32, i32) {
    %c0_i32 = arith.constant 0 : i32
    %c0_i32_0 = arith.constant 0 : i32
    %c0_i32_1 = arith.constant 0 : i32
    %c0_i32_2 = arith.constant 0 : i32
    return %c0_i32, %c0_i32_0, %c0_i32_1 : i32, i32, i32
  }
  func.func @transform_11(%arg0: i32) -> (i32, i32, i32) {
    %c0_i32 = arith.constant 0 : i32
    %c0_i32_0 = arith.constant 0 : i32
    %c0_i32_1 = arith.constant 0 : i32
    %c0_i32_2 = arith.constant 0 : i32
    return %c0_i32, %c0_i32_0, %c0_i32_1 : i32, i32, i32
  }
  func.func @transform_12(%arg0: i32) -> (i32, i32, i32) {
    %c0_i32 = arith.constant 0 : i32
    %c0_i32_0 = arith.constant 0 : i32
    %c0_i32_1 = arith.constant 0 : i32
    %c0_i32_2 = arith.constant 0 : i32
    return %c0_i32, %c0_i32_0, %c0_i32_1 : i32, i32, i32
  }
  func.func @transform_13(%arg0: i32) -> (i32, i32, i32) {
    %c0_i32 = arith.constant 0 : i32
    %c0_i32_0 = arith.constant 0 : i32
    %c0_i32_1 = arith.constant 0 : i32
    %c0_i32_2 = arith.constant 0 : i32
    return %c0_i32, %c0_i32_0, %c0_i32_1 : i32, i32, i32
  }
  func.func @transform_14(%arg0: i32) -> (i32, i32, i32) {
    %c0_i32 = arith.constant 0 : i32
    %c0_i32_0 = arith.constant 0 : i32
    %c0_i32_1 = arith.constant 0 : i32
    %c0_i32_2 = arith.constant 0 : i32
    return %c0_i32, %c0_i32_0, %c0_i32_1 : i32, i32, i32
  }
  func.func @transform_15(%arg0: i32) -> (i32, i32, i32) {
    %c0_i32 = arith.constant 0 : i32
    %c0_i32_0 = arith.constant 0 : i32
    %c0_i32_1 = arith.constant 0 : i32
    %c0_i32_2 = arith.constant 0 : i32
    return %c0_i32, %c0_i32_0, %c0_i32_1 : i32, i32, i32
  }
  func.func @transform_16(%arg0: i32) -> (i32, i32) {
    %c0_i32 = arith.constant 0 : i32
    %c0_i32_0 = arith.constant 0 : i32
    %c0_i32_1 = arith.constant 0 : i32
    return %c0_i32, %c0_i32_0 : i32, i32
  }
  func.func @transform_17(%arg0: i32) -> (i32, i32) {
    %c0_i32 = arith.constant 0 : i32
    %c0_i32_0 = arith.constant 0 : i32
    %c0_i32_1 = arith.constant 0 : i32
    return %c0_i32, %c0_i32_0 : i32, i32
  }
  func.func @transform_18(%arg0: i32) -> (i32, i32) {
    %c0_i32 = arith.constant 0 : i32
    %c0_i32_0 = arith.constant 0 : i32
    %c0_i32_1 = arith.constant 0 : i32
    return %c0_i32, %c0_i32_0 : i32, i32
  }
  func.func @transform_19(%arg0: i32) -> (i32, i32) {
    %c0_i32 = arith.constant 0 : i32
    %c0_i32_0 = arith.constant 0 : i32
    %c0_i32_1 = arith.constant 0 : i32
    return %c0_i32, %c0_i32_0 : i32, i32
  }
  func.func @transform_20(%arg0: i32) -> (i32, i32) {
    %c0_i32 = arith.constant 0 : i32
    %c0_i32_0 = arith.constant 0 : i32
    %c0_i32_1 = arith.constant 0 : i32
    return %c0_i32, %c0_i32_0 : i32, i32
  }
  func.func @transform_21(%arg0: i32) -> (i32, i32) {
    %c0_i32 = arith.constant 0 : i32
    %c0_i32_0 = arith.constant 0 : i32
    %c0_i32_1 = arith.constant 0 : i32
    return %c0_i32, %c0_i32_0 : i32, i32
  }
  func.func @transform_22(%arg0: i32) -> (i32, i32) {
    %c0_i32 = arith.constant 0 : i32
    %c0_i32_0 = arith.constant 0 : i32
    %c0_i32_1 = arith.constant 0 : i32
    return %c0_i32, %c0_i32_0 : i32, i32
  }
  func.func @transform_23(%arg0: i32) -> (i32, i32) {
    %c0_i32 = arith.constant 0 : i32
    %c0_i32_0 = arith.constant 0 : i32
    %c0_i32_1 = arith.constant 0 : i32
    return %c0_i32, %c0_i32_0 : i32, i32
  }
  func.func @transform_24(%arg0: i32) -> (i32, i32, i32) {
    %c0_i32 = arith.constant 0 : i32
    %c0_i32_0 = arith.constant 0 : i32
    %c0_i32_1 = arith.constant 0 : i32
    return %arg0, %c0_i32, %c0_i32_0 : i32, i32, i32
  }
}

</mosaic_0001>

<llo_original>
// kernel: graphwavenet_forward.1
$region0: #{graphwavenet_forward.1}
  #allocation0 [shape = 'u32[]', space=smem, size = 0x4, offset = 0x4, fixed_abs, tag = 'smem constant byte address 0x4 - core index']
  #allocation1 [shape = 'u32[144,128]{1,0:T(1,128)}', space=vmem, size = 0x12000, scoped, tag = 'internal scratch']
  %s0 = inlined_call_operand.vmem [shape: f32[2,112,2], index: 0, kind: input, shape index: {}]
  %s1 = inlined_call_operand.vmem [shape: f32[2,16,16], index: 1, kind: input, shape index: {}]
  %s2 = inlined_call_operand.vmem [shape: f32[2,16,16], index: 2, kind: input, shape index: {}]
  %s3 = inlined_call_operand.vmem [shape: f32[10,16], index: 3, kind: input, shape index: {}]
  %s4 = inlined_call_operand.vmem [shape: f32[16,10], index: 4, kind: input, shape index: {}]
  %s5 = inlined_call_operand.vmem [shape: f32[2,16,16], index: 5, kind: input, shape index: {}]
  %s6 = inlined_call_operand.vmem [shape: f32[2,32], index: 6, kind: input, shape index: {}]
  %s7 = inlined_call_operand.hbm [shape: f32[1,32], index: 7, kind: input, shape index: {}]
  %s8 = inlined_call_operand.vmem [shape: f32[4,64,64], index: 8, kind: input, shape index: {}]
  %s9 = inlined_call_operand.hbm [shape: f32[4,1,64], index: 9, kind: input, shape index: {}]
  %s10 = inlined_call_operand.vmem [shape: f32[4,32,256], index: 10, kind: input, shape index: {}]
  %s11 = inlined_call_operand.hbm [shape: f32[4,1,256], index: 11, kind: input, shape index: {}]
  %s12 = inlined_call_operand.vmem [shape: f32[4,288,32], index: 12, kind: input, shape index: {}]
  %s13 = inlined_call_operand.hbm [shape: f32[4,1,32], index: 13, kind: input, shape index: {}]
  %s14 = inlined_call_operand.vmem [shape: f32[4,1,32], index: 14, kind: input, shape index: {}]
  %s15 = inlined_call_operand.vmem [shape: f32[4,1,32], index: 15, kind: input, shape index: {}]
  %s16 = inlined_call_operand.vmem [shape: f32[16,512], index: 16, kind: input, shape index: {}]
  %s17 = inlined_call_operand.hbm [shape: f32[1,512], index: 17, kind: input, shape index: {}]
  %s18 = inlined_call_operand.vmem [shape: f32[512,256], index: 18, kind: input, shape index: {}]
  %s19 = inlined_call_operand.hbm [shape: f32[1,256], index: 19, kind: input, shape index: {}]
  %s20 = inlined_call_operand.vmem [shape: f32[256,512], index: 20, kind: input, shape index: {}]
  %s21 = inlined_call_operand.hbm [shape: f32[1,512], index: 21, kind: input, shape index: {}]
  %s22 = inlined_call_operand.vmem [shape: f32[512,12], index: 22, kind: input, shape index: {}]
  %s23 = inlined_call_operand.hbm [shape: f32[1,12], index: 23, kind: input, shape index: {}]
  %s24 = inlined_call_operand.vmem [shape: f32[2,16,12], index: 24, kind: output, shape index: {}]
  %s25 = sld [smem:[#allocation0]]
  $region161: #{graphwavenet_forward.1} parent=0
    _
  %s27 = ssub.s32 1, %s25
  %s28 = scalar_select 0, %s27, %s25
  $region1: #{graphwavenet_forward.1} parent=0
    #allocation2 [shape = 'u8[512]{0}', space=vmem, size = 0x400, scoped, tag = 'input window, operand 7, single buffered']
    #allocation3 [shape = 's32[2]{0}', space=sflag, size = 0x8, scoped, tag = 'scoped memory for graphwavenet_forward.1']
    #allocation4 [shape = 'u8[2048]{0}', space=vmem, size = 0x800, scoped, tag = 'input window, operand 9, single buffered']
    #allocation5 [shape = 's32[1]{0}', space=sflag, size = 0x4, scoped, tag = 'scoped memory for graphwavenet_forward.1']
    #allocation6 [shape = 'u8[4096]{0}', space=vmem, size = 0x1000, scoped, tag = 'input window, operand 11, single buffered']
    #allocation7 [shape = 'u8[2048]{0}', space=vmem, size = 0x800, scoped, tag = 'input window, operand 13, single buffered']
    #allocation8 [shape = 's32[1]{0}', space=sflag, size = 0x4, scoped, tag = 'scoped memory for graphwavenet_forward.1']
    #allocation9 [shape = 'u8[2048]{0}', space=vmem, size = 0x800, scoped, tag = 'input window, operand 17, single buffered']
    #allocation10 [shape = 'u8[1024]{0}', space=vmem, size = 0x400, scoped, tag = 'input window, operand 19, single buffered']
    #allocation11 [shape = 's32[1]{0}', space=sflag, size = 0x4, scoped, tag = 'scoped memory for graphwavenet_forward.1']
    #allocation12 [shape = 'u8[2048]{0}', space=vmem, size = 0x800, scoped, tag = 'input window, operand 21, single buffered']
    #allocation13 [shape = 'u8[512]{0}', space=vmem, size = 0x400, scoped, tag = 'input window, operand 23, single buffered']
    #allocation14 [shape = 's32[1]{0}', space=sflag, size = 0x4, scoped, tag = 'scoped memory for graphwavenet_forward.1']
    %29 = vsyncpa [#allocation3], 0
    %30 = vsyncpa [#allocation5], 0
    %31 = vsyncpa [#allocation8], 0
    %32 = vsyncpa [#allocation11], 0
    %33 = vsyncpa [#allocation14], 0
    loop: start=0, step=1, limit=4
    $region2: #{graphwavenet_forward.1} parent=1 // loop_pre_header
      _
    $region3: #{graphwavenet_forward.1} parent=1 // loop_header
      %s35 = sphi 0, %s39
      %p36 = scmp.ge.s32.totalorder %s35, 4
      %s45 = sphi 0, %s47
      %s48 = sphi 0, %s45
      %s49 = sphi 0, %s48
      %s65 = sphi 0, %s49
      %s71 = sphi 0, %s73
      %s74 = sphi 0, %s71
      %s75 = sphi 0, %s74
      %s91 = sphi 0, %s75
      %s95 = sphi 0, %s95
      %s97 = sphi 0, %s95
      %s98 = sphi 0, %s97
      %s112 = sphi 0, %s98
      %s116 = sphi 0, %s116
      %s118 = sphi 0, %s116
      %s119 = sphi 0, %s118
      %s133 = sphi 0, %s119
      %s137 = sphi 0, %s137
      %s139 = sphi 0, %s137
      %s140 = sphi 0, %s139
      %s154 = sphi 0, %s140
      %s160 = sphi 0, %s162
      %s163 = sphi 0, %s160
      %s164 = sphi 0, %s163
      %s180 = sphi 0, %s164
      %s184 = sphi 0, %s184
      %s186 = sphi 0, %s184
      %s187 = sphi 0, %s186
      %s201 = sphi 0, %s187
      %s205 = sphi 0, %s205
      %s207 = sphi 0, %s205
      %s208 = sphi 0, %s207
      %s222 = sphi 0, %s208
      %s226 = sphi 0, %s226
      %s228 = sphi 0, %s226
      %s229 = sphi 0, %s228
      %s243 = sphi 0, %s229
      %s247 = sphi 0, %s247
      %s249 = sphi 0, %s247
      %s250 = sphi 0, %s249
      %s264 = sphi 0, %s250
      %s268 = sphi 0, %s268
      %s270 = sphi 0, %s268
      %s271 = sphi 0, %s270
      %s285 = sphi 0, %s271
      %s289 = sphi 0, %s289
      %s291 = sphi 0, %s289
      %s292 = sphi 0, %s291
      %s306 = sphi 0, %s292
      %s310 = sphi 0, %s310
      %s312 = sphi 0, %s310
      %s313 = sphi 0, %s312
      %s327 = sphi 0, %s313
      %s331 = sphi 0, %s331
      %s333 = sphi 0, %s331
      %s334 = sphi 0, %s333
      %s348 = sphi 0, %s334
      %s352 = sphi 0, %s352
      %s354 = sphi 0, %s352
      %s355 = sphi 0, %s354
      %s369 = sphi 0, %s355
      %s373 = sphi 0, %s373
      %s375 = sphi 0, %s373
      %s376 = sphi 0, %s375
      %s390 = sphi 0, %s376
      %s394 = sphi 0, %s394
      %s396 = sphi 0, %s394
      %s397 = sphi 0, %s396
      %s411 = sphi 0, %s397
      %s415 = sphi 0, %s415
      %s417 = sphi 0, %s415
      %s418 = sphi 0, %s417
      %s432 = sphi 0, %s418
      %s436 = sphi 0, %s436
      %s438 = sphi 0, %s436
      %s439 = sphi 0, %s438
      %s453 = sphi 0, %s439
      %s457 = sphi 0, %s457
      %s459 = sphi 0, %s457
      %s460 = sphi 0, %s459
      %s474 = sphi 0, %s460
      %s478 = sphi 0, %s478
      %s480 = sphi 0, %s478
      %s481 = sphi 0, %s480
      %s495 = sphi 0, %s481
      %s499 = sphi 0, %s499
      %s501 = sphi 0, %s499
      %s502 = sphi 0, %s501
      %s516 = sphi 0, %s502
      %s520 = sphi 0, %s520
      %s522 = sphi 0, %s520
      %s523 = sphi 0, %s522
      %s537 = sphi 0, %s523
      %s541 = sphi 0, %s541
      %s543 = sphi 0, %s541
      %s544 = sphi 0, %s543
      %s558 = sphi 0, %s544
      %s564 = sphi 0, %s566
      %s567 = sphi 0, %s564
      %s568 = sphi 0, %s567
      %s584 = sphi 0, %s568
    $region4: #{graphwavenet_forward.1} parent=1 // loop_header_branch
      %38 = sbr.rel (%p36) target = $region8
    $region5: #{graphwavenet_forward.1} parent=1 // loop_body
      %s40 = ssub.s32 %s35, 1
      %s41 = ssub.s32 %s35, 2
      %s42 = sadd.s32 %s35, 1
      %s43 = ssub.s32 %s35, %s42
      %p44 = scmp.eq.s32.totalorder %s43, 0
      %s46 = sadd.s32 %s45, 1
      %s47 = scalar_select %p44, %s45, %s46
      %p50 = pneg %p44
      %p51 = scmp.eq.s32.totalorder %s35, 1
      %p52 = por %p50, %p51
      %p53 = scmp.ne.s32.totalorder %s45, %s48
      %p54 = scmp.eq.s32.totalorder %s35, 0
      %p55 = por %p53, %p54
      %p56 = scmp.ne.s32.totalorder %s45, %s48
      %p57 = scmp.eq.s32.totalorder %s40, 1
      %p58 = por %p56, %p57
      %p59 = scmp.ne.s32.totalorder %s48, %s49
      %p60 = scmp.eq.s32.totalorder %s40, 0
      %p61 = por %p59, %p60
      %p62 = scmp.ne.s32.totalorder %s48, %s49
      %p63 = scmp.eq.s32.totalorder %s41, 1
      %p64 = por %p62, %p63
      %p66 = scmp.ne.s32.totalorder %s49, %s65
      %p67 = scmp.eq.s32.totalorder %s41, 0
      %p68 = por %p66, %p67
      %s69 = ssub.s32 %s35, %s42
      %p70 = scmp.eq.s32.totalorder %s69, 0
      %s72 = sadd.s32 %s71, 1
      %s73 = scalar_select %p70, %s71, %s72
      %p76 = pneg %p70
      %p77 = scmp.eq.s32.totalorder %s35, 1
      %p78 = por %p76, %p77
      %p79 = scmp.ne.s32.totalorder %s71, %s74
      %p80 = scmp.eq.s32.totalorder %s35, 0
      %p81 = por %p79, %p80
      %p82 = scmp.ne.s32.totalorder %s71, %s74
      %p83 = scmp.eq.s32.totalorder %s40, 1
      %p84 = por %p82, %p83
      %p85 = scmp.ne.s32.totalorder %s74, %s75
      %p86 = scmp.eq.s32.totalorder %s40, 0
      %p87 = por %p85, %p86
      %p88 = scmp.ne.s32.totalorder %s74, %s75
      %p89 = scmp.eq.s32.totalorder %s41, 1
      %p90 = por %p88, %p89
      %p92 = scmp.ne.s32.totalorder %s75, %s91
      %p93 = scmp.eq.s32.totalorder %s41, 0
      %p94 = por %p92, %p93
      %s96 = sadd.s32 %s95, 1
      %p99 = scmp.eq.s32.totalorder %s35, 1
      %p100 = scmp.ne.s32.totalorder %s95, %s97
      %p101 = scmp.eq.s32.totalorder %s35, 0
      %p102 = por %p100, %p101
      %p103 = scmp.ne.s32.totalorder %s95, %s97
      %p104 = scmp.eq.s32.totalorder %s40, 1
      %p105 = por %p103, %p104
      %p106 = scmp.ne.s32.totalorder %s97, %s98
      %p107 = scmp.eq.s32.totalorder %s40, 0
      %p108 = por %p106, %p107
      %p109 = scmp.ne.s32.totalorder %s97, %s98
      %p110 = scmp.eq.s32.totalorder %s41, 1
      %p111 = por %p109, %p110
      %p113 = scmp.ne.s32.totalorder %s98, %s112
      %p114 = scmp.eq.s32.totalorder %s41, 0
      %p115 = por %p113, %p114
      %s117 = sadd.s32 %s116, 1
      %p120 = scmp.eq.s32.totalorder %s35, 1
      %p121 = scmp.ne.s32.totalorder %s116, %s118
      %p122 = scmp.eq.s32.totalorder %s35, 0
      %p123 = por %p121, %p122
      %p124 = scmp.ne.s32.totalorder %s116, %s118
      %p125 = scmp.eq.s32.totalorder %s40, 1
      %p126 = por %p124, %p125
      %p127 = scmp.ne.s32.totalorder %s118, %s119
      %p128 = scmp.eq.s32.totalorder %s40, 0
      %p129 = por %p127, %p128
      %p130 = scmp.ne.s32.totalorder %s118, %s119
      %p131 = scmp.eq.s32.totalorder %s41, 1
      %p132 = por %p130, %p131
      %p134 = scmp.ne.s32.totalorder %s119, %s133
      %p135 = scmp.eq.s32.totalorder %s41, 0
      %p136 = por %p134, %p135
      %s138 = sadd.s32 %s137, 1
      %p141 = scmp.eq.s32.totalorder %s35, 1
      %p142 = scmp.ne.s32.totalorder %s137, %s139
      %p143 = scmp.eq.s32.totalorder %s35, 0
      %p144 = por %p142, %p143
      %p145 = scmp.ne.s32.totalorder %s137, %s139
      %p146 = scmp.eq.s32.totalorder %s40, 1
      %p147 = por %p145, %p146
      %p148 = scmp.ne.s32.totalorder %s139, %s140
      %p149 = scmp.eq.s32.totalorder %s40, 0
      %p150 = por %p148, %p149
      %p151 = scmp.ne.s32.totalorder %s139, %s140
      %p152 = scmp.eq.s32.totalorder %s41, 1
      %p153 = por %p151, %p152
      %p155 = scmp.ne.s32.totalorder %s140, %s154
      %p156 = scmp.eq.s32.totalorder %s41, 0
      %p157 = por %p155, %p156
      %s158 = ssub.s32 %s35, %s42
      %p159 = scmp.eq.s32.totalorder %s158, 0
      %s161 = sadd.s32 %s160, 1
      %s162 = scalar_select %p159, %s160, %s161
      %p165 = pneg %p159
      %p166 = scmp.eq.s32.totalorder %s35, 1
      %p167 = por %p165, %p166
      %p168 = scmp.ne.s32.totalorder %s160, %s163
      %p169 = scmp.eq.s32.totalorder %s35, 0
      %p170 = por %p168, %p169
      %p171 = scmp.ne.s32.totalorder %s160, %s163
      %p172 = scmp.eq.s32.totalorder %s40, 1
      %p173 = por %p171, %p172
      %p174 = scmp.ne.s32.totalorder %s163, %s164
      %p175 = scmp.eq.s32.totalorder %s40, 0
      %p176 = por %p174, %p175
      %p177 = scmp.ne.s32.totalorder %s163, %s164
      %p178 = scmp.eq.s32.totalorder %s41, 1
      %p179 = por %p177, %p178
      %p181 = scmp.ne.s32.totalorder %s164, %s180
      %p182 = scmp.eq.s32.totalorder %s41, 0
      %p183 = por %p181, %p182
      %s185 = sadd.s32 %s184, 1
      %p188 = scmp.eq.s32.totalorder %s35, 1
      %p189 = scmp.ne.s32.totalorder %s184, %s186
      %p190 = scmp.eq.s32.totalorder %s35, 0
      %p191 = por %p189, %p190
      %p192 = scmp.ne.s32.totalorder %s184, %s186
      %p193 = scmp.eq.s32.totalorder %s40, 1
      %p194 = por %p192, %p193
      %p195 = scmp.ne.s32.totalorder %s186, %s187
      %p196 = scmp.eq.s32.totalorder %s40, 0
      %p197 = por %p195, %p196
      %p198 = scmp.ne.s32.totalorder %s186, %s187
      %p199 = scmp.eq.s32.totalorder %s41, 1
      %p200 = por %p198, %p199
      %p202 = scmp.ne.s32.totalorder %s187, %s201
      %p203 = scmp.eq.s32.totalorder %s41, 0
      %p204 = por %p202, %p203
      %s206 = sadd.s32 %s205, 1
      %p209 = scmp.eq.s32.totalorder %s35, 1
      %p210 = scmp.ne.s32.totalorder %s205, %s207
      %p211 = scmp.eq.s32.totalorder %s35, 0
      %p212 = por %p210, %p211
      %p213 = scmp.ne.s32.totalorder %s205, %s207
      %p214 = scmp.eq.s32.totalorder %s40, 1
      %p215 = por %p213, %p214
      %p216 = scmp.ne.s32.totalorder %s207, %s208
      %p217 = scmp.eq.s32.totalorder %s40, 0
      %p218 = por %p216, %p217
      %p219 = scmp.ne.s32.totalorder %s207, %s208
      %p220 = scmp.eq.s32.totalorder %s41, 1
      %p221 = por %p219, %p220
      %p223 = scmp.ne.s32.totalorder %s208, %s222
      %p224 = scmp.eq.s32.totalorder %s41, 0
      %p225 = por %p223, %p224
      %s227 = sadd.s32 %s226, 1
      %p230 = scmp.eq.s32.totalorder %s35, 1
      %p231 = scmp.ne.s32.totalorder %s226, %s228
      %p232 = scmp.eq.s32.totalorder %s35, 0
      %p233 = por %p231, %p232
      %p234 = scmp.ne.s32.totalorder %s226, %s228
      %p235 = scmp.eq.s32.totalorder %s40, 1
      %p236 = por %p234, %p235
      %p237 = scmp.ne.s32.totalorder %s228, %s229
      %p238 = scmp.eq.s32.totalorder %s40, 0
      %p239 = por %p237, %p238
      %p240 = scmp.ne.s32.totalorder %s228, %s229
      %p241 = scmp.eq.s32.totalorder %s41, 1
      %p242 = por %p240, %p241
      %p244 = scmp.ne.s32.totalorder %s229, %s243
      %p245 = scmp.eq.s32.totalorder %s41, 0
      %p246 = por %p244, %p245
      %s248 = sadd.s32 %s247, 1
      %p251 = scmp.eq.s32.totalorder %s35, 1
      %p252 = scmp.ne.s32.totalorder %s247, %s249
      %p253 = scmp.eq.s32.totalorder %s35, 0
      %p254 = por %p252, %p253
      %p255 = scmp.ne.s32.totalorder %s247, %s249
      %p256 = scmp.eq.s32.totalorder %s40, 1
      %p257 = por %p255, %p256
      %p258 = scmp.ne.s32.totalorder %s249, %s250
      %p259 = scmp.eq.s32.totalorder %s40, 0
      %p260 = por %p258, %p259
      %p261 = scmp.ne.s32.totalorder %s249, %s250
      %p262 = scmp.eq.s32.totalorder %s41, 1
      %p263 = por %p261, %p262
      %p265 = scmp.ne.s32.totalorder %s250, %s264
      %p266 = scmp.eq.s32.totalorder %s41, 0
      %p267 = por %p265, %p266
      %s269 = sadd.s32 %s268, 1
      %p272 = scmp.eq.s32.totalorder %s35, 1
      %p273 = scmp.ne.s32.totalorder %s268, %s270
      %p274 = scmp.eq.s32.totalorder %s35, 0
      %p275 = por %p273, %p274
      %p276 = scmp.ne.s32.totalorder %s268, %s270
      %p277 = scmp.eq.s32.totalorder %s40, 1
      %p278 = por %p276, %p277
      %p279 = scmp.ne.s32.totalorder %s270, %s271
      %p280 = scmp.eq.s32.totalorder %s40, 0
      %p281 = por %p279, %p280
      %p282 = scmp.ne.s32.totalorder %s270, %s271
      %p283 = scmp.eq.s32.totalorder %s41, 1
      %p284 = por %p282, %p283
      %p286 = scmp.ne.s32.totalorder %s271, %s285
      %p287 = scmp.eq.s32.totalorder %s41, 0
      %p288 = por %p286, %p287
      %s290 = sadd.s32 %s289, 1
      %p293 = scmp.eq.s32.totalorder %s35, 1
      %p294 = scmp.ne.s32.totalorder %s289, %s291
      %p295 = scmp.eq.s32.totalorder %s35, 0
      %p296 = por %p294, %p295
      %p297 = scmp.ne.s32.totalorder %s289, %s291
      %p298 = scmp.eq.s32.totalorder %s40, 1
      %p299 = por %p297, %p298
      %p300 = scmp.ne.s32.totalorder %s291, %s292
      %p301 = scmp.eq.s32.totalorder %s40, 0
      %p302 = por %p300, %p301
      %p303 = scmp.ne.s32.totalorder %s291, %s292
      %p304 = scmp.eq.s32.totalorder %s41, 1
      %p305 = por %p303, %p304
      %p307 = scmp.ne.s32.totalorder %s292, %s306
      %p308 = scmp.eq.s32.totalorder %s41, 0
      %p309 = por %p307, %p308
      %s311 = sadd.s32 %s310, 1
      %p314 = scmp.eq.s32.totalorder %s35, 1
      %p315 = scmp.ne.s32.totalorder %s310, %s312
      %p316 = scmp.eq.s32.totalorder %s35, 0
      %p317 = por %p315, %p316
      %p318 = scmp.ne.s32.totalorder %s310, %s312
      %p319 = scmp.eq.s32.totalorder %s40, 1
      %p320 = por %p318, %p319
      %p321 = scmp.ne.s32.totalorder %s312, %s313
      %p322 = scmp.eq.s32.totalorder %s40, 0
      %p323 = por %p321, %p322
      %p324 = scmp.ne.s32.totalorder %s312, %s313
      %p325 = scmp.eq.s32.totalorder %s41, 1
      %p326 = por %p324, %p325
      %p328 = scmp.ne.s32.totalorder %s313, %s327
      %p329 = scmp.eq.s32.totalorder %s41, 0
      %p330 = por %p328, %p329
      %s332 = sadd.s32 %s331, 1
      %p335 = scmp.eq.s32.totalorder %s35, 1
      %p336 = scmp.ne.s32.totalorder %s331, %s333
      %p337 = scmp.eq.s32.totalorder %s35, 0
      %p338 = por %p336, %p337
      %p339 = scmp.ne.s32.totalorder %s331, %s333
      %p340 = scmp.eq.s32.totalorder %s40, 1
      %p341 = por %p339, %p340
      %p342 = scmp.ne.s32.totalorder %s333, %s334
      %p343 = scmp.eq.s32.totalorder %s40, 0
      %p344 = por %p342, %p343
      %p345 = scmp.ne.s32.totalorder %s333, %s334
      %p346 = scmp.eq.s32.totalorder %s41, 1
      %p347 = por %p345, %p346
      %p349 = scmp.ne.s32.totalorder %s334, %s348
      %p350 = scmp.eq.s32.totalorder %s41, 0
      %p351 = por %p349, %p350
      %s353 = sadd.s32 %s352, 1
      %p356 = scmp.eq.s32.totalorder %s35, 1
      %p357 = scmp.ne.s32.totalorder %s352, %s354
      %p358 = scmp.eq.s32.totalorder %s35, 0
      %p359 = por %p357, %p358
      %p360 = scmp.ne.s32.totalorder %s352, %s354
      %p361 = scmp.eq.s32.totalorder %s40, 1
      %p362 = por %p360, %p361
      %p363 = scmp.ne.s32.totalorder %s354, %s355
      %p364 = scmp.eq.s32.totalorder %s40, 0
      %p365 = por %p363, %p364
      %p366 = scmp.ne.s32.totalorder %s354, %s355
      %p367 = scmp.eq.s32.totalorder %s41, 1
      %p368 = por %p366, %p367
      %p370 = scmp.ne.s32.totalorder %s355, %s369
      %p371 = scmp.eq.s32.totalorder %s41, 0
      %p372 = por %p370, %p371
      %s374 = sadd.s32 %s373, 1
      %p377 = scmp.eq.s32.totalorder %s35, 1
      %p378 = scmp.ne.s32.totalorder %s373, %s375
      %p379 = scmp.eq.s32.totalorder %s35, 0
      %p380 = por %p378, %p379
      %p381 = scmp.ne.s32.totalorder %s373, %s375
      %p382 = scmp.eq.s32.totalorder %s40, 1
      %p383 = por %p381, %p382
      %p384 = scmp.ne.s32.totalorder %s375, %s376
      %p385 = scmp.eq.s32.totalorder %s40, 0
      %p386 = por %p384, %p385
      %p387 = scmp.ne.s32.totalorder %s375, %s376
      %p388 = scmp.eq.s32.totalorder %s41, 1
      %p389 = por %p387, %p388
      %p391 = scmp.ne.s32.totalorder %s376, %s390
      %p392 = scmp.eq.s32.totalorder %s41, 0
      %p393 = por %p391, %p392
      %s395 = sadd.s32 %s394, 1
      %p398 = scmp.eq.s32.totalorder %s35, 1
      %p399 = scmp.ne.s32.totalorder %s394, %s396
      %p400 = scmp.eq.s32.totalorder %s35, 0
      %p401 = por %p399, %p400
      %p402 = scmp.ne.s32.totalorder %s394, %s396
      %p403 = scmp.eq.s32.totalorder %s40, 1
      %p404 = por %p402, %p403
      %p405 = scmp.ne.s32.totalorder %s396, %s397
      %p406 = scmp.eq.s32.totalorder %s40, 0
      %p407 = por %p405, %p406
      %p408 = scmp.ne.s32.totalorder %s396, %s397
      %p409 = scmp.eq.s32.totalorder %s41, 1
      %p410 = por %p408, %p409
      %p412 = scmp.ne.s32.totalorder %s397, %s411
      %p413 = scmp.eq.s32.totalorder %s41, 0
      %p414 = por %p412, %p413
      %s416 = sadd.s32 %s415, 1
      %p419 = scmp.eq.s32.totalorder %s35, 1
      %p420 = scmp.ne.s32.totalorder %s415, %s417
      %p421 = scmp.eq.s32.totalorder %s35, 0
      %p422 = por %p420, %p421
      %p423 = scmp.ne.s32.totalorder %s415, %s417
      %p424 = scmp.eq.s32.totalorder %s40, 1
      %p425 = por %p423, %p424
      %p426 = scmp.ne.s32.totalorder %s417, %s418
      %p427 = scmp.eq.s32.totalorder %s40, 0
      %p428 = por %p426, %p427
      %p429 = scmp.ne.s32.totalorder %s417, %s418
      %p430 = scmp.eq.s32.totalorder %s41, 1
      %p431 = por %p429, %p430
      %p433 = scmp.ne.s32.totalorder %s418, %s432
      %p434 = scmp.eq.s32.totalorder %s41, 0
      %p435 = por %p433, %p434
      %s437 = sadd.s32 %s436, 1
      %p440 = scmp.eq.s32.totalorder %s35, 1
      %p441 = scmp.ne.s32.totalorder %s436, %s438
      %p442 = scmp.eq.s32.totalorder %s35, 0
      %p443 = por %p441, %p442
      %p444 = scmp.ne.s32.totalorder %s436, %s438
      %p445 = scmp.eq.s32.totalorder %s40, 1
      %p446 = por %p444, %p445
      %p447 = scmp.ne.s32.totalorder %s438, %s439
      %p448 = scmp.eq.s32.totalorder %s40, 0
      %p449 = por %p447, %p448
      %p450 = scmp.ne.s32.totalorder %s438, %s439
      %p451 = scmp.eq.s32.totalorder %s41, 1
      %p452 = por %p450, %p451
      %p454 = scmp.ne.s32.totalorder %s439, %s453
      %p455 = scmp.eq.s32.totalorder %s41, 0
      %p456 = por %p454, %p455
      %s458 = sadd.s32 %s457, 1
      %p461 = scmp.eq.s32.totalorder %s35, 1
      %p462 = scmp.ne.s32.totalorder %s457, %s459
      %p463 = scmp.eq.s32.totalorder %s35, 0
      %p464 = por %p462, %p463
      %p465 = scmp.ne.s32.totalorder %s457, %s459
      %p466 = scmp.eq.s32.totalorder %s40, 1
      %p467 = por %p465, %p466
      %p468 = scmp.ne.s32.totalorder %s459, %s460
      %p469 = scmp.eq.s32.totalorder %s40, 0
      %p470 = por %p468, %p469
      %p471 = scmp.ne.s32.totalorder %s459, %s460
      %p472 = scmp.eq.s32.totalorder %s41, 1
      %p473 = por %p471, %p472
      %p475 = scmp.ne.s32.totalorder %s460, %s474
      %p476 = scmp.eq.s32.totalorder %s41, 0
      %p477 = por %p475, %p476
      %s479 = sadd.s32 %s478, 1
      %p482 = scmp.eq.s32.totalorder %s35, 1
      %p483 = scmp.ne.s32.totalorder %s478, %s480
      %p484 = scmp.eq.s32.totalorder %s35, 0
      %p485 = por %p483, %p484
      %p486 = scmp.ne.s32.totalorder %s478, %s480
      %p487 = scmp.eq.s32.totalorder %s40, 1
      %p488 = por %p486, %p487
      %p489 = scmp.ne.s32.totalorder %s480, %s481
      %p490 = scmp.eq.s32.totalorder %s40, 0
      %p491 = por %p489, %p490
      %p492 = scmp.ne.s32.totalorder %s480, %s481
      %p493 = scmp.eq.s32.totalorder %s41, 1
      %p494 = por %p492, %p493
      %p496 = scmp.ne.s32.totalorder %s481, %s495
      %p497 = scmp.eq.s32.totalorder %s41, 0
      %p498 = por %p496, %p497
      %s500 = sadd.s32 %s499, 1
      %p503 = scmp.eq.s32.totalorder %s35, 1
      %p504 = scmp.ne.s32.totalorder %s499, %s501
      %p505 = scmp.eq.s32.totalorder %s35, 0
      %p506 = por %p504, %p505
      %p507 = scmp.ne.s32.totalorder %s499, %s501
      %p508 = scmp.eq.s32.totalorder %s40, 1
      %p509 = por %p507, %p508
      %p510 = scmp.ne.s32.totalorder %s501, %s502
      %p511 = scmp.eq.s32.totalorder %s40, 0
      %p512 = por %p510, %p511
      %p513 = scmp.ne.s32.totalorder %s501, %s502
      %p514 = scmp.eq.s32.totalorder %s41, 1
      %p515 = por %p513, %p514
      %p517 = scmp.ne.s32.totalorder %s502, %s516
      %p518 = scmp.eq.s32.totalorder %s41, 0
      %p519 = por %p517, %p518
      %s521 = sadd.s32 %s520, 1
      %p524 = scmp.eq.s32.totalorder %s35, 1
      %p525 = scmp.ne.s32.totalorder %s520, %s522
      %p526 = scmp.eq.s32.totalorder %s35, 0
      %p527 = por %p525, %p526
      %p528 = scmp.ne.s32.totalorder %s520, %s522
      %p529 = scmp.eq.s32.totalorder %s40, 1
      %p530 = por %p528, %p529
      %p531 = scmp.ne.s32.totalorder %s522, %s523
      %p532 = scmp.eq.s32.totalorder %s40, 0
      %p533 = por %p531, %p532
      %p534 = scmp.ne.s32.totalorder %s522, %s523
      %p535 = scmp.eq.s32.totalorder %s41, 1
      %p536 = por %p534, %p535
      %p538 = scmp.ne.s32.totalorder %s523, %s537
      %p539 = scmp.eq.s32.totalorder %s41, 0
      %p540 = por %p538, %p539
      %s542 = sadd.s32 %s541, 1
      %p545 = scmp.eq.s32.totalorder %s35, 1
      %p546 = scmp.ne.s32.totalorder %s541, %s543
      %p547 = scmp.eq.s32.totalorder %s35, 0
      %p548 = por %p546, %p547
      %p549 = scmp.ne.s32.totalorder %s541, %s543
      %p550 = scmp.eq.s32.totalorder %s40, 1
      %p551 = por %p549, %p550
      %p552 = scmp.ne.s32.totalorder %s543, %s544
      %p553 = scmp.eq.s32.totalorder %s40, 0
      %p554 = por %p552, %p553
      %p555 = scmp.ne.s32.totalorder %s543, %s544
      %p556 = scmp.eq.s32.totalorder %s41, 1
      %p557 = por %p555, %p556
      %p559 = scmp.ne.s32.totalorder %s544, %s558
      %p560 = scmp.eq.s32.totalorder %s41, 0
      %p561 = por %p559, %p560
      %s562 = ssub.s32 %s35, %s42
      %p563 = scmp.eq.s32.totalorder %s562, 0
      %s565 = sadd.s32 %s564, 1
      %s566 = scalar_select %p563, %s564, %s565
      %p569 = pneg %p563
      %p570 = scmp.eq.s32.totalorder %s35, 1
      %p571 = por %p569, %p570
      %p572 = scmp.ne.s32.totalorder %s564, %s567
      %p573 = scmp.eq.s32.totalorder %s35, 0
      %p574 = por %p572, %p573
      %p575 = scmp.ne.s32.totalorder %s564, %s567
      %p576 = scmp.eq.s32.totalorder %s40, 1
      %p577 = por %p575, %p576
      %p578 = scmp.ne.s32.totalorder %s567, %s568
      %p579 = scmp.eq.s32.totalorder %s40, 0
      %p580 = por %p578, %p579
      %p581 = scmp.ne.s32.totalorder %s567, %s568
      %p582 = scmp.eq.s32.totalorder %s41, 1
      %p583 = por %p581, %p582
      %p585 = scmp.ne.s32.totalorder %s568, %s584
      %p586 = scmp.eq.s32.totalorder %s41, 0
      %p587 = por %p585, %p586
      %p588 = scmp.le.s32.totalorder 1, %s35
      %p589 = scmp.lt.s32.totalorder %s35, 3
      %p590 = pnand %p588, %p589
      %p591 = pneg %p590
      // Predicated region
      $region9: #{graphwavenet_forward.1} parent=5 // pred_check
        _
      $region10: #{graphwavenet_forward.1} parent=5 // pred_check_branch
        %593 = sbr.rel (%p590) target = $region12
      $region11: #{graphwavenet_forward.1} parent=5 // pred_region
        %s594 = ssub.s32 %s35, 1
        // Predicated region
        $region13: #{graphwavenet_forward.1} parent=11 // pred_check
          %p595 = pneg %p108
        $region14: #{graphwavenet_forward.1} parent=11 // pred_check_branch
          %597 = sbr.rel (%p595) target = $region16
        $region15: #{graphwavenet_forward.1} parent=11 // pred_region
          _
        $region16: #{graphwavenet_forward.1} parent=11 // pred_fallthru
          _
        // Predicated region
        $region17: #{graphwavenet_forward.1} parent=11 // pred_check
          %p598 = pneg %p129
        $region18: #{graphwavenet_forward.1} parent=11 // pred_check_branch
          %600 = sbr.rel (%p598) target = $region20
        $region19: #{graphwavenet_forward.1} parent=11 // pred_region
          _
        $region20: #{graphwavenet_forward.1} parent=11 // pred_fallthru
          _
        // Predicated region
        $region21: #{graphwavenet_forward.1} parent=11 // pred_check
          %p601 = pneg %p150
        $region22: #{graphwavenet_forward.1} parent=11 // pred_check_branch
          %603 = sbr.rel (%p601) target = $region24
        $region23: #{graphwavenet_forward.1} parent=11 // pred_region
          _
        $region24: #{graphwavenet_forward.1} parent=11 // pred_fallthru
          _
        // Predicated region
        $region25: #{graphwavenet_forward.1} parent=11 // pred_check
          %p604 = pneg %p197
        $region26: #{graphwavenet_forward.1} parent=11 // pred_check_branch
          %606 = sbr.rel (%p604) target = $region28
        $region27: #{graphwavenet_forward.1} parent=11 // pred_region
          _
        $region28: #{graphwavenet_forward.1} parent=11 // pred_fallthru
          _
        // Predicated region
        $region29: #{graphwavenet_forward.1} parent=11 // pred_check
          %p607 = pneg %p218
        $region30: #{graphwavenet_forward.1} parent=11 // pred_check_branch
          %609 = sbr.rel (%p607) target = $region32
        $region31: #{graphwavenet_forward.1} parent=11 // pred_region
          %s611 = ssub.s32 16, 16
          %612 = vsyncadd [#allocation3], %s611
          %s614 = sshll.u32 [#allocation2], 4
          %s615 = int_to_ptr.vmem [resolvable:$true] %s614
          %617 = dma.hbm_to_vmem [thread:$0]  %s7, 16, %s615, [#allocation3]
        $region32: #{graphwavenet_forward.1} parent=11 // pred_fallthru
          _
        // Predicated region
        $region33: #{graphwavenet_forward.1} parent=11 // pred_check
          %p618 = pneg %p239
        $region34: #{graphwavenet_forward.1} parent=11 // pred_check_branch
          %620 = sbr.rel (%p618) target = $region36
        $region35: #{graphwavenet_forward.1} parent=11 // pred_region
          _
        $region36: #{graphwavenet_forward.1} parent=11 // pred_fallthru
          _
        // Predicated region
        $region37: #{graphwavenet_forward.1} parent=11 // pred_check
          %p621 = pneg %p260
        $region38: #{graphwavenet_forward.1} parent=11 // pred_check_branch
          %623 = sbr.rel (%p621) target = $region40
        $region39: #{graphwavenet_forward.1} parent=11 // pred_region
          %s625 = ssub.s32 64, 64
          %626 = vsyncadd [#allocation5], %s625
          %s627 = sshll.u32 [#allocation4], 4
          %s628 = int_to_ptr.vmem [resolvable:$true] %s627
          %633 = dma.hbm_to_vmem [thread:$0]  %s9, 64, %s628, [#allocation5], 16, 16, 1
        $region40: #{graphwavenet_forward.1} parent=11 // pred_fallthru
          _
        // Predicated region
        $region41: #{graphwavenet_forward.1} parent=11 // pred_check
          %p634 = pneg %p281
        $region42: #{graphwavenet_forward.1} parent=11 // pred_check_branch
          %636 = sbr.rel (%p634) target = $region44
        $region43: #{graphwavenet_forward.1} parent=11 // pred_region
          _
        $region44: #{graphwavenet_forward.1} parent=11 // pred_fallthru
          _
        // Predicated region
        $region45: #{graphwavenet_forward.1} parent=11 // pred_check
          %p637 = pneg %p302
        $region46: #{graphwavenet_forward.1} parent=11 // pred_check_branch
          %639 = sbr.rel (%p637) target = $region48
        $region47: #{graphwavenet_forward.1} parent=11 // pred_region
          %s641 = ssub.s32 128, 128
          %642 = vsyncadd [#allocation5], %s641
          %s643 = sshll.u32 [#allocation6], 4
          %s644 = int_to_ptr.vmem [resolvable:$true] %s643
          %649 = dma.hbm_to_vmem [thread:$0]  %s11, 128, %s644, [#allocation5], 32, 32, 2
        $region48: #{graphwavenet_forward.1} parent=11 // pred_fallthru
          _
        // Predicated region
        $region49: #{graphwavenet_forward.1} parent=11 // pred_check
          %p650 = pneg %p323
        $region50: #{graphwavenet_forward.1} parent=11 // pred_check_branch
          %652 = sbr.rel (%p650) target = $region52
        $region51: #{graphwavenet_forward.1} parent=11 // pred_region
          _
        $region52: #{graphwavenet_forward.1} parent=11 // pred_fallthru
          _
        // Predicated region
        $region53: #{graphwavenet_forward.1} parent=11 // pred_check
          %p653 = pneg %p344
        $region54: #{graphwavenet_forward.1} parent=11 // pred_check_branch
          %655 = sbr.rel (%p653) target = $region56
        $region55: #{graphwavenet_forward.1} parent=11 // pred_region
          %s657 = ssub.s32 64, 64
          %658 = vsyncadd [#allocation8], %s657
          %s659 = sshll.u32 [#allocation7], 4
          %s660 = int_to_ptr.vmem [resolvable:$true] %s659
          %665 = dma.hbm_to_vmem [thread:$0]  %s13, 64, %s660, [#allocation8], 16, 16, 1
        $region56: #{graphwavenet_forward.1} parent=11 // pred_fallthru
          _
        // Predicated region
        $region57: #{graphwavenet_forward.1} parent=11 // pred_check
          %p666 = pneg %p365
        $region58: #{graphwavenet_forward.1} parent=11 // pred_check_branch
          %668 = sbr.rel (%p666) target = $region60
        $region59: #{graphwavenet_forward.1} parent=11 // pred_region
          _
        $region60: #{graphwavenet_forward.1} parent=11 // pred_fallthru
          _
        // Predicated region
        $region61: #{graphwavenet_forward.1} parent=11 // pred_check
          %p669 = pneg %p386
        $region62: #{graphwavenet_forward.1} parent=11 // pred_check_branch
          %671 = sbr.rel (%p669) target = $region64
        $region63: #{graphwavenet_forward.1} parent=11 // pred_region
          _
        $region64: #{graphwavenet_forward.1} parent=11 // pred_fallthru
          _
        // Predicated region
        $region65: #{graphwavenet_forward.1} parent=11 // pred_check
          %p672 = pneg %p407
        $region66: #{graphwavenet_forward.1} parent=11 // pred_check_branch
          %674 = sbr.rel (%p672) target = $region68
        $region67: #{graphwavenet_forward.1} parent=11 // pred_region
          _
        $region68: #{graphwavenet_forward.1} parent=11 // pred_fallthru
          _
        // Predicated region
        $region69: #{graphwavenet_forward.1} parent=11 // pred_check
          %p675 = pneg %p428
        $region70: #{graphwavenet_forward.1} parent=11 // pred_check_branch
          %677 = sbr.rel (%p675) target = $region72
        $region71: #{graphwavenet_forward.1} parent=11 // pred_region
          %s679 = ssub.s32 64, 64
          %680 = vsyncadd [#allocation8], %s679
          %s682 = sshll.u32 [#allocation9], 4
          %s683 = int_to_ptr.vmem [resolvable:$true] %s682
          %685 = dma.hbm_to_vmem [thread:$0]  %s17, 64, %s683, [#allocation8]
        $region72: #{graphwavenet_forward.1} parent=11 // pred_fallthru
          _
        // Predicated region
        $region73: #{graphwavenet_forward.1} parent=11 // pred_check
          %p686 = pneg %p449
        $region74: #{graphwavenet_forward.1} parent=11 // pred_check_branch
          %688 = sbr.rel (%p686) target = $region76
        $region75: #{graphwavenet_forward.1} parent=11 // pred_region
          _
        $region76: #{graphwavenet_forward.1} parent=11 // pred_fallthru
          _
        // Predicated region
        $region77: #{graphwavenet_forward.1} parent=11 // pred_check
          %p689 = pneg %p470
        $region78: #{graphwavenet_forward.1} parent=11 // pred_check_branch
          %691 = sbr.rel (%p689) target = $region80
        $region79: #{graphwavenet_forward.1} parent=11 // pred_region
          %s693 = ssub.s32 32, 32
          %694 = vsyncadd [#allocation11], %s693
          %s696 = sshll.u32 [#allocation10], 4
          %s697 = int_to_ptr.vmem [resolvable:$true] %s696
          %699 = dma.hbm_to_vmem [thread:$0]  %s19, 32, %s697, [#allocation11]
        $region80: #{graphwavenet_forward.1} parent=11 // pred_fallthru
          _
        // Predicated region
        $region81: #{graphwavenet_forward.1} parent=11 // pred_check
          %p700 = pneg %p491
        $region82: #{graphwavenet_forward.1} parent=11 // pred_check_branch
          %702 = sbr.rel (%p700) target = $region84
        $region83: #{graphwavenet_forward.1} parent=11 // pred_region
          _
        $region84: #{graphwavenet_forward.1} parent=11 // pred_fallthru
          _
        // Predicated region
        $region85: #{graphwavenet_forward.1} parent=11 // pred_check
          %p703 = pneg %p512
        $region86: #{graphwavenet_forward.1} parent=11 // pred_check_branch
          %705 = sbr.rel (%p703) target = $region88
        $region87: #{graphwavenet_forward.1} parent=11 // pred_region
          %s707 = ssub.s32 64, 64
          %708 = vsyncadd [#allocation11], %s707
          %s710 = sshll.u32 [#allocation12], 4
          %s711 = int_to_ptr.vmem [resolvable:$true] %s710
          %713 = dma.hbm_to_vmem [thread:$0]  %s21, 64, %s711, [#allocation11]
        $region88: #{graphwavenet_forward.1} parent=11 // pred_fallthru
          _
        // Predicated region
        $region89: #{graphwavenet_forward.1} parent=11 // pred_check
          %p714 = pneg %p533
        $region90: #{graphwavenet_forward.1} parent=11 // pred_check_branch
          %716 = sbr.rel (%p714) target = $region92
        $region91: #{graphwavenet_forward.1} parent=11 // pred_region
          _
        $region92: #{graphwavenet_forward.1} parent=11 // pred_fallthru
          _
        // Predicated region
        $region93: #{graphwavenet_forward.1} parent=11 // pred_check
          %p717 = pneg %p554
        $region94: #{graphwavenet_forward.1} parent=11 // pred_check_branch
          %719 = sbr.rel (%p717) target = $region96
        $region95: #{graphwavenet_forward.1} parent=11 // pred_region
          %s721 = ssub.s32 16, 16
          %722 = vsyncadd [#allocation14], %s721
          %s724 = sshll.u32 [#allocation13], 4
          %s725 = int_to_ptr.vmem [resolvable:$true] %s724
          %727 = dma.hbm_to_vmem [thread:$0]  %s23, 16, %s725, [#allocation14]
        $region96: #{graphwavenet_forward.1} parent=11 // pred_fallthru
          _
      $region12: #{graphwavenet_forward.1} parent=5 // pred_fallthru
        _
      %p728 = scmp.lt.s32.totalorder %s35, 2
      // Predicated region
      $region97: #{graphwavenet_forward.1} parent=5 // pred_check
        %p729 = pneg %p728
      $region98: #{graphwavenet_forward.1} parent=5 // pred_check_branch
        %731 = sbr.rel (%p729) target = $region100
      $region99: #{graphwavenet_forward.1} parent=5 // pred_region
        // Predicated region
        $region101: #{graphwavenet_forward.1} parent=99 // pred_check
          %p732 = pneg %p55
        $region102: #{graphwavenet_forward.1} parent=99 // pred_check_branch
          %734 = sbr.rel (%p732) target = $region104
        $region103: #{graphwavenet_forward.1} parent=99 // pred_region
          %p735 = scmp.lt.s32.totalorder %s35, 1
          %s736 = scalar_select %p735, %s35, 1
          %s737 = smul.addr %s736, 14
          %s738 = smul.addr %s737, 8
          %s739 = scalar_lea.vmem %s0, %s738
        $region104: #{graphwavenet_forward.1} parent=99 // pred_fallthru
          _
        // Predicated region
        $region105: #{graphwavenet_forward.1} parent=99 // pred_check
          %p740 = pneg %p81
        $region106: #{graphwavenet_forward.1} parent=99 // pred_check_branch
          %742 = sbr.rel (%p740) target = $region108
        $region107: #{graphwavenet_forward.1} parent=99 // pred_region
          %p743 = scmp.lt.s32.totalorder %s35, 1
          %s744 = scalar_select %p743, %s35, 1
          %s745 = smul.addr %s744, 2
          %s746 = smul.addr %s745, 8
          %s747 = scalar_lea.vmem %s1, %s746
        $region108: #{graphwavenet_forward.1} parent=99 // pred_fallthru
          _
        // Predicated region
        $region109: #{graphwavenet_forward.1} parent=99 // pred_check
          %p748 = pneg %p170
        $region110: #{graphwavenet_forward.1} parent=99 // pred_check_branch
          %750 = sbr.rel (%p748) target = $region112
        $region111: #{graphwavenet_forward.1} parent=99 // pred_region
          %p751 = scmp.lt.s32.totalorder %s35, 1
          %s752 = scalar_select %p751, %s35, 1
          %s753 = smul.addr %s752, 2
          %s754 = smul.addr %s753, 8
          %s755 = scalar_lea.vmem %s5, %s754
        $region112: #{graphwavenet_forward.1} parent=99 // pred_fallthru
          _
      $region100: #{graphwavenet_forward.1} parent=5 // pred_fallthru
        _
      %p756 = scmp.le.s32.totalorder 1, %s35
      %p757 = scmp.lt.s32.totalorder %s35, 3
      %p758 = pnand %p756, %p757
      %p759 = pneg %p758
      // Predicated region
      $region113: #{graphwavenet_forward.1} parent=5 // pred_check
        _
      $region114: #{graphwavenet_forward.1} parent=5 // pred_check_branch
        %761 = sbr.rel (%p758) target = $region116
      $region115: #{graphwavenet_forward.1} parent=5 // pred_region
        %s762 = ssub.s32 %s35, 1
        // Predicated region
        $region117: #{graphwavenet_forward.1} parent=115 // pred_check
          %p763 = pneg %p218
        $region118: #{graphwavenet_forward.1} parent=115 // pred_check_branch
          %765 = sbr.rel (%p763) target = $region120
        $region119: #{graphwavenet_forward.1} parent=115 // pred_region
          %766 = dma.done [#allocation3], 16
        $region120: #{graphwavenet_forward.1} parent=115 // pred_fallthru
          _
        // Predicated region
        $region121: #{graphwavenet_forward.1} parent=115 // pred_check
          %p767 = pneg %p260
        $region122: #{graphwavenet_forward.1} parent=115 // pred_check_branch
          %769 = sbr.rel (%p767) target = $region124
        $region123: #{graphwavenet_forward.1} parent=115 // pred_region
          %770 = dma.done [#allocation5], 64
        $region124: #{graphwavenet_forward.1} parent=115 // pred_fallthru
          _
        // Predicated region
        $region125: #{graphwavenet_forward.1} parent=115 // pred_check
          %p771 = pneg %p302
        $region126: #{graphwavenet_forward.1} parent=115 // pred_check_branch
          %773 = sbr.rel (%p771) target = $region128
        $region127: #{graphwavenet_forward.1} parent=115 // pred_region
          %774 = dma.done [#allocation5], 128
        $region128: #{graphwavenet_forward.1} parent=115 // pred_fallthru
          _
        // Predicated region
        $region129: #{graphwavenet_forward.1} parent=115 // pred_check
          %p775 = pneg %p344
        $region130: #{graphwavenet_forward.1} parent=115 // pred_check_branch
          %777 = sbr.rel (%p775) target = $region132
        $region131: #{graphwavenet_forward.1} parent=115 // pred_region
          %778 = dma.done [#allocation8], 64
        $region132: #{graphwavenet_forward.1} parent=115 // pred_fallthru
          _
        // Predicated region
        $region133: #{graphwavenet_forward.1} parent=115 // pred_check
          %p779 = pneg %p428
        $region134: #{graphwavenet_forward.1} parent=115 // pred_check_branch
          %781 = sbr.rel (%p779) target = $region136
        $region135: #{graphwavenet_forward.1} parent=115 // pred_region
          %782 = dma.done [#allocation8], 64
        $region136: #{graphwavenet_forward.1} parent=115 // pred_fallthru
          _
        // Predicated region
        $region137: #{graphwavenet_forward.1} parent=115 // pred_check
          %p783 = pneg %p470
        $region138: #{graphwavenet_forward.1} parent=115 // pred_check_branch
          %785 = sbr.rel (%p783) target = $region140
        $region139: #{graphwavenet_forward.1} parent=115 // pred_region
          %786 = dma.done [#allocation11], 32
        $region140: #{graphwavenet_forward.1} parent=115 // pred_fallthru
          _
        // Predicated region
        $region141: #{graphwavenet_forward.1} parent=115 // pred_check
          %p787 = pneg %p512
        $region142: #{graphwavenet_forward.1} parent=115 // pred_check_branch
          %789 = sbr.rel (%p787) target = $region144
        $region143: #{graphwavenet_forward.1} parent=115 // pred_region
          %790 = dma.done [#allocation11], 64
        $region144: #{graphwavenet_forward.1} parent=115 // pred_fallthru
          _
        // Predicated region
        $region145: #{graphwavenet_forward.1} parent=115 // pred_check
          %p791 = pneg %p554
        $region146: #{graphwavenet_forward.1} parent=115 // pred_check_branch
          %793 = sbr.rel (%p791) target = $region148
        $region147: #{graphwavenet_forward.1} parent=115 // pred_region
          %794 = dma.done [#allocation14], 16
        $region148: #{graphwavenet_forward.1} parent=115 // pred_fallthru
          _
        %p795 = scmp.lt.s32.totalorder %s40, 1
        %s796 = scalar_select %p795, %s40, 1
        %s797 = smul.addr %s796, 14
        %s798 = smul.addr %s797, 8
        %s799 = scalar_lea.vmem %s0, %s798
        %p800 = pneg %p61
        %p801 = pneg %p58
        %p802 = scmp.lt.s32.totalorder %s40, 1
        %s803 = scalar_select %p802, %s40, 1
        %s804 = smul.addr %s803, 2
        %s805 = smul.addr %s804, 8
        %s806 = scalar_lea.vmem %s1, %s805
        %p807 = pneg %p87
        %p808 = pneg %p84
        %p809 = pneg %p108
        %p810 = pneg %p105
        %p811 = pneg %p129
        %p812 = pneg %p126
        %p813 = pneg %p150
        %p814 = pneg %p147
        %p815 = scmp.lt.s32.totalorder %s40, 1
        %s816 = scalar_select %p815, %s40, 1
        %s817 = smul.addr %s816, 2
        %s818 = smul.addr %s817, 8
        %s819 = scalar_lea.vmem %s5, %s818
        %p820 = pneg %p176
        %p821 = pneg %p173
        %p822 = pneg %p197
        %p823 = pneg %p194
        %p824 = pneg %p218
        %p825 = pneg %p215
        %p826 = pneg %p239
        %p827 = pneg %p236
        %p828 = pneg %p260
        %p829 = pneg %p257
        %p830 = pneg %p281
        %p831 = pneg %p278
        %p832 = pneg %p302
        %p833 = pneg %p299
        %p834 = pneg %p323
        %p835 = pneg %p320
        %p836 = pneg %p344
        %p837 = pneg %p341
        %p838 = pneg %p365
        %p839 = pneg %p362
        %p840 = pneg %p386
        %p841 = pneg %p383
        %p842 = pneg %p407
        %p843 = pneg %p404
        %p844 = pneg %p428
        %p845 = pneg %p425
        %p846 = pneg %p449
        %p847 = pneg %p446
        %p848 = pneg %p470
        %p849 = pneg %p467
        %p850 = pneg %p491
        %p851 = pneg %p488
        %p852 = pneg %p512
        %p853 = pneg %p509
        %p854 = pneg %p533
        %p855 = pneg %p530
        %p856 = pneg %p554
        %p857 = pneg %p551
        %p858 = pneg %p580
        %p859 = pneg %p577
        %p860 = scmp.lt.s32.totalorder %s40, 1
        %s861 = scalar_select %p860, %s40, 1
        %s862 = smul.addr %s861, 2
        %s863 = smul.addr %s862, 8
        %s864 = scalar_lea.vmem %s24, %s863
        %p865 = scmp.lt.s32.totalorder %s40, 1
        %s866 = scalar_select %p865, %s40, 1
        %s867 = smul.addr %s866, 14
        %s868 = smul.addr %s867, 8
        %s869 = scalar_lea.vmem %s0, %s868
        %p870 = scmp.lt.s32.totalorder %s40, 1
        %s871 = scalar_select %p870, %s40, 1
        %s872 = smul.addr %s871, 2
        %s873 = smul.addr %s872, 8
        %s874 = scalar_lea.vmem %s1, %s873
        %p875 = scmp.lt.s32.totalorder %s40, 1
        %s876 = scalar_select %p875, %s40, 1
        %s877 = smul.addr %s876, 2
        %s878 = smul.addr %s877, 8
        %s879 = scalar_lea.vmem %s5, %s878
        %p880 = scmp.lt.s32.totalorder %s40, 1
        %s881 = scalar_select %p880, %s40, 1
        %s882 = smul.addr %s881, 2
        %s883 = smul.addr %s882, 8
        %s884 = scalar_lea.vmem %s24, %s883
        %v885 = vld [vmem:[%s874] sm:$0xff]
        %v886 = vld [vmem:[%s874 + $0x8] sm:$0xff]
        %v887 = vlaneseq
        %v888 = vshrl.u32 %v887, 7
        %v889 = vadd.s32 %v888, 8
        %v890 = vlaneseq
        %v891 = vand.u32 %v890, 127
        %vm892 = vcmp.eq.s32.totalorder %v888, %v891
        %vm893 = vcmp.eq.s32.totalorder %v889, %v891
        %v894 = vsel %vm892, 1, 0
        %v895 = vsel %vm893, 1, 0
        %v896 = vcvt.s32.f32 %v894
        %v897 = vcvt.s32.f32 %v895
        %v898 = vadd.f32 %v885, %v896
        %v899 = vadd.f32 %v886, %v897
        %vm900 = vcmask 130048
        %v901 = vsel %vm900, %v898, 0.0
        %v902 = vsel %vm900, %v899, 0.0
        %v903 = vadd.f32 %v901, %v902
        %v904 = vrot.slane %v903, 4
        %v905 = vadd.f32 %v903, %v904
        %v906 = vrot.slane %v905, 2
        %v907 = vadd.f32 %v905, %v906
        %v908 = vrot.slane %v907, 1
        %v909 = vadd.f32 %v907, %v908
        %v910 = vrcp.pop %v909
        %v911 = vmul.f32 1.0, %v910
        %v912 = vand.u32 2147483647, %v911
        %vm913 = vcmp.eq.f32.partialorder %v912, inf
        %v914 = vsel %vm913, 0.0, %v911
        %v915 = vmul.f32 %v898, %v914
        %v916 = vmul.f32 %v899, %v914
        %v917 = vld [vmem:[%s4] sm:$0xff]
        %v918 = vld [vmem:[%s4 + $0x8] sm:$0xff]
        %v919 = vld [vmem:[%s3] sm:$0xff]
        %v920 = vld [vmem:[%s3 + $0x8] sm:$0x3]
        %vm921 = vcmask 80896
        %v923 = vsel %vm921, %v917, 0
        %v926 = vsel %vm921, %v918, 0
        %vm928 = vcmask 1041408
        %v930 = vsel %vm928, %v920, 0
        %932 = vmatprep.subr.mxu0 0.0
        %933 = vmatpush1.msra.mxu0 %v919
        %934 = vmatprep.subr.mxu0 0.0
        %935 = vmatpush1.msra.mxu0 %v930
        %936 = vmatprep.subr.mxu0 0.0
        %937 = vmatpush1.msra.mxu0 0.0
        %938 = vmatprep.subr.mxu0 0.0
        %939 = vmatpush1.msra.mxu0 0.0
        %940 = vmatprep.subr.mxu0 0.0
        %941 = vmatpush1.msra.mxu0 0.0
        %942 = vmatprep.subr.mxu0 0.0
        %943 = vmatpush1.msra.mxu0 0.0
        %944 = vmatprep.subr.mxu0 0.0
        %945 = vmatpush1.msra.mxu0 0.0
        %946 = vmatprep.subr.mxu0 0.0
        %947 = vmatpush1.msra.mxu0 0.0
        %948 = vmatprep.subr.mxu0 0.0
        %949 = vmatpush1.msra.mxu0 0.0
        %950 = vmatprep.subr.mxu0 0.0
        %951 = vmatpush1.msra.mxu0 0.0
        %952 = vmatprep.subr.mxu0 0.0
        %953 = vmatpush1.msra.mxu0 0.0
        %954 = vmatprep.subr.mxu0 0.0
        %955 = vmatpush1.msra.mxu0 0.0
        %956 = vmatprep.subr.mxu0 0.0
        %957 = vmatpush1.msra.mxu0 0.0
        %958 = vmatprep.subr.mxu0 0.0
        %959 = vmatpush1.msra.mxu0 0.0
        %960 = vmatprep.subr.mxu0 0.0
        %961 = vmatpush1.msra.mxu0 0.0
        %962 = vmatprep.subr.mxu0 0.0
        %963 = vmatpush1.msra.mxu0 0.0
        %964 = vmatprep.subr.mxu0 0.0
        %965 = vmatpush1.msra.mxu0 0.0
        %966 = vmatprep.subr.mxu0 0.0
        %967 = vmatpush1.msra.mxu0 0.0
        %968 = vmatprep.subr.mxu0 0.0
        %969 = vmatpush1.msra.mxu0 0.0
        %970 = vmatprep.subr.mxu0 0.0
        %971 = vmatpush1.msra.mxu0 0.0
        %972 = vmatprep.subr.mxu0 0.0
        %973 = vmatpush1.msra.mxu0 0.0
        %974 = vmatprep.subr.mxu0 0.0
        %975 = vmatpush1.msra.mxu0 0.0
        %976 = vmatprep.subr.mxu0 0.0
        %977 = vmatpush1.msra.mxu0 0.0
        %978 = vmatprep.subr.mxu0 0.0
        %979 = vmatpush1.msra.mxu0 0.0
        %980 = vmatprep.subr.mxu0 0.0
        %981 = vmatpush1.msra.mxu0 0.0
        %982 = vmatprep.subr.mxu0 0.0
        %983 = vmatpush1.msra.mxu0 0.0
        %984 = vmatprep.subr.mxu0 0.0
        %985 = vmatpush1.msra.mxu0 0.0
        %986 = vmatprep.subr.mxu0 0.0
        %987 = vmatpush1.msra.mxu0 0.0
        %988 = vmatprep.subr.mxu0 0.0
        %989 = vmatpush1.msra.mxu0 0.0
        %990 = vmatprep.subr.mxu0 0.0
        %991 = vmatpush1.msra.mxu0 0.0
        %992 = vmatprep.subr.mxu0 0.0
        %993 = vmatpush1.msra.mxu0 0.0
        %994 = vmatprep.subr.mxu0 0.0
        %995 = vmatpush1.msra.mxu0 0.0
        %996 = vmatprep.mubr.f32.mxu0 0.0
        %997 = vmatmul.mubr.f32.gmra.mrb[0].mxu0 %v923
        %v998 = vpop.f32.mrb[0].mxu0
        %v999 = vadd.f32 0.0, %v998
        %v1000 = vpop.f32.mrb[0].mxu0
        %1001 = vmatprep.mubr.f32.mxu0 0.0
        %1002 = vmatmul.mubr.f32.gmra.mrb[0].mxu0 %v926
        %v1003 = vpop.f32.mrb[0].mxu0
        %v1004 = vadd.f32 0.0, %v1003
        %v1005 = vpop.f32.mrb[0].mxu0
        %1006 = vdwg.mxu0
        %v1007 = vmax.f32 %v999, 0.0
        %v1008 = vmax.f32 %v1004, 0.0
        %v1009 = vsel %vm900, %v1007, -inf
        %v1010 = vsel %vm900, %v1008, -inf
        %v1011 = vmax.f32 %v1009, %v1010
        %v1012 = vrot.slane %v1011, 4
        %v1013 = vmax.f32 %v1011, %v1012
        %v1014 = vrot.slane %v1013, 2
        %v1015 = vmax.f32 %v1013, %v1014
        %v1016 = vrot.slane %v1015, 1
        %v1017 = vmax.f32 %v1015, %v1016
        %v1018 = vsub.f32 %v1007, %v1017
        %v1019 = vsub.f32 %v1008, %v1017
        %v1020 = vmul.f32 %v1018, 1.442695
        %v1021 = vpow.pop %v1020
        %v1022 = vmul.f32 %v1019, 1.442695
        %v1023 = vpow.pop %v1022
        %v1024 = vsel %vm900, %v1021, 0.0
        %v1025 = vsel %vm900, %v1023, 0.0
        %v1026 = vadd.f32 %v1024, %v1025
        %v1027 = vrot.slane %v1026, 4
        %v1028 = vadd.f32 %v1026, %v1027
        %v1029 = vrot.slane %v1028, 2
        %v1030 = vadd.f32 %v1028, %v1029
        %v1031 = vrot.slane %v1030, 1
        %v1032 = vadd.f32 %v1030, %v1031
        %v1033 = vrcp.pop %v1032
        %v1034 = vmul.f32 %v1021, %v1033
        %v1035 = vmul.f32 %v1023, %v1033
        %v1036 = vld [vmem:[%s2] sm:$0xff]
        %v1037 = vld [vmem:[%s2 + $0x8] sm:$0xff]
        %s1038 = scalar_lea.vmem %s2, 16
        %v1039 = vld [vmem:[%s1038] sm:$0xff]
        %v1040 = vld [vmem:[%s1038 + $0x8] sm:$0xff]
        %v1041 = vsel %vm900, %v915, 0.0
        %v1042 = vsel %vm900, %v916, 0.0
        %vm1043 = vcmask 261120
        %v1044 = vsel %vm1043, %v1041, 0.0
        %v1045 = vsel %vm1043, %v1042, 0.0
        %vm1046 = vcmask 392192
        %v1047 = vsel %vm1046, %v1044, 0.0
        %v1048 = vsel %vm1046, %v1045, 0.0
        %1051 = vrot.lane.b32.xlu0 %v1036, 16
        %v1052 = vpop.permute.xlu0 %1051
        %1053 = vrot.lane.b32.xlu0 %v1037, 16
        %v1054 = vpop.permute.xlu0 %1053
        %v1057 = vsel %vm900, 0.0, %v1052
        %v1058 = vsel %vm900, 0.0, %v1054
        %v1059 = vsel %vm1043, %v1057, 0.0
        %v1060 = vsel %vm1043, %v1058, 0.0
        %v1061 = vsel %vm1046, %v1059, 0.0
        %v1062 = vsel %vm1046, %v1060, 0.0
        %1065 = vrot.lane.b32.xlu0 %v1039, 32
        %v1066 = vpop.permute.xlu0 %1065
        %1067 = vrot.lane.b32.xlu0 %v1040, 32
        %v1068 = vpop.permute.xlu0 %1067
        %v1071 = vsel %vm1043, 0.0, %v1066
        %v1072 = vsel %vm1043, 0.0, %v1068
        %v1073 = vsel %vm1046, %v1071, 0.0
        %v1074 = vsel %vm1046, %v1072, 0.0
        %1077 = vrot.lane.b32.xlu0 %v1034, 48
        %v1078 = vpop.permute.xlu0 %1077
        %1079 = vrot.lane.b32.xlu0 %v1035, 48
        %v1080 = vpop.permute.xlu0 %1079
        %v1083 = vsel %vm1046, 0.0, %v1078
        %v1084 = vsel %vm1046, 0.0, %v1080
        %v1085 = vld [vmem:[%s869] sm:$0xff]
        %v1086 = vld [vmem:[%s869 + $0x8] sm:$0xff]
        %v1087 = vld [vmem:[%s869 + $0x10] sm:$0xff]
        %v1088 = vld [vmem:[%s869 + $0x18] sm:$0xff]
        %v1089 = vld [vmem:[%s869 + $0x20] sm:$0xff]
        %v1090 = vld [vmem:[%s869 + $0x28] sm:$0xff]
        %v1091 = vld [vmem:[%s869 + $0x30] sm:$0xff]
        %v1092 = vld [vmem:[%s869 + $0x38] sm:$0xff]
        %v1093 = vld [vmem:[%s869 + $0x40] sm:$0xff]
        %v1094 = vld [vmem:[%s869 + $0x48] sm:$0xff]
        %v1095 = vld [vmem:[%s869 + $0x50] sm:$0xff]
        %v1096 = vld [vmem:[%s869 + $0x58] sm:$0xff]
        %v1097 = vld [vmem:[%s869 + $0x60] sm:$0xff]
        %v1098 = vld [vmem:[%s869 + $0x68] sm:$0xff]
        %v1099 = vld [vmem:[%s6] sm:$0x3]
        %v1100 = vld [vmem:[#allocation2] sm:$0x1]
        %v1102 = vlaneseq
        %v1103 = vshrl.u32 %v1102, 7
        %v1104 = vsub.s32 0, %v1103
        %v1105 = vrot.slane %v1100, %v1104
        %vm1107 = vcmask 15360
        %v1109 = vsel %vm1107, %v1085, 0
        %v1112 = vsel %vm1107, %v1086, 0
        %v1115 = vsel %vm1107, %v1087, 0
        %v1118 = vsel %vm1107, %v1088, 0
        %v1121 = vsel %vm1107, %v1089, 0
        %v1124 = vsel %vm1107, %v1090, 0
        %v1127 = vsel %vm1107, %v1091, 0
        %v1130 = vsel %vm1107, %v1092, 0
        %v1133 = vsel %vm1107, %v1093, 0
        %v1136 = vsel %vm1107, %v1094, 0
        %v1139 = vsel %vm1107, %v1095, 0
        %v1142 = vsel %vm1107, %v1096, 0
        %v1145 = vsel %vm1107, %v1097, 0
        %v1148 = vsel %vm1107, %v1098, 0
        %v1151 = vsel %vm928, %v1099, 0
        %1153 = vmatprep.subr.mxu0 0.0
        %1154 = vmatpush1.msra.mxu0 %v1151
        %1155 = vmatprep.subr.mxu0 0.0
        %1156 = vmatpush1.msra.mxu0 0.0
        %1157 = vmatprep.subr.mxu0 0.0
        %1158 = vmatpush1.msra.mxu0 0.0
        %1159 = vmatprep.subr.mxu0 0.0
        %1160 = vmatpush1.msra.mxu0 0.0
        %1161 = vmatprep.subr.mxu0 0.0
        %1162 = vmatpush1.msra.mxu0 0.0
        %1163 = vmatprep.subr.mxu0 0.0
        %1164 = vmatpush1.msra.mxu0 0.0
        %1165 = vmatprep.subr.mxu0 0.0
        %1166 = vmatpush1.msra.mxu0 0.0
        %1167 = vmatprep.subr.mxu0 0.0
        %1168 = vmatpush1.msra.mxu0 0.0
        %1169 = vmatprep.subr.mxu0 0.0
        %1170 = vmatpush1.msra.mxu0 0.0
        %1171 = vmatprep.subr.mxu0 0.0
        %1172 = vmatpush1.msra.mxu0 0.0
        %1173 = vmatprep.subr.mxu0 0.0
        %1174 = vmatpush1.msra.mxu0 0.0
        %1175 = vmatprep.subr.mxu0 0.0
        %1176 = vmatpush1.msra.mxu0 0.0
        %1177 = vmatprep.subr.mxu0 0.0
        %1178 = vmatpush1.msra.mxu0 0.0
        %1179 = vmatprep.subr.mxu0 0.0
        %1180 = vmatpush1.msra.mxu0 0.0
        %1181 = vmatprep.subr.mxu0 0.0
        %1182 = vmatpush1.msra.mxu0 0.0
        %1183 = vmatprep.subr.mxu0 0.0
        %1184 = vmatpush1.msra.mxu0 0.0
        %1185 = vmatprep.subr.mxu0 0.0
        %1186 = vmatpush1.msra.mxu0 0.0
        %1187 = vmatprep.subr.mxu0 0.0
        %1188 = vmatpush1.msra.mxu0 0.0
        %1189 = vmatprep.subr.mxu0 0.0
        %1190 = vmatpush1.msra.mxu0 0.0
        %1191 = vmatprep.subr.mxu0 0.0
        %1192 = vmatpush1.msra.mxu0 0.0
        %1193 = vmatprep.subr.mxu0 0.0
        %1194 = vmatpush1.msra.mxu0 0.0
        %1195 = vmatprep.subr.mxu0 0.0
        %1196 = vmatpush1.msra.mxu0 0.0
        %1197 = vmatprep.subr.mxu0 0.0
        %1198 = vmatpush1.msra.mxu0 0.0
        %1199 = vmatprep.subr.mxu0 0.0
        %1200 = vmatpush1.msra.mxu0 0.0
        %1201 = vmatprep.subr.mxu0 0.0
        %1202 = vmatpush1.msra.mxu0 0.0
        %1203 = vmatprep.subr.mxu0 0.0
        %1204 = vmatpush1.msra.mxu0 0.0
        %1205 = vmatprep.subr.mxu0 0.0
        %1206 = vmatpush1.msra.mxu0 0.0
        %1207 = vmatprep.subr.mxu0 0.0
        %1208 = vmatpush1.msra.mxu0 0.0
        %1209 = vmatprep.subr.mxu0 0.0
        %1210 = vmatpush1.msra.mxu0 0.0
        %1211 = vmatprep.subr.mxu0 0.0
        %1212 = vmatpush1.msra.mxu0 0.0
        %1213 = vmatprep.subr.mxu0 0.0
        %1214 = vmatpush1.msra.mxu0 0.0
        %1215 = vmatprep.subr.mxu0 0.0
        %1216 = vmatpush1.msra.mxu0 0.0
        %1217 = vmatprep.mubr.f32.mxu0 0.0
        %1218 = vmatmul.mubr.f32.gmra.mrb[0].mxu0 %v1109
        %v1219 = vpop.f32.mrb[0].mxu0
        %v1220 = vadd.f32 %v1105, %v1219
        %v1221 = vpop.f32.mrb[0].mxu0
        %1222 = vmatprep.mubr.f32.mxu0 0.0
        %1223 = vmatmul.mubr.f32.gmra.mrb[0].mxu0 %v1112
        %v1224 = vpop.f32.mrb[0].mxu0
        %v1225 = vadd.f32 %v1105, %v1224
        %v1226 = vpop.f32.mrb[0].mxu0
        %1227 = vmatprep.mubr.f32.mxu0 0.0
        %1228 = vmatmul.mubr.f32.gmra.mrb[0].mxu0 %v1115
        %v1229 = vpop.f32.mrb[0].mxu0
        %v1230 = vadd.f32 %v1105, %v1229
        %v1231 = vpop.f32.mrb[0].mxu0
        %1232 = vmatprep.mubr.f32.mxu0 0.0
        %1233 = vmatmul.mubr.f32.gmra.mrb[0].mxu0 %v1118
        %v1234 = vpop.f32.mrb[0].mxu0
        %v1235 = vadd.f32 %v1105, %v1234
        %v1236 = vpop.f32.mrb[0].mxu0
        %1237 = vmatprep.mubr.f32.mxu0 0.0
        %1238 = vmatmul.mubr.f32.gmra.mrb[0].mxu0 %v1121
        %v1239 = vpop.f32.mrb[0].mxu0
        %v1240 = vadd.f32 %v1105, %v1239
        %v1241 = vpop.f32.mrb[0].mxu0
        %1242 = vmatprep.mubr.f32.mxu0 0.0
        %1243 = vmatmul.mubr.f32.gmra.mrb[0].mxu0 %v1124
        %v1244 = vpop.f32.mrb[0].mxu0
        %v1245 = vadd.f32 %v1105, %v1244
        %v1246 = vpop.f32.mrb[0].mxu0
        %1247 = vmatprep.mubr.f32.mxu0 0.0
        %1248 = vmatmul.mubr.f32.gmra.mrb[0].mxu0 %v1127
        %v1249 = vpop.f32.mrb[0].mxu0
        %v1250 = vadd.f32 %v1105, %v1249
        %v1251 = vpop.f32.mrb[0].mxu0
        %1252 = vmatprep.mubr.f32.mxu0 0.0
        %1253 = vmatmul.mubr.f32.gmra.mrb[0].mxu0 %v1130
        %v1254 = vpop.f32.mrb[0].mxu0
        %v1255 = vadd.f32 %v1105, %v1254
        %v1256 = vpop.f32.mrb[0].mxu0
        %1257 = vmatprep.mubr.f32.mxu0 0.0
        %1258 = vmatmul.mubr.f32.gmra.mrb[0].mxu0 %v1133
        %v1259 = vpop.f32.mrb[0].mxu0
        %v1260 = vadd.f32 %v1105, %v1259
        %v1261 = vpop.f32.mrb[0].mxu0
        %1262 = vmatprep.mubr.f32.mxu0 0.0
        %1263 = vmatmul.mubr.f32.gmra.mrb[0].mxu0 %v1136
        %v1264 = vpop.f32.mrb[0].mxu0
        %v1265 = vadd.f32 %v1105, %v1264
        %v1266 = vpop.f32.mrb[0].mxu0
        %1267 = vmatprep.mubr.f32.mxu0 0.0
        %1268 = vmatmul.mubr.f32.gmra.mrb[0].mxu0 %v1139
        %v1269 = vpop.f32.mrb[0].mxu0
        %v1270 = vadd.f32 %v1105, %v1269
        %v1271 = vpop.f32.mrb[0].mxu0
        %1272 = vmatprep.mubr.f32.mxu0 0.0
        %1273 = vmatmul.mubr.f32.gmra.mrb[0].mxu0 %v1142
        %v1274 = vpop.f32.mrb[0].mxu0
        %v1275 = vadd.f32 %v1105, %v1274
        %v1276 = vpop.f32.mrb[0].mxu0
        %1277 = vmatprep.mubr.f32.mxu0 0.0
        %1278 = vmatmul.mubr.f32.gmra.mrb[0].mxu0 %v1145
        %v1279 = vpop.f32.mrb[0].mxu0
        %v1280 = vadd.f32 %v1105, %v1279
        %v1281 = vpop.f32.mrb[0].mxu0
        %1282 = vmatprep.mubr.f32.mxu0 0.0
        %1283 = vmatmul.mubr.f32.gmra.mrb[0].mxu0 %v1148
        %v1284 = vpop.f32.mrb[0].mxu0
        %v1285 = vadd.f32 %v1105, %v1284
        %v1286 = vpop.f32.mrb[0].mxu0
        %1287 = vdwg.mxu0
        %1300 = vrot.lane.b32.xlu0 %v1230, 32
        %v1301 = vpop.permute.xlu0 %1300
        %1302 = vrot.lane.b32.xlu0 %v1235, 32
        %v1303 = vpop.permute.xlu0 %1302
        %1304 = vrot.lane.b32.xlu0 %v1240, 32
        %v1305 = vpop.permute.xlu0 %1304
        %1306 = vrot.lane.b32.xlu0 %v1245, 32
        %v1307 = vpop.permute.xlu0 %1306
        %1308 = vrot.lane.b32.xlu0 %v1250, 32
        %v1309 = vpop.permute.xlu0 %1308
        %1310 = vrot.lane.b32.xlu0 %v1255, 32
        %v1311 = vpop.permute.xlu0 %1310
        %1312 = vrot.lane.b32.xlu0 %v1260, 32
        %v1313 = vpop.permute.xlu0 %1312
        %1314 = vrot.lane.b32.xlu0 %v1265, 32
        %v1315 = vpop.permute.xlu0 %1314
        %1316 = vrot.lane.b32.xlu0 %v1270, 32
        %v1317 = vpop.permute.xlu0 %1316
        %1318 = vrot.lane.b32.xlu0 %v1275, 32
        %v1319 = vpop.permute.xlu0 %1318
        %1320 = vrot.lane.b32.xlu0 %v1280, 32
        %v1321 = vpop.permute.xlu0 %1320
        %1322 = vrot.lane.b32.xlu0 %v1285, 32
        %v1323 = vpop.permute.xlu0 %1322
        %v1336 = vsel %vm1043, %v1220, %v1301
        %v1337 = vsel %vm1043, %v1225, %v1303
        %v1338 = vsel %vm1043, %v1230, %v1305
        %v1339 = vsel %vm1043, %v1235, %v1307
        %v1340 = vsel %vm1043, %v1240, %v1309
        %v1341 = vsel %vm1043, %v1245, %v1311
        %v1342 = vsel %vm1043, %v1250, %v1313
        %v1343 = vsel %vm1043, %v1255, %v1315
        %v1344 = vsel %vm1043, %v1260, %v1317
        %v1345 = vsel %vm1043, %v1265, %v1319
        %v1346 = vsel %vm1043, %v1270, %v1321
        %v1347 = vsel %vm1043, %v1275, %v1323
        %v1348 = vld [vmem:[%s8] sm:$0xff]
        %v1349 = vld [vmem:[%s8 + $0x8] sm:$0xff]
        %v1350 = vld [vmem:[%s8 + $0x10] sm:$0xff]
        %v1351 = vld [vmem:[%s8 + $0x18] sm:$0xff]
        %v1352 = vld [vmem:[%s8 + $0x20] sm:$0xff]
        %v1353 = vld [vmem:[%s8 + $0x28] sm:$0xff]
        %v1354 = vld [vmem:[%s8 + $0x30] sm:$0xff]
        %v1355 = vld [vmem:[%s8 + $0x38] sm:$0xff]
        %v1356 = vld [vmem:[#allocation4] sm:$0x1]
        %v1358 = vlaneseq
        %v1359 = vshrl.u32 %v1358, 7
        %v1360 = vsub.s32 0, %v1359
        %v1361 = vrot.slane %v1356, %v1360
        %vm1363 = vcmask 523264
        %v1365 = vsel %vm1363, %v1336, 0
        %v1368 = vsel %vm1363, %v1337, 0
        %v1371 = vsel %vm1363, %v1338, 0
        %v1374 = vsel %vm1363, %v1339, 0
        %v1377 = vsel %vm1363, %v1340, 0
        %v1380 = vsel %vm1363, %v1341, 0
        %v1383 = vsel %vm1363, %v1342, 0
        %v1386 = vsel %vm1363, %v1343, 0
        %v1389 = vsel %vm1363, %v1344, 0
        %v1392 = vsel %vm1363, %v1345, 0
        %v1395 = vsel %vm1363, %v1346, 0
        %v1398 = vsel %vm1363, %v1347, 0
        %1400 = vmatprep.subr.mxu0 0.0
        %1401 = vmatpush1.msra.mxu0 %v1348
        %1402 = vmatprep.subr.mxu0 0.0
        %1403 = vmatpush1.msra.mxu0 %v1349
        %1404 = vmatprep.subr.mxu0 0.0
        %1405 = vmatpush1.msra.mxu0 %v1350
        %1406 = vmatprep.subr.mxu0 0.0
        %1407 = vmatpush1.msra.mxu0 %v1351
        %1408 = vmatprep.subr.mxu0 0.0
        %1409 = vmatpush1.msra.mxu0 %v1352
        %1410 = vmatprep.subr.mxu0 0.0
        %1411 = vmatpush1.msra.mxu0 %v1353
        %1412 = vmatprep.subr.mxu0 0.0
        %1413 = vmatpush1.msra.mxu0 %v1354
        %1414 = vmatprep.subr.mxu0 0.0
        %1415 = vmatpush1.msra.mxu0 %v1355
        %1416 = vmatprep.subr.mxu0 0.0
        %1417 = vmatpush1.msra.mxu0 0.0
        %1418 = vmatprep.subr.mxu0 0.0
        %1419 = vmatpush1.msra.mxu0 0.0
        %1420 = vmatprep.subr.mxu0 0.0
        %1421 = vmatpush1.msra.mxu0 0.0
        %1422 = vmatprep.subr.mxu0 0.0
        %1423 = vmatpush1.msra.mxu0 0.0
        %1424 = vmatprep.subr.mxu0 0.0
        %1425 = vmatpush1.msra.mxu0 0.0
        %1426 = vmatprep.subr.mxu0 0.0
        %1427 = vmatpush1.msra.mxu0 0.0
        %1428 = vmatprep.subr.mxu0 0.0
        %1429 = vmatpush1.msra.mxu0 0.0
        %1430 = vmatprep.subr.mxu0 0.0
        %1431 = vmatpush1.msra.mxu0 0.0
        %1432 = vmatprep.subr.mxu0 0.0
        %1433 = vmatpush1.msra.mxu0 0.0
        %1434 = vmatprep.subr.mxu0 0.0
        %1435 = vmatpush1.msra.mxu0 0.0
        %1436 = vmatprep.subr.mxu0 0.0
        %1437 = vmatpush1.msra.mxu0 0.0
        %1438 = vmatprep.subr.mxu0 0.0
        %1439 = vmatpush1.msra.mxu0 0.0
        %1440 = vmatprep.subr.mxu0 0.0
        %1441 = vmatpush1.msra.mxu0 0.0
        %1442 = vmatprep.subr.mxu0 0.0
        %1443 = vmatpush1.msra.mxu0 0.0
        %1444 = vmatprep.subr.mxu0 0.0
        %1445 = vmatpush1.msra.mxu0 0.0
        %1446 = vmatprep.subr.mxu0 0.0
        %1447 = vmatpush1.msra.mxu0 0.0
        %1448 = vmatprep.subr.mxu0 0.0
        %1449 = vmatpush1.msra.mxu0 0.0
        %1450 = vmatprep.subr.mxu0 0.0
        %1451 = vmatpush1.msra.mxu0 0.0
        %1452 = vmatprep.subr.mxu0 0.0
        %1453 = vmatpush1.msra.mxu0 0.0
        %1454 = vmatprep.subr.mxu0 0.0
        %1455 = vmatpush1.msra.mxu0 0.0
        %1456 = vmatprep.subr.mxu0 0.0
        %1457 = vmatpush1.msra.mxu0 0.0
        %1458 = vmatprep.subr.mxu0 0.0
        %1459 = vmatpush1.msra.mxu0 0.0
        %1460 = vmatprep.subr.mxu0 0.0
        %1461 = vmatpush1.msra.mxu0 0.0
        %1462 = vmatprep.subr.mxu0 0.0
        %1463 = vmatpush1.msra.mxu0 0.0
        %1464 = vmatprep.mubr.f32.mxu0 0.0
        %1465 = vmatmul.mubr.f32.gmra.mrb[0].mxu0 %v1365
        %v1466 = vpop.f32.mrb[0].mxu0
        %v1467 = vadd.f32 %v1361, %v1466
        %v1468 = vpop.f32.mrb[0].mxu0
        %1469 = vmatprep.mubr.f32.mxu0 0.0
        %1470 = vmatmul.mubr.f32.gmra.mrb[0].mxu0 %v1368
        %v1471 = vpop.f32.mrb[0].mxu0
        %v1472 = vadd.f32 %v1361, %v1471
        %v1473 = vpop.f32.mrb[0].mxu0
        %1474 = vmatprep.mubr.f32.mxu0 0.0
        %1475 = vmatmul.mubr.f32.gmra.mrb[0].mxu0 %v1371
        %v1476 = vpop.f32.mrb[0].mxu0
        %v1477 = vadd.f32 %v1361, %v1476
        %v1478 = vpop.f32.mrb[0].mxu0
        %1479 = vmatprep.mubr.f32.mxu0 0.0
        %1480 = vmatmul.mubr.f32.gmra.mrb[0].mxu0 %v1374
        %v1481 = vpop.f32.mrb[0].mxu0
        %v1482 = vadd.f32 %v1361, %v1481
        %v1483 = vpop.f32.mrb[0].mxu0
        %1484 = vmatprep.mubr.f32.mxu0 0.0
        %1485 = vmatmul.mubr.f32.gmra.mrb[0].mxu0 %v1377
        %v1486 = vpop.f32.mrb[0].mxu0
        %v1487 = vadd.f32 %v1361, %v1486
        %v1488 = vpop.f32.mrb[0].mxu0
        %1489 = vmatprep.mubr.f32.mxu0 0.0
        %1490 = vmatmul.mubr.f32.gmra.mrb[0].mxu0 %v1380
        %v1491 = vpop.f32.mrb[0].mxu0
        %v1492 = vadd.f32 %v1361, %v1491
        %v1493 = vpop.f32.mrb[0].mxu0
        %1494 = vmatprep.mubr.f32.mxu0 0.0
        %1495 = vmatmul.mubr.f32.gmra.mrb[0].mxu0 %v1383
        %v1496 = vpop.f32.mrb[0].mxu0
        %v1497 = vadd.f32 %v1361, %v1496
        %v1498 = vpop.f32.mrb[0].mxu0
        %1499 = vmatprep.mubr.f32.mxu0 0.0
        %1500 = vmatmul.mubr.f32.gmra.mrb[0].mxu0 %v1386
        %v1501 = vpop.f32.mrb[0].mxu0
        %v1502 = vadd.f32 %v1361, %v1501
        %v1503 = vpop.f32.mrb[0].mxu0
        %1504 = vmatprep.mubr.f32.mxu0 0.0
        %1505 = vmatmul.mubr.f32.gmra.mrb[0].mxu0 %v1389
        %v1506 = vpop.f32.mrb[0].mxu0
        %v1507 = vadd.f32 %v1361, %v1506
        %v1508 = vpop.f32.mrb[0].mxu0
        %1509 = vmatprep.mubr.f32.mxu0 0.0
        %1510 = vmatmul.mubr.f32.gmra.mrb[0].mxu0 %v1392
        %v1511 = vpop.f32.mrb[0].mxu0
        %v1512 = vadd.f32 %v1361, %v1511
        %v1513 = vpop.f32.mrb[0].mxu0
        %1514 = vmatprep.mubr.f32.mxu0 0.0
        %1515 = vmatmul.mubr.f32.gmra.mrb[0].mxu0 %v1395
        %v1516 = vpop.f32.mrb[0].mxu0
        %v1517 = vadd.f32 %v1361, %v1516
        %v1518 = vpop.f32.mrb[0].mxu0
        %1519 = vmatprep.mubr.f32.mxu0 0.0
        %1520 = vmatmul.mubr.f32.gmra.mrb[0].mxu0 %v1398
        %v1521 = vpop.f32.mrb[0].mxu0
        %v1522 = vadd.f32 %v1361, %v1521
        %v1523 = vpop.f32.mrb[0].mxu0
        %1524 = vdwg.mxu0
        %v1525 = vtanh.pop %v1467
        %v1526 = vtanh.pop %v1472
        %v1527 = vtanh.pop %v1477
        %v1528 = vtanh.pop %v1482
        %v1529 = vtanh.pop %v1487
        %v1530 = vtanh.pop %v1492
        %v1531 = vtanh.pop %v1497
        %v1532 = vtanh.pop %v1502
        %v1533 = vtanh.pop %v1507
        %v1534 = vtanh.pop %v1512
        %v1535 = vtanh.pop %v1517
        %v1536 = vtanh.pop %v1522
        %v1537 = vxor.u32 %v1467, 2147483648
        %v1538 = vxor.u32 %v1472, 2147483648
        %v1539 = vxor.u32 %v1477, 2147483648
        %v1540 = vxor.u32 %v1482, 2147483648
        %v1541 = vxor.u32 %v1487, 2147483648
        %v1542 = vxor.u32 %v1492, 2147483648
        %v1543 = vxor.u32 %v1497, 2147483648
        %v1544 = vxor.u32 %v1502, 2147483648
        %v1545 = vxor.u32 %v1507, 2147483648
        %v1546 = vxor.u32 %v1512, 2147483648
        %v1547 = vxor.u32 %v1517, 2147483648
        %v1548 = vxor.u32 %v1522, 2147483648
        %v1549 = vmul.f32 %v1537, 1.442695
        %v1550 = vpow.pop %v1549
        %v1551 = vmul.f32 %v1538, 1.442695
        %v1552 = vpow.pop %v1551
        %v1553 = vmul.f32 %v1539, 1.442695
        %v1554 = vpow.pop %v1553
        %v1555 = vmul.f32 %v1540, 1.442695
        %v1556 = vpow.pop %v1555
        %v1557 = vmul.f32 %v1541, 1.442695
        %v1558 = vpow.pop %v1557
        %v1559 = vmul.f32 %v1542, 1.442695
        %v1560 = vpow.pop %v1559
        %v1561 = vmul.f32 %v1543, 1.442695
        %v1562 = vpow.pop %v1561
        %v1563 = vmul.f32 %v1544, 1.442695
        %v1564 = vpow.pop %v1563
        %v1565 = vmul.f32 %v1545, 1.442695
        %v1566 = vpow.pop %v1565
        %v1567 = vmul.f32 %v1546, 1.442695
        %v1568 = vpow.pop %v1567
        %v1569 = vmul.f32 %v1547, 1.442695
        %v1570 = vpow.pop %v1569
        %v1571 = vmul.f32 %v1548, 1.442695
        %v1572 = vpow.pop %v1571
        %v1573 = vadd.f32 %v1550, 1.0
        %v1574 = vadd.f32 %v1552, 1.0
        %v1575 = vadd.f32 %v1554, 1.0
        %v1576 = vadd.f32 %v1556, 1.0
        %v1577 = vadd.f32 %v1558, 1.0
        %v1578 = vadd.f32 %v1560, 1.0
        %v1579 = vadd.f32 %v1562, 1.0
        %v1580 = vadd.f32 %v1564, 1.0
        %v1581 = vadd.f32 %v1566, 1.0
        %v1582 = vadd.f32 %v1568, 1.0
        %v1583 = vadd.f32 %v1570, 1.0
        %v1584 = vadd.f32 %v1572, 1.0
        %v1585 = vrcp.pop %v1573
        %v1586 = vmul.f32 1.0, %v1585
        %v1587 = vrcp.pop %v1574
        %v1588 = vmul.f32 1.0, %v1587
        %v1589 = vrcp.pop %v1575
        %v1590 = vmul.f32 1.0, %v1589
        %v1591 = vrcp.pop %v1576
        %v1592 = vmul.f32 1.0, %v1591
        %v1593 = vrcp.pop %v1577
        %v1594 = vmul.f32 1.0, %v1593
        %v1595 = vrcp.pop %v1578
        %v1596 = vmul.f32 1.0, %v1595
        %v1597 = vrcp.pop %v1579
        %v1598 = vmul.f32 1.0, %v1597
        %v1599 = vrcp.pop %v1580
        %v1600 = vmul.f32 1.0, %v1599
        %v1601 = vrcp.pop %v1581
        %v1602 = vmul.f32 1.0, %v1601
        %v1603 = vrcp.pop %v1582
        %v1604 = vmul.f32 1.0, %v1603
        %v1605 = vrcp.pop %v1583
        %v1606 = vmul.f32 1.0, %v1605
        %v1607 = vrcp.pop %v1584
        %v1608 = vmul.f32 1.0, %v1607
        %1621 = vrot.lane.b32.xlu0 %v1586, 96
        %v1622 = vpop.permute.xlu0 %1621
        %1623 = vrot.lane.b32.xlu0 %v1588, 96
        %v1624 = vpop.permute.xlu0 %1623
        %1625 = vrot.lane.b32.xlu0 %v1590, 96
        %v1626 = vpop.permute.xlu0 %1625
        %1627 = vrot.lane.b32.xlu0 %v1592, 96
        %v1628 = vpop.permute.xlu0 %1627
        %1629 = vrot.lane.b32.xlu0 %v1594, 96
        %v1630 = vpop.permute.xlu0 %1629
        %1631 = vrot.lane.b32.xlu0 %v1596, 96
        %v1632 = vpop.permute.xlu0 %1631
        %1633 = vrot.lane.b32.xlu0 %v1598, 96
        %v1634 = vpop.permute.xlu0 %1633
        %1635 = vrot.lane.b32.xlu0 %v1600, 96
        %v1636 = vpop.permute.xlu0 %1635
        %1637 = vrot.lane.b32.xlu0 %v1602, 96
        %v1638 = vpop.permute.xlu0 %1637
        %1639 = vrot.lane.b32.xlu0 %v1604, 96
        %v1640 = vpop.permute.xlu0 %1639
        %1641 = vrot.lane.b32.xlu0 %v1606, 96
        %v1642 = vpop.permute.xlu0 %1641
        %1643 = vrot.lane.b32.xlu0 %v1608, 96
        %v1644 = vpop.permute.xlu0 %1643
        %v1657 = vmul.f32 %v1525, %v1622
        %v1658 = vmul.f32 %v1526, %v1624
        %v1659 = vmul.f32 %v1527, %v1626
        %v1660 = vmul.f32 %v1528, %v1628
        %v1661 = vmul.f32 %v1529, %v1630
        %v1662 = vmul.f32 %v1530, %v1632
        %v1663 = vmul.f32 %v1531, %v1634
        %v1664 = vmul.f32 %v1532, %v1636
        %v1665 = vmul.f32 %v1533, %v1638
        %v1666 = vmul.f32 %v1534, %v1640
        %v1667 = vmul.f32 %v1535, %v1642
        %v1668 = vmul.f32 %v1536, %v1644
        %v1669 = vld [vmem:[%s10] sm:$0xff]
        %v1670 = vld [vmem:[%s10 + $0x8] sm:$0xff]
        %v1671 = vld [vmem:[%s10 + $0x10] sm:$0xff]
        %v1672 = vld [vmem:[%s10 + $0x18] sm:$0xff]
        %v1673 = vld [vmem:[%s10 + $0x20] sm:$0xff]
        %v1674 = vld [vmem:[%s10 + $0x28] sm:$0xff]
        %v1675 = vld [vmem:[%s10 + $0x30] sm:$0xff]
        %v1676 = vld [vmem:[%s10 + $0x38] sm:$0xff]
        %v1677 = vld [vmem:[#allocation6] sm:$0x3]
        %v1679 = vlaneseq
        %v1680 = vshrl.u32 %v1679, 7
        %v1681 = vsub.s32 0, %v1680
        %v1682 = vrot.slane %v1677, %v1681
        %v1683 = vlaneseq
        %v1684 = vshrl.u32 %v1683, 7
        %v1685 = vsub.s32 1, %v1684
        %v1686 = vrot.slane %v1677, %v1685
        %v1690 = vsel %vm1043, %v1667, 0
        %v1693 = vsel %vm1043, %v1668, 0
        %1695 = vmatprep.subr.mxu0 %v1670
        %1696 = vmatpush1.msra.mxu0 %v1669
        %1697 = vmatprep.subr.mxu0 %v1672
        %1698 = vmatpush1.msra.mxu0 %v1671
        %1699 = vmatprep.subr.mxu0 %v1674
        %1700 = vmatpush1.msra.mxu0 %v1673
        %1701 = vmatprep.subr.mxu0 %v1676
        %1702 = vmatpush1.msra.mxu0 %v1675
        %1703 = vmatprep.subr.mxu0 0.0
        %1704 = vmatpush1.msra.mxu0 0.0
        %1705 = vmatprep.subr.mxu0 0.0
        %1706 = vmatpush1.msra.mxu0 0.0
        %1707 = vmatprep.subr.mxu0 0.0
        %1708 = vmatpush1.msra.mxu0 0.0
        %1709 = vmatprep.subr.mxu0 0.0
        %1710 = vmatpush1.msra.mxu0 0.0
        %1711 = vmatprep.subr.mxu0 0.0
        %1712 = vmatpush1.msra.mxu0 0.0
        %1713 = vmatprep.subr.mxu0 0.0
        %1714 = vmatpush1.msra.mxu0 0.0
        %1715 = vmatprep.subr.mxu0 0.0
        %1716 = vmatpush1.msra.mxu0 0.0
        %1717 = vmatprep.subr.mxu0 0.0
        %1718 = vmatpush1.msra.mxu0 0.0
        %1719 = vmatprep.subr.mxu0 0.0
        %1720 = vmatpush1.msra.mxu0 0.0
        %1721 = vmatprep.subr.mxu0 0.0
        %1722 = vmatpush1.msra.mxu0 0.0
        %1723 = vmatprep.subr.mxu0 0.0
        %1724 = vmatpush1.msra.mxu0 0.0
        %1725 = vmatprep.subr.mxu0 0.0
        %1726 = vmatpush1.msra.mxu0 0.0
        %1727 = vmatprep.subr.mxu0 0.0
        %1728 = vmatpush1.msra.mxu0 0.0
        %1729 = vmatprep.subr.mxu0 0.0
        %1730 = vmatpush1.msra.mxu0 0.0
        %1731 = vmatprep.subr.mxu0 0.0
        %1732 = vmatpush1.msra.mxu0 0.0
        %1733 = vmatprep.subr.mxu0 0.0
        %1734 = vmatpush1.msra.mxu0 0.0
        %1735 = vmatprep.subr.mxu0 0.0
        %1736 = vmatpush1.msra.mxu0 0.0
        %1737 = vmatprep.subr.mxu0 0.0
        %1738 = vmatpush1.msra.mxu0 0.0
        %1739 = vmatprep.subr.mxu0 0.0
        %1740 = vmatpush1.msra.mxu0 0.0
        %1741 = vmatprep.subr.mxu0 0.0
        %1742 = vmatpush1.msra.mxu0 0.0
        %1743 = vmatprep.subr.mxu0 0.0
        %1744 = vmatpush1.msra.mxu0 0.0
        %1745 = vmatprep.subr.mxu0 0.0
        %1746 = vmatpush1.msra.mxu0 0.0
        %1747 = vmatprep.subr.mxu0 0.0
        %1748 = vmatpush1.msra.mxu0 0.0
        %1749 = vmatprep.subr.mxu0 0.0
        %1750 = vmatpush1.msra.mxu0 0.0
        %1751 = vmatprep.subr.mxu0 0.0
        %1752 = vmatpush1.msra.mxu0 0.0
        %1753 = vmatprep.subr.mxu0 0.0
        %1754 = vmatpush1.msra.mxu0 0.0
        %1755 = vmatprep.subr.mxu0 0.0
        %1756 = vmatpush1.msra.mxu0 0.0
        %1757 = vmatprep.subr.mxu0 0.0
        %1758 = vmatpush1.msra.mxu0 0.0
        %1759 = vmatprep.mubr.f32.mxu0 0.0
        %1760 = vmatmul.mubr.f32.gmra.mrb[0].mxu0 %v1690
        %v1761 = vpop.f32.mrb[0].mxu0
        %v1762 = vadd.f32 %v1682, %v1761
        %v1763 = vpop.f32.mrb[0].mxu0
        %v1764 = vadd.f32 %v1686, %v1763
        %1765 = vmatprep.mubr.f32.mxu0 0.0
        %1766 = vmatmul.mubr.f32.gmra.mrb[0].mxu0 %v1693
        %v1767 = vpop.f32.mrb[0].mxu0
        %v1768 = vadd.f32 %v1682, %v1767
        %v1769 = vpop.f32.mrb[0].mxu0
        %v1770 = vadd.f32 %v1686, %v1769
        %1771 = vdwg.mxu0
        %v1773 = vsel %vm900, %v915, 0
        %v1776 = vsel %vm900, %v916, 0
        %v1778 = vsel %vm900, %v1036, 0
        %v1780 = vsel %vm900, %v1037, 0
        %v1782 = vsel %vm900, %v1039, 0
        %v1784 = vsel %vm900, %v1040, 0
        %v1786 = vsel %vm900, %v1034, 0
        %v1788 = vsel %vm900, %v1035, 0
        %1790 = vmatprep.subr.mxu0 0.0
        %1791 = vmatpush1.msra.mxu0 %v1657
        %1792 = vmatprep.subr.mxu0 0.0
        %1793 = vmatpush1.msra.mxu0 %v1658
        %1794 = vmatprep.subr.mxu0 0.0
        %1795 = vmatpush1.msra.mxu0 0.0
        %1796 = vmatprep.subr.mxu0 0.0
        %1797 = vmatpush1.msra.mxu0 0.0
        %1798 = vmatprep.subr.mxu0 0.0
        %1799 = vmatpush1.msra.mxu0 0.0
        %1800 = vmatprep.subr.mxu0 0.0
        %1801 = vmatpush1.msra.mxu0 0.0
        %1802 = vmatprep.subr.mxu0 0.0
        %1803 = vmatpush1.msra.mxu0 0.0
        %1804 = vmatprep.subr.mxu0 0.0
        %1805 = vmatpush1.msra.mxu0 0.0
        %1806 = vmatprep.subr.mxu0 0.0
        %1807 = vmatpush1.msra.mxu0 0.0
        %1808 = vmatprep.subr.mxu0 0.0
        %1809 = vmatpush1.msra.mxu0 0.0
        %1810 = vmatprep.subr.mxu0 0.0
        %1811 = vmatpush1.msra.mxu0 0.0
        %1812 = vmatprep.subr.mxu0 0.0
        %1813 = vmatpush1.msra.mxu0 0.0
        %1814 = vmatprep.subr.mxu0 0.0
        %1815 = vmatpush1.msra.mxu0 0.0
        %1816 = vmatprep.subr.mxu0 0.0
        %1817 = vmatpush1.msra.mxu0 0.0
        %1818 = vmatprep.subr.mxu0 0.0
        %1819 = vmatpush1.msra.mxu0 0.0
        %1820 = vmatprep.subr.mxu0 0.0
        %1821 = vmatpush1.msra.mxu0 0.0
        %1822 = vmatprep.subr.mxu0 0.0
        %1823 = vmatpush1.msra.mxu0 0.0
        %1824 = vmatprep.subr.mxu0 0.0
        %1825 = vmatpush1.msra.mxu0 0.0
        %1826 = vmatprep.subr.mxu0 0.0
        %1827 = vmatpush1.msra.mxu0 0.0
        %1828 = vmatprep.subr.mxu0 0.0
        %1829 = vmatpush1.msra.mxu0 0.0
        %1830 = vmatprep.subr.mxu0 0.0
        %1831 = vmatpush1.msra.mxu0 0.0
        %1832 = vmatprep.subr.mxu0 0.0
        %1833 = vmatpush1.msra.mxu0 0.0
        %1834 = vmatprep.subr.mxu0 0.0
        %1835 = vmatpush1.msra.mxu0 0.0
        %1836 = vmatprep.subr.mxu0 0.0
        %1837 = vmatpush1.msra.mxu0 0.0
        %1838 = vmatprep.subr.mxu0 0.0
        %1839 = vmatpush1.msra.mxu0 0.0
        %1840 = vmatprep.subr.mxu0 0.0
        %1841 = vmatpush1.msra.mxu0 0.0
        %1842 = vmatprep.subr.mxu0 0.0
        %1843 = vmatpush1.msra.mxu0 0.0
        %1844 = vmatprep.subr.mxu0 0.0
        %1845 = vmatpush1.msra.mxu0 0.0
        %1846 = vmatprep.subr.mxu0 0.0
        %1847 = vmatpush1.msra.mxu0 0.0
        %1848 = vmatprep.subr.mxu0 0.0
        %1849 = vmatpush1.msra.mxu0 0.0
        %1850 = vmatprep.subr.mxu0 0.0
        %1851 = vmatpush1.msra.mxu0 0.0
        %1852 = vmatprep.subr.mxu0 0.0
        %1853 = vmatpush1.msra.mxu0 0.0
        %1854 = vmatprep.mubr.f32.mxu0 0.0
        %1855 = vmatmul.mubr.f32.gmra.mrb[0].mxu0 %v1773
        %v1856 = vpop.f32.mrb[0].mxu0
        %v1857 = vadd.f32 0.0, %v1856
        %v1858 = vpop.f32.mrb[0].mxu0
        %1859 = vmatprep.mubr.f32.mxu0 0.0
        %1860 = vmatmul.mubr.f32.gmra.mrb[0].mxu0 %v1776
        %v1861 = vpop.f32.mrb[0].mxu0
        %v1862 = vadd.f32 0.0, %v1861
        %v1863 = vpop.f32.mrb[0].mxu0
        %1864 = vmatprep.mubr.f32.mxu0 0.0
        %1865 = vmatmul.mubr.f32.gmra.mrb[0].mxu0 %v1778
        %v1866 = vpop.f32.mrb[0].mxu0
        %v1867 = vadd.f32 0.0, %v1866
        %v1868 = vpop.f32.mrb[0].mxu0
        %1869 = vmatprep.mubr.f32.mxu0 0.0
        %1870 = vmatmul.mubr.f32.gmra.mrb[0].mxu0 %v1780
        %v1871 = vpop.f32.mrb[0].mxu0
        %v1872 = vadd.f32 0.0, %v1871
        %v1873 = vpop.f32.mrb[0].mxu0
        %1874 = vmatprep.mubr.f32.mxu0 0.0
        %1875 = vmatmul.mubr.f32.gmra.mrb[0].mxu0 %v1782
        %v1876 = vpop.f32.mrb[0].mxu0
        %v1877 = vadd.f32 0.0, %v1876
        %v1878 = vpop.f32.mrb[0].mxu0
        %1879 = vmatprep.mubr.f32.mxu0 0.0
        %1880 = vmatmul.mubr.f32.gmra.mrb[0].mxu0 %v1784
        %v1881 = vpop.f32.mrb[0].mxu0
        %v1882 = vadd.f32 0.0, %v1881
        %v1883 = vpop.f32.mrb[0].mxu0
        %1884 = vmatprep.mubr.f32.mxu0 0.0
        %1885 = vmatmul.mubr.f32.gmra.mrb[0].mxu0 %v1786
        %v1886 = vpop.f32.mrb[0].mxu0
        %v1887 = vadd.f32 0.0, %v1886
        %v1888 = vpop.f32.mrb[0].mxu0
        %1889 = vmatprep.mubr.f32.mxu0 0.0
        %1890 = vmatmul.mubr.f32.gmra.mrb[0].mxu0 %v1788
        %v1891 = vpop.f32.mrb[0].mxu0
        %v1892 = vadd.f32 0.0, %v1891
        %v1893 = vpop.f32.mrb[0].mxu0
        %1894 = vdwg.mxu0
        %v1896 = vsel %vm1363, %v1047, 0
        %v1899 = vsel %vm1363, %v1048, 0
        %v1902 = vsel %vm1363, %v1061, 0
        %v1905 = vsel %vm1363, %v1062, 0
        %v1908 = vsel %vm1363, %v1073, 0
        %v1911 = vsel %vm1363, %v1074, 0
        %v1914 = vsel %vm1363, %v1083, 0
        %v1917 = vsel %vm1363, %v1084, 0
        %1919 = vmatprep.subr.mxu0 0.0
        %1920 = vmatpush1.msra.mxu0 %v1857
        %1921 = vmatprep.subr.mxu0 0.0
        %1922 = vmatpush1.msra.mxu0 %v1862
        %1923 = vmatprep.subr.mxu0 0.0
        %1924 = vmatpush1.msra.mxu0 %v1867
        %1925 = vmatprep.subr.mxu0 0.0
        %1926 = vmatpush1.msra.mxu0 %v1872
        %1927 = vmatprep.subr.mxu0 0.0
        %1928 = vmatpush1.msra.mxu0 %v1877
        %1929 = vmatprep.subr.mxu0 0.0
        %1930 = vmatpush1.msra.mxu0 %v1882
        %1931 = vmatprep.subr.mxu0 0.0
        %1932 = vmatpush1.msra.mxu0 %v1887
        %1933 = vmatprep.subr.mxu0 0.0
        %1934 = vmatpush1.msra.mxu0 %v1892
        %1935 = vmatprep.subr.mxu0 0.0
        %1936 = vmatpush1.msra.mxu0 0.0
        %1937 = vmatprep.subr.mxu0 0.0
        %1938 = vmatpush1.msra.mxu0 0.0
        %1939 = vmatprep.subr.mxu0 0.0
        %1940 = vmatpush1.msra.mxu0 0.0
        %1941 = vmatprep.subr.mxu0 0.0
        %1942 = vmatpush1.msra.mxu0 0.0
        %1943 = vmatprep.subr.mxu0 0.0
        %1944 = vmatpush1.msra.mxu0 0.0
        %1945 = vmatprep.subr.mxu0 0.0
        %1946 = vmatpush1.msra.mxu0 0.0
        %1947 = vmatprep.subr.mxu0 0.0
        %1948 = vmatpush1.msra.mxu0 0.0
        %1949 = vmatprep.subr.mxu0 0.0
        %1950 = vmatpush1.msra.mxu0 0.0
        %1951 = vmatprep.subr.mxu0 0.0
        %1952 = vmatpush1.msra.mxu0 0.0
        %1953 = vmatprep.subr.mxu0 0.0
        %1954 = vmatpush1.msra.mxu0 0.0
        %1955 = vmatprep.subr.mxu0 0.0
        %1956 = vmatpush1.msra.mxu0 0.0
        %1957 = vmatprep.subr.mxu0 0.0
        %1958 = vmatpush1.msra.mxu0 0.0
        %1959 = vmatprep.subr.mxu0 0.0
        %1960 = vmatpush1.msra.mxu0 0.0
        %1961 = vmatprep.subr.mxu0 0.0
        %1962 = vmatpush1.msra.mxu0 0.0
        %1963 = vmatprep.subr.mxu0 0.0
        %1964 = vmatpush1.msra.mxu0 0.0
        %1965 = vmatprep.subr.mxu0 0.0
        %1966 = vmatpush1.msra.mxu0 0.0
        %1967 = vmatprep.subr.mxu0 0.0
        %1968 = vmatpush1.msra.mxu0 0.0
        %1969 = vmatprep.subr.mxu0 0.0
        %1970 = vmatpush1.msra.mxu0 0.0
        %1971 = vmatprep.subr.mxu0 0.0
        %1972 = vmatpush1.msra.mxu0 0.0
        %1973 = vmatprep.subr.mxu0 0.0
        %1974 = vmatpush1.msra.mxu0 0.0
        %1975 = vmatprep.subr.mxu0 0.0
        %1976 = vmatpush1.msra.mxu0 0.0
        %1977 = vmatprep.subr.mxu0 0.0
        %1978 = vmatpush1.msra.mxu0 0.0
        %1979 = vmatprep.subr.mxu0 0.0
        %1980 = vmatpush1.msra.mxu0 0.0
        %1981 = vmatprep.subr.mxu0 0.0
        %1982 = vmatpush1.msra.mxu0 0.0
        %1983 = vmatprep.mubr.f32.mxu0 0.0
        %1984 = vmatmul.mubr.f32.gmra.mrb[0].mxu0 %v1896
        %v1985 = vpop.f32.mrb[0].mxu0
        %v1986 = vadd.f32 0.0, %v1985
        %v1987 = vpop.f32.mrb[0].mxu0
        %1988 = vmatprep.mubr.f32.mxu0 0.0
        %1989 = vmatmul.mubr.f32.gmra.mrb[0].mxu0 %v1899
        %v1990 = vpop.f32.mrb[0].mxu0
        %v1991 = vadd.f32 0.0, %v1990
        %v1992 = vpop.f32.mrb[0].mxu0
        %1993 = vmatprep.mubr.f32.mxu0 0.0
        %1994 = vmatmul.mubr.f32.gmra.mrb[0].mxu0 %v1902
        %v1995 = vpop.f32.mrb[0].mxu0
        %v1996 = vadd.f32 0.0, %v1995
        %v1997 = vpop.f32.mrb[0].mxu0
        %1998 = vmatprep.mubr.f32.mxu0 0.0
        %1999 = vmatmul.mubr.f32.gmra.mrb[0].mxu0 %v1905
        %v2000 = vpop.f32.mrb[0].mxu0
        %v2001 = vadd.f32 0.0, %v2000
        %v2002 = vpop.f32.mrb[0].mxu0
        %2003 = vmatprep.mubr.f32.mxu0 0.0
        %2004 = vmatmul.mubr.f32.gmra.mrb[0].mxu0 %v1908
        %v2005 = vpop.f32.mrb[0].mxu0
        %v2006 = vadd.f32 0.0, %v2005
        %v2007 = vpop.f32.mrb[0].mxu0
        %2008 = vmatprep.mubr.f32.mxu0 0.0
        %2009 = vmatmul.mubr.f32.gmra.mrb[0].mxu0 %v1911
        %v2010 = vpop.f32.mrb[0].mxu0
        %v2011 = vadd.f32 0.0, %v2010
        %v2012 = vpop.f32.mrb[0].mxu0
        %2013 = vmatprep.mubr.f32.mxu0 0.0
        %2014 = vmatmul.mubr.f32.gmra.mrb[0].mxu0 %v1914
        %v2015 = vpop.f32.mrb[0].mxu0
        %v2016 = vadd.f32 0.0, %v2015
        %v2017 = vpop.f32.mrb[0].mxu0
        %2018 = vmatprep.mubr.f32.mxu0 0.0
        %2019 = vmatmul.mubr.f32.gmra.mrb[0].mxu0 %v1917
        %v2020 = vpop.f32.mrb[0].mxu0
        %v2021 = vadd.f32 0.0, %v2020
        %v2022 = vpop.f32.mrb[0].mxu0
        %2023 = vdwg.mxu0
        %2026 = vrot.lane.b32.xlu0 %v1857, 32
        %v2027 = vpop.permute.xlu0 %2026
        %2028 = vrot.lane.b32.xlu0 %v1862, 32
        %v2029 = vpop.permute.xlu0 %2028
        %2034 = vrot.lane.b32.xlu0 %v1986, 64
        %v2035 = vpop.permute.xlu0 %2034
        %2036 = vrot.lane.b32.xlu0 %v1991, 64
        %v2037 = vpop.permute.xlu0 %2036
        %2042 = vrot.lane.b32.xlu0 %v1867, 96
        %v2043 = vpop.permute.xlu0 %2042
        %2044 = vrot.lane.b32.xlu0 %v1872, 96
        %v2045 = vpop.permute.xlu0 %2044
        %2050 = vrot.lane.b32.xlu0 %v1877, 32
        %v2051 = vpop.permute.xlu0 %2050
        %2052 = vrot.lane.b32.xlu0 %v1882, 32
        %v2053 = vpop.permute.xlu0 %2052
        %2058 = vrot.lane.b32.xlu0 %v2006, 64
        %v2059 = vpop.permute.xlu0 %2058
        %2060 = vrot.lane.b32.xlu0 %v2011, 64
        %v2061 = vpop.permute.xlu0 %2060
        %2066 = vrot.lane.b32.xlu0 %v1887, 96
        %v2067 = vpop.permute.xlu0 %2066
        %2068 = vrot.lane.b32.xlu0 %v1892, 96
        %v2069 = vpop.permute.xlu0 %2068
        %v2072 = vsel %vm1043, %v1657, %v2027
        %v2073 = vsel %vm1043, %v1658, %v2029
        %v2074 = vsel %vm1363, %v2072, %v2035
        %v2075 = vsel %vm1363, %v2073, %v2037
        %vm2076 = vcmask 785408
        %v2077 = vsel %vm2076, %v2074, %v2043
        %v2078 = vsel %vm2076, %v2075, %v2045
        %v2079 = vsel %vm1043, %v1996, %v2051
        %v2080 = vsel %vm1043, %v2001, %v2053
        %v2081 = vsel %vm1363, %v2079, %v2059
        %v2082 = vsel %vm1363, %v2080, %v2061
        %v2083 = vsel %vm2076, %v2081, %v2067
        %v2084 = vsel %vm2076, %v2082, %v2069
        %2085 = vmatprep.subr.mxu0 0.0
        %2086 = vmatpush1.msra.mxu0 %v1659
        %2087 = vmatprep.subr.mxu0 0.0
        %2088 = vmatpush1.msra.mxu0 %v1660
        %2089 = vmatprep.subr.mxu0 0.0
        %2090 = vmatpush1.msra.mxu0 0.0
        %2091 = vmatprep.subr.mxu0 0.0
        %2092 = vmatpush1.msra.mxu0 0.0
        %2093 = vmatprep.subr.mxu0 0.0
        %2094 = vmatpush1.msra.mxu0 0.0
        %2095 = vmatprep.subr.mxu0 0.0
        %2096 = vmatpush1.msra.mxu0 0.0
        %2097 = vmatprep.subr.mxu0 0.0
        %2098 = vmatpush1.msra.mxu0 0.0
        %2099 = vmatprep.subr.mxu0 0.0
        %2100 = vmatpush1.msra.mxu0 0.0
        %2101 = vmatprep.subr.mxu0 0.0
        %2102 = vmatpush1.msra.mxu0 0.0
        %2103 = vmatprep.subr.mxu0 0.0
        %2104 = vmatpush1.msra.mxu0 0.0
        %2105 = vmatprep.subr.mxu0 0.0
        %2106 = vmatpush1.msra.mxu0 0.0
        %2107 = vmatprep.subr.mxu0 0.0
        %2108 = vmatpush1.msra.mxu0 0.0
        %2109 = vmatprep.subr.mxu0 0.0
        %2110 = vmatpush1.msra.mxu0 0.0
        %2111 = vmatprep.subr.mxu0 0.0
        %2112 = vmatpush1.msra.mxu0 0.0
        %2113 = vmatprep.subr.mxu0 0.0
        %2114 = vmatpush1.msra.mxu0 0.0
        %2115 = vmatprep.subr.mxu0 0.0
        %2116 = vmatpush1.msra.mxu0 0.0
        %2117 = vmatprep.subr.mxu0 0.0
        %2118 = vmatpush1.msra.mxu0 0.0
        %2119 = vmatprep.subr.mxu0 0.0
        %2120 = vmatpush1.msra.mxu0 0.0
        %2121 = vmatprep.subr.mxu0 0.0
        %2122 = vmatpush1.msra.mxu0 0.0
        %2123 = vmatprep.subr.mxu0 0.0
        %2124 = vmatpush1.msra.mxu0 0.0
        %2125 = vmatprep.subr.mxu0 0.0
        %2126 = vmatpush1.msra.mxu0 0.0
        %2127 = vmatprep.subr.mxu0 0.0
        %2128 = vmatpush1.msra.mxu0 0.0
        %2129 = vmatprep.subr.mxu0 0.0
        %2130 = vmatpush1.msra.mxu0 0.0
        %2131 = vmatprep.subr.mxu0 0.0
        %2132 = vmatpush1.msra.mxu0 0.0
        %2133 = vmatprep.subr.mxu0 0.0
        %2134 = vmatpush1.msra.mxu0 0.0
        %2135 = vmatprep.subr.mxu0 0.0
        %2136 = vmatpush1.msra.mxu0 0.0
        %2137 = vmatprep.subr.mxu0 0.0
        %2138 = vmatpush1.msra.mxu0 0.0
        %2139 = vmatprep.subr.mxu0 0.0
        %2140 = vmatpush1.msra.mxu0 0.0
        %2141 = vmatprep.subr.mxu0 0.0
        %2142 = vmatpush1.msra.mxu0 0.0
        %2143 = vmatprep.subr.mxu0 0.0
        %2144 = vmatpush1.msra.mxu0 0.0
        %2145 = vmatprep.subr.mxu0 0.0
        %2146 = vmatpush1.msra.mxu0 0.0
        %2147 = vmatprep.subr.mxu0 0.0
        %2148 = vmatpush1.msra.mxu0 0.0
        %2149 = vmatprep.mubr.f32.mxu0 0.0
        %2150 = vmatmul.mubr.f32.gmra.mrb[0].mxu0 %v1773
        %v2151 = vpop.f32.mrb[0].mxu0
        %v2152 = vadd.f32 0.0, %v2151
        %v2153 = vpop.f32.mrb[0].mxu0
        %2154 = vmatprep.mubr.f32.mxu0 0.0
        %2155 = vmatmul.mubr.f32.gmra.mrb[0].mxu0 %v1776
        %v2156 = vpop.f32.mrb[0].mxu0
        %v2157 = vadd.f32 0.0, %v2156
        %v2158 = vpop.f32.mrb[0].mxu0
        %2159 = vmatprep.mubr.f32.mxu0 0.0
        %2160 = vmatmul.mubr.f32.gmra.mrb[0].mxu0 %v1778
        %v2161 = vpop.f32.mrb[0].mxu0
        %v2162 = vadd.f32 0.0, %v2161
        %v2163 = vpop.f32.mrb[0].mxu0
        %2164 = vmatprep.mubr.f32.mxu0 0.0
        %2165 = vmatmul.mubr.f32.gmra.mrb[0].mxu0 %v1780
        %v2166 = vpop.f32.mrb[0].mxu0
        %v2167 = vadd.f32 0.0, %v2166
        %v2168 = vpop.f32.mrb[0].mxu0
        %2169 = vmatprep.mubr.f32.mxu0 0.0
        %2170 = vmatmul.mubr.f32.gmra.mrb[0].mxu0 %v1782
        %v2171 = vpop.f32.mrb[0].mxu0
        %v2172 = vadd.f32 0.0, %v2171
        %v2173 = vpop.f32.mrb[0].mxu0
        %2174 = vmatprep.mubr.f32.mxu0 0.0
        %2175 = vmatmul.mubr.f32.gmra.mrb[0].mxu0 %v1784
        %v2176 = vpop.f32.mrb[0].mxu0
        %v2177 = vadd.f32 0.0, %v2176
        %v2178 = vpop.f32.mrb[0].mxu0
        %2179 = vmatprep.mubr.f32.mxu0 0.0
        %2180 = vmatmul.mubr.f32.gmra.mrb[0].mxu0 %v1786
        %v2181 = vpop.f32.mrb[0].mxu0
        %v2182 = vadd.f32 0.0, %v2181
        %v2183 = vpop.f32.mrb[0].mxu0
        %2184 = vmatprep.mubr.f32.mxu0 0.0
        %2185 = vmatmul.mubr.f32.gmra.mrb[0].mxu0 %v1788
        %v2186 = vpop.f32.mrb[0].mxu0
        %v2187 = vadd.f32 0.0, %v2186
        %v2188 = vpop.f32.mrb[0].mxu0
        %2189 = vdwg.mxu0
        %2190 = vmatprep.subr.mxu0 0.0
        %2191 = vmatpush1.msra.mxu0 %v2152
        %2192 = vmatprep.subr.mxu0 0.0
        %2193 = vmatpush1.msra.mxu0 %v2157
        %2194 = vmatprep.subr.mxu0 0.0
        %2195 = vmatpush1.msra.mxu0 %v2162
        %2196 = vmatprep.subr.mxu0 0.0
        %2197 = vmatpush1.msra.mxu0 %v2167
        %2198 = vmatprep.subr.mxu0 0.0
        %2199 = vmatpush1.msra.mxu0 %v2172
        %2200 = vmatprep.subr.mxu0 0.0
        %2201 = vmatpush1.msra.mxu0 %v2177
        %2202 = vmatprep.subr.mxu0 0.0
        %2203 = vmatpush1.msra.mxu0 %v2182
        %2204 = vmatprep.subr.mxu0 0.0
        %2205 = vmatpush1.msra.mxu0 %v2187
        %2206 = vmatprep.subr.mxu0 0.0
        %2207 = vmatpush1.msra.mxu0 0.0
        %2208 = vmatprep.subr.mxu0 0.0
        %2209 = vmatpush1.msra.mxu0 0.0
        %2210 = vmatprep.subr.mxu0 0.0
        %2211 = vmatpush1.msra.mxu0 0.0
        %2212 = vmatprep.subr.mxu0 0.0
        %2213 = vmatpush1.msra.mxu0 0.0
        %2214 = vmatprep.subr.mxu0 0.0
        %2215 = vmatpush1.msra.mxu0 0.0
        %2216 = vmatprep.subr.mxu0 0.0
        %2217 = vmatpush1.msra.mxu0 0.0
        %2218 = vmatprep.subr.mxu0 0.0
        %2219 = vmatpush1.msra.mxu0 0.0
        %2220 = vmatprep.subr.mxu0 0.0
        %2221 = vmatpush1.msra.mxu0 0.0
        %2222 = vmatprep.subr.mxu0 0.0
        %2223 = vmatpush1.msra.mxu0 0.0
        %2224 = vmatprep.subr.mxu0 0.0
        %2225 = vmatpush1.msra.mxu0 0.0
        %2226 = vmatprep.subr.mxu0 0.0
        %2227 = vmatpush1.msra.mxu0 0.0
        %2228 = vmatprep.subr.mxu0 0.0
        %2229 = vmatpush1.msra.mxu0 0.0
        %2230 = vmatprep.subr.mxu0 0.0
        %2231 = vmatpush1.msra.mxu0 0.0
        %2232 = vmatprep.subr.mxu0 0.0
        %2233 = vmatpush1.msra.mxu0 0.0
        %2234 = vmatprep.subr.mxu0 0.0
        %2235 = vmatpush1.msra.mxu0 0.0
        %2236 = vmatprep.subr.mxu0 0.0
        %2237 = vmatpush1.msra.mxu0 0.0
        %2238 = vmatprep.subr.mxu0 0.0
        %2239 = vmatpush1.msra.mxu0 0.0
        %2240 = vmatprep.subr.mxu0 0.0
        %2241 = vmatpush1.msra.mxu0 0.0
        %2242 = vmatprep.subr.mxu0 0.0
        %2243 = vmatpush1.msra.mxu0 0.0
        %2244 = vmatprep.subr.mxu0 0.0
        %2245 = vmatpush1.msra.mxu0 0.0
        %2246 = vmatprep.subr.mxu0 0.0
        %2247 = vmatpush1.msra.mxu0 0.0
        %2248 = vmatprep.subr.mxu0 0.0
        %2249 = vmatpush1.msra.mxu0 0.0
        %2250 = vmatprep.subr.mxu0 0.0
        %2251 = vmatpush1.msra.mxu0 0.0
        %2252 = vmatprep.subr.mxu0 0.0
        %2253 = vmatpush1.msra.mxu0 0.0
        %2254 = vmatprep.mubr.f32.mxu0 0.0
        %2255 = vmatmul.mubr.f32.gmra.mrb[0].mxu0 %v1896
        %v2256 = vpop.f32.mrb[0].mxu0
        %v2257 = vadd.f32 0.0, %v2256
        %v2258 = vpop.f32.mrb[0].mxu0
        %2259 = vmatprep.mubr.f32.mxu0 0.0
        %2260 = vmatmul.mubr.f32.gmra.mrb[0].mxu0 %v1899
        %v2261 = vpop.f32.mrb[0].mxu0
        %v2262 = vadd.f32 0.0, %v2261
        %v2263 = vpop.f32.mrb[0].mxu0
        %2264 = vmatprep.mubr.f32.mxu0 0.0
        %2265 = vmatmul.mubr.f32.gmra.mrb[0].mxu0 %v1902
        %v2266 = vpop.f32.mrb[0].mxu0
        %v2267 = vadd.f32 0.0, %v2266
        %v2268 = vpop.f32.mrb[0].mxu0
        %2269 = vmatprep.mubr.f32.mxu0 0.0
        %2270 = vmatmul.mubr.f32.gmra.mrb[0].mxu0 %v1905
        %v2271 = vpop.f32.mrb[0].mxu0
        %v2272 = vadd.f32 0.0, %v2271
        %v2273 = vpop.f32.mrb[0].mxu0
        %2274 = vmatprep.mubr.f32.mxu0 0.0
        %2275 = vmatmul.mubr.f32.gmra.mrb[0].mxu0 %v1908
        %v2276 = vpop.f32.mrb[0].mxu0
        %v2277 = vadd.f32 0.0, %v2276
        %v2278 = vpop.f32.mrb[0].mxu0
        %2279 = vmatprep.mubr.f32.mxu0 0.0
        %2280 = vmatmul.mubr.f32.gmra.mrb[0].mxu0 %v1911
        %v2281 = vpop.f32.mrb[0].mxu0
        %v2282 = vadd.f32 0.0, %v2281
        %v2283 = vpop.f32.mrb[0].mxu0
        %2284 = vmatprep.mubr.f32.mxu0 0.0
        %2285 = vmatmul.mubr.f32.gmra.mrb[0].mxu0 %v1914
        %v2286 = vpop.f32.mrb[0].mxu0
        %v2287 = vadd.f32 0.0, %v2286
        %v2288 = vpop.f32.mrb[0].mxu0
        %2289 = vmatprep.mubr.f32.mxu0 0.0
        %2290 = vmatmul.mubr.f32.gmra.mrb[0].mxu0 %v1917
        %v2291 = vpop.f32.mrb[0].mxu0
        %v2292 = vadd.f32 0.0, %v2291
        %v2293 = vpop.f32.mrb[0].mxu0
        %2294 = vdwg.mxu0
        %2297 = vrot.lane.b32.xlu0 %v2152, 32
        %v2298 = vpop.permute.xlu0 %2297
        %2299 = vrot.lane.b32.xlu0 %v2157, 32
        %v2300 = vpop.permute.xlu0 %2299
        %2305 = vrot.lane.b32.xlu0 %v2257, 64
        %v2306 = vpop.permute.xlu0 %2305
        %2307 = vrot.lane.b32.xlu0 %v2262, 64
        %v2308 = vpop.permute.xlu0 %2307
        %2313 = vrot.lane.b32.xlu0 %v2162, 96
        %v2314 = vpop.permute.xlu0 %2313
        %2315 = vrot.lane.b32.xlu0 %v2167, 96
        %v2316 = vpop.permute.xlu0 %2315
        %2321 = vrot.lane.b32.xlu0 %v2172, 32
        %v2322 = vpop.permute.xlu0 %2321
        %2323 = vrot.lane.b32.xlu0 %v2177, 32
        %v2324 = vpop.permute.xlu0 %2323
        %2329 = vrot.lane.b32.xlu0 %v2277, 64
        %v2330 = vpop.permute.xlu0 %2329
        %2331 = vrot.lane.b32.xlu0 %v2282, 64
        %v2332 = vpop.permute.xlu0 %2331
        %2337 = vrot.lane.b32.xlu0 %v2182, 96
        %v2338 = vpop.permute.xlu0 %2337
        %2339 = vrot.lane.b32.xlu0 %v2187, 96
        %v2340 = vpop.permute.xlu0 %2339
        %v2343 = vsel %vm1043, %v1659, %v2298
        %v2344 = vsel %vm1043, %v1660, %v2300
        %v2345 = vsel %vm1363, %v2343, %v2306
        %v2346 = vsel %vm1363, %v2344, %v2308
        %v2347 = vsel %vm2076, %v2345, %v2314
        %v2348 = vsel %vm2076, %v2346, %v2316
        %v2349 = vsel %vm1043, %v2267, %v2322
        %v2350 = vsel %vm1043, %v2272, %v2324
        %v2351 = vsel %vm1363, %v2349, %v2330
        %v2352 = vsel %vm1363, %v2350, %v2332
        %v2353 = vsel %vm2076, %v2351, %v2338
        %v2354 = vsel %vm2076, %v2352, %v2340
        %2355 = vmatprep.subr.mxu0 0.0
        %2356 = vmatpush1.msra.mxu0 %v1661
        %2357 = vmatprep.subr.mxu0 0.0
        %2358 = vmatpush1.msra.mxu0 %v1662
        %2359 = vmatprep.subr.mxu0 0.0
        %2360 = vmatpush1.msra.mxu0 0.0
        %2361 = vmatprep.subr.mxu0 0.0
        %2362 = vmatpush1.msra.mxu0 0.0
        %2363 = vmatprep.subr.mxu0 0.0
        %2364 = vmatpush1.msra.mxu0 0.0
        %2365 = vmatprep.subr.mxu0 0.0
        %2366 = vmatpush1.msra.mxu0 0.0
        %2367 = vmatprep.subr.mxu0 0.0
        %2368 = vmatpush1.msra.mxu0 0.0
        %2369 = vmatprep.subr.mxu0 0.0
        %2370 = vmatpush1.msra.mxu0 0.0
        %2371 = vmatprep.subr.mxu0 0.0
        %2372 = vmatpush1.msra.mxu0 0.0
        %2373 = vmatprep.subr.mxu0 0.0
        %2374 = vmatpush1.msra.mxu0 0.0
        %2375 = vmatprep.subr.mxu0 0.0
        %2376 = vmatpush1.msra.mxu0 0.0
        %2377 = vmatprep.subr.mxu0 0.0
        %2378 = vmatpush1.msra.mxu0 0.0
        %2379 = vmatprep.subr.mxu0 0.0
        %2380 = vmatpush1.msra.mxu0 0.0
        %2381 = vmatprep.subr.mxu0 0.0
        %2382 = vmatpush1.msra.mxu0 0.0
        %2383 = vmatprep.subr.mxu0 0.0
        %2384 = vmatpush1.msra.mxu0 0.0
        %2385 = vmatprep.subr.mxu0 0.0
        %2386 = vmatpush1.msra.mxu0 0.0
        %2387 = vmatprep.subr.mxu0 0.0
        %2388 = vmatpush1.msra.mxu0 0.0
        %2389 = vmatprep.subr.mxu0 0.0
        %2390 = vmatpush1.msra.mxu0 0.0
        %2391 = vmatprep.subr.mxu0 0.0
        %2392 = vmatpush1.msra.mxu0 0.0
        %2393 = vmatprep.subr.mxu0 0.0
        %2394 = vmatpush1.msra.mxu0 0.0
        %2395 = vmatprep.subr.mxu0 0.0
        %2396 = vmatpush1.msra.mxu0 0.0
        %2397 = vmatprep.subr.mxu0 0.0
        %2398 = vmatpush1.msra.mxu0 0.0
        %2399 = vmatprep.subr.mxu0 0.0
        %2400 = vmatpush1.msra.mxu0 0.0
        %2401 = vmatprep.subr.mxu0 0.0
        %2402 = vmatpush1.msra.mxu0 0.0
        %2403 = vmatprep.subr.mxu0 0.0
        %2404 = vmatpush1.msra.mxu0 0.0
        %2405 = vmatprep.subr.mxu0 0.0
        %2406 = vmatpush1.msra.mxu0 0.0
        %2407 = vmatprep.subr.mxu0 0.0
        %2408 = vmatpush1.msra.mxu0 0.0
        %2409 = vmatprep.subr.mxu0 0.0
        %2410 = vmatpush1.msra.mxu0 0.0
        %2411 = vmatprep.subr.mxu0 0.0
        %2412 = vmatpush1.msra.mxu0 0.0
        %2413 = vmatprep.subr.mxu0 0.0
        %2414 = vmatpush1.msra.mxu0 0.0
        %2415 = vmatprep.subr.mxu0 0.0
        %2416 = vmatpush1.msra.mxu0 0.0
        %2417 = vmatprep.subr.mxu0 0.0
        %2418 = vmatpush1.msra.mxu0 0.0
        %2419 = vmatprep.mubr.f32.mxu0 0.0
        %2420 = vmatmul.mubr.f32.gmra.mrb[0].mxu0 %v1773
        %v2421 = vpop.f32.mrb[0].mxu0
        %v2422 = vadd.f32 0.0, %v2421
        %v2423 = vpop.f32.mrb[0].mxu0
        %2424 = vmatprep.mubr.f32.mxu0 0.0
        %2425 = vmatmul.mubr.f32.gmra.mrb[0].mxu0 %v1776
        %v2426 = vpop.f32.mrb[0].mxu0
        %v2427 = vadd.f32 0.0, %v2426
        %v2428 = vpop.f32.mrb[0].mxu0
        %2429 = vmatprep.mubr.f32.mxu0 0.0
        %2430 = vmatmul.mubr.f32.gmra.mrb[0].mxu0 %v1778
        %v2431 = vpop.f32.mrb[0].mxu0
        %v2432 = vadd.f32 0.0, %v2431
        %v2433 = vpop.f32.mrb[0].mxu0
        %2434 = vmatprep.mubr.f32.mxu0 0.0
        %2435 = vmatmul.mubr.f32.gmra.mrb[0].mxu0 %v1780
        %v2436 = vpop.f32.mrb[0].mxu0
        %v2437 = vadd.f32 0.0, %v2436
        %v2438 = vpop.f32.mrb[0].mxu0
        %2439 = vmatprep.mubr.f32.mxu0 0.0
        %2440 = vmatmul.mubr.f32.gmra.mrb[0].mxu0 %v1782
        %v2441 = vpop.f32.mrb[0].mxu0
        %v2442 = vadd.f32 0.0, %v2441
        %v2443 = vpop.f32.mrb[0].mxu0
        %2444 = vmatprep.mubr.f32.mxu0 0.0
        %2445 = vmatmul.mubr.f32.gmra.mrb[0].mxu0 %v1784
        %v2446 = vpop.f32.mrb[0].mxu0
        %v2447 = vadd.f32 0.0, %v2446
        %v2448 = vpop.f32.mrb[0].mxu0
        %2449 = vmatprep.mubr.f32.mxu0 0.0
        %2450 = vmatmul.mubr.f32.gmra.mrb[0].mxu0 %v1786
        %v2451 = vpop.f32.mrb[0].mxu0
        %v2452 = vadd.f32 0.0, %v2451
        %v2453 = vpop.f32.mrb[0].mxu0
        %2454 = vmatprep.mubr.f32.mxu0 0.0
        %2455 = vmatmul.mubr.f32.gmra.mrb[0].mxu0 %v1788
        %v2456 = vpop.f32.mrb[0].mxu0
        %v2457 = vadd.f32 0.0, %v2456
        %v2458 = vpop.f32.mrb[0].mxu0
        %2459 = vdwg.mxu0
        %2460 = vmatprep.subr.mxu0 0.0
        %2461 = vmatpush1.msra.mxu0 %v2422
        %2462 = vmatprep.subr.mxu0 0.0
        %2463 = vmatpush1.msra.mxu0 %v2427
        %2464 = vmatprep.subr.mxu0 0.0
        %2465 = vmatpush1.msra.mxu0 %v2432
        %2466 = vmatprep.subr.mxu0 0.0
        %2467 = vmatpush1.msra.mxu0 %v2437
        %2468 = vmatprep.subr.mxu0 0.0
        %2469 = vmatpush1.msra.mxu0 %v2442
        %2470 = vmatprep.subr.mxu0 0.0
        %2471 = vmatpush1.msra.mxu0 %v2447
        %2472 = vmatprep.subr.mxu0 0.0
        %2473 = vmatpush1.msra.mxu0 %v2452
        %2474 = vmatprep.subr.mxu0 0.0
        %2475 = vmatpush1.msra.mxu0 %v2457
        %2476 = vmatprep.subr.mxu0 0.0
        %2477 = vmatpush1.msra.mxu0 0.0
        %2478 = vmatprep.subr.mxu0 0.0
        %2479 = vmatpush1.msra.mxu0 0.0
        %2480 = vmatprep.subr.mxu0 0.0
        %2481 = vmatpush1.msra.mxu0 0.0
        %2482 = vmatprep.subr.mxu0 0.0
        %2483 = vmatpush1.msra.mxu0 0.0
        %2484 = vmatprep.subr.mxu0 0.0
        %2485 = vmatpush1.msra.mxu0 0.0
        %2486 = vmatprep.subr.mxu0 0.0
        %2487 = vmatpush1.msra.mxu0 0.0
        %2488 = vmatprep.subr.mxu0 0.0
        %2489 = vmatpush1.msra.mxu0 0.0
        %2490 = vmatprep.subr.mxu0 0.0
        %2491 = vmatpush1.msra.mxu0 0.0
        %2492 = vmatprep.subr.mxu0 0.0
        %2493 = vmatpush1.msra.mxu0 0.0
        %2494 = vmatprep.subr.mxu0 0.0
        %2495 = vmatpush1.msra.mxu0 0.0
        %2496 = vmatprep.subr.mxu0 0.0
        %2497 = vmatpush1.msra.mxu0 0.0
        %2498 = vmatprep.subr.mxu0 0.0
        %2499 = vmatpush1.msra.mxu0 0.0
        %2500 = vmatprep.subr.mxu0 0.0
        %2501 = vmatpush1.msra.mxu0 0.0
        %2502 = vmatprep.subr.mxu0 0.0
        %2503 = vmatpush1.msra.mxu0 0.0
        %2504 = vmatprep.subr.mxu0 0.0
        %2505 = vmatpush1.msra.mxu0 0.0
        %2506 = vmatprep.subr.mxu0 0.0
        %2507 = vmatpush1.msra.mxu0 0.0
        %2508 = vmatprep.subr.mxu0 0.0
        %2509 = vmatpush1.msra.mxu0 0.0
        %2510 = vmatprep.subr.mxu0 0.0
        %2511 = vmatpush1.msra.mxu0 0.0
        %2512 = vmatprep.subr.mxu0 0.0
        %2513 = vmatpush1.msra.mxu0 0.0
        %2514 = vmatprep.subr.mxu0 0.0
        %2515 = vmatpush1.msra.mxu0 0.0
        %2516 = vmatprep.subr.mxu0 0.0
        %2517 = vmatpush1.msra.mxu0 0.0
        %2518 = vmatprep.subr.mxu0 0.0
        %2519 = vmatpush1.msra.mxu0 0.0
        %2520 = vmatprep.subr.mxu0 0.0
        %2521 = vmatpush1.msra.mxu0 0.0
        %2522 = vmatprep.subr.mxu0 0.0
        %2523 = vmatpush1.msra.mxu0 0.0
        %2524 = vmatprep.mubr.f32.mxu0 0.0
        %2525 = vmatmul.mubr.f32.gmra.mrb[0].mxu0 %v1896
        %v2526 = vpop.f32.mrb[0].mxu0
        %v2527 = vadd.f32 0.0, %v2526
        %v2528 = vpop.f32.mrb[0].mxu0
        %2529 = vmatprep.mubr.f32.mxu0 0.0
        %2530 = vmatmul.mubr.f32.gmra.mrb[0].mxu0 %v1899
        %v2531 = vpop.f32.mrb[0].mxu0
        %v2532 = vadd.f32 0.0, %v2531
        %v2533 = vpop.f32.mrb[0].mxu0
        %2534 = vmatprep.mubr.f32.mxu0 0.0
        %2535 = vmatmul.mubr.f32.gmra.mrb[0].mxu0 %v1902
        %v2536 = vpop.f32.mrb[0].mxu0
        %v2537 = vadd.f32 0.0, %v2536
        %v2538 = vpop.f32.mrb[0].mxu0
        %2539 = vmatprep.mubr.f32.mxu0 0.0
        %2540 = vmatmul.mubr.f32.gmra.mrb[0].mxu0 %v1905
        %v2541 = vpop.f32.mrb[0].mxu0
        %v2542 = vadd.f32 0.0, %v2541
        %v2543 = vpop.f32.mrb[0].mxu0
        %2544 = vmatprep.mubr.f32.mxu0 0.0
        %2545 = vmatmul.mubr.f32.gmra.mrb[0].mxu0 %v1908
        %v2546 = vpop.f32.mrb[0].mxu0
        %v2547 = vadd.f32 0.0, %v2546
        %v2548 = vpop.f32.mrb[0].mxu0
        %2549 = vmatprep.mubr.f32.mxu0 0.0
        %2550 = vmatmul.mubr.f32.gmra.mrb[0].mxu0 %v1911
        %v2551 = vpop.f32.mrb[0].mxu0
        %v2552 = vadd.f32 0.0, %v2551
        %v2553 = vpop.f32.mrb[0].mxu0
        %2554 = vmatprep.mubr.f32.mxu0 0.0
        %2555 = vmatmul.mubr.f32.gmra.mrb[0].mxu0 %v1914
        %v2556 = vpop.f32.mrb[0].mxu0
        %v2557 = vadd.f32 0.0, %v2556
        %v2558 = vpop.f32.mrb[0].mxu0
        %2559 = vmatprep.mubr.f32.mxu0 0.0
        %2560 = vmatmul.mubr.f32.gmra.mrb[0].mxu0 %v1917
        %v2561 = vpop.f32.mrb[0].mxu0
        %v2562 = vadd.f32 0.0, %v2561
        %v2563 = vpop.f32.mrb[0].mxu0
        %2564 = vdwg.mxu0
        %2567 = vrot.lane.b32.xlu0 %v2422, 32
        %v2568 = vpop.permute.xlu0 %2567
        %2569 = vrot.lane.b32.xlu0 %v2427, 32
        %v2570 = vpop.permute.xlu0 %2569
        %2575 = vrot.lane.b32.xlu0 %v2527, 64
        %v2576 = vpop.permute.xlu0 %2575
        %2577 = vrot.lane.b32.xlu0 %v2532, 64
        %v2578 = vpop.permute.xlu0 %2577
        %2583 = vrot.lane.b32.xlu0 %v2432, 96
        %v2584 = vpop.permute.xlu0 %2583
        %2585 = vrot.lane.b32.xlu0 %v2437, 96
        %v2586 = vpop.permute.xlu0 %2585
        %2591 = vrot.lane.b32.xlu0 %v2442, 32
        %v2592 = vpop.permute.xlu0 %2591
        %2593 = vrot.lane.b32.xlu0 %v2447, 32
        %v2594 = vpop.permute.xlu0 %2593
        %2599 = vrot.lane.b32.xlu0 %v2547, 64
        %v2600 = vpop.permute.xlu0 %2599
        %2601 = vrot.lane.b32.xlu0 %v2552, 64
        %v2602 = vpop.permute.xlu0 %2601
        %2607 = vrot.lane.b32.xlu0 %v2452, 96
        %v2608 = vpop.permute.xlu0 %2607
        %2609 = vrot.lane.b32.xlu0 %v2457, 96
        %v2610 = vpop.permute.xlu0 %2609
        %v2613 = vsel %vm1043, %v1661, %v2568
        %v2614 = vsel %vm1043, %v1662, %v2570
        %v2615 = vsel %vm1363, %v2613, %v2576
        %v2616 = vsel %vm1363, %v2614, %v2578
        %v2617 = vsel %vm2076, %v2615, %v2584
        %v2618 = vsel %vm2076, %v2616, %v2586
        %v2619 = vsel %vm1043, %v2537, %v2592
        %v2620 = vsel %vm1043, %v2542, %v2594
        %v2621 = vsel %vm1363, %v2619, %v2600
        %v2622 = vsel %vm1363, %v2620, %v2602
        %v2623 = vsel %vm2076, %v2621, %v2608
        %v2624 = vsel %vm2076, %v2622, %v2610
        %2625 = vmatprep.subr.mxu0 0.0
        %2626 = vmatpush1.msra.mxu0 %v1663
        %2627 = vmatprep.subr.mxu0 0.0
        %2628 = vmatpush1.msra.mxu0 %v1664
        %2629 = vmatprep.subr.mxu0 0.0
        %2630 = vmatpush1.msra.mxu0 0.0
        %2631 = vmatprep.subr.mxu0 0.0
        %2632 = vmatpush1.msra.mxu0 0.0
        %2633 = vmatprep.subr.mxu0 0.0
        %2634 = vmatpush1.msra.mxu0 0.0
        %2635 = vmatprep.subr.mxu0 0.0
        %2636 = vmatpush1.msra.mxu0 0.0
        %2637 = vmatprep.subr.mxu0 0.0
        %2638 = vmatpush1.msra.mxu0 0.0
        %2639 = vmatprep.subr.mxu0 0.0
        %2640 = vmatpush1.msra.mxu0 0.0
        %2641 = vmatprep.subr.mxu0 0.0
        %2642 = vmatpush1.msra.mxu0 0.0
        %2643 = vmatprep.subr.mxu0 0.0
        %2644 = vmatpush1.msra.mxu0 0.0
        %2645 = vmatprep.subr.mxu0 0.0
        %2646 = vmatpush1.msra.mxu0 0.0
        %2647 = vmatprep.subr.mxu0 0.0
        %2648 = vmatpush1.msra.mxu0 0.0
        %2649 = vmatprep.subr.mxu0 0.0
        %2650 = vmatpush1.msra.mxu0 0.0
        %2651 = vmatprep.subr.mxu0 0.0
        %2652 = vmatpush1.msra.mxu0 0.0
        %2653 = vmatprep.subr.mxu0 0.0
        %2654 = vmatpush1.msra.mxu0 0.0
        %2655 = vmatprep.subr.mxu0 0.0
        %2656 = vmatpush1.msra.mxu0 0.0
        %2657 = vmatprep.subr.mxu0 0.0
        %2658 = vmatpush1.msra.mxu0 0.0
        %2659 = vmatprep.subr.mxu0 0.0
        %2660 = vmatpush1.msra.mxu0 0.0
        %2661 = vmatprep.subr.mxu0 0.0
        %2662 = vmatpush1.msra.mxu0 0.0
        %2663 = vmatprep.subr.mxu0 0.0
        %2664 = vmatpush1.msra.mxu0 0.0
        %2665 = vmatprep.subr.mxu0 0.0
        %2666 = vmatpush1.msra.mxu0 0.0
        %2667 = vmatprep.subr.mxu0 0.0
        %2668 = vmatpush1.msra.mxu0 0.0
        %2669 = vmatprep.subr.mxu0 0.0
        %2670 = vmatpush1.msra.mxu0 0.0
        %2671 = vmatprep.subr.mxu0 0.0
        %2672 = vmatpush1.msra.mxu0 0.0
        %2673 = vmatprep.subr.mxu0 0.0
        %2674 = vmatpush1.msra.mxu0 0.0
        %2675 = vmatprep.subr.mxu0 0.0
        %2676 = vmatpush1.msra.mxu0 0.0
        %2677 = vmatprep.subr.mxu0 0.0
        %2678 = vmatpush1.msra.mxu0 0.0
        %2679 = vmatprep.subr.mxu0 0.0
        %2680 = vmatpush1.msra.mxu0 0.0
        %2681 = vmatprep.subr.mxu0 0.0
        %2682 = vmatpush1.msra.mxu0 0.0
        %2683 = vmatprep.subr.mxu0 0.0
        %2684 = vmatpush1.msra.mxu0 0.0
        %2685 = vmatprep.subr.mxu0 0.0
        %2686 = vmatpush1.msra.mxu0 0.0
        %2687 = vmatprep.subr.mxu0 0.0
        %2688 = vmatpush1.msra.mxu0 0.0
        %2689 = vmatprep.mubr.f32.mxu0 0.0
        %2690 = vmatmul.mubr.f32.gmra.mrb[0].mxu0 %v1773
        %v2691 = vpop.f32.mrb[0].mxu0
        %v2692 = vadd.f32 0.0, %v2691
        %v2693 = vpop.f32.mrb[0].mxu0
        %2694 = vmatprep.mubr.f32.mxu0 0.0
        %2695 = vmatmul.mubr.f32.gmra.mrb[0].mxu0 %v1776
        %v2696 = vpop.f32.mrb[0].mxu0
        %v2697 = vadd.f32 0.0, %v2696
        %v2698 = vpop.f32.mrb[0].mxu0
        %2699 = vmatprep.mubr.f32.mxu0 0.0
        %2700 = vmatmul.mubr.f32.gmra.mrb[0].mxu0 %v1778
        %v2701 = vpop.f32.mrb[0].mxu0
        %v2702 = vadd.f32 0.0, %v2701
        %v2703 = vpop.f32.mrb[0].mxu0
        %2704 = vmatprep.mubr.f32.mxu0 0.0
        %2705 = vmatmul.mubr.f32.gmra.mrb[0].mxu0 %v1780
        %v2706 = vpop.f32.mrb[0].mxu0
        %v2707 = vadd.f32 0.0, %v2706
        %v2708 = vpop.f32.mrb[0].mxu0
        %2709 = vmatprep.mubr.f32.mxu0 0.0
        %2710 = vmatmul.mubr.f32.gmra.mrb[0].mxu0 %v1782
        %v2711 = vpop.f32.mrb[0].mxu0
        %v2712 = vadd.f32 0.0, %v2711
        %v2713 = vpop.f32.mrb[0].mxu0
        %2714 = vmatprep.mubr.f32.mxu0 0.0
        %2715 = vmatmul.mubr.f32.gmra.mrb[0].mxu0 %v1784
        %v2716 = vpop.f32.mrb[0].mxu0
        %v2717 = vadd.f32 0.0, %v2716
        %v2718 = vpop.f32.mrb[0].mxu0
        %2719 = vmatprep.mubr.f32.mxu0 0.0
        %2720 = vmatmul.mubr.f32.gmra.mrb[0].mxu0 %v1786
        %v2721 = vpop.f32.mrb[0].mxu0
        %v2722 = vadd.f32 0.0, %v2721
        %v2723 = vpop.f32.mrb[0].mxu0
        %2724 = vmatprep.mubr.f32.mxu0 0.0
        %2725 = vmatmul.mubr.f32.gmra.mrb[0].mxu0 %v1788
        %v2726 = vpop.f32.mrb[0].mxu0
        %v2727 = vadd.f32 0.0, %v2726
        %v2728 = vpop.f32.mrb[0].mxu0
        %2729 = vdwg.mxu0
        %2730 = vmatprep.subr.mxu0 0.0
        %2731 = vmatpush1.msra.mxu0 %v2692
        %2732 = vmatprep.subr.mxu0 0.0
        %2733 = vmatpush1.msra.mxu0 %v2697
        %2734 = vmatprep.subr.mxu0 0.0
        %2735 = vmatpush1.msra.mxu0 %v2702
        %2736 = vmatprep.subr.mxu0 0.0
        %2737 = vmatpush1.msra.mxu0 %v2707
        %2738 = vmatprep.subr.mxu0 0.0
        %2739 = vmatpush1.msra.mxu0 %v2712
        %2740 = vmatprep.subr.mxu0 0.0
        %2741 = vmatpush1.msra.mxu0 %v2717
        %2742 = vmatprep.subr.mxu0 0.0
        %2743 = vmatpush1.msra.mxu0 %v2722
        %2744 = vmatprep.subr.mxu0 0.0
        %2745 = vmatpush1.msra.mxu0 %v2727
        %2746 = vmatprep.subr.mxu0 0.0
        %2747 = vmatpush1.msra.mxu0 0.0
        %2748 = vmatprep.subr.mxu0 0.0
        %2749 = vmatpush1.msra.mxu0 0.0
        %2750 = vmatprep.subr.mxu0 0.0
        %2751 = vmatpush1.msra.mxu0 0.0
        %2752 = vmatprep.subr.mxu0 0.0
        %2753 = vmatpush1.msra.mxu0 0.0
        %2754 = vmatprep.subr.mxu0 0.0
        %2755 = vmatpush1.msra.mxu0 0.0
        %2756 = vmatprep.subr.mxu0 0.0
        %2757 = vmatpush1.msra.mxu0 0.0
        %2758 = vmatprep.subr.mxu0 0.0
        %2759 = vmatpush1.msra.mxu0 0.0
        %2760 = vmatprep.subr.mxu0 0.0
        %2761 = vmatpush1.msra.mxu0 0.0
        %2762 = vmatprep.subr.mxu0 0.0
        %2763 = vmatpush1.msra.mxu0 0.0
        %2764 = vmatprep.subr.mxu0 0.0
        %2765 = vmatpush1.msra.mxu0 0.0
        %2766 = vmatprep.subr.mxu0 0.0
        %2767 = vmatpush1.msra.mxu0 0.0
        %2768 = vmatprep.subr.mxu0 0.0
        %2769 = vmatpush1.msra.mxu0 0.0
        %2770 = vmatprep.subr.mxu0 0.0
        %2771 = vmatpush1.msra.mxu0 0.0
        %2772 = vmatprep.subr.mxu0 0.0
        %2773 = vmatpush1.msra.mxu0 0.0
        %2774 = vmatprep.subr.mxu0 0.0
        %2775 = vmatpush1.msra.mxu0 0.0
        %2776 = vmatprep.subr.mxu0 0.0
        %2777 = vmatpush1.msra.mxu0 0.0
        %2778 = vmatprep.subr.mxu0 0.0
        %2779 = vmatpush1.msra.mxu0 0.0
        %2780 = vmatprep.subr.mxu0 0.0
        %2781 = vmatpush1.msra.mxu0 0.0
        %2782 = vmatprep.subr.mxu0 0.0
        %2783 = vmatpush1.msra.mxu0 0.0
        %2784 = vmatprep.subr.mxu0 0.0
        %2785 = vmatpush1.msra.mxu0 0.0
        %2786 = vmatprep.subr.mxu0 0.0
        %2787 = vmatpush1.msra.mxu0 0.0
        %2788 = vmatprep.subr.mxu0 0.0
        %2789 = vmatpush1.msra.mxu0 0.0
        %2790 = vmatprep.subr.mxu0 0.0
        %2791 = vmatpush1.msra.mxu0 0.0
        %2792 = vmatprep.subr.mxu0 0.0
        %2793 = vmatpush1.msra.mxu0 0.0
        %2794 = vmatprep.mubr.f32.mxu0 0.0
        %2795 = vmatmul.mubr.f32.gmra.mrb[0].mxu0 %v1896
        %v2796 = vpop.f32.mrb[0].mxu0
        %v2797 = vadd.f32 0.0, %v2796
        %v2798 = vpop.f32.mrb[0].mxu0
        %2799 = vmatprep.mubr.f32.mxu0 0.0
        %2800 = vmatmul.mubr.f32.gmra.mrb[0].mxu0 %v1899
        %v2801 = vpop.f32.mrb[0].mxu0
        %v2802 = vadd.f32 0.0, %v2801
        %v2803 = vpop.f32.mrb[0].mxu0
        %2804 = vmatprep.mubr.f32.mxu0 0.0
        %2805 = vmatmul.mubr.f32.gmra.mrb[0].mxu0 %v1902
        %v2806 = vpop.f32.mrb[0].mxu0
        %v2807 = vadd.f32 0.0, %v2806
        %v2808 = vpop.f32.mrb[0].mxu0
        %2809 = vmatprep.mubr.f32.mxu0 0.0
        %2810 = vmatmul.mubr.f32.gmra.mrb[0].mxu0 %v1905
        %v2811 = vpop.f32.mrb[0].mxu0
        %v2812 = vadd.f32 0.0, %v2811
        %v2813 = vpop.f32.mrb[0].mxu0
        %2814 = vmatprep.mubr.f32.mxu0 0.0
        %2815 = vmatmul.mubr.f32.gmra.mrb[0].mxu0 %v1908
        %v2816 = vpop.f32.mrb[0].mxu0
        %v2817 = vadd.f32 0.0, %v2816
        %v2818 = vpop.f32.mrb[0].mxu0
        %2819 = vmatprep.mubr.f32.mxu0 0.0
        %2820 = vmatmul.mubr.f32.gmra.mrb[0].mxu0 %v1911
        %v2821 = vpop.f32.mrb[0].mxu0
        %v2822 = vadd.f32 0.0, %v2821
        %v2823 = vpop.f32.mrb[0].mxu0
        %2824 = vmatprep.mubr.f32.mxu0 0.0
        %2825 = vmatmul.mubr.f32.gmra.mrb[0].mxu0 %v1914
        %v2826 = vpop.f32.mrb[0].mxu0
        %v2827 = vadd.f32 0.0, %v2826
        %v2828 = vpop.f32.mrb[0].mxu0
        %2829 = vmatprep.mubr.f32.mxu0 0.0
        %2830 = vmatmul.mubr.f32.gmra.mrb[0].mxu0 %v1917
        %v2831 = vpop.f32.mrb[0].mxu0
        %v2832 = vadd.f32 0.0, %v2831
        %v2833 = vpop.f32.mrb[0].mxu0
        %2834 = vdwg.mxu0
        %2837 = vrot.lane.b32.xlu0 %v2692, 32
        %v2838 = vpop.permute.xlu0 %2837
        %2839 = vrot.lane.b32.xlu0 %v2697, 32
        %v2840 = vpop.permute.xlu0 %2839
        %2845 = vrot.lane.b32.xlu0 %v2797, 64
        %v2846 = vpop.permute.xlu0 %2845
        %2847 = vrot.lane.b32.xlu0 %v2802, 64
        %v2848 = vpop.permute.xlu0 %2847
        %2853 = vrot.lane.b32.xlu0 %v2702, 96
        %v2854 = vpop.permute.xlu0 %2853
        %2855 = vrot.lane.b32.xlu0 %v2707, 96
        %v2856 = vpop.permute.xlu0 %2855
        %2861 = vrot.lane.b32.xlu0 %v2712, 32
        %v2862 = vpop.permute.xlu0 %2861
        %2863 = vrot.lane.b32.xlu0 %v2717, 32
        %v2864 = vpop.permute.xlu0 %2863
        %2869 = vrot.lane.b32.xlu0 %v2817, 64
        %v2870 = vpop.permute.xlu0 %2869
        %2871 = vrot.lane.b32.xlu0 %v2822, 64
        %v2872 = vpop.permute.xlu0 %2871
        %2877 = vrot.lane.b32.xlu0 %v2722, 96
        %v2878 = vpop.permute.xlu0 %2877
        %2879 = vrot.lane.b32.xlu0 %v2727, 96
        %v2880 = vpop.permute.xlu0 %2879
        %v2883 = vsel %vm1043, %v1663, %v2838
        %v2884 = vsel %vm1043, %v1664, %v2840
        %v2885 = vsel %vm1363, %v2883, %v2846
        %v2886 = vsel %vm1363, %v2884, %v2848
        %v2887 = vsel %vm2076, %v2885, %v2854
        %v2888 = vsel %vm2076, %v2886, %v2856
        %v2889 = vsel %vm1043, %v2807, %v2862
        %v2890 = vsel %vm1043, %v2812, %v2864
        %v2891 = vsel %vm1363, %v2889, %v2870
        %v2892 = vsel %vm1363, %v2890, %v2872
        %v2893 = vsel %vm2076, %v2891, %v2878
        %v2894 = vsel %vm2076, %v2892, %v2880
        %2895 = vmatprep.subr.mxu0 0.0
        %2896 = vmatpush1.msra.mxu0 %v1665
        %2897 = vmatprep.subr.mxu0 0.0
        %2898 = vmatpush1.msra.mxu0 %v1666
        %2899 = vmatprep.subr.mxu0 0.0
        %2900 = vmatpush1.msra.mxu0 0.0
        %2901 = vmatprep.subr.mxu0 0.0
        %2902 = vmatpush1.msra.mxu0 0.0
        %2903 = vmatprep.subr.mxu0 0.0
        %2904 = vmatpush1.msra.mxu0 0.0
        %2905 = vmatprep.subr.mxu0 0.0
        %2906 = vmatpush1.msra.mxu0 0.0
        %2907 = vmatprep.subr.mxu0 0.0
        %2908 = vmatpush1.msra.mxu0 0.0
        %2909 = vmatprep.subr.mxu0 0.0
        %2910 = vmatpush1.msra.mxu0 0.0
        %2911 = vmatprep.subr.mxu0 0.0
        %2912 = vmatpush1.msra.mxu0 0.0
        %2913 = vmatprep.subr.mxu0 0.0
        %2914 = vmatpush1.msra.mxu0 0.0
        %2915 = vmatprep.subr.mxu0 0.0
        %2916 = vmatpush1.msra.mxu0 0.0
        %2917 = vmatprep.subr.mxu0 0.0
        %2918 = vmatpush1.msra.mxu0 0.0
        %2919 = vmatprep.subr.mxu0 0.0
        %2920 = vmatpush1.msra.mxu0 0.0
        %2921 = vmatprep.subr.mxu0 0.0
        %2922 = vmatpush1.msra.mxu0 0.0
        %2923 = vmatprep.subr.mxu0 0.0
        %2924 = vmatpush1.msra.mxu0 0.0
        %2925 = vmatprep.subr.mxu0 0.0
        %2926 = vmatpush1.msra.mxu0 0.0
        %2927 = vmatprep.subr.mxu0 0.0
        %2928 = vmatpush1.msra.mxu0 0.0
        %2929 = vmatprep.subr.mxu0 0.0
        %2930 = vmatpush1.msra.mxu0 0.0
        %2931 = vmatprep.subr.mxu0 0.0
        %2932 = vmatpush1.msra.mxu0 0.0
        %2933 = vmatprep.subr.mxu0 0.0
        %2934 = vmatpush1.msra.mxu0 0.0
        %2935 = vmatprep.subr.mxu0 0.0
        %2936 = vmatpush1.msra.mxu0 0.0
        %2937 = vmatprep.subr.mxu0 0.0
        %2938 = vmatpush1.msra.mxu0 0.0
        %2939 = vmatprep.subr.mxu0 0.0
        %2940 = vmatpush1.msra.mxu0 0.0
        %2941 = vmatprep.subr.mxu0 0.0
        %2942 = vmatpush1.msra.mxu0 0.0
        %2943 = vmatprep.subr.mxu0 0.0
        %2944 = vmatpush1.msra.mxu0 0.0
        %2945 = vmatprep.subr.mxu0 0.0
        %2946 = vmatpush1.msra.mxu0 0.0
        %2947 = vmatprep.subr.mxu0 0.0
        %2948 = vmatpush1.msra.mxu0 0.0
        %2949 = vmatprep.subr.mxu0 0.0
        %2950 = vmatpush1.msra.mxu0 0.0
        %2951 = vmatprep.subr.mxu0 0.0
        %2952 = vmatpush1.msra.mxu0 0.0
        %2953 = vmatprep.subr.mxu0 0.0
        %2954 = vmatpush1.msra.mxu0 0.0
        %2955 = vmatprep.subr.mxu0 0.0
        %2956 = vmatpush1.msra.mxu0 0.0
        %2957 = vmatprep.subr.mxu0 0.0
        %2958 = vmatpush1.msra.mxu0 0.0
        %2959 = vmatprep.mubr.f32.mxu0 0.0
        %2960 = vmatmul.mubr.f32.gmra.mrb[0].mxu0 %v1773
        %v2961 = vpop.f32.mrb[0].mxu0
        %v2962 = vadd.f32 0.0, %v2961
        %v2963 = vpop.f32.mrb[0].mxu0
        %2964 = vmatprep.mubr.f32.mxu0 0.0
        %2965 = vmatmul.mubr.f32.gmra.mrb[0].mxu0 %v1776
        %v2966 = vpop.f32.mrb[0].mxu0
        %v2967 = vadd.f32 0.0, %v2966
        %v2968 = vpop.f32.mrb[0].mxu0
        %2969 = vmatprep.mubr.f32.mxu0 0.0
        %2970 = vmatmul.mubr.f32.gmra.mrb[0].mxu0 %v1778
        %v2971 = vpop.f32.mrb[0].mxu0
        %v2972 = vadd.f32 0.0, %v2971
        %v2973 = vpop.f32.mrb[0].mxu0
        %2974 = vmatprep.mubr.f32.mxu0 0.0
        %2975 = vmatmul.mubr.f32.gmra.mrb[0].mxu0 %v1780
        %v2976 = vpop.f32.mrb[0].mxu0
        %v2977 = vadd.f32 0.0, %v2976
        %v2978 = vpop.f32.mrb[0].mxu0
        %2979 = vmatprep.mubr.f32.mxu0 0.0
        %2980 = vmatmul.mubr.f32.gmra.mrb[0].mxu0 %v1782
        %v2981 = vpop.f32.mrb[0].mxu0
        %v2982 = vadd.f32 0.0, %v2981
        %v2983 = vpop.f32.mrb[0].mxu0
        %2984 = vmatprep.mubr.f32.mxu0 0.0
        %2985 = vmatmul.mubr.f32.gmra.mrb[0].mxu0 %v1784
        %v2986 = vpop.f32.mrb[0].mxu0
        %v2987 = vadd.f32 0.0, %v2986
        %v2988 = vpop.f32.mrb[0].mxu0
        %2989 = vmatprep.mubr.f32.mxu0 0.0
        %2990 = vmatmul.mubr.f32.gmra.mrb[0].mxu0 %v1786
        %v2991 = vpop.f32.mrb[0].mxu0
        %v2992 = vadd.f32 0.0, %v2991
        %v2993 = vpop.f32.mrb[0].mxu0
        %2994 = vmatprep.mubr.f32.mxu0 0.0
        %2995 = vmatmul.mubr.f32.gmra.mrb[0].mxu0 %v1788
        %v2996 = vpop.f32.mrb[0].mxu0
        %v2997 = vadd.f32 0.0, %v2996
        %v2998 = vpop.f32.mrb[0].mxu0
        %2999 = vdwg.mxu0
        %3000 = vmatprep.subr.mxu0 0.0
        %3001 = vmatpush1.msra.mxu0 %v2962
        %3002 = vmatprep.subr.mxu0 0.0
        %3003 = vmatpush1.msra.mxu0 %v2967
        %3004 = vmatprep.subr.mxu0 0.0
        %3005 = vmatpush1.msra.mxu0 %v2972
        %3006 = vmatprep.subr.mxu0 0.0
        %3007 = vmatpush1.msra.mxu0 %v2977
        %3008 = vmatprep.subr.mxu0 0.0
        %3009 = vmatpush1.msra.mxu0 %v2982
        %3010 = vmatprep.subr.mxu0 0.0
        %3011 = vmatpush1.msra.mxu0 %v2987
        %3012 = vmatprep.subr.mxu0 0.0
        %3013 = vmatpush1.msra.mxu0 %v2992
        %3014 = vmatprep.subr.mxu0 0.0
        %3015 = vmatpush1.msra.mxu0 %v2997
        %3016 = vmatprep.subr.mxu0 0.0
        %3017 = vmatpush1.msra.mxu0 0.0
        %3018 = vmatprep.subr.mxu0 0.0
        %3019 = vmatpush1.msra.mxu0 0.0
        %3020 = vmatprep.subr.mxu0 0.0
        %3021 = vmatpush1.msra.mxu0 0.0
        %3022 = vmatprep.subr.mxu0 0.0
        %3023 = vmatpush1.msra.mxu0 0.0
        %3024 = vmatprep.subr.mxu0 0.0
        %3025 = vmatpush1.msra.mxu0 0.0
        %3026 = vmatprep.subr.mxu0 0.0
        %3027 = vmatpush1.msra.mxu0 0.0
        %3028 = vmatprep.subr.mxu0 0.0
        %3029 = vmatpush1.msra.mxu0 0.0
        %3030 = vmatprep.subr.mxu0 0.0
        %3031 = vmatpush1.msra.mxu0 0.0
        %3032 = vmatprep.subr.mxu0 0.0
        %3033 = vmatpush1.msra.mxu0 0.0
        %3034 = vmatprep.subr.mxu0 0.0
        %3035 = vmatpush1.msra.mxu0 0.0
        %3036 = vmatprep.subr.mxu0 0.0
        %3037 = vmatpush1.msra.mxu0 0.0
        %3038 = vmatprep.subr.mxu0 0.0
        %3039 = vmatpush1.msra.mxu0 0.0
        %3040 = vmatprep.subr.mxu0 0.0
        %3041 = vmatpush1.msra.mxu0 0.0
        %3042 = vmatprep.subr.mxu0 0.0
        %3043 = vmatpush1.msra.mxu0 0.0
        %3044 = vmatprep.subr.mxu0 0.0
        %3045 = vmatpush1.msra.mxu0 0.0
        %3046 = vmatprep.subr.mxu0 0.0
        %3047 = vmatpush1.msra.mxu0 0.0
        %3048 = vmatprep.subr.mxu0 0.0
        %3049 = vmatpush1.msra.mxu0 0.0
        %3050 = vmatprep.subr.mxu0 0.0
        %3051 = vmatpush1.msra.mxu0 0.0
        %3052 = vmatprep.subr.mxu0 0.0
        %3053 = vmatpush1.msra.mxu0 0.0
        %3054 = vmatprep.subr.mxu0 0.0
        %3055 = vmatpush1.msra.mxu0 0.0
        %3056 = vmatprep.subr.mxu0 0.0
        %3057 = vmatpush1.msra.mxu0 0.0
        %3058 = vmatprep.subr.mxu0 0.0
        %3059 = vmatpush1.msra.mxu0 0.0
        %3060 = vmatprep.subr.mxu0 0.0
        %3061 = vmatpush1.msra.mxu0 0.0
        %3062 = vmatprep.subr.mxu0 0.0
        %3063 = vmatpush1.msra.mxu0 0.0
        %3064 = vmatprep.mubr.f32.mxu0 0.0
        %3065 = vmatmul.mubr.f32.gmra.mrb[0].mxu0 %v1896
        %v3066 = vpop.f32.mrb[0].mxu0
        %v3067 = vadd.f32 0.0, %v3066
        %v3068 = vpop.f32.mrb[0].mxu0
        %3069 = vmatprep.mubr.f32.mxu0 0.0
        %3070 = vmatmul.mubr.f32.gmra.mrb[0].mxu0 %v1899
        %v3071 = vpop.f32.mrb[0].mxu0
        %v3072 = vadd.f32 0.0, %v3071
        %v3073 = vpop.f32.mrb[0].mxu0
        %3074 = vmatprep.mubr.f32.mxu0 0.0
        %3075 = vmatmul.mubr.f32.gmra.mrb[0].mxu0 %v1902
        %v3076 = vpop.f32.mrb[0].mxu0
        %v3077 = vadd.f32 0.0, %v3076
        %v3078 = vpop.f32.mrb[0].mxu0
        %3079 = vmatprep.mubr.f32.mxu0 0.0
        %3080 = vmatmul.mubr.f32.gmra.mrb[0].mxu0 %v1905
        %v3081 = vpop.f32.mrb[0].mxu0
        %v3082 = vadd.f32 0.0, %v3081
        %v3083 = vpop.f32.mrb[0].mxu0
        %3084 = vmatprep.mubr.f32.mxu0 0.0
        %3085 = vmatmul.mubr.f32.gmra.mrb[0].mxu0 %v1908
        %v3086 = vpop.f32.mrb[0].mxu0
        %v3087 = vadd.f32 0.0, %v3086
        %v3088 = vpop.f32.mrb[0].mxu0
        %3089 = vmatprep.mubr.f32.mxu0 0.0
        %3090 = vmatmul.mubr.f32.gmra.mrb[0].mxu0 %v1911
        %v3091 = vpop.f32.mrb[0].mxu0
        %v3092 = vadd.f32 0.0, %v3091
        %v3093 = vpop.f32.mrb[0].mxu0
        %3094 = vmatprep.mubr.f32.mxu0 0.0
        %3095 = vmatmul.mubr.f32.gmra.mrb[0].mxu0 %v1914
        %v3096 = vpop.f32.mrb[0].mxu0
        %v3097 = vadd.f32 0.0, %v3096
        %v3098 = vpop.f32.mrb[0].mxu0
        %3099 = vmatprep.mubr.f32.mxu0 0.0
        %3100 = vmatmul.mubr.f32.gmra.mrb[0].mxu0 %v1917
        %v3101 = vpop.f32.mrb[0].mxu0
        %v3102 = vadd.f32 0.0, %v3101
        %v3103 = vpop.f32.mrb[0].mxu0
        %3104 = vdwg.mxu0
        %3107 = vrot.lane.b32.xlu0 %v2962, 32
        %v3108 = vpop.permute.xlu0 %3107
        %3109 = vrot.lane.b32.xlu0 %v2967, 32
        %v3110 = vpop.permute.xlu0 %3109
        %3115 = vrot.lane.b32.xlu0 %v3067, 64
        %v3116 = vpop.permute.xlu0 %3115
        %3117 = vrot.lane.b32.xlu0 %v3072, 64
        %v3118 = vpop.permute.xlu0 %3117
        %3123 = vrot.lane.b32.xlu0 %v2972, 96
        %v3124 = vpop.permute.xlu0 %3123
        %3125 = vrot.lane.b32.xlu0 %v2977, 96
        %v3126 = vpop.permute.xlu0 %3125
        %3131 = vrot.lane.b32.xlu0 %v2982, 32
        %v3132 = vpop.permute.xlu0 %3131
        %3133 = vrot.lane.b32.xlu0 %v2987, 32
        %v3134 = vpop.permute.xlu0 %3133
        %3139 = vrot.lane.b32.xlu0 %v3087, 64
        %v3140 = vpop.permute.xlu0 %3139
        %3141 = vrot.lane.b32.xlu0 %v3092, 64
        %v3142 = vpop.permute.xlu0 %3141
        %3147 = vrot.lane.b32.xlu0 %v2992, 96
        %v3148 = vpop.permute.xlu0 %3147
        %3149 = vrot.lane.b32.xlu0 %v2997, 96
        %v3150 = vpop.permute.xlu0 %3149
        %v3153 = vsel %vm1043, %v1665, %v3108
        %v3154 = vsel %vm1043, %v1666, %v3110
        %v3155 = vsel %vm1363, %v3153, %v3116
        %v3156 = vsel %vm1363, %v3154, %v3118
        %v3157 = vsel %vm2076, %v3155, %v3124
        %v3158 = vsel %vm2076, %v3156, %v3126
        %v3159 = vsel %vm1043, %v3077, %v3132
        %v3160 = vsel %vm1043, %v3082, %v3134
        %v3161 = vsel %vm1363, %v3159, %v3140
        %v3162 = vsel %vm1363, %v3160, %v3142
        %v3163 = vsel %vm2076, %v3161, %v3148
        %v3164 = vsel %vm2076, %v3162, %v3150
        %3165 = vmatprep.subr.mxu0 0.0
        %3166 = vmatpush1.msra.mxu0 %v1667
        %3167 = vmatprep.subr.mxu0 0.0
        %3168 = vmatpush1.msra.mxu0 %v1668
        %3169 = vmatprep.subr.mxu0 0.0
        %3170 = vmatpush1.msra.mxu0 0.0
        %3171 = vmatprep.subr.mxu0 0.0
        %3172 = vmatpush1.msra.mxu0 0.0
        %3173 = vmatprep.subr.mxu0 0.0
        %3174 = vmatpush1.msra.mxu0 0.0
        %3175 = vmatprep.subr.mxu0 0.0
        %3176 = vmatpush1.msra.mxu0 0.0
        %3177 = vmatprep.subr.mxu0 0.0
        %3178 = vmatpush1.msra.mxu0 0.0
        %3179 = vmatprep.subr.mxu0 0.0
        %3180 = vmatpush1.msra.mxu0 0.0
        %3181 = vmatprep.subr.mxu0 0.0
        %3182 = vmatpush1.msra.mxu0 0.0
        %3183 = vmatprep.subr.mxu0 0.0
        %3184 = vmatpush1.msra.mxu0 0.0
        %3185 = vmatprep.subr.mxu0 0.0
        %3186 = vmatpush1.msra.mxu0 0.0
        %3187 = vmatprep.subr.mxu0 0.0
        %3188 = vmatpush1.msra.mxu0 0.0
        %3189 = vmatprep.subr.mxu0 0.0
        %3190 = vmatpush1.msra.mxu0 0.0
        %3191 = vmatprep.subr.mxu0 0.0
        %3192 = vmatpush1.msra.mxu0 0.0
        %3193 = vmatprep.subr.mxu0 0.0
        %3194 = vmatpush1.msra.mxu0 0.0
        %3195 = vmatprep.subr.mxu0 0.0
        %3196 = vmatpush1.msra.mxu0 0.0
        %3197 = vmatprep.subr.mxu0 0.0
        %3198 = vmatpush1.msra.mxu0 0.0
        %3199 = vmatprep.subr.mxu0 0.0
        %3200 = vmatpush1.msra.mxu0 0.0
        %3201 = vmatprep.subr.mxu0 0.0
        %3202 = vmatpush1.msra.mxu0 0.0
        %3203 = vmatprep.subr.mxu0 0.0
        %3204 = vmatpush1.msra.mxu0 0.0
        %3205 = vmatprep.subr.mxu0 0.0
        %3206 = vmatpush1.msra.mxu0 0.0
        %3207 = vmatprep.subr.mxu0 0.0
        %3208 = vmatpush1.msra.mxu0 0.0
        %3209 = vmatprep.subr.mxu0 0.0
        %3210 = vmatpush1.msra.mxu0 0.0
        %3211 = vmatprep.subr.mxu0 0.0
        %3212 = vmatpush1.msra.mxu0 0.0
        %3213 = vmatprep.subr.mxu0 0.0
        %3214 = vmatpush1.msra.mxu0 0.0
        %3215 = vmatprep.subr.mxu0 0.0
        %3216 = vmatpush1.msra.mxu0 0.0
        %3217 = vmatprep.subr.mxu0 0.0
        %3218 = vmatpush1.msra.mxu0 0.0
        %3219 = vmatprep.subr.mxu0 0.0
        %3220 = vmatpush1.msra.mxu0 0.0
        %3221 = vmatprep.subr.mxu0 0.0
        %3222 = vmatpush1.msra.mxu0 0.0
        %3223 = vmatprep.subr.mxu0 0.0
        %3224 = vmatpush1.msra.mxu0 0.0
        %3225 = vmatprep.subr.mxu0 0.0
        %3226 = vmatpush1.msra.mxu0 0.0
        %3227 = vmatprep.subr.mxu0 0.0
        %3228 = vmatpush1.msra.mxu0 0.0
        %3229 = vmatprep.mubr.f32.mxu0 0.0
        %3230 = vmatmul.mubr.f32.gmra.mrb[0].mxu0 %v1773
        %v3231 = vpop.f32.mrb[0].mxu0
        %v3232 = vadd.f32 0.0, %v3231
        %v3233 = vpop.f32.mrb[0].mxu0
        %3234 = vmatprep.mubr.f32.mxu0 0.0
        %3235 = vmatmul.mubr.f32.gmra.mrb[0].mxu0 %v1776
        %v3236 = vpop.f32.mrb[0].mxu0
        %v3237 = vadd.f32 0.0, %v3236
        %v3238 = vpop.f32.mrb[0].mxu0
        %3239 = vmatprep.mubr.f32.mxu0 0.0
        %3240 = vmatmul.mubr.f32.gmra.mrb[0].mxu0 %v1778
        %v3241 = vpop.f32.mrb[0].mxu0
        %v3242 = vadd.f32 0.0, %v3241
        %v3243 = vpop.f32.mrb[0].mxu0
        %3244 = vmatprep.mubr.f32.mxu0 0.0
        %3245 = vmatmul.mubr.f32.gmra.mrb[0].mxu0 %v1780
        %v3246 = vpop.f32.mrb[0].mxu0
        %v3247 = vadd.f32 0.0, %v3246
        %v3248 = vpop.f32.mrb[0].mxu0
        %3249 = vmatprep.mubr.f32.mxu0 0.0
        %3250 = vmatmul.mubr.f32.gmra.mrb[0].mxu0 %v1782
        %v3251 = vpop.f32.mrb[0].mxu0
        %v3252 = vadd.f32 0.0, %v3251
        %v3253 = vpop.f32.mrb[0].mxu0
        %3254 = vmatprep.mubr.f32.mxu0 0.0
        %3255 = vmatmul.mubr.f32.gmra.mrb[0].mxu0 %v1784
        %v3256 = vpop.f32.mrb[0].mxu0
        %v3257 = vadd.f32 0.0, %v3256
        %v3258 = vpop.f32.mrb[0].mxu0
        %3259 = vmatprep.mubr.f32.mxu0 0.0
        %3260 = vmatmul.mubr.f32.gmra.mrb[0].mxu0 %v1786
        %v3261 = vpop.f32.mrb[0].mxu0
        %v3262 = vadd.f32 0.0, %v3261
        %v3263 = vpop.f32.mrb[0].mxu0
        %3264 = vmatprep.mubr.f32.mxu0 0.0
        %3265 = vmatmul.mubr.f32.gmra.mrb[0].mxu0 %v1788
        %v3266 = vpop.f32.mrb[0].mxu0
        %v3267 = vadd.f32 0.0, %v3266
        %v3268 = vpop.f32.mrb[0].mxu0
        %3269 = vdwg.mxu0
        %3270 = vmatprep.subr.mxu0 0.0
        %3271 = vmatpush1.msra.mxu0 %v3232
        %3272 = vmatprep.subr.mxu0 0.0
        %3273 = vmatpush1.msra.mxu0 %v3237
        %3274 = vmatprep.subr.mxu0 0.0
        %3275 = vmatpush1.msra.mxu0 %v3242
        %3276 = vmatprep.subr.mxu0 0.0
        %3277 = vmatpush1.msra.mxu0 %v3247
        %3278 = vmatprep.subr.mxu0 0.0
        %3279 = vmatpush1.msra.mxu0 %v3252
        %3280 = vmatprep.subr.mxu0 0.0
        %3281 = vmatpush1.msra.mxu0 %v3257
        %3282 = vmatprep.subr.mxu0 0.0
        %3283 = vmatpush1.msra.mxu0 %v3262
        %3284 = vmatprep.subr.mxu0 0.0
        %3285 = vmatpush1.msra.mxu0 %v3267
        %3286 = vmatprep.subr.mxu0 0.0
        %3287 = vmatpush1.msra.mxu0 0.0
        %3288 = vmatprep.subr.mxu0 0.0
        %3289 = vmatpush1.msra.mxu0 0.0
        %3290 = vmatprep.subr.mxu0 0.0
        %3291 = vmatpush1.msra.mxu0 0.0
        %3292 = vmatprep.subr.mxu0 0.0
        %3293 = vmatpush1.msra.mxu0 0.0
        %3294 = vmatprep.subr.mxu0 0.0
        %3295 = vmatpush1.msra.mxu0 0.0
        %3296 = vmatprep.subr.mxu0 0.0
        %3297 = vmatpush1.msra.mxu0 0.0
        %3298 = vmatprep.subr.mxu0 0.0
        %3299 = vmatpush1.msra.mxu0 0.0
        %3300 = vmatprep.subr.mxu0 0.0
        %3301 = vmatpush1.msra.mxu0 0.0
        %3302 = vmatprep.subr.mxu0 0.0
        %3303 = vmatpush1.msra.mxu0 0.0
        %3304 = vmatprep.subr.mxu0 0.0
        %3305 = vmatpush1.msra.mxu0 0.0
        %3306 = vmatprep.subr.mxu0 0.0
        %3307 = vmatpush1.msra.mxu0 0.0
        %3308 = vmatprep.subr.mxu0 0.0
        %3309 = vmatpush1.msra.mxu0 0.0
        %3310 = vmatprep.subr.mxu0 0.0
        %3311 = vmatpush1.msra.mxu0 0.0
        %3312 = vmatprep.subr.mxu0 0.0
        %3313 = vmatpush1.msra.mxu0 0.0
        %3314 = vmatprep.subr.mxu0 0.0
        %3315 = vmatpush1.msra.mxu0 0.0
        %3316 = vmatprep.subr.mxu0 0.0
        %3317 = vmatpush1.msra.mxu0 0.0
        %3318 = vmatprep.subr.mxu0 0.0
        %3319 = vmatpush1.msra.mxu0 0.0
        %3320 = vmatprep.subr.mxu0 0.0
        %3321 = vmatpush1.msra.mxu0 0.0
        %3322 = vmatprep.subr.mxu0 0.0
        %3323 = vmatpush1.msra.mxu0 0.0
        %3324 = vmatprep.subr.mxu0 0.0
        %3325 = vmatpush1.msra.mxu0 0.0
        %3326 = vmatprep.subr.mxu0 0.0
        %3327 = vmatpush1.msra.mxu0 0.0
        %3328 = vmatprep.subr.mxu0 0.0
        %3329 = vmatpush1.msra.mxu0 0.0
        %3330 = vmatprep.subr.mxu0 0.0
        %3331 = vmatpush1.msra.mxu0 0.0
        %3332 = vmatprep.subr.mxu0 0.0
        %3333 = vmatpush1.msra.mxu0 0.0
        %3334 = vmatprep.mubr.f32.mxu0 0.0
        %3335 = vmatmul.mubr.f32.gmra.mrb[0].mxu0 %v1896
        %v3336 = vpop.f32.mrb[0].mxu0
        %v3337 = vadd.f32 0.0, %v3336
        %v3338 = vpop.f32.mrb[0].mxu0
        %3339 = vmatprep.mubr.f32.mxu0 0.0
        %3340 = vmatmul.mubr.f32.gmra.mrb[0].mxu0 %v1899
        %v3341 = vpop.f32.mrb[0].mxu0
        %v3342 = vadd.f32 0.0, %v3341
        %v3343 = vpop.f32.mrb[0].mxu0
        %3344 = vmatprep.mubr.f32.mxu0 0.0
        %3345 = vmatmul.mubr.f32.gmra.mrb[0].mxu0 %v1902
        %v3346 = vpop.f32.mrb[0].mxu0
        %v3347 = vadd.f32 0.0, %v3346
        %v3348 = vpop.f32.mrb[0].mxu0
        %3349 = vmatprep.mubr.f32.mxu0 0.0
        %3350 = vmatmul.mubr.f32.gmra.mrb[0].mxu0 %v1905
        %v3351 = vpop.f32.mrb[0].mxu0
        %v3352 = vadd.f32 0.0, %v3351
        %v3353 = vpop.f32.mrb[0].mxu0
        %3354 = vmatprep.mubr.f32.mxu0 0.0
        %3355 = vmatmul.mubr.f32.gmra.mrb[0].mxu0 %v1908
        %v3356 = vpop.f32.mrb[0].mxu0
        %v3357 = vadd.f32 0.0, %v3356
        %v3358 = vpop.f32.mrb[0].mxu0
        %3359 = vmatprep.mubr.f32.mxu0 0.0
        %3360 = vmatmul.mubr.f32.gmra.mrb[0].mxu0 %v1911
        %v3361 = vpop.f32.mrb[0].mxu0
        %v3362 = vadd.f32 0.0, %v3361
        %v3363 = vpop.f32.mrb[0].mxu0
        %3364 = vmatprep.mubr.f32.mxu0 0.0
        %3365 = vmatmul.mubr.f32.gmra.mrb[0].mxu0 %v1914
        %v3366 = vpop.f32.mrb[0].mxu0
        %v3367 = vadd.f32 0.0, %v3366
        %v3368 = vpop.f32.mrb[0].mxu0
        %3369 = vmatprep.mubr.f32.mxu0 0.0
        %3370 = vmatmul.mubr.f32.gmra.mrb[0].mxu0 %v1917
        %v3371 = vpop.f32.mrb[0].mxu0
        %v3372 = vadd.f32 0.0, %v3371
        %v3373 = vpop.f32.mrb[0].mxu0
        %3374 = vdwg.mxu0
        %3377 = vrot.lane.b32.xlu0 %v3232, 32
        %v3378 = vpop.permute.xlu0 %3377
        %3379 = vrot.lane.b32.xlu0 %v3237, 32
        %v3380 = vpop.permute.xlu0 %3379
        %3385 = vrot.lane.b32.xlu0 %v3337, 64
        %v3386 = vpop.permute.xlu0 %3385
        %3387 = vrot.lane.b32.xlu0 %v3342, 64
        %v3388 = vpop.permute.xlu0 %3387
        %3393 = vrot.lane.b32.xlu0 %v3242, 96
        %v3394 = vpop.permute.xlu0 %3393
        %3395 = vrot.lane.b32.xlu0 %v3247, 96
        %v3396 = vpop.permute.xlu0 %3395
        %3401 = vrot.lane.b32.xlu0 %v3252, 32
        %v3402 = vpop.permute.xlu0 %3401
        %3403 = vrot.lane.b32.xlu0 %v3257, 32
        %v3404 = vpop.permute.xlu0 %3403
        %3409 = vrot.lane.b32.xlu0 %v3357, 64
        %v3410 = vpop.permute.xlu0 %3409
        %3411 = vrot.lane.b32.xlu0 %v3362, 64
        %v3412 = vpop.permute.xlu0 %3411
        %3417 = vrot.lane.b32.xlu0 %v3262, 96
        %v3418 = vpop.permute.xlu0 %3417
        %3419 = vrot.lane.b32.xlu0 %v3267, 96
        %v3420 = vpop.permute.xlu0 %3419
        %v3423 = vsel %vm1043, %v1667, %v3378
        %v3424 = vsel %vm1043, %v1668, %v3380
        %v3425 = vsel %vm1363, %v3423, %v3386
        %v3426 = vsel %vm1363, %v3424, %v3388
        %v3427 = vsel %vm2076, %v3425, %v3394
        %v3428 = vsel %vm2076, %v3426, %v3396
        %v3429 = vsel %vm1043, %v3347, %v3402
        %v3430 = vsel %vm1043, %v3352, %v3404
        %v3431 = vsel %vm1363, %v3429, %v3410
        %v3432 = vsel %vm1363, %v3430, %v3412
        %v3433 = vsel %vm2076, %v3431, %v3418
        %v3434 = vsel %vm2076, %v3432, %v3420
        %v3435 = vld [vmem:[%s12] sm:$0xff]
        %v3436 = vld [vmem:[%s12 + $0x8] sm:$0xff]
        %v3437 = vld [vmem:[%s12 + $0x10] sm:$0xff]
        %v3438 = vld [vmem:[%s12 + $0x18] sm:$0xff]
        %v3439 = vld [vmem:[%s12 + $0x20] sm:$0xff]
        %v3440 = vld [vmem:[%s12 + $0x28] sm:$0xff]
        %v3441 = vld [vmem:[%s12 + $0x30] sm:$0xff]
        %v3442 = vld [vmem:[%s12 + $0x38] sm:$0xff]
        %v3443 = vld [vmem:[%s12 + $0x40] sm:$0xff]
        %v3444 = vld [vmem:[%s12 + $0x48] sm:$0xff]
        %v3445 = vld [vmem:[%s12 + $0x50] sm:$0xff]
        %v3446 = vld [vmem:[%s12 + $0x58] sm:$0xff]
        %v3447 = vld [vmem:[%s12 + $0x60] sm:$0xff]
        %v3448 = vld [vmem:[%s12 + $0x68] sm:$0xff]
        %v3449 = vld [vmem:[%s12 + $0x70] sm:$0xff]
        %v3450 = vld [vmem:[%s12 + $0x78] sm:$0xff]
        %v3451 = vld [vmem:[%s12 + $0x80] sm:$0xff]
        %v3452 = vld [vmem:[%s12 + $0x88] sm:$0xff]
        %v3453 = vld [vmem:[%s12 + $0x90] sm:$0xff]
        %v3454 = vld [vmem:[%s12 + $0x98] sm:$0xff]
        %v3455 = vld [vmem:[%s12 + $0xa0] sm:$0xff]
        %v3456 = vld [vmem:[%s12 + $0xa8] sm:$0xff]
        %v3457 = vld [vmem:[%s12 + $0xb0] sm:$0xff]
        %v3458 = vld [vmem:[%s12 + $0xb8] sm:$0xff]
        %v3459 = vld [vmem:[%s12 + $0xc0] sm:$0xff]
        %v3460 = vld [vmem:[%s12 + $0xc8] sm:$0xff]
        %v3461 = vld [vmem:[%s12 + $0xd0] sm:$0xff]
        %v3462 = vld [vmem:[%s12 + $0xd8] sm:$0xff]
        %v3463 = vld [vmem:[%s12 + $0xe0] sm:$0xff]
        %v3464 = vld [vmem:[%s12 + $0xe8] sm:$0xff]
        %v3465 = vld [vmem:[%s12 + $0xf0] sm:$0xff]
        %v3466 = vld [vmem:[%s12 + $0xf8] sm:$0xff]
        %v3467 = vld [vmem:[%s12 + $0x100] sm:$0xff]
        %v3468 = vld [vmem:[%s12 + $0x108] sm:$0xff]
        %v3469 = vld [vmem:[%s12 + $0x110] sm:$0xff]
        %v3470 = vld [vmem:[%s12 + $0x118] sm:$0xff]
        %v3471 = vld [vmem:[#allocation7] sm:$0x1]
        %v3473 = vlaneseq
        %v3474 = vshrl.u32 %v3473, 7
        %v3475 = vsub.s32 0, %v3474
        %v3476 = vrot.slane %v3471, %v3475
        %v3479 = vsel %vm1043, %v2016, 0
        %v3482 = vsel %vm1043, %v2021, 0
        %v3485 = vsel %vm1043, %v2287, 0
        %v3488 = vsel %vm1043, %v2292, 0
        %v3491 = vsel %vm1043, %v2557, 0
        %v3494 = vsel %vm1043, %v2562, 0
        %v3497 = vsel %vm1043, %v2827, 0
        %v3500 = vsel %vm1043, %v2832, 0
        %v3503 = vsel %vm1043, %v3097, 0
        %v3506 = vsel %vm1043, %v3102, 0
        %v3509 = vsel %vm1043, %v3367, 0
        %v3512 = vsel %vm1043, %v3372, 0
        %3514 = vmatprep.subr.mxu0 0.0
        %3515 = vmatpush1.msra.mxu0 %v3435
        %3516 = vmatprep.subr.mxu0 0.0
        %3517 = vmatpush1.msra.mxu0 %v3436
        %3518 = vmatprep.subr.mxu0 0.0
        %3519 = vmatpush1.msra.mxu0 %v3437
        %3520 = vmatprep.subr.mxu0 0.0
        %3521 = vmatpush1.msra.mxu0 %v3438
        %3522 = vmatprep.subr.mxu0 0.0
        %3523 = vmatpush1.msra.mxu0 %v3439
        %3524 = vmatprep.subr.mxu0 0.0
        %3525 = vmatpush1.msra.mxu0 %v3440
        %3526 = vmatprep.subr.mxu0 0.0
        %3527 = vmatpush1.msra.mxu0 %v3441
        %3528 = vmatprep.subr.mxu0 0.0
        %3529 = vmatpush1.msra.mxu0 %v3442
        %3530 = vmatprep.subr.mxu0 0.0
        %3531 = vmatpush1.msra.mxu0 %v3443
        %3532 = vmatprep.subr.mxu0 0.0
        %3533 = vmatpush1.msra.mxu0 %v3444
        %3534 = vmatprep.subr.mxu0 0.0
        %3535 = vmatpush1.msra.mxu0 %v3445
        %3536 = vmatprep.subr.mxu0 0.0
        %3537 = vmatpush1.msra.mxu0 %v3446
        %3538 = vmatprep.subr.mxu0 0.0
        %3539 = vmatpush1.msra.mxu0 %v3447
        %3540 = vmatprep.subr.mxu0 0.0
        %3541 = vmatpush1.msra.mxu0 %v3448
        %3542 = vmatprep.subr.mxu0 0.0
        %3543 = vmatpush1.msra.mxu0 %v3449
        %3544 = vmatprep.subr.mxu0 0.0
        %3545 = vmatpush1.msra.mxu0 %v3450
        %3546 = vmatprep.subr.mxu0 0.0
        %3547 = vmatpush1.msra.mxu0 %v3451
        %3548 = vmatprep.subr.mxu0 0.0
        %3549 = vmatpush1.msra.mxu0 %v3452
        %3550 = vmatprep.subr.mxu0 0.0
        %3551 = vmatpush1.msra.mxu0 %v3453
        %3552 = vmatprep.subr.mxu0 0.0
        %3553 = vmatpush1.msra.mxu0 %v3454
        %3554 = vmatprep.subr.mxu0 0.0
        %3555 = vmatpush1.msra.mxu0 %v3455
        %3556 = vmatprep.subr.mxu0 0.0
        %3557 = vmatpush1.msra.mxu0 %v3456
        %3558 = vmatprep.subr.mxu0 0.0
        %3559 = vmatpush1.msra.mxu0 %v3457
        %3560 = vmatprep.subr.mxu0 0.0
        %3561 = vmatpush1.msra.mxu0 %v3458
        %3562 = vmatprep.subr.mxu0 0.0
        %3563 = vmatpush1.msra.mxu0 %v3459
        %3564 = vmatprep.subr.mxu0 0.0
        %3565 = vmatpush1.msra.mxu0 %v3460
        %3566 = vmatprep.subr.mxu0 0.0
        %3567 = vmatpush1.msra.mxu0 %v3461
        %3568 = vmatprep.subr.mxu0 0.0
        %3569 = vmatpush1.msra.mxu0 %v3462
        %3570 = vmatprep.subr.mxu0 0.0
        %3571 = vmatpush1.msra.mxu0 %v3463
        %3572 = vmatprep.subr.mxu0 0.0
        %3573 = vmatpush1.msra.mxu0 %v3464
        %3574 = vmatprep.subr.mxu0 0.0
        %3575 = vmatpush1.msra.mxu0 %v3465
        %3576 = vmatprep.subr.mxu0 0.0
        %3577 = vmatpush1.msra.mxu0 %v3466
        %3578 = vmatprep.mubr.f32.mxu0 %v2083
        %3579 = vmatmul.mubr.f32.gmra.mrb[0].mxu0 %v2077
        %v3580 = vpop.f32.mrb[0].mxu0
        %v3581 = vadd.f32 %v3476, %v3580
        %v3582 = vpop.f32.mrb[0].mxu0
        %3583 = vmatprep.mubr.f32.mxu0 %v2084
        %3584 = vmatmul.mubr.f32.gmra.mrb[0].mxu0 %v2078
        %v3585 = vpop.f32.mrb[0].mxu0
        %v3586 = vadd.f32 %v3476, %v3585
        %v3587 = vpop.f32.mrb[0].mxu0
        %3588 = vmatprep.mubr.f32.mxu0 %v2353
        %3589 = vmatmul.mubr.f32.gmra.mrb[0].mxu0 %v2347
        %v3590 = vpop.f32.mrb[0].mxu0
        %v3591 = vadd.f32 %v3476, %v3590
        %v3592 = vpop.f32.mrb[0].mxu0
        %3593 = vmatprep.mubr.f32.mxu0 %v2354
        %3594 = vmatmul.mubr.f32.gmra.mrb[0].mxu0 %v2348
        %v3595 = vpop.f32.mrb[0].mxu0
        %v3596 = vadd.f32 %v3476, %v3595
        %v3597 = vpop.f32.mrb[0].mxu0
        %3598 = vmatprep.mubr.f32.mxu0 %v2623
        %3599 = vmatmul.mubr.f32.gmra.mrb[0].mxu0 %v2617
        %v3600 = vpop.f32.mrb[0].mxu0
        %v3601 = vadd.f32 %v3476, %v3600
        %v3602 = vpop.f32.mrb[0].mxu0
        %3603 = vmatprep.mubr.f32.mxu0 %v2624
        %3604 = vmatmul.mubr.f32.gmra.mrb[0].mxu0 %v2618
        %v3605 = vpop.f32.mrb[0].mxu0
        %v3606 = vadd.f32 %v3476, %v3605
        %v3607 = vpop.f32.mrb[0].mxu0
        %3608 = vmatprep.mubr.f32.mxu0 %v2893
        %3609 = vmatmul.mubr.f32.gmra.mrb[0].mxu0 %v2887
        %v3610 = vpop.f32.mrb[0].mxu0
        %v3611 = vadd.f32 %v3476, %v3610
        %v3612 = vpop.f32.mrb[0].mxu0
        %3613 = vmatprep.mubr.f32.mxu0 %v2894
        %3614 = vmatmul.mubr.f32.gmra.mrb[0].mxu0 %v2888
        %v3615 = vpop.f32.mrb[0].mxu0
        %v3616 = vadd.f32 %v3476, %v3615
        %v3617 = vpop.f32.mrb[0].mxu0
        %3618 = vmatprep.mubr.f32.mxu0 %v3163
        %3619 = vmatmul.mubr.f32.gmra.mrb[0].mxu0 %v3157
        %v3620 = vpop.f32.mrb[0].mxu0
        %v3621 = vadd.f32 %v3476, %v3620
        %v3622 = vpop.f32.mrb[0].mxu0
        %3623 = vmatprep.mubr.f32.mxu0 %v3164
        %3624 = vmatmul.mubr.f32.gmra.mrb[0].mxu0 %v3158
        %v3625 = vpop.f32.mrb[0].mxu0
        %v3626 = vadd.f32 %v3476, %v3625
        %v3627 = vpop.f32.mrb[0].mxu0
        %3628 = vmatprep.mubr.f32.mxu0 %v3433
        %3629 = vmatmul.mubr.f32.gmra.mrb[0].mxu0 %v3427
        %v3630 = vpop.f32.mrb[0].mxu0
        %v3631 = vadd.f32 %v3476, %v3630
        %v3632 = vpop.f32.mrb[0].mxu0
        %3633 = vmatprep.mubr.f32.mxu0 %v3434
        %3634 = vmatmul.mubr.f32.gmra.mrb[0].mxu0 %v3428
        %v3635 = vpop.f32.mrb[0].mxu0
        %v3636 = vadd.f32 %v3476, %v3635
        %v3637 = vpop.f32.mrb[0].mxu0
        %3638 = vdwg.mxu0
        %3639 = vmatprep.subr.mxu0 0.0
        %3640 = vmatpush1.msra.mxu0 %v3467
        %3641 = vmatprep.subr.mxu0 0.0
        %3642 = vmatpush1.msra.mxu0 %v3468
        %3643 = vmatprep.subr.mxu0 0.0
        %3644 = vmatpush1.msra.mxu0 %v3469
        %3645 = vmatprep.subr.mxu0 0.0
        %3646 = vmatpush1.msra.mxu0 %v3470
        %3647 = vmatprep.subr.mxu0 0.0
        %3648 = vmatpush1.msra.mxu0 0.0
        %3649 = vmatprep.subr.mxu0 0.0
        %3650 = vmatpush1.msra.mxu0 0.0
        %3651 = vmatprep.subr.mxu0 0.0
        %3652 = vmatpush1.msra.mxu0 0.0
        %3653 = vmatprep.subr.mxu0 0.0
        %3654 = vmatpush1.msra.mxu0 0.0
        %3655 = vmatprep.subr.mxu0 0.0
        %3656 = vmatpush1.msra.mxu0 0.0
        %3657 = vmatprep.subr.mxu0 0.0
        %3658 = vmatpush1.msra.mxu0 0.0
        %3659 = vmatprep.subr.mxu0 0.0
        %3660 = vmatpush1.msra.mxu0 0.0
        %3661 = vmatprep.subr.mxu0 0.0
        %3662 = vmatpush1.msra.mxu0 0.0
        %3663 = vmatprep.subr.mxu0 0.0
        %3664 = vmatpush1.msra.mxu0 0.0
        %3665 = vmatprep.subr.mxu0 0.0
        %3666 = vmatpush1.msra.mxu0 0.0
        %3667 = vmatprep.subr.mxu0 0.0
        %3668 = vmatpush1.msra.mxu0 0.0
        %3669 = vmatprep.subr.mxu0 0.0
        %3670 = vmatpush1.msra.mxu0 0.0
        %3671 = vmatprep.subr.mxu0 0.0
        %3672 = vmatpush1.msra.mxu0 0.0
        %3673 = vmatprep.subr.mxu0 0.0
        %3674 = vmatpush1.msra.mxu0 0.0
        %3675 = vmatprep.subr.mxu0 0.0
        %3676 = vmatpush1.msra.mxu0 0.0
        %3677 = vmatprep.subr.mxu0 0.0
        %3678 = vmatpush1.msra.mxu0 0.0
        %3679 = vmatprep.subr.mxu0 0.0
        %3680 = vmatpush1.msra.mxu0 0.0
        %3681 = vmatprep.subr.mxu0 0.0
        %3682 = vmatpush1.msra.mxu0 0.0
        %3683 = vmatprep.subr.mxu0 0.0
        %3684 = vmatpush1.msra.mxu0 0.0
        %3685 = vmatprep.subr.mxu0 0.0
        %3686 = vmatpush1.msra.mxu0 0.0
        %3687 = vmatprep.subr.mxu0 0.0
        %3688 = vmatpush1.msra.mxu0 0.0
        %3689 = vmatprep.subr.mxu0 0.0
        %3690 = vmatpush1.msra.mxu0 0.0
        %3691 = vmatprep.subr.mxu0 0.0
        %3692 = vmatpush1.msra.mxu0 0.0
        %3693 = vmatprep.subr.mxu0 0.0
        %3694 = vmatpush1.msra.mxu0 0.0
        %3695 = vmatprep.subr.mxu0 0.0
        %3696 = vmatpush1.msra.mxu0 0.0
        %3697 = vmatprep.subr.mxu0 0.0
        %3698 = vmatpush1.msra.mxu0 0.0
        %3699 = vmatprep.subr.mxu0 0.0
        %3700 = vmatpush1.msra.mxu0 0.0
        %3701 = vmatprep.subr.mxu0 0.0
        %3702 = vmatpush1.msra.mxu0 0.0
        %3703 = vmatprep.mubr.f32.mxu0 0.0
        %3704 = vmatmul.mubr.f32.gmra.mrb[0].mxu0 %v3479
        %v3705 = vpop.f32.mrb[0].mxu0
        %v3706 = vadd.f32 %v3581, %v3705
        %v3707 = vpop.f32.mrb[0].mxu0
        %3708 = vmatprep.mubr.f32.mxu0 0.0
        %3709 = vmatmul.mubr.f32.gmra.mrb[0].mxu0 %v3482
        %v3710 = vpop.f32.mrb[0].mxu0
        %v3711 = vadd.f32 %v3586, %v3710
        %v3712 = vpop.f32.mrb[0].mxu0
        %3713 = vmatprep.mubr.f32.mxu0 0.0
        %3714 = vmatmul.mubr.f32.gmra.mrb[0].mxu0 %v3485
        %v3715 = vpop.f32.mrb[0].mxu0
        %v3716 = vadd.f32 %v3591, %v3715
        %v3717 = vpop.f32.mrb[0].mxu0
        %3718 = vmatprep.mubr.f32.mxu0 0.0
        %3719 = vmatmul.mubr.f32.gmra.mrb[0].mxu0 %v3488
        %v3720 = vpop.f32.mrb[0].mxu0
        %v3721 = vadd.f32 %v3596, %v3720
        %v3722 = vpop.f32.mrb[0].mxu0
        %3723 = vmatprep.mubr.f32.mxu0 0.0
        %3724 = vmatmul.mubr.f32.gmra.mrb[0].mxu0 %v3491
        %v3725 = vpop.f32.mrb[0].mxu0
        %v3726 = vadd.f32 %v3601, %v3725
        %v3727 = vpop.f32.mrb[0].mxu0
        %3728 = vmatprep.mubr.f32.mxu0 0.0
        %3729 = vmatmul.mubr.f32.gmra.mrb[0].mxu0 %v3494
        %v3730 = vpop.f32.mrb[0].mxu0
        %v3731 = vadd.f32 %v3606, %v3730
        %v3732 = vpop.f32.mrb[0].mxu0
        %3733 = vmatprep.mubr.f32.mxu0 0.0
        %3734 = vmatmul.mubr.f32.gmra.mrb[0].mxu0 %v3497
        %v3735 = vpop.f32.mrb[0].mxu0
        %v3736 = vadd.f32 %v3611, %v3735
        %v3737 = vpop.f32.mrb[0].mxu0
        %3738 = vmatprep.mubr.f32.mxu0 0.0
        %3739 = vmatmul.mubr.f32.gmra.mrb[0].mxu0 %v3500
        %v3740 = vpop.f32.mrb[0].mxu0
        %v3741 = vadd.f32 %v3616, %v3740
        %v3742 = vpop.f32.mrb[0].mxu0
        %3743 = vmatprep.mubr.f32.mxu0 0.0
        %3744 = vmatmul.mubr.f32.gmra.mrb[0].mxu0 %v3503
        %v3745 = vpop.f32.mrb[0].mxu0
        %v3746 = vadd.f32 %v3621, %v3745
        %v3747 = vpop.f32.mrb[0].mxu0
        %3748 = vmatprep.mubr.f32.mxu0 0.0
        %3749 = vmatmul.mubr.f32.gmra.mrb[0].mxu0 %v3506
        %v3750 = vpop.f32.mrb[0].mxu0
        %v3751 = vadd.f32 %v3626, %v3750
        %v3752 = vpop.f32.mrb[0].mxu0
        %3753 = vmatprep.mubr.f32.mxu0 0.0
        %3754 = vmatmul.mubr.f32.gmra.mrb[0].mxu0 %v3509
        %v3755 = vpop.f32.mrb[0].mxu0
        %v3756 = vadd.f32 %v3631, %v3755
        %v3757 = vpop.f32.mrb[0].mxu0
        %3758 = vmatprep.mubr.f32.mxu0 0.0
        %3759 = vmatmul.mubr.f32.gmra.mrb[0].mxu0 %v3512
        %v3760 = vpop.f32.mrb[0].mxu0
        %v3761 = vadd.f32 %v3636, %v3760
        %v3762 = vpop.f32.mrb[0].mxu0
        %3763 = vdwg.mxu0
        %v3764 = vadd.f32 %v3706, %v1230
        %v3765 = vadd.f32 %v3711, %v1235
        %v3766 = vadd.f32 %v3716, %v1240
        %v3767 = vadd.f32 %v3721, %v1245
        %v3768 = vadd.f32 %v3726, %v1250
        %v3769 = vadd.f32 %v3731, %v1255
        %v3770 = vadd.f32 %v3736, %v1260
        %v3771 = vadd.f32 %v3741, %v1265
        %v3772 = vadd.f32 %v3746, %v1270
        %v3773 = vadd.f32 %v3751, %v1275
        %v3774 = vadd.f32 %v3756, %v1280
        %v3775 = vadd.f32 %v3761, %v1285
        %v3776 = vld [vmem:[%s14] sm:$0x1]
        %v3778 = vlaneseq
        %v3779 = vshrl.u32 %v3778, 7
        %v3780 = vsub.s32 0, %v3779
        %v3781 = vrot.slane %v3776, %v3780
        %v3783 = vmul.f32 %v3764, %v3781
        %v3784 = vmul.f32 %v3765, %v3781
        %v3785 = vmul.f32 %v3766, %v3781
        %v3786 = vmul.f32 %v3767, %v3781
        %v3787 = vmul.f32 %v3768, %v3781
        %v3788 = vmul.f32 %v3769, %v3781
        %v3789 = vmul.f32 %v3770, %v3781
        %v3790 = vmul.f32 %v3771, %v3781
        %v3791 = vmul.f32 %v3772, %v3781
        %v3792 = vmul.f32 %v3773, %v3781
        %v3793 = vmul.f32 %v3774, %v3781
        %v3794 = vmul.f32 %v3775, %v3781
        %v3795 = vld [vmem:[%s15] sm:$0x1]
        %v3797 = vlaneseq
        %v3798 = vshrl.u32 %v3797, 7
        %v3799 = vsub.s32 0, %v3798
        %v3800 = vrot.slane %v3795, %v3799
        %v3802 = vadd.f32 %v3783, %v3800
        %v3803 = vadd.f32 %v3784, %v3800
        %v3804 = vadd.f32 %v3785, %v3800
        %v3805 = vadd.f32 %v3786, %v3800
        %v3806 = vadd.f32 %v3787, %v3800
        %v3807 = vadd.f32 %v3788, %v3800
        %v3808 = vadd.f32 %v3789, %v3800
        %v3809 = vadd.f32 %v3790, %v3800
        %v3810 = vadd.f32 %v3791, %v3800
        %v3811 = vadd.f32 %v3792, %v3800
        %v3812 = vadd.f32 %v3793, %v3800
        %v3813 = vadd.f32 %v3794, %v3800
        %3822 = vrot.lane.b32.xlu0 %v3806, 32
        %v3823 = vpop.permute.xlu0 %3822
        %3824 = vrot.lane.b32.xlu0 %v3807, 32
        %v3825 = vpop.permute.xlu0 %3824
        %3826 = vrot.lane.b32.xlu0 %v3808, 32
        %v3827 = vpop.permute.xlu0 %3826
        %3828 = vrot.lane.b32.xlu0 %v3809, 32
        %v3829 = vpop.permute.xlu0 %3828
        %3830 = vrot.lane.b32.xlu0 %v3810, 32
        %v3831 = vpop.permute.xlu0 %3830
        %3832 = vrot.lane.b32.xlu0 %v3811, 32
        %v3833 = vpop.permute.xlu0 %3832
        %3834 = vrot.lane.b32.xlu0 %v3812, 32
        %v3835 = vpop.permute.xlu0 %3834
        %3836 = vrot.lane.b32.xlu0 %v3813, 32
        %v3837 = vpop.permute.xlu0 %3836
        %v3846 = vsel %vm1043, %v3802, %v3823
        %v3847 = vsel %vm1043, %v3803, %v3825
        %v3848 = vsel %vm1043, %v3804, %v3827
        %v3849 = vsel %vm1043, %v3805, %v3829
        %v3850 = vsel %vm1043, %v3806, %v3831
        %v3851 = vsel %vm1043, %v3807, %v3833
        %v3852 = vsel %vm1043, %v3808, %v3835
        %v3853 = vsel %vm1043, %v3809, %v3837
        %s3854 = scalar_lea.vmem %s8, 64
        %v3855 = vld [vmem:[%s3854] sm:$0xff]
        %v3856 = vld [vmem:[%s3854 + $0x8] sm:$0xff]
        %v3857 = vld [vmem:[%s3854 + $0x10] sm:$0xff]
        %v3858 = vld [vmem:[%s3854 + $0x18] sm:$0xff]
        %v3859 = vld [vmem:[%s3854 + $0x20] sm:$0xff]
        %v3860 = vld [vmem:[%s3854 + $0x28] sm:$0xff]
        %v3861 = vld [vmem:[%s3854 + $0x30] sm:$0xff]
        %v3862 = vld [vmem:[%s3854 + $0x38] sm:$0xff]
        %s3863 = scalar_lea.vmem [#allocation4], 1
        %v3864 = vld [vmem:[%s3863] sm:$0x1]
        %v3866 = vlaneseq
        %v3867 = vshrl.u32 %v3866, 7
        %v3868 = vsub.s32 0, %v3867
        %v3869 = vrot.slane %v3864, %v3868
        %v3872 = vsel %vm1363, %v3846, 0
        %v3875 = vsel %vm1363, %v3847, 0
        %v3878 = vsel %vm1363, %v3848, 0
        %v3881 = vsel %vm1363, %v3849, 0
        %v3884 = vsel %vm1363, %v3850, 0
        %v3887 = vsel %vm1363, %v3851, 0
        %v3890 = vsel %vm1363, %v3852, 0
        %v3893 = vsel %vm1363, %v3853, 0
        %3895 = vmatprep.subr.mxu0 0.0
        %3896 = vmatpush1.msra.mxu0 %v3855
        %3897 = vmatprep.subr.mxu0 0.0
        %3898 = vmatpush1.msra.mxu0 %v3856
        %3899 = vmatprep.subr.mxu0 0.0
        %3900 = vmatpush1.msra.mxu0 %v3857
        %3901 = vmatprep.subr.mxu0 0.0
        %3902 = vmatpush1.msra.mxu0 %v3858
        %3903 = vmatprep.subr.mxu0 0.0
        %3904 = vmatpush1.msra.mxu0 %v3859
        %3905 = vmatprep.subr.mxu0 0.0
        %3906 = vmatpush1.msra.mxu0 %v3860
        %3907 = vmatprep.subr.mxu0 0.0
        %3908 = vmatpush1.msra.mxu0 %v3861
        %3909 = vmatprep.subr.mxu0 0.0
        %3910 = vmatpush1.msra.mxu0 %v3862
        %3911 = vmatprep.subr.mxu0 0.0
        %3912 = vmatpush1.msra.mxu0 0.0
        %3913 = vmatprep.subr.mxu0 0.0
        %3914 = vmatpush1.msra.mxu0 0.0
        %3915 = vmatprep.subr.mxu0 0.0
        %3916 = vmatpush1.msra.mxu0 0.0
        %3917 = vmatprep.subr.mxu0 0.0
        %3918 = vmatpush1.msra.mxu0 0.0
        %3919 = vmatprep.subr.mxu0 0.0
        %3920 = vmatpush1.msra.mxu0 0.0
        %3921 = vmatprep.subr.mxu0 0.0
        %3922 = vmatpush1.msra.mxu0 0.0
        %3923 = vmatprep.subr.mxu0 0.0
        %3924 = vmatpush1.msra.mxu0 0.0
        %3925 = vmatprep.subr.mxu0 0.0
        %3926 = vmatpush1.msra.mxu0 0.0
        %3927 = vmatprep.subr.mxu0 0.0
        %3928 = vmatpush1.msra.mxu0 0.0
        %3929 = vmatprep.subr.mxu0 0.0
        %3930 = vmatpush1.msra.mxu0 0.0
        %3931 = vmatprep.subr.mxu0 0.0
        %3932 = vmatpush1.msra.mxu0 0.0
        %3933 = vmatprep.subr.mxu0 0.0
        %3934 = vmatpush1.msra.mxu0 0.0
        %3935 = vmatprep.subr.mxu0 0.0
        %3936 = vmatpush1.msra.mxu0 0.0
        %3937 = vmatprep.subr.mxu0 0.0
        %3938 = vmatpush1.msra.mxu0 0.0
        %3939 = vmatprep.subr.mxu0 0.0
        %3940 = vmatpush1.msra.mxu0 0.0
        %3941 = vmatprep.subr.mxu0 0.0
        %3942 = vmatpush1.msra.mxu0 0.0
        %3943 = vmatprep.subr.mxu0 0.0
        %3944 = vmatpush1.msra.mxu0 0.0
        %3945 = vmatprep.subr.mxu0 0.0
        %3946 = vmatpush1.msra.mxu0 0.0
        %3947 = vmatprep.subr.mxu0 0.0
        %3948 = vmatpush1.msra.mxu0 0.0
        %3949 = vmatprep.subr.mxu0 0.0
        %3950 = vmatpush1.msra.mxu0 0.0
        %3951 = vmatprep.subr.mxu0 0.0
        %3952 = vmatpush1.msra.mxu0 0.0
        %3953 = vmatprep.subr.mxu0 0.0
        %3954 = vmatpush1.msra.mxu0 0.0
        %3955 = vmatprep.subr.mxu0 0.0
        %3956 = vmatpush1.msra.mxu0 0.0
        %3957 = vmatprep.subr.mxu0 0.0
        %3958 = vmatpush1.msra.mxu0 0.0
        %3959 = vmatprep.mubr.f32.mxu0 0.0
        %3960 = vmatmul.mubr.f32.gmra.mrb[0].mxu0 %v3872
        %v3961 = vpop.f32.mrb[0].mxu0
        %v3962 = vadd.f32 %v3869, %v3961
        %v3963 = vpop.f32.mrb[0].mxu0
        %3964 = vmatprep.mubr.f32.mxu0 0.0
        %3965 = vmatmul.mubr.f32.gmra.mrb[0].mxu0 %v3875
        %v3966 = vpop.f32.mrb[0].mxu0
        %v3967 = vadd.f32 %v3869, %v3966
        %v3968 = vpop.f32.mrb[0].mxu0
        %3969 = vmatprep.mubr.f32.mxu0 0.0
        %3970 = vmatmul.mubr.f32.gmra.mrb[0].mxu0 %v3878
        %v3971 = vpop.f32.mrb[0].mxu0
        %v3972 = vadd.f32 %v3869, %v3971
        %v3973 = vpop.f32.mrb[0].mxu0
        %3974 = vmatprep.mubr.f32.mxu0 0.0
        %3975 = vmatmul.mubr.f32.gmra.mrb[0].mxu0 %v3881
        %v3976 = vpop.f32.mrb[0].mxu0
        %v3977 = vadd.f32 %v3869, %v3976
        %v3978 = vpop.f32.mrb[0].mxu0
        %3979 = vmatprep.mubr.f32.mxu0 0.0
        %3980 = vmatmul.mubr.f32.gmra.mrb[0].mxu0 %v3884
        %v3981 = vpop.f32.mrb[0].mxu0
        %v3982 = vadd.f32 %v3869, %v3981
        %v3983 = vpop.f32.mrb[0].mxu0
        %3984 = vmatprep.mubr.f32.mxu0 0.0
        %3985 = vmatmul.mubr.f32.gmra.mrb[0].mxu0 %v3887
        %v3986 = vpop.f32.mrb[0].mxu0
        %v3987 = vadd.f32 %v3869, %v3986
        %v3988 = vpop.f32.mrb[0].mxu0
        %3989 = vmatprep.mubr.f32.mxu0 0.0
        %3990 = vmatmul.mubr.f32.gmra.mrb[0].mxu0 %v3890
        %v3991 = vpop.f32.mrb[0].mxu0
        %v3992 = vadd.f32 %v3869, %v3991
        %v3993 = vpop.f32.mrb[0].mxu0
        %3994 = vmatprep.mubr.f32.mxu0 0.0
        %3995 = vmatmul.mubr.f32.gmra.mrb[0].mxu0 %v3893
        %v3996 = vpop.f32.mrb[0].mxu0
        %v3997 = vadd.f32 %v3869, %v3996
        %v3998 = vpop.f32.mrb[0].mxu0
        %3999 = vdwg.mxu0
        %v4000 = vtanh.pop %v3962
        %v4001 = vtanh.pop %v3967
        %v4002 = vtanh.pop %v3972
        %v4003 = vtanh.pop %v3977
        %v4004 = vtanh.pop %v3982
        %v4005 = vtanh.pop %v3987
        %v4006 = vtanh.pop %v3992
        %v4007 = vtanh.pop %v3997
        %v4008 = vxor.u32 %v3962, 2147483648
        %v4009 = vxor.u32 %v3967, 2147483648
        %v4010 = vxor.u32 %v3972, 2147483648
        %v4011 = vxor.u32 %v3977, 2147483648
        %v4012 = vxor.u32 %v3982, 2147483648
        %v4013 = vxor.u32 %v3987, 2147483648
        %v4014 = vxor.u32 %v3992, 2147483648
        %v4015 = vxor.u32 %v3997, 2147483648
        %v4016 = vmul.f32 %v4008, 1.442695
        %v4017 = vpow.pop %v4016
        %v4018 = vmul.f32 %v4009, 1.442695
        %v4019 = vpow.pop %v4018
        %v4020 = vmul.f32 %v4010, 1.442695
        %v4021 = vpow.pop %v4020
        %v4022 = vmul.f32 %v4011, 1.442695
        %v4023 = vpow.pop %v4022
        %v4024 = vmul.f32 %v4012, 1.442695
        %v4025 = vpow.pop %v4024
        %v4026 = vmul.f32 %v4013, 1.442695
        %v4027 = vpow.pop %v4026
        %v4028 = vmul.f32 %v4014, 1.442695
        %v4029 = vpow.pop %v4028
        %v4030 = vmul.f32 %v4015, 1.442695
        %v4031 = vpow.pop %v4030
        %v4032 = vadd.f32 %v4017, 1.0
        %v4033 = vadd.f32 %v4019, 1.0
        %v4034 = vadd.f32 %v4021, 1.0
        %v4035 = vadd.f32 %v4023, 1.0
        %v4036 = vadd.f32 %v4025, 1.0
        %v4037 = vadd.f32 %v4027, 1.0
        %v4038 = vadd.f32 %v4029, 1.0
        %v4039 = vadd.f32 %v4031, 1.0
        %v4040 = vrcp.pop %v4032
        %v4041 = vmul.f32 1.0, %v4040
        %v4042 = vrcp.pop %v4033
        %v4043 = vmul.f32 1.0, %v4042
        %v4044 = vrcp.pop %v4034
        %v4045 = vmul.f32 1.0, %v4044
        %v4046 = vrcp.pop %v4035
        %v4047 = vmul.f32 1.0, %v4046
        %v4048 = vrcp.pop %v4036
        %v4049 = vmul.f32 1.0, %v4048
        %v4050 = vrcp.pop %v4037
        %v4051 = vmul.f32 1.0, %v4050
        %v4052 = vrcp.pop %v4038
        %v4053 = vmul.f32 1.0, %v4052
        %v4054 = vrcp.pop %v4039
        %v4055 = vmul.f32 1.0, %v4054
        %4064 = vrot.lane.b32.xlu0 %v4041, 96
        %v4065 = vpop.permute.xlu0 %4064
        %4066 = vrot.lane.b32.xlu0 %v4043, 96
        %v4067 = vpop.permute.xlu0 %4066
        %4068 = vrot.lane.b32.xlu0 %v4045, 96
        %v4069 = vpop.permute.xlu0 %4068
        %4070 = vrot.lane.b32.xlu0 %v4047, 96
        %v4071 = vpop.permute.xlu0 %4070
        %4072 = vrot.lane.b32.xlu0 %v4049, 96
        %v4073 = vpop.permute.xlu0 %4072
        %4074 = vrot.lane.b32.xlu0 %v4051, 96
        %v4075 = vpop.permute.xlu0 %4074
        %4076 = vrot.lane.b32.xlu0 %v4053, 96
        %v4077 = vpop.permute.xlu0 %4076
        %4078 = vrot.lane.b32.xlu0 %v4055, 96
        %v4079 = vpop.permute.xlu0 %4078
        %v4088 = vmul.f32 %v4000, %v4065
        %v4089 = vmul.f32 %v4001, %v4067
        %v4090 = vmul.f32 %v4002, %v4069
        %v4091 = vmul.f32 %v4003, %v4071
        %v4092 = vmul.f32 %v4004, %v4073
        %v4093 = vmul.f32 %v4005, %v4075
        %v4094 = vmul.f32 %v4006, %v4077
        %v4095 = vmul.f32 %v4007, %v4079
        %s4096 = scalar_lea.vmem %s10, 64
        %v4097 = vld [vmem:[%s4096] sm:$0xff]
        %v4098 = vld [vmem:[%s4096 + $0x8] sm:$0xff]
        %v4099 = vld [vmem:[%s4096 + $0x10] sm:$0xff]
        %v4100 = vld [vmem:[%s4096 + $0x18] sm:$0xff]
        %v4101 = vld [vmem:[%s4096 + $0x20] sm:$0xff]
        %v4102 = vld [vmem:[%s4096 + $0x28] sm:$0xff]
        %v4103 = vld [vmem:[%s4096 + $0x30] sm:$0xff]
        %v4104 = vld [vmem:[%s4096 + $0x38] sm:$0xff]
        %s4105 = scalar_lea.vmem [#allocation6], 2
        %v4106 = vld [vmem:[%s4105] sm:$0x3]
        %v4108 = vlaneseq
        %v4109 = vshrl.u32 %v4108, 7
        %v4110 = vsub.s32 0, %v4109
        %v4111 = vrot.slane %v4106, %v4110
        %v4112 = vlaneseq
        %v4113 = vshrl.u32 %v4112, 7
        %v4114 = vsub.s32 1, %v4113
        %v4115 = vrot.slane %v4106, %v4114
        %v4119 = vsel %vm1043, %v4094, 0
        %v4122 = vsel %vm1043, %v4095, 0
        %4124 = vmatprep.subr.mxu0 %v4098
        %4125 = vmatpush1.msra.mxu0 %v4097
        %4126 = vmatprep.subr.mxu0 %v4100
        %4127 = vmatpush1.msra.mxu0 %v4099
        %4128 = vmatprep.subr.mxu0 %v4102
        %4129 = vmatpush1.msra.mxu0 %v4101
        %4130 = vmatprep.subr.mxu0 %v4104
        %4131 = vmatpush1.msra.mxu0 %v4103
        %4132 = vmatprep.subr.mxu0 0.0
        %4133 = vmatpush1.msra.mxu0 0.0
        %4134 = vmatprep.subr.mxu0 0.0
        %4135 = vmatpush1.msra.mxu0 0.0
        %4136 = vmatprep.subr.mxu0 0.0
        %4137 = vmatpush1.msra.mxu0 0.0
        %4138 = vmatprep.subr.mxu0 0.0
        %4139 = vmatpush1.msra.mxu0 0.0
        %4140 = vmatprep.subr.mxu0 0.0
        %4141 = vmatpush1.msra.mxu0 0.0
        %4142 = vmatprep.subr.mxu0 0.0
        %4143 = vmatpush1.msra.mxu0 0.0
        %4144 = vmatprep.subr.mxu0 0.0
        %4145 = vmatpush1.msra.mxu0 0.0
        %4146 = vmatprep.subr.mxu0 0.0
        %4147 = vmatpush1.msra.mxu0 0.0
        %4148 = vmatprep.subr.mxu0 0.0
        %4149 = vmatpush1.msra.mxu0 0.0
        %4150 = vmatprep.subr.mxu0 0.0
        %4151 = vmatpush1.msra.mxu0 0.0
        %4152 = vmatprep.subr.mxu0 0.0
        %4153 = vmatpush1.msra.mxu0 0.0
        %4154 = vmatprep.subr.mxu0 0.0
        %4155 = vmatpush1.msra.mxu0 0.0
        %4156 = vmatprep.subr.mxu0 0.0
        %4157 = vmatpush1.msra.mxu0 0.0
        %4158 = vmatprep.subr.mxu0 0.0
        %4159 = vmatpush1.msra.mxu0 0.0
        %4160 = vmatprep.subr.mxu0 0.0
        %4161 = vmatpush1.msra.mxu0 0.0
        %4162 = vmatprep.subr.mxu0 0.0
        %4163 = vmatpush1.msra.mxu0 0.0
        %4164 = vmatprep.subr.mxu0 0.0
        %4165 = vmatpush1.msra.mxu0 0.0
        %4166 = vmatprep.subr.mxu0 0.0
        %4167 = vmatpush1.msra.mxu0 0.0
        %4168 = vmatprep.subr.mxu0 0.0
        %4169 = vmatpush1.msra.mxu0 0.0
        %4170 = vmatprep.subr.mxu0 0.0
        %4171 = vmatpush1.msra.mxu0 0.0
        %4172 = vmatprep.subr.mxu0 0.0
        %4173 = vmatpush1.msra.mxu0 0.0
        %4174 = vmatprep.subr.mxu0 0.0
        %4175 = vmatpush1.msra.mxu0 0.0
        %4176 = vmatprep.subr.mxu0 0.0
        %4177 = vmatpush1.msra.mxu0 0.0
        %4178 = vmatprep.subr.mxu0 0.0
        %4179 = vmatpush1.msra.mxu0 0.0
        %4180 = vmatprep.subr.mxu0 0.0
        %4181 = vmatpush1.msra.mxu0 0.0
        %4182 = vmatprep.subr.mxu0 0.0
        %4183 = vmatpush1.msra.mxu0 0.0
        %4184 = vmatprep.subr.mxu0 0.0
        %4185 = vmatpush1.msra.mxu0 0.0
        %4186 = vmatprep.subr.mxu0 0.0
        %4187 = vmatpush1.msra.mxu0 0.0
        %4188 = vmatprep.mubr.f32.mxu0 0.0
        %4189 = vmatmul.mubr.f32.gmra.mrb[0].mxu0 %v4119
        %v4190 = vpop.f32.mrb[0].mxu0
        %v4191 = vadd.f32 %v4111, %v4190
        %v4192 = vpop.f32.mrb[0].mxu0
        %v4193 = vadd.f32 %v4115, %v4192
        %4194 = vmatprep.mubr.f32.mxu0 0.0
        %4195 = vmatmul.mubr.f32.gmra.mrb[0].mxu0 %v4122
        %v4196 = vpop.f32.mrb[0].mxu0
        %v4197 = vadd.f32 %v4111, %v4196
        %v4198 = vpop.f32.mrb[0].mxu0
        %v4199 = vadd.f32 %v4115, %v4198
        %4200 = vdwg.mxu0
        %v4201 = vadd.f32 %v1762, %v4191
        %v4202 = vadd.f32 %v1764, %v4193
        %v4203 = vadd.f32 %v1768, %v4197
        %v4204 = vadd.f32 %v1770, %v4199
        %4205 = vmatprep.subr.mxu0 0.0
        %4206 = vmatpush1.msra.mxu0 %v4088
        %4207 = vmatprep.subr.mxu0 0.0
        %4208 = vmatpush1.msra.mxu0 %v4089
        %4209 = vmatprep.subr.mxu0 0.0
        %4210 = vmatpush1.msra.mxu0 0.0
        %4211 = vmatprep.subr.mxu0 0.0
        %4212 = vmatpush1.msra.mxu0 0.0
        %4213 = vmatprep.subr.mxu0 0.0
        %4214 = vmatpush1.msra.mxu0 0.0
        %4215 = vmatprep.subr.mxu0 0.0
        %4216 = vmatpush1.msra.mxu0 0.0
        %4217 = vmatprep.subr.mxu0 0.0
        %4218 = vmatpush1.msra.mxu0 0.0
        %4219 = vmatprep.subr.mxu0 0.0
        %4220 = vmatpush1.msra.mxu0 0.0
        %4221 = vmatprep.subr.mxu0 0.0
        %4222 = vmatpush1.msra.mxu0 0.0
        %4223 = vmatprep.subr.mxu0 0.0
        %4224 = vmatpush1.msra.mxu0 0.0
        %4225 = vmatprep.subr.mxu0 0.0
        %4226 = vmatpush1.msra.mxu0 0.0
        %4227 = vmatprep.subr.mxu0 0.0
        %4228 = vmatpush1.msra.mxu0 0.0
        %4229 = vmatprep.subr.mxu0 0.0
        %4230 = vmatpush1.msra.mxu0 0.0
        %4231 = vmatprep.subr.mxu0 0.0
        %4232 = vmatpush1.msra.mxu0 0.0
        %4233 = vmatprep.subr.mxu0 0.0
        %4234 = vmatpush1.msra.mxu0 0.0
        %4235 = vmatprep.subr.mxu0 0.0
        %4236 = vmatpush1.msra.mxu0 0.0
        %4237 = vmatprep.subr.mxu0 0.0
        %4238 = vmatpush1.msra.mxu0 0.0
        %4239 = vmatprep.subr.mxu0 0.0
        %4240 = vmatpush1.msra.mxu0 0.0
        %4241 = vmatprep.subr.mxu0 0.0
        %4242 = vmatpush1.msra.mxu0 0.0
        %4243 = vmatprep.subr.mxu0 0.0
        %4244 = vmatpush1.msra.mxu0 0.0
        %4245 = vmatprep.subr.mxu0 0.0
        %4246 = vmatpush1.msra.mxu0 0.0
        %4247 = vmatprep.subr.mxu0 0.0
        %4248 = vmatpush1.msra.mxu0 0.0
        %4249 = vmatprep.subr.mxu0 0.0
        %4250 = vmatpush1.msra.mxu0 0.0
        %4251 = vmatprep.subr.mxu0 0.0
        %4252 = vmatpush1.msra.mxu0 0.0
        %4253 = vmatprep.subr.mxu0 0.0
        %4254 = vmatpush1.msra.mxu0 0.0
        %4255 = vmatprep.subr.mxu0 0.0
        %4256 = vmatpush1.msra.mxu0 0.0
        %4257 = vmatprep.subr.mxu0 0.0
        %4258 = vmatpush1.msra.mxu0 0.0
        %4259 = vmatprep.subr.mxu0 0.0
        %4260 = vmatpush1.msra.mxu0 0.0
        %4261 = vmatprep.subr.mxu0 0.0
        %4262 = vmatpush1.msra.mxu0 0.0
        %4263 = vmatprep.subr.mxu0 0.0
        %4264 = vmatpush1.msra.mxu0 0.0
        %4265 = vmatprep.subr.mxu0 0.0
        %4266 = vmatpush1.msra.mxu0 0.0
        %4267 = vmatprep.subr.mxu0 0.0
        %4268 = vmatpush1.msra.mxu0 0.0
        %4269 = vmatprep.mubr.f32.mxu0 0.0
        %4270 = vmatmul.mubr.f32.gmra.mrb[0].mxu0 %v1773
        %v4271 = vpop.f32.mrb[0].mxu0
        %v4272 = vadd.f32 0.0, %v4271
        %v4273 = vpop.f32.mrb[0].mxu0
        %4274 = vmatprep.mubr.f32.mxu0 0.0
        %4275 = vmatmul.mubr.f32.gmra.mrb[0].mxu0 %v1776
        %v4276 = vpop.f32.mrb[0].mxu0
        %v4277 = vadd.f32 0.0, %v4276
        %v4278 = vpop.f32.mrb[0].mxu0
        %4279 = vmatprep.mubr.f32.mxu0 0.0
        %4280 = vmatmul.mubr.f32.gmra.mrb[0].mxu0 %v1778
        %v4281 = vpop.f32.mrb[0].mxu0
        %v4282 = vadd.f32 0.0, %v4281
        %v4283 = vpop.f32.mrb[0].mxu0
        %4284 = vmatprep.mubr.f32.mxu0 0.0
        %4285 = vmatmul.mubr.f32.gmra.mrb[0].mxu0 %v1780
        %v4286 = vpop.f32.mrb[0].mxu0
        %v4287 = vadd.f32 0.0, %v4286
        %v4288 = vpop.f32.mrb[0].mxu0
        %4289 = vmatprep.mubr.f32.mxu0 0.0
        %4290 = vmatmul.mubr.f32.gmra.mrb[0].mxu0 %v1782
        %v4291 = vpop.f32.mrb[0].mxu0
        %v4292 = vadd.f32 0.0, %v4291
        %v4293 = vpop.f32.mrb[0].mxu0
        %4294 = vmatprep.mubr.f32.mxu0 0.0
        %4295 = vmatmul.mubr.f32.gmra.mrb[0].mxu0 %v1784
        %v4296 = vpop.f32.mrb[0].mxu0
        %v4297 = vadd.f32 0.0, %v4296
        %v4298 = vpop.f32.mrb[0].mxu0
        %4299 = vmatprep.mubr.f32.mxu0 0.0
        %4300 = vmatmul.mubr.f32.gmra.mrb[0].mxu0 %v1786
        %v4301 = vpop.f32.mrb[0].mxu0
        %v4302 = vadd.f32 0.0, %v4301
        %v4303 = vpop.f32.mrb[0].mxu0
        %4304 = vmatprep.mubr.f32.mxu0 0.0
        %4305 = vmatmul.mubr.f32.gmra.mrb[0].mxu0 %v1788
        %v4306 = vpop.f32.mrb[0].mxu0
        %v4307 = vadd.f32 0.0, %v4306
        %v4308 = vpop.f32.mrb[0].mxu0
        %4309 = vdwg.mxu0
        %4310 = vmatprep.subr.mxu0 0.0
        %4311 = vmatpush1.msra.mxu0 %v4272
        %4312 = vmatprep.subr.mxu0 0.0
        %4313 = vmatpush1.msra.mxu0 %v4277
        %4314 = vmatprep.subr.mxu0 0.0
        %4315 = vmatpush1.msra.mxu0 %v4282
        %4316 = vmatprep.subr.mxu0 0.0
        %4317 = vmatpush1.msra.mxu0 %v4287
        %4318 = vmatprep.subr.mxu0 0.0
        %4319 = vmatpush1.msra.mxu0 %v4292
        %4320 = vmatprep.subr.mxu0 0.0
        %4321 = vmatpush1.msra.mxu0 %v4297
        %4322 = vmatprep.subr.mxu0 0.0
        %4323 = vmatpush1.msra.mxu0 %v4302
        %4324 = vmatprep.subr.mxu0 0.0
        %4325 = vmatpush1.msra.mxu0 %v4307
        %4326 = vmatprep.subr.mxu0 0.0
        %4327 = vmatpush1.msra.mxu0 0.0
        %4328 = vmatprep.subr.mxu0 0.0
        %4329 = vmatpush1.msra.mxu0 0.0
        %4330 = vmatprep.subr.mxu0 0.0
        %4331 = vmatpush1.msra.mxu0 0.0
        %4332 = vmatprep.subr.mxu0 0.0
        %4333 = vmatpush1.msra.mxu0 0.0
        %4334 = vmatprep.subr.mxu0 0.0
        %4335 = vmatpush1.msra.mxu0 0.0
        %4336 = vmatprep.subr.mxu0 0.0
        %4337 = vmatpush1.msra.mxu0 0.0
        %4338 = vmatprep.subr.mxu0 0.0
        %4339 = vmatpush1.msra.mxu0 0.0
        %4340 = vmatprep.subr.mxu0 0.0
        %4341 = vmatpush1.msra.mxu0 0.0
        %4342 = vmatprep.subr.mxu0 0.0
        %4343 = vmatpush1.msra.mxu0 0.0
        %4344 = vmatprep.subr.mxu0 0.0
        %4345 = vmatpush1.msra.mxu0 0.0
        %4346 = vmatprep.subr.mxu0 0.0
        %4347 = vmatpush1.msra.mxu0 0.0
        %4348 = vmatprep.subr.mxu0 0.0
        %4349 = vmatpush1.msra.mxu0 0.0
        %4350 = vmatprep.subr.mxu0 0.0
        %4351 = vmatpush1.msra.mxu0 0.0
        %4352 = vmatprep.subr.mxu0 0.0
        %4353 = vmatpush1.msra.mxu0 0.0
        %4354 = vmatprep.subr.mxu0 0.0
        %4355 = vmatpush1.msra.mxu0 0.0
        %4356 = vmatprep.subr.mxu0 0.0
        %4357 = vmatpush1.msra.mxu0 0.0
        %4358 = vmatprep.subr.mxu0 0.0
        %4359 = vmatpush1.msra.mxu0 0.0
        %4360 = vmatprep.subr.mxu0 0.0
        %4361 = vmatpush1.msra.mxu0 0.0
        %4362 = vmatprep.subr.mxu0 0.0
        %4363 = vmatpush1.msra.mxu0 0.0
        %4364 = vmatprep.subr.mxu0 0.0
        %4365 = vmatpush1.msra.mxu0 0.0
        %4366 = vmatprep.subr.mxu0 0.0
        %4367 = vmatpush1.msra.mxu0 0.0
        %4368 = vmatprep.subr.mxu0 0.0
        %4369 = vmatpush1.msra.mxu0 0.0
        %4370 = vmatprep.subr.mxu0 0.0
        %4371 = vmatpush1.msra.mxu0 0.0
        %4372 = vmatprep.subr.mxu0 0.0
        %4373 = vmatpush1.msra.mxu0 0.0
        %4374 = vmatprep.mubr.f32.mxu0 0.0
        %4375 = vmatmul.mubr.f32.gmra.mrb[0].mxu0 %v1896
        %v4376 = vpop.f32.mrb[0].mxu0
        %v4377 = vadd.f32 0.0, %v4376
        %v4378 = vpop.f32.mrb[0].mxu0
        %4379 = vmatprep.mubr.f32.mxu0 0.0
        %4380 = vmatmul.mubr.f32.gmra.mrb[0].mxu0 %v1899
        %v4381 = vpop.f32.mrb[0].mxu0
        %v4382 = vadd.f32 0.0, %v4381
        %v4383 = vpop.f32.mrb[0].mxu0
        %4384 = vmatprep.mubr.f32.mxu0 0.0
        %4385 = vmatmul.mubr.f32.gmra.mrb[0].mxu0 %v1902
        %v4386 = vpop.f32.mrb[0].mxu0
        %v4387 = vadd.f32 0.0, %v4386
        %v4388 = vpop.f32.mrb[0].mxu0
        %4389 = vmatprep.mubr.f32.mxu0 0.0
        %4390 = vmatmul.mubr.f32.gmra.mrb[0].mxu0 %v1905
        %v4391 = vpop.f32.mrb[0].mxu0
        %v4392 = vadd.f32 0.0, %v4391
        %v4393 = vpop.f32.mrb[0].mxu0
        %4394 = vmatprep.mubr.f32.mxu0 0.0
        %4395 = vmatmul.mubr.f32.gmra.mrb[0].mxu0 %v1908
        %v4396 = vpop.f32.mrb[0].mxu0
        %v4397 = vadd.f32 0.0, %v4396
        %v4398 = vpop.f32.mrb[0].mxu0
        %4399 = vmatprep.mubr.f32.mxu0 0.0
        %4400 = vmatmul.mubr.f32.gmra.mrb[0].mxu0 %v1911
        %v4401 = vpop.f32.mrb[0].mxu0
        %v4402 = vadd.f32 0.0, %v4401
        %v4403 = vpop.f32.mrb[0].mxu0
        %4404 = vmatprep.mubr.f32.mxu0 0.0
        %4405 = vmatmul.mubr.f32.gmra.mrb[0].mxu0 %v1914
        %v4406 = vpop.f32.mrb[0].mxu0
        %v4407 = vadd.f32 0.0, %v4406
        %v4408 = vpop.f32.mrb[0].mxu0
        %4409 = vmatprep.mubr.f32.mxu0 0.0
        %4410 = vmatmul.mubr.f32.gmra.mrb[0].mxu0 %v1917
        %v4411 = vpop.f32.mrb[0].mxu0
        %v4412 = vadd.f32 0.0, %v4411
        %v4413 = vpop.f32.mrb[0].mxu0
        %4414 = vdwg.mxu0
        %4417 = vrot.lane.b32.xlu0 %v4272, 32
        %v4418 = vpop.permute.xlu0 %4417
        %4419 = vrot.lane.b32.xlu0 %v4277, 32
        %v4420 = vpop.permute.xlu0 %4419
        %4425 = vrot.lane.b32.xlu0 %v4377, 64
        %v4426 = vpop.permute.xlu0 %4425
        %4427 = vrot.lane.b32.xlu0 %v4382, 64
        %v4428 = vpop.permute.xlu0 %4427
        %4433 = vrot.lane.b32.xlu0 %v4282, 96
        %v4434 = vpop.permute.xlu0 %4433
        %4435 = vrot.lane.b32.xlu0 %v4287, 96
        %v4436 = vpop.permute.xlu0 %4435
        %4441 = vrot.lane.b32.xlu0 %v4292, 32
        %v4442 = vpop.permute.xlu0 %4441
        %4443 = vrot.lane.b32.xlu0 %v4297, 32
        %v4444 = vpop.permute.xlu0 %4443
        %4449 = vrot.lane.b32.xlu0 %v4397, 64
        %v4450 = vpop.permute.xlu0 %4449
        %4451 = vrot.lane.b32.xlu0 %v4402, 64
        %v4452 = vpop.permute.xlu0 %4451
        %4457 = vrot.lane.b32.xlu0 %v4302, 96
        %v4458 = vpop.permute.xlu0 %4457
        %4459 = vrot.lane.b32.xlu0 %v4307, 96
        %v4460 = vpop.permute.xlu0 %4459
        %v4463 = vsel %vm1043, %v4088, %v4418
        %v4464 = vsel %vm1043, %v4089, %v4420
        %v4465 = vsel %vm1363, %v4463, %v4426
        %v4466 = vsel %vm1363, %v4464, %v4428
        %v4467 = vsel %vm2076, %v4465, %v4434
        %v4468 = vsel %vm2076, %v4466, %v4436
        %v4469 = vsel %vm1043, %v4387, %v4442
        %v4470 = vsel %vm1043, %v4392, %v4444
        %v4471 = vsel %vm1363, %v4469, %v4450
        %v4472 = vsel %vm1363, %v4470, %v4452
        %v4473 = vsel %vm2076, %v4471, %v4458
        %v4474 = vsel %vm2076, %v4472, %v4460
        %4475 = vmatprep.subr.mxu0 0.0
        %4476 = vmatpush1.msra.mxu0 %v4090
        %4477 = vmatprep.subr.mxu0 0.0
        %4478 = vmatpush1.msra.mxu0 %v4091
        %4479 = vmatprep.subr.mxu0 0.0
        %4480 = vmatpush1.msra.mxu0 0.0
        %4481 = vmatprep.subr.mxu0 0.0
        %4482 = vmatpush1.msra.mxu0 0.0
        %4483 = vmatprep.subr.mxu0 0.0
        %4484 = vmatpush1.msra.mxu0 0.0
        %4485 = vmatprep.subr.mxu0 0.0
        %4486 = vmatpush1.msra.mxu0 0.0
        %4487 = vmatprep.subr.mxu0 0.0
        %4488 = vmatpush1.msra.mxu0 0.0
        %4489 = vmatprep.subr.mxu0 0.0
        %4490 = vmatpush1.msra.mxu0 0.0
        %4491 = vmatprep.subr.mxu0 0.0
        %4492 = vmatpush1.msra.mxu0 0.0
        %4493 = vmatprep.subr.mxu0 0.0
        %4494 = vmatpush1.msra.mxu0 0.0
        %4495 = vmatprep.subr.mxu0 0.0
        %4496 = vmatpush1.msra.mxu0 0.0
        %4497 = vmatprep.subr.mxu0 0.0
        %4498 = vmatpush1.msra.mxu0 0.0
        %4499 = vmatprep.subr.mxu0 0.0
        %4500 = vmatpush1.msra.mxu0 0.0
        %4501 = vmatprep.subr.mxu0 0.0
        %4502 = vmatpush1.msra.mxu0 0.0
        %4503 = vmatprep.subr.mxu0 0.0
        %4504 = vmatpush1.msra.mxu0 0.0
        %4505 = vmatprep.subr.mxu0 0.0
        %4506 = vmatpush1.msra.mxu0 0.0
        %4507 = vmatprep.subr.mxu0 0.0
        %4508 = vmatpush1.msra.mxu0 0.0
        %4509 = vmatprep.subr.mxu0 0.0
        %4510 = vmatpush1.msra.mxu0 0.0
        %4511 = vmatprep.subr.mxu0 0.0
        %4512 = vmatpush1.msra.mxu0 0.0
        %4513 = vmatprep.subr.mxu0 0.0
        %4514 = vmatpush1.msra.mxu0 0.0
        %4515 = vmatprep.subr.mxu0 0.0
        %4516 = vmatpush1.msra.mxu0 0.0
        %4517 = vmatprep.subr.mxu0 0.0
        %4518 = vmatpush1.msra.mxu0 0.0
        %4519 = vmatprep.subr.mxu0 0.0
        %4520 = vmatpush1.msra.mxu0 0.0
        %4521 = vmatprep.subr.mxu0 0.0
        %4522 = vmatpush1.msra.mxu0 0.0
        %4523 = vmatprep.subr.mxu0 0.0
        %4524 = vmatpush1.msra.mxu0 0.0
        %4525 = vmatprep.subr.mxu0 0.0
        %4526 = vmatpush1.msra.mxu0 0.0
        %4527 = vmatprep.subr.mxu0 0.0
        %4528 = vmatpush1.msra.mxu0 0.0
        %4529 = vmatprep.subr.mxu0 0.0
        %4530 = vmatpush1.msra.mxu0 0.0
        %4531 = vmatprep.subr.mxu0 0.0
        %4532 = vmatpush1.msra.mxu0 0.0
        %4533 = vmatprep.subr.mxu0 0.0
        %4534 = vmatpush1.msra.mxu0 0.0
        %4535 = vmatprep.subr.mxu0 0.0
        %4536 = vmatpush1.msra.mxu0 0.0
        %4537 = vmatprep.subr.mxu0 0.0
        %4538 = vmatpush1.msra.mxu0 0.0
        %4539 = vmatprep.mubr.f32.mxu0 0.0
        %4540 = vmatmul.mubr.f32.gmra.mrb[0].mxu0 %v1773
        %v4541 = vpop.f32.mrb[0].mxu0
        %v4542 = vadd.f32 0.0, %v4541
        %v4543 = vpop.f32.mrb[0].mxu0
        %4544 = vmatprep.mubr.f32.mxu0 0.0
        %4545 = vmatmul.mubr.f32.gmra.mrb[0].mxu0 %v1776
        %v4546 = vpop.f32.mrb[0].mxu0
        %v4547 = vadd.f32 0.0, %v4546
        %v4548 = vpop.f32.mrb[0].mxu0
        %4549 = vmatprep.mubr.f32.mxu0 0.0
        %4550 = vmatmul.mubr.f32.gmra.mrb[0].mxu0 %v1778
        %v4551 = vpop.f32.mrb[0].mxu0
        %v4552 = vadd.f32 0.0, %v4551
        %v4553 = vpop.f32.mrb[0].mxu0
        %4554 = vmatprep.mubr.f32.mxu0 0.0
        %4555 = vmatmul.mubr.f32.gmra.mrb[0].mxu0 %v1780
        %v4556 = vpop.f32.mrb[0].mxu0
        %v4557 = vadd.f32 0.0, %v4556
        %v4558 = vpop.f32.mrb[0].mxu0
        %4559 = vmatprep.mubr.f32.mxu0 0.0
        %4560 = vmatmul.mubr.f32.gmra.mrb[0].mxu0 %v1782
        %v4561 = vpop.f32.mrb[0].mxu0
        %v4562 = vadd.f32 0.0, %v4561
        %v4563 = vpop.f32.mrb[0].mxu0
        %4564 = vmatprep.mubr.f32.mxu0 0.0
        %4565 = vmatmul.mubr.f32.gmra.mrb[0].mxu0 %v1784
        %v4566 = vpop.f32.mrb[0].mxu0
        %v4567 = vadd.f32 0.0, %v4566
        %v4568 = vpop.f32.mrb[0].mxu0
        %4569 = vmatprep.mubr.f32.mxu0 0.0
        %4570 = vmatmul.mubr.f32.gmra.mrb[0].mxu0 %v1786
        %v4571 = vpop.f32.mrb[0].mxu0
        %v4572 = vadd.f32 0.0, %v4571
        %v4573 = vpop.f32.mrb[0].mxu0
        %4574 = vmatprep.mubr.f32.mxu0 0.0
        %4575 = vmatmul.mubr.f32.gmra.mrb[0].mxu0 %v1788
        %v4576 = vpop.f32.mrb[0].mxu0
        %v4577 = vadd.f32 0.0, %v4576
        %v4578 = vpop.f32.mrb[0].mxu0
        %4579 = vdwg.mxu0
        %4580 = vmatprep.subr.mxu0 0.0
        %4581 = vmatpush1.msra.mxu0 %v4542
        %4582 = vmatprep.subr.mxu0 0.0
        %4583 = vmatpush1.msra.mxu0 %v4547
        %4584 = vmatprep.subr.mxu0 0.0
        %4585 = vmatpush1.msra.mxu0 %v4552
        %4586 = vmatprep.subr.mxu0 0.0
        %4587 = vmatpush1.msra.mxu0 %v4557
        %4588 = vmatprep.subr.mxu0 0.0
        %4589 = vmatpush1.msra.mxu0 %v4562
        %4590 = vmatprep.subr.mxu0 0.0
        %4591 = vmatpush1.msra.mxu0 %v4567
        %4592 = vmatprep.subr.mxu0 0.0
        %4593 = vmatpush1.msra.mxu0 %v4572
        %4594 = vmatprep.subr.mxu0 0.0
        %4595 = vmatpush1.msra.mxu0 %v4577
        %4596 = vmatprep.subr.mxu0 0.0
        %4597 = vmatpush1.msra.mxu0 0.0
        %4598 = vmatprep.subr.mxu0 0.0
        %4599 = vmatpush1.msra.mxu0 0.0
        %4600 = vmatprep.subr.mxu0 0.0
        %4601 = vmatpush1.msra.mxu0 0.0
        %4602 = vmatprep.subr.mxu0 0.0
        %4603 = vmatpush1.msra.mxu0 0.0
        %4604 = vmatprep.subr.mxu0 0.0
        %4605 = vmatpush1.msra.mxu0 0.0
        %4606 = vmatprep.subr.mxu0 0.0
        %4607 = vmatpush1.msra.mxu0 0.0
        %4608 = vmatprep.subr.mxu0 0.0
        %4609 = vmatpush1.msra.mxu0 0.0
        %4610 = vmatprep.subr.mxu0 0.0
        %4611 = vmatpush1.msra.mxu0 0.0
        %4612 = vmatprep.subr.mxu0 0.0
        %4613 = vmatpush1.msra.mxu0 0.0
        %4614 = vmatprep.subr.mxu0 0.0
        %4615 = vmatpush1.msra.mxu0 0.0
        %4616 = vmatprep.subr.mxu0 0.0
        %4617 = vmatpush1.msra.mxu0 0.0
        %4618 = vmatprep.subr.mxu0 0.0
        %4619 = vmatpush1.msra.mxu0 0.0
        %4620 = vmatprep.subr.mxu0 0.0
        %4621 = vmatpush1.msra.mxu0 0.0
        %4622 = vmatprep.subr.mxu0 0.0
        %4623 = vmatpush1.msra.mxu0 0.0
        %4624 = vmatprep.subr.mxu0 0.0
        %4625 = vmatpush1.msra.mxu0 0.0
        %4626 = vmatprep.subr.mxu0 0.0
        %4627 = vmatpush1.msra.mxu0 0.0
        %4628 = vmatprep.subr.mxu0 0.0
        %4629 = vmatpush1.msra.mxu0 0.0
        %4630 = vmatprep.subr.mxu0 0.0
        %4631 = vmatpush1.msra.mxu0 0.0
        %4632 = vmatprep.subr.mxu0 0.0
        %4633 = vmatpush1.msra.mxu0 0.0
        %4634 = vmatprep.subr.mxu0 0.0
        %4635 = vmatpush1.msra.mxu0 0.0
        %4636 = vmatprep.subr.mxu0 0.0
        %4637 = vmatpush1.msra.mxu0 0.0
        %4638 = vmatprep.subr.mxu0 0.0
        %4639 = vmatpush1.msra.mxu0 0.0
        %4640 = vmatprep.subr.mxu0 0.0
        %4641 = vmatpush1.msra.mxu0 0.0
        %4642 = vmatprep.subr.mxu0 0.0
        %4643 = vmatpush1.msra.mxu0 0.0
        %4644 = vmatprep.mubr.f32.mxu0 0.0
        %4645 = vmatmul.mubr.f32.gmra.mrb[0].mxu0 %v1896
        %v4646 = vpop.f32.mrb[0].mxu0
        %v4647 = vadd.f32 0.0, %v4646
        %v4648 = vpop.f32.mrb[0].mxu0
        %4649 = vmatprep.mubr.f32.mxu0 0.0
        %4650 = vmatmul.mubr.f32.gmra.mrb[0].mxu0 %v1899
        %v4651 = vpop.f32.mrb[0].mxu0
        %v4652 = vadd.f32 0.0, %v4651
        %v4653 = vpop.f32.mrb[0].mxu0
        %4654 = vmatprep.mubr.f32.mxu0 0.0
        %4655 = vmatmul.mubr.f32.gmra.mrb[0].mxu0 %v1902
        %v4656 = vpop.f32.mrb[0].mxu0
        %v4657 = vadd.f32 0.0, %v4656
        %v4658 = vpop.f32.mrb[0].mxu0
        %4659 = vmatprep.mubr.f32.mxu0 0.0
        %4660 = vmatmul.mubr.f32.gmra.mrb[0].mxu0 %v1905
        %v4661 = vpop.f32.mrb[0].mxu0
        %v4662 = vadd.f32 0.0, %v4661
        %v4663 = vpop.f32.mrb[0].mxu0
        %4664 = vmatprep.mubr.f32.mxu0 0.0
        %4665 = vmatmul.mubr.f32.gmra.mrb[0].mxu0 %v1908
        %v4666 = vpop.f32.mrb[0].mxu0
        %v4667 = vadd.f32 0.0, %v4666
        %v4668 = vpop.f32.mrb[0].mxu0
        %4669 = vmatprep.mubr.f32.mxu0 0.0
        %4670 = vmatmul.mubr.f32.gmra.mrb[0].mxu0 %v1911
        %v4671 = vpop.f32.mrb[0].mxu0
        %v4672 = vadd.f32 0.0, %v4671
        %v4673 = vpop.f32.mrb[0].mxu0
        %4674 = vmatprep.mubr.f32.mxu0 0.0
        %4675 = vmatmul.mubr.f32.gmra.mrb[0].mxu0 %v1914
        %v4676 = vpop.f32.mrb[0].mxu0
        %v4677 = vadd.f32 0.0, %v4676
        %v4678 = vpop.f32.mrb[0].mxu0
        %4679 = vmatprep.mubr.f32.mxu0 0.0
        %4680 = vmatmul.mubr.f32.gmra.mrb[0].mxu0 %v1917
        %v4681 = vpop.f32.mrb[0].mxu0
        %v4682 = vadd.f32 0.0, %v4681
        %v4683 = vpop.f32.mrb[0].mxu0
        %4684 = vdwg.mxu0
        %4687 = vrot.lane.b32.xlu0 %v4542, 32
        %v4688 = vpop.permute.xlu0 %4687
        %4689 = vrot.lane.b32.xlu0 %v4547, 32
        %v4690 = vpop.permute.xlu0 %4689
        %4695 = vrot.lane.b32.xlu0 %v4647, 64
        %v4696 = vpop.permute.xlu0 %4695
        %4697 = vrot.lane.b32.xlu0 %v4652, 64
        %v4698 = vpop.permute.xlu0 %4697
        %4703 = vrot.lane.b32.xlu0 %v4552, 96
        %v4704 = vpop.permute.xlu0 %4703
        %4705 = vrot.lane.b32.xlu0 %v4557, 96
        %v4706 = vpop.permute.xlu0 %4705
        %4711 = vrot.lane.b32.xlu0 %v4562, 32
        %v4712 = vpop.permute.xlu0 %4711
        %4713 = vrot.lane.b32.xlu0 %v4567, 32
        %v4714 = vpop.permute.xlu0 %4713
        %4719 = vrot.lane.b32.xlu0 %v4667, 64
        %v4720 = vpop.permute.xlu0 %4719
        %4721 = vrot.lane.b32.xlu0 %v4672, 64
        %v4722 = vpop.permute.xlu0 %4721
        %4727 = vrot.lane.b32.xlu0 %v4572, 96
        %v4728 = vpop.permute.xlu0 %4727
        %4729 = vrot.lane.b32.xlu0 %v4577, 96
        %v4730 = vpop.permute.xlu0 %4729
        %v4733 = vsel %vm1043, %v4090, %v4688
        %v4734 = vsel %vm1043, %v4091, %v4690
        %v4735 = vsel %vm1363, %v4733, %v4696
        %v4736 = vsel %vm1363, %v4734, %v4698
        %v4737 = vsel %vm2076, %v4735, %v4704
        %v4738 = vsel %vm2076, %v4736, %v4706
        %v4739 = vsel %vm1043, %v4657, %v4712
        %v4740 = vsel %vm1043, %v4662, %v4714
        %v4741 = vsel %vm1363, %v4739, %v4720
        %v4742 = vsel %vm1363, %v4740, %v4722
        %v4743 = vsel %vm2076, %v4741, %v4728
        %v4744 = vsel %vm2076, %v4742, %v4730
        %4745 = vmatprep.subr.mxu0 0.0
        %4746 = vmatpush1.msra.mxu0 %v4092
        %4747 = vmatprep.subr.mxu0 0.0
        %4748 = vmatpush1.msra.mxu0 %v4093
        %4749 = vmatprep.subr.mxu0 0.0
        %4750 = vmatpush1.msra.mxu0 0.0
        %4751 = vmatprep.subr.mxu0 0.0
        %4752 = vmatpush1.msra.mxu0 0.0
        %4753 = vmatprep.subr.mxu0 0.0
        %4754 = vmatpush1.msra.mxu0 0.0
        %4755 = vmatprep.subr.mxu0 0.0
        %4756 = vmatpush1.msra.mxu0 0.0
        %4757 = vmatprep.subr.mxu0 0.0
        %4758 = vmatpush1.msra.mxu0 0.0
        %4759 = vmatprep.subr.mxu0 0.0
        %4760 = vmatpush1.msra.mxu0 0.0
        %4761 = vmatprep.subr.mxu0 0.0
        %4762 = vmatpush1.msra.mxu0 0.0
        %4763 = vmatprep.subr.mxu0 0.0
        %4764 = vmatpush1.msra.mxu0 0.0
        %4765 = vmatprep.subr.mxu0 0.0
        %4766 = vmatpush1.msra.mxu0 0.0
        %4767 = vmatprep.subr.mxu0 0.0
        %4768 = vmatpush1.msra.mxu0 0.0
        %4769 = vmatprep.subr.mxu0 0.0
        %4770 = vmatpush1.msra.mxu0 0.0
        %4771 = vmatprep.subr.mxu0 0.0
        %4772 = vmatpush1.msra.mxu0 0.0
        %4773 = vmatprep.subr.mxu0 0.0
        %4774 = vmatpush1.msra.mxu0 0.0
        %4775 = vmatprep.subr.mxu0 0.0
        %4776 = vmatpush1.msra.mxu0 0.0
        %4777 = vmatprep.subr.mxu0 0.0
        %4778 = vmatpush1.msra.mxu0 0.0
        %4779 = vmatprep.subr.mxu0 0.0
        %4780 = vmatpush1.msra.mxu0 0.0
        %4781 = vmatprep.subr.mxu0 0.0
        %4782 = vmatpush1.msra.mxu0 0.0
        %4783 = vmatprep.subr.mxu0 0.0
        %4784 = vmatpush1.msra.mxu0 0.0
        %4785 = vmatprep.subr.mxu0 0.0
        %4786 = vmatpush1.msra.mxu0 0.0
        %4787 = vmatprep.subr.mxu0 0.0
        %4788 = vmatpush1.msra.mxu0 0.0
        %4789 = vmatprep.subr.mxu0 0.0
        %4790 = vmatpush1.msra.mxu0 0.0
        %4791 = vmatprep.subr.mxu0 0.0
        %4792 = vmatpush1.msra.mxu0 0.0
        %4793 = vmatprep.subr.mxu0 0.0
        %4794 = vmatpush1.msra.mxu0 0.0
        %4795 = vmatprep.subr.mxu0 0.0
        %4796 = vmatpush1.msra.mxu0 0.0
        %4797 = vmatprep.subr.mxu0 0.0
        %4798 = vmatpush1.msra.mxu0 0.0
        %4799 = vmatprep.subr.mxu0 0.0
        %4800 = vmatpush1.msra.mxu0 0.0
        %4801 = vmatprep.subr.mxu0 0.0
        %4802 = vmatpush1.msra.mxu0 0.0
        %4803 = vmatprep.subr.mxu0 0.0
        %4804 = vmatpush1.msra.mxu0 0.0
        %4805 = vmatprep.subr.mxu0 0.0
        %4806 = vmatpush1.msra.mxu0 0.0
        %4807 = vmatprep.subr.mxu0 0.0
        %4808 = vmatpush1.msra.mxu0 0.0
        %4809 = vmatprep.mubr.f32.mxu0 0.0
        %4810 = vmatmul.mubr.f32.gmra.mrb[0].mxu0 %v1773
        %v4811 = vpop.f32.mrb[0].mxu0
        %v4812 = vadd.f32 0.0, %v4811
        %v4813 = vpop.f32.mrb[0].mxu0
        %4814 = vmatprep.mubr.f32.mxu0 0.0
        %4815 = vmatmul.mubr.f32.gmra.mrb[0].mxu0 %v1776
        %v4816 = vpop.f32.mrb[0].mxu0
        %v4817 = vadd.f32 0.0, %v4816
        %v4818 = vpop.f32.mrb[0].mxu0
        %4819 = vmatprep.mubr.f32.mxu0 0.0
        %4820 = vmatmul.mubr.f32.gmra.mrb[0].mxu0 %v1778
        %v4821 = vpop.f32.mrb[0].mxu0
        %v4822 = vadd.f32 0.0, %v4821
        %v4823 = vpop.f32.mrb[0].mxu0
        %4824 = vmatprep.mubr.f32.mxu0 0.0
        %4825 = vmatmul.mubr.f32.gmra.mrb[0].mxu0 %v1780
        %v4826 = vpop.f32.mrb[0].mxu0
        %v4827 = vadd.f32 0.0, %v4826
        %v4828 = vpop.f32.mrb[0].mxu0
        %4829 = vmatprep.mubr.f32.mxu0 0.0
        %4830 = vmatmul.mubr.f32.gmra.mrb[0].mxu0 %v1782
        %v4831 = vpop.f32.mrb[0].mxu0
        %v4832 = vadd.f32 0.0, %v4831
        %v4833 = vpop.f32.mrb[0].mxu0
        %4834 = vmatprep.mubr.f32.mxu0 0.0
        %4835 = vmatmul.mubr.f32.gmra.mrb[0].mxu0 %v1784
        %v4836 = vpop.f32.mrb[0].mxu0
        %v4837 = vadd.f32 0.0, %v4836
        %v4838 = vpop.f32.mrb[0].mxu0
        %4839 = vmatprep.mubr.f32.mxu0 0.0
        %4840 = vmatmul.mubr.f32.gmra.mrb[0].mxu0 %v1786
        %v4841 = vpop.f32.mrb[0].mxu0
        %v4842 = vadd.f32 0.0, %v4841
        %v4843 = vpop.f32.mrb[0].mxu0
        %4844 = vmatprep.mubr.f32.mxu0 0.0
        %4845 = vmatmul.mubr.f32.gmra.mrb[0].mxu0 %v1788
        %v4846 = vpop.f32.mrb[0].mxu0
        %v4847 = vadd.f32 0.0, %v4846
        %v4848 = vpop.f32.mrb[0].mxu0
        %4849 = vdwg.mxu0
        %4850 = vmatprep.subr.mxu0 0.0
        %4851 = vmatpush1.msra.mxu0 %v4812
        %4852 = vmatprep.subr.mxu0 0.0
        %4853 = vmatpush1.msra.mxu0 %v4817
        %4854 = vmatprep.subr.mxu0 0.0
        %4855 = vmatpush1.msra.mxu0 %v4822
        %4856 = vmatprep.subr.mxu0 0.0
        %4857 = vmatpush1.msra.mxu0 %v4827
        %4858 = vmatprep.subr.mxu0 0.0
        %4859 = vmatpush1.msra.mxu0 %v4832
        %4860 = vmatprep.subr.mxu0 0.0
        %4861 = vmatpush1.msra.mxu0 %v4837
        %4862 = vmatprep.subr.mxu0 0.0
        %4863 = vmatpush1.msra.mxu0 %v4842
        %4864 = vmatprep.subr.mxu0 0.0
        %4865 = vmatpush1.msra.mxu0 %v4847
        %4866 = vmatprep.subr.mxu0 0.0
        %4867 = vmatpush1.msra.mxu0 0.0
        %4868 = vmatprep.subr.mxu0 0.0
        %4869 = vmatpush1.msra.mxu0 0.0
        %4870 = vmatprep.subr.mxu0 0.0
        %4871 = vmatpush1.msra.mxu0 0.0
        %4872 = vmatprep.subr.mxu0 0.0
        %4873 = vmatpush1.msra.mxu0 0.0
        %4874 = vmatprep.subr.mxu0 0.0
        %4875 = vmatpush1.msra.mxu0 0.0
        %4876 = vmatprep.subr.mxu0 0.0
        %4877 = vmatpush1.msra.mxu0 0.0
        %4878 = vmatprep.subr.mxu0 0.0
        %4879 = vmatpush1.msra.mxu0 0.0
        %4880 = vmatprep.subr.mxu0 0.0
        %4881 = vmatpush1.msra.mxu0 0.0
        %4882 = vmatprep.subr.mxu0 0.0
        %4883 = vmatpush1.msra.mxu0 0.0
        %4884 = vmatprep.subr.mxu0 0.0
        %4885 = vmatpush1.msra.mxu0 0.0
        %4886 = vmatprep.subr.mxu0 0.0
        %4887 = vmatpush1.msra.mxu0 0.0
        %4888 = vmatprep.subr.mxu0 0.0
        %4889 = vmatpush1.msra.mxu0 0.0
        %4890 = vmatprep.subr.mxu0 0.0
        %4891 = vmatpush1.msra.mxu0 0.0
        %4892 = vmatprep.subr.mxu0 0.0
        %4893 = vmatpush1.msra.mxu0 0.0
        %4894 = vmatprep.subr.mxu0 0.0
        %4895 = vmatpush1.msra.mxu0 0.0
        %4896 = vmatprep.subr.mxu0 0.0
        %4897 = vmatpush1.msra.mxu0 0.0
        %4898 = vmatprep.subr.mxu0 0.0
        %4899 = vmatpush1.msra.mxu0 0.0
        %4900 = vmatprep.subr.mxu0 0.0
        %4901 = vmatpush1.msra.mxu0 0.0
        %4902 = vmatprep.subr.mxu0 0.0
        %4903 = vmatpush1.msra.mxu0 0.0
        %4904 = vmatprep.subr.mxu0 0.0
        %4905 = vmatpush1.msra.mxu0 0.0
        %4906 = vmatprep.subr.mxu0 0.0
        %4907 = vmatpush1.msra.mxu0 0.0
        %4908 = vmatprep.subr.mxu0 0.0
        %4909 = vmatpush1.msra.mxu0 0.0
        %4910 = vmatprep.subr.mxu0 0.0
        %4911 = vmatpush1.msra.mxu0 0.0
        %4912 = vmatprep.subr.mxu0 0.0
        %4913 = vmatpush1.msra.mxu0 0.0
        %4914 = vmatprep.mubr.f32.mxu0 0.0
        %4915 = vmatmul.mubr.f32.gmra.mrb[0].mxu0 %v1896
        %v4916 = vpop.f32.mrb[0].mxu0
        %v4917 = vadd.f32 0.0, %v4916
        %v4918 = vpop.f32.mrb[0].mxu0
        %4919 = vmatprep.mubr.f32.mxu0 0.0
        %4920 = vmatmul.mubr.f32.gmra.mrb[0].mxu0 %v1899
        %v4921 = vpop.f32.mrb[0].mxu0
        %v4922 = vadd.f32 0.0, %v4921
        %v4923 = vpop.f32.mrb[0].mxu0
        %4924 = vmatprep.mubr.f32.mxu0 0.0
        %4925 = vmatmul.mubr.f32.gmra.mrb[0].mxu0 %v1902
        %v4926 = vpop.f32.mrb[0].mxu0
        %v4927 = vadd.f32 0.0, %v4926
        %v4928 = vpop.f32.mrb[0].mxu0
        %4929 = vmatprep.mubr.f32.mxu0 0.0
        %4930 = vmatmul.mubr.f32.gmra.mrb[0].mxu0 %v1905
        %v4931 = vpop.f32.mrb[0].mxu0
        %v4932 = vadd.f32 0.0, %v4931
        %v4933 = vpop.f32.mrb[0].mxu0
        %4934 = vmatprep.mubr.f32.mxu0 0.0
        %4935 = vmatmul.mubr.f32.gmra.mrb[0].mxu0 %v1908
        %v4936 = vpop.f32.mrb[0].mxu0
        %v4937 = vadd.f32 0.0, %v4936
        %v4938 = vpop.f32.mrb[0].mxu0
        %4939 = vmatprep.mubr.f32.mxu0 0.0
        %4940 = vmatmul.mubr.f32.gmra.mrb[0].mxu0 %v1911
        %v4941 = vpop.f32.mrb[0].mxu0
        %v4942 = vadd.f32 0.0, %v4941
        %v4943 = vpop.f32.mrb[0].mxu0
        %4944 = vmatprep.mubr.f32.mxu0 0.0
        %4945 = vmatmul.mubr.f32.gmra.mrb[0].mxu0 %v1914
        %v4946 = vpop.f32.mrb[0].mxu0
        %v4947 = vadd.f32 0.0, %v4946
        %v4948 = vpop.f32.mrb[0].mxu0
        %4949 = vmatprep.mubr.f32.mxu0 0.0
        %4950 = vmatmul.mubr.f32.gmra.mrb[0].mxu0 %v1917
        %v4951 = vpop.f32.mrb[0].mxu0
        %v4952 = vadd.f32 0.0, %v4951
        %v4953 = vpop.f32.mrb[0].mxu0
        %4954 = vdwg.mxu0
        %4957 = vrot.lane.b32.xlu0 %v4812, 32
        %v4958 = vpop.permute.xlu0 %4957
        %4959 = vrot.lane.b32.xlu0 %v4817, 32
        %v4960 = vpop.permute.xlu0 %4959
        %4965 = vrot.lane.b32.xlu0 %v4917, 64
        %v4966 = vpop.permute.xlu0 %4965
        %4967 = vrot.lane.b32.xlu0 %v4922, 64
        %v4968 = vpop.permute.xlu0 %4967
        %4973 = vrot.lane.b32.xlu0 %v4822, 96
        %v4974 = vpop.permute.xlu0 %4973
        %4975 = vrot.lane.b32.xlu0 %v4827, 96
        %v4976 = vpop.permute.xlu0 %4975
        %4981 = vrot.lane.b32.xlu0 %v4832, 32
        %v4982 = vpop.permute.xlu0 %4981
        %4983 = vrot.lane.b32.xlu0 %v4837, 32
        %v4984 = vpop.permute.xlu0 %4983
        %4989 = vrot.lane.b32.xlu0 %v4937, 64
        %v4990 = vpop.permute.xlu0 %4989
        %4991 = vrot.lane.b32.xlu0 %v4942, 64
        %v4992 = vpop.permute.xlu0 %4991
        %4997 = vrot.lane.b32.xlu0 %v4842, 96
        %v4998 = vpop.permute.xlu0 %4997
        %4999 = vrot.lane.b32.xlu0 %v4847, 96
        %v5000 = vpop.permute.xlu0 %4999
        %v5003 = vsel %vm1043, %v4092, %v4958
        %v5004 = vsel %vm1043, %v4093, %v4960
        %v5005 = vsel %vm1363, %v5003, %v4966
        %v5006 = vsel %vm1363, %v5004, %v4968
        %v5007 = vsel %vm2076, %v5005, %v4974
        %v5008 = vsel %vm2076, %v5006, %v4976
        %v5009 = vsel %vm1043, %v4927, %v4982
        %v5010 = vsel %vm1043, %v4932, %v4984
        %v5011 = vsel %vm1363, %v5009, %v4990
        %v5012 = vsel %vm1363, %v5010, %v4992
        %v5013 = vsel %vm2076, %v5011, %v4998
        %v5014 = vsel %vm2076, %v5012, %v5000
        %5015 = vmatprep.subr.mxu0 0.0
        %5016 = vmatpush1.msra.mxu0 %v4094
        %5017 = vmatprep.subr.mxu0 0.0
        %5018 = vmatpush1.msra.mxu0 %v4095
        %5019 = vmatprep.subr.mxu0 0.0
        %5020 = vmatpush1.msra.mxu0 0.0
        %5021 = vmatprep.subr.mxu0 0.0
        %5022 = vmatpush1.msra.mxu0 0.0
        %5023 = vmatprep.subr.mxu0 0.0
        %5024 = vmatpush1.msra.mxu0 0.0
        %5025 = vmatprep.subr.mxu0 0.0
        %5026 = vmatpush1.msra.mxu0 0.0
        %5027 = vmatprep.subr.mxu0 0.0
        %5028 = vmatpush1.msra.mxu0 0.0
        %5029 = vmatprep.subr.mxu0 0.0
        %5030 = vmatpush1.msra.mxu0 0.0
        %5031 = vmatprep.subr.mxu0 0.0
        %5032 = vmatpush1.msra.mxu0 0.0
        %5033 = vmatprep.subr.mxu0 0.0
        %5034 = vmatpush1.msra.mxu0 0.0
        %5035 = vmatprep.subr.mxu0 0.0
        %5036 = vmatpush1.msra.mxu0 0.0
        %5037 = vmatprep.subr.mxu0 0.0
        %5038 = vmatpush1.msra.mxu0 0.0
        %5039 = vmatprep.subr.mxu0 0.0
        %5040 = vmatpush1.msra.mxu0 0.0
        %5041 = vmatprep.subr.mxu0 0.0
        %5042 = vmatpush1.msra.mxu0 0.0
        %5043 = vmatprep.subr.mxu0 0.0
        %5044 = vmatpush1.msra.mxu0 0.0
        %5045 = vmatprep.subr.mxu0 0.0
        %5046 = vmatpush1.msra.mxu0 0.0
        %5047 = vmatprep.subr.mxu0 0.0
        %5048 = vmatpush1.msra.mxu0 0.0
        %5049 = vmatprep.subr.mxu0 0.0
        %5050 = vmatpush1.msra.mxu0 0.0
        %5051 = vmatprep.subr.mxu0 0.0
        %5052 = vmatpush1.msra.mxu0 0.0
        %5053 = vmatprep.subr.mxu0 0.0
        %5054 = vmatpush1.msra.mxu0 0.0
        %5055 = vmatprep.subr.mxu0 0.0
        %5056 = vmatpush1.msra.mxu0 0.0
        %5057 = vmatprep.subr.mxu0 0.0
        %5058 = vmatpush1.msra.mxu0 0.0
        %5059 = vmatprep.subr.mxu0 0.0
        %5060 = vmatpush1.msra.mxu0 0.0
        %5061 = vmatprep.subr.mxu0 0.0
        %5062 = vmatpush1.msra.mxu0 0.0
        %5063 = vmatprep.subr.mxu0 0.0
        %5064 = vmatpush1.msra.mxu0 0.0
        %5065 = vmatprep.subr.mxu0 0.0
        %5066 = vmatpush1.msra.mxu0 0.0
        %5067 = vmatprep.subr.mxu0 0.0
        %5068 = vmatpush1.msra.mxu0 0.0
        %5069 = vmatprep.subr.mxu0 0.0
        %5070 = vmatpush1.msra.mxu0 0.0
        %5071 = vmatprep.subr.mxu0 0.0
        %5072 = vmatpush1.msra.mxu0 0.0
        %5073 = vmatprep.subr.mxu0 0.0
        %5074 = vmatpush1.msra.mxu0 0.0
        %5075 = vmatprep.subr.mxu0 0.0
        %5076 = vmatpush1.msra.mxu0 0.0
        %5077 = vmatprep.subr.mxu0 0.0
        %5078 = vmatpush1.msra.mxu0 0.0
        %5079 = vmatprep.mubr.f32.mxu0 0.0
        %5080 = vmatmul.mubr.f32.gmra.mrb[0].mxu0 %v1773
        %v5081 = vpop.f32.mrb[0].mxu0
        %v5082 = vadd.f32 0.0, %v5081
        %v5083 = vpop.f32.mrb[0].mxu0
        %5084 = vmatprep.mubr.f32.mxu0 0.0
        %5085 = vmatmul.mubr.f32.gmra.mrb[0].mxu0 %v1776
        %v5086 = vpop.f32.mrb[0].mxu0
        %v5087 = vadd.f32 0.0, %v5086
        %v5088 = vpop.f32.mrb[0].mxu0
        %5089 = vmatprep.mubr.f32.mxu0 0.0
        %5090 = vmatmul.mubr.f32.gmra.mrb[0].mxu0 %v1778
        %v5091 = vpop.f32.mrb[0].mxu0
        %v5092 = vadd.f32 0.0, %v5091
        %v5093 = vpop.f32.mrb[0].mxu0
        %5094 = vmatprep.mubr.f32.mxu0 0.0
        %5095 = vmatmul.mubr.f32.gmra.mrb[0].mxu0 %v1780
        %v5096 = vpop.f32.mrb[0].mxu0
        %v5097 = vadd.f32 0.0, %v5096
        %v5098 = vpop.f32.mrb[0].mxu0
        %5099 = vmatprep.mubr.f32.mxu0 0.0
        %5100 = vmatmul.mubr.f32.gmra.mrb[0].mxu0 %v1782
        %v5101 = vpop.f32.mrb[0].mxu0
        %v5102 = vadd.f32 0.0, %v5101
        %v5103 = vpop.f32.mrb[0].mxu0
        %5104 = vmatprep.mubr.f32.mxu0 0.0
        %5105 = vmatmul.mubr.f32.gmra.mrb[0].mxu0 %v1784
        %v5106 = vpop.f32.mrb[0].mxu0
        %v5107 = vadd.f32 0.0, %v5106
        %v5108 = vpop.f32.mrb[0].mxu0
        %5109 = vmatprep.mubr.f32.mxu0 0.0
        %5110 = vmatmul.mubr.f32.gmra.mrb[0].mxu0 %v1786
        %v5111 = vpop.f32.mrb[0].mxu0
        %v5112 = vadd.f32 0.0, %v5111
        %v5113 = vpop.f32.mrb[0].mxu0
        %5114 = vmatprep.mubr.f32.mxu0 0.0
        %5115 = vmatmul.mubr.f32.gmra.mrb[0].mxu0 %v1788
        %v5116 = vpop.f32.mrb[0].mxu0
        %v5117 = vadd.f32 0.0, %v5116
        %v5118 = vpop.f32.mrb[0].mxu0
        %5119 = vdwg.mxu0
        %5120 = vmatprep.subr.mxu0 0.0
        %5121 = vmatpush1.msra.mxu0 %v5082
        %5122 = vmatprep.subr.mxu0 0.0
        %5123 = vmatpush1.msra.mxu0 %v5087
        %5124 = vmatprep.subr.mxu0 0.0
        %5125 = vmatpush1.msra.mxu0 %v5092
        %5126 = vmatprep.subr.mxu0 0.0
        %5127 = vmatpush1.msra.mxu0 %v5097
        %5128 = vmatprep.subr.mxu0 0.0
        %5129 = vmatpush1.msra.mxu0 %v5102
        %5130 = vmatprep.subr.mxu0 0.0
        %5131 = vmatpush1.msra.mxu0 %v5107
        %5132 = vmatprep.subr.mxu0 0.0
        %5133 = vmatpush1.msra.mxu0 %v5112
        %5134 = vmatprep.subr.mxu0 0.0
        %5135 = vmatpush1.msra.mxu0 %v5117
        %5136 = vmatprep.subr.mxu0 0.0
        %5137 = vmatpush1.msra.mxu0 0.0
        %5138 = vmatprep.subr.mxu0 0.0
        %5139 = vmatpush1.msra.mxu0 0.0
        %5140 = vmatprep.subr.mxu0 0.0
        %5141 = vmatpush1.msra.mxu0 0.0
        %5142 = vmatprep.subr.mxu0 0.0
        %5143 = vmatpush1.msra.mxu0 0.0
        %5144 = vmatprep.subr.mxu0 0.0
        %5145 = vmatpush1.msra.mxu0 0.0
        %5146 = vmatprep.subr.mxu0 0.0
        %5147 = vmatpush1.msra.mxu0 0.0
        %5148 = vmatprep.subr.mxu0 0.0
        %5149 = vmatpush1.msra.mxu0 0.0
        %5150 = vmatprep.subr.mxu0 0.0
        %5151 = vmatpush1.msra.mxu0 0.0
        %5152 = vmatprep.subr.mxu0 0.0
        %5153 = vmatpush1.msra.mxu0 0.0
        %5154 = vmatprep.subr.mxu0 0.0
        %5155 = vmatpush1.msra.mxu0 0.0
        %5156 = vmatprep.subr.mxu0 0.0
        %5157 = vmatpush1.msra.mxu0 0.0
        %5158 = vmatprep.subr.mxu0 0.0
        %5159 = vmatpush1.msra.mxu0 0.0
        %5160 = vmatprep.subr.mxu0 0.0
        %5161 = vmatpush1.msra.mxu0 0.0
        %5162 = vmatprep.subr.mxu0 0.0
        %5163 = vmatpush1.msra.mxu0 0.0
        %5164 = vmatprep.subr.mxu0 0.0
        %5165 = vmatpush1.msra.mxu0 0.0
        %5166 = vmatprep.subr.mxu0 0.0
        %5167 = vmatpush1.msra.mxu0 0.0
        %5168 = vmatprep.subr.mxu0 0.0
        %5169 = vmatpush1.msra.mxu0 0.0
        %5170 = vmatprep.subr.mxu0 0.0
        %5171 = vmatpush1.msra.mxu0 0.0
        %5172 = vmatprep.subr.mxu0 0.0
        %5173 = vmatpush1.msra.mxu0 0.0
        %5174 = vmatprep.subr.mxu0 0.0
        %5175 = vmatpush1.msra.mxu0 0.0
        %5176 = vmatprep.subr.mxu0 0.0
        %5177 = vmatpush1.msra.mxu0 0.0
        %5178 = vmatprep.subr.mxu0 0.0
        %5179 = vmatpush1.msra.mxu0 0.0
        %5180 = vmatprep.subr.mxu0 0.0
        %5181 = vmatpush1.msra.mxu0 0.0
        %5182 = vmatprep.subr.mxu0 0.0
        %5183 = vmatpush1.msra.mxu0 0.0
        %5184 = vmatprep.mubr.f32.mxu0 0.0
        %5185 = vmatmul.mubr.f32.gmra.mrb[0].mxu0 %v1896
        %v5186 = vpop.f32.mrb[0].mxu0
        %v5187 = vadd.f32 0.0, %v5186
        %v5188 = vpop.f32.mrb[0].mxu0
        %5189 = vmatprep.mubr.f32.mxu0 0.0
        %5190 = vmatmul.mubr.f32.gmra.mrb[0].mxu0 %v1899
        %v5191 = vpop.f32.mrb[0].mxu0
        %v5192 = vadd.f32 0.0, %v5191
        %v5193 = vpop.f32.mrb[0].mxu0
        %5194 = vmatprep.mubr.f32.mxu0 0.0
        %5195 = vmatmul.mubr.f32.gmra.mrb[0].mxu0 %v1902
        %v5196 = vpop.f32.mrb[0].mxu0
        %v5197 = vadd.f32 0.0, %v5196
        %v5198 = vpop.f32.mrb[0].mxu0
        %5199 = vmatprep.mubr.f32.mxu0 0.0
        %5200 = vmatmul.mubr.f32.gmra.mrb[0].mxu0 %v1905
        %v5201 = vpop.f32.mrb[0].mxu0
        %v5202 = vadd.f32 0.0, %v5201
        %v5203 = vpop.f32.mrb[0].mxu0
        %5204 = vmatprep.mubr.f32.mxu0 0.0
        %5205 = vmatmul.mubr.f32.gmra.mrb[0].mxu0 %v1908
        %v5206 = vpop.f32.mrb[0].mxu0
        %v5207 = vadd.f32 0.0, %v5206
        %v5208 = vpop.f32.mrb[0].mxu0
        %5209 = vmatprep.mubr.f32.mxu0 0.0
        %5210 = vmatmul.mubr.f32.gmra.mrb[0].mxu0 %v1911
        %v5211 = vpop.f32.mrb[0].mxu0
        %v5212 = vadd.f32 0.0, %v5211
        %v5213 = vpop.f32.mrb[0].mxu0
        %5214 = vmatprep.mubr.f32.mxu0 0.0
        %5215 = vmatmul.mubr.f32.gmra.mrb[0].mxu0 %v1914
        %v5216 = vpop.f32.mrb[0].mxu0
        %v5217 = vadd.f32 0.0, %v5216
        %v5218 = vpop.f32.mrb[0].mxu0
        %5219 = vmatprep.mubr.f32.mxu0 0.0
        %5220 = vmatmul.mubr.f32.gmra.mrb[0].mxu0 %v1917
        %v5221 = vpop.f32.mrb[0].mxu0
        %v5222 = vadd.f32 0.0, %v5221
        %v5223 = vpop.f32.mrb[0].mxu0
        %5224 = vdwg.mxu0
        %5227 = vrot.lane.b32.xlu0 %v5082, 32
        %v5228 = vpop.permute.xlu0 %5227
        %5229 = vrot.lane.b32.xlu0 %v5087, 32
        %v5230 = vpop.permute.xlu0 %5229
        %5235 = vrot.lane.b32.xlu0 %v5187, 64
        %v5236 = vpop.permute.xlu0 %5235
        %5237 = vrot.lane.b32.xlu0 %v5192, 64
        %v5238 = vpop.permute.xlu0 %5237
        %5243 = vrot.lane.b32.xlu0 %v5092, 96
        %v5244 = vpop.permute.xlu0 %5243
        %5245 = vrot.lane.b32.xlu0 %v5097, 96
        %v5246 = vpop.permute.xlu0 %5245
        %5251 = vrot.lane.b32.xlu0 %v5102, 32
        %v5252 = vpop.permute.xlu0 %5251
        %5253 = vrot.lane.b32.xlu0 %v5107, 32
        %v5254 = vpop.permute.xlu0 %5253
        %5259 = vrot.lane.b32.xlu0 %v5207, 64
        %v5260 = vpop.permute.xlu0 %5259
        %5261 = vrot.lane.b32.xlu0 %v5212, 64
        %v5262 = vpop.permute.xlu0 %5261
        %5267 = vrot.lane.b32.xlu0 %v5112, 96
        %v5268 = vpop.permute.xlu0 %5267
        %5269 = vrot.lane.b32.xlu0 %v5117, 96
        %v5270 = vpop.permute.xlu0 %5269
        %v5273 = vsel %vm1043, %v4094, %v5228
        %v5274 = vsel %vm1043, %v4095, %v5230
        %v5275 = vsel %vm1363, %v5273, %v5236
        %v5276 = vsel %vm1363, %v5274, %v5238
        %v5277 = vsel %vm2076, %v5275, %v5244
        %v5278 = vsel %vm2076, %v5276, %v5246
        %v5279 = vsel %vm1043, %v5197, %v5252
        %v5280 = vsel %vm1043, %v5202, %v5254
        %v5281 = vsel %vm1363, %v5279, %v5260
        %v5282 = vsel %vm1363, %v5280, %v5262
        %v5283 = vsel %vm2076, %v5281, %v5268
        %v5284 = vsel %vm2076, %v5282, %v5270
        %s5285 = scalar_lea.vmem %s12, 288
        %v5286 = vld [vmem:[%s5285] sm:$0xff]
        %v5287 = vld [vmem:[%s5285 + $0x8] sm:$0xff]
        %v5288 = vld [vmem:[%s5285 + $0x10] sm:$0xff]
        %v5289 = vld [vmem:[%s5285 + $0x18] sm:$0xff]
        %v5290 = vld [vmem:[%s5285 + $0x20] sm:$0xff]
        %v5291 = vld [vmem:[%s5285 + $0x28] sm:$0xff]
        %v5292 = vld [vmem:[%s5285 + $0x30] sm:$0xff]
        %v5293 = vld [vmem:[%s5285 + $0x38] sm:$0xff]
        %v5294 = vld [vmem:[%s5285 + $0x40] sm:$0xff]
        %v5295 = vld [vmem:[%s5285 + $0x48] sm:$0xff]
        %v5296 = vld [vmem:[%s5285 + $0x50] sm:$0xff]
        %v5297 = vld [vmem:[%s5285 + $0x58] sm:$0xff]
        %v5298 = vld [vmem:[%s5285 + $0x60] sm:$0xff]
        %v5299 = vld [vmem:[%s5285 + $0x68] sm:$0xff]
        %v5300 = vld [vmem:[%s5285 + $0x70] sm:$0xff]
        %v5301 = vld [vmem:[%s5285 + $0x78] sm:$0xff]
        %v5302 = vld [vmem:[%s5285 + $0x80] sm:$0xff]
        %v5303 = vld [vmem:[%s5285 + $0x88] sm:$0xff]
        %v5304 = vld [vmem:[%s5285 + $0x90] sm:$0xff]
        %v5305 = vld [vmem:[%s5285 + $0x98] sm:$0xff]
        %v5306 = vld [vmem:[%s5285 + $0xa0] sm:$0xff]
        %v5307 = vld [vmem:[%s5285 + $0xa8] sm:$0xff]
        %v5308 = vld [vmem:[%s5285 + $0xb0] sm:$0xff]
        %v5309 = vld [vmem:[%s5285 + $0xb8] sm:$0xff]
        %v5310 = vld [vmem:[%s5285 + $0xc0] sm:$0xff]
        %v5311 = vld [vmem:[%s5285 + $0xc8] sm:$0xff]
        %v5312 = vld [vmem:[%s5285 + $0xd0] sm:$0xff]
        %v5313 = vld [vmem:[%s5285 + $0xd8] sm:$0xff]
        %v5314 = vld [vmem:[%s5285 + $0xe0] sm:$0xff]
        %v5315 = vld [vmem:[%s5285 + $0xe8] sm:$0xff]
        %v5316 = vld [vmem:[%s5285 + $0xf0] sm:$0xff]
        %v5317 = vld [vmem:[%s5285 + $0xf8] sm:$0xff]
        %v5318 = vld [vmem:[%s5285 + $0x100] sm:$0xff]
        %v5319 = vld [vmem:[%s5285 + $0x108] sm:$0xff]
        %v5320 = vld [vmem:[%s5285 + $0x110] sm:$0xff]
        %v5321 = vld [vmem:[%s5285 + $0x118] sm:$0xff]
        %s5322 = scalar_lea.vmem [#allocation7], 1
        %v5323 = vld [vmem:[%s5322] sm:$0x1]
        %v5325 = vlaneseq
        %v5326 = vshrl.u32 %v5325, 7
        %v5327 = vsub.s32 0, %v5326
        %v5328 = vrot.slane %v5323, %v5327
        %v5331 = vsel %vm1043, %v4407, 0
        %v5334 = vsel %vm1043, %v4412, 0
        %v5337 = vsel %vm1043, %v4677, 0
        %v5340 = vsel %vm1043, %v4682, 0
        %v5343 = vsel %vm1043, %v4947, 0
        %v5346 = vsel %vm1043, %v4952, 0
        %v5349 = vsel %vm1043, %v5217, 0
        %v5352 = vsel %vm1043, %v5222, 0
        %5354 = vmatprep.subr.mxu0 0.0
        %5355 = vmatpush1.msra.mxu0 %v5286
        %5356 = vmatprep.subr.mxu0 0.0
        %5357 = vmatpush1.msra.mxu0 %v5287
        %5358 = vmatprep.subr.mxu0 0.0
        %5359 = vmatpush1.msra.mxu0 %v5288
        %5360 = vmatprep.subr.mxu0 0.0
        %5361 = vmatpush1.msra.mxu0 %v5289
        %5362 = vmatprep.subr.mxu0 0.0
        %5363 = vmatpush1.msra.mxu0 %v5290
        %5364 = vmatprep.subr.mxu0 0.0
        %5365 = vmatpush1.msra.mxu0 %v5291
        %5366 = vmatprep.subr.mxu0 0.0
        %5367 = vmatpush1.msra.mxu0 %v5292
        %5368 = vmatprep.subr.mxu0 0.0
        %5369 = vmatpush1.msra.mxu0 %v5293
        %5370 = vmatprep.subr.mxu0 0.0
        %5371 = vmatpush1.msra.mxu0 %v5294
        %5372 = vmatprep.subr.mxu0 0.0
        %5373 = vmatpush1.msra.mxu0 %v5295
        %5374 = vmatprep.subr.mxu0 0.0
        %5375 = vmatpush1.msra.mxu0 %v5296
        %5376 = vmatprep.subr.mxu0 0.0
        %5377 = vmatpush1.msra.mxu0 %v5297
        %5378 = vmatprep.subr.mxu0 0.0
        %5379 = vmatpush1.msra.mxu0 %v5298
        %5380 = vmatprep.subr.mxu0 0.0
        %5381 = vmatpush1.msra.mxu0 %v5299
        %5382 = vmatprep.subr.mxu0 0.0
        %5383 = vmatpush1.msra.mxu0 %v5300
        %5384 = vmatprep.subr.mxu0 0.0
        %5385 = vmatpush1.msra.mxu0 %v5301
        %5386 = vmatprep.subr.mxu0 0.0
        %5387 = vmatpush1.msra.mxu0 %v5302
        %5388 = vmatprep.subr.mxu0 0.0
        %5389 = vmatpush1.msra.mxu0 %v5303
        %5390 = vmatprep.subr.mxu0 0.0
        %5391 = vmatpush1.msra.mxu0 %v5304
        %5392 = vmatprep.subr.mxu0 0.0
        %5393 = vmatpush1.msra.mxu0 %v5305
        %5394 = vmatprep.subr.mxu0 0.0
        %5395 = vmatpush1.msra.mxu0 %v5306
        %5396 = vmatprep.subr.mxu0 0.0
        %5397 = vmatpush1.msra.mxu0 %v5307
        %5398 = vmatprep.subr.mxu0 0.0
        %5399 = vmatpush1.msra.mxu0 %v5308
        %5400 = vmatprep.subr.mxu0 0.0
        %5401 = vmatpush1.msra.mxu0 %v5309
        %5402 = vmatprep.subr.mxu0 0.0
        %5403 = vmatpush1.msra.mxu0 %v5310
        %5404 = vmatprep.subr.mxu0 0.0
        %5405 = vmatpush1.msra.mxu0 %v5311
        %5406 = vmatprep.subr.mxu0 0.0
        %5407 = vmatpush1.msra.mxu0 %v5312
        %5408 = vmatprep.subr.mxu0 0.0
        %5409 = vmatpush1.msra.mxu0 %v5313
        %5410 = vmatprep.subr.mxu0 0.0
        %5411 = vmatpush1.msra.mxu0 %v5314
        %5412 = vmatprep.subr.mxu0 0.0
        %5413 = vmatpush1.msra.mxu0 %v5315
        %5414 = vmatprep.subr.mxu0 0.0
        %5415 = vmatpush1.msra.mxu0 %v5316
        %5416 = vmatprep.subr.mxu0 0.0
        %5417 = vmatpush1.msra.mxu0 %v5317
        %5418 = vmatprep.mubr.f32.mxu0 %v4473
        %5419 = vmatmul.mubr.f32.gmra.mrb[0].mxu0 %v4467
        %v5420 = vpop.f32.mrb[0].mxu0
        %v5421 = vadd.f32 %v5328, %v5420
        %v5422 = vpop.f32.mrb[0].mxu0
        %5423 = vmatprep.mubr.f32.mxu0 %v4474
        %5424 = vmatmul.mubr.f32.gmra.mrb[0].mxu0 %v4468
        %v5425 = vpop.f32.mrb[0].mxu0
        %v5426 = vadd.f32 %v5328, %v5425
        %v5427 = vpop.f32.mrb[0].mxu0
        %5428 = vmatprep.mubr.f32.mxu0 %v4743
        %5429 = vmatmul.mubr.f32.gmra.mrb[0].mxu0 %v4737
        %v5430 = vpop.f32.mrb[0].mxu0
        %v5431 = vadd.f32 %v5328, %v5430
        %v5432 = vpop.f32.mrb[0].mxu0
        %5433 = vmatprep.mubr.f32.mxu0 %v4744
        %5434 = vmatmul.mubr.f32.gmra.mrb[0].mxu0 %v4738
        %v5435 = vpop.f32.mrb[0].mxu0
        %v5436 = vadd.f32 %v5328, %v5435
        %v5437 = vpop.f32.mrb[0].mxu0
        %5438 = vmatprep.mubr.f32.mxu0 %v5013
        %5439 = vmatmul.mubr.f32.gmra.mrb[0].mxu0 %v5007
        %v5440 = vpop.f32.mrb[0].mxu0
        %v5441 = vadd.f32 %v5328, %v5440
        %v5442 = vpop.f32.mrb[0].mxu0
        %5443 = vmatprep.mubr.f32.mxu0 %v5014
        %5444 = vmatmul.mubr.f32.gmra.mrb[0].mxu0 %v5008
        %v5445 = vpop.f32.mrb[0].mxu0
        %v5446 = vadd.f32 %v5328, %v5445
        %v5447 = vpop.f32.mrb[0].mxu0
        %5448 = vmatprep.mubr.f32.mxu0 %v5283
        %5449 = vmatmul.mubr.f32.gmra.mrb[0].mxu0 %v5277
        %v5450 = vpop.f32.mrb[0].mxu0
        %v5451 = vadd.f32 %v5328, %v5450
        %v5452 = vpop.f32.mrb[0].mxu0
        %5453 = vmatprep.mubr.f32.mxu0 %v5284
        %5454 = vmatmul.mubr.f32.gmra.mrb[0].mxu0 %v5278
        %v5455 = vpop.f32.mrb[0].mxu0
        %v5456 = vadd.f32 %v5328, %v5455
        %v5457 = vpop.f32.mrb[0].mxu0
        %5458 = vdwg.mxu0
        %5459 = vmatprep.subr.mxu0 0.0
        %5460 = vmatpush1.msra.mxu0 %v5318
        %5461 = vmatprep.subr.mxu0 0.0
        %5462 = vmatpush1.msra.mxu0 %v5319
        %5463 = vmatprep.subr.mxu0 0.0
        %5464 = vmatpush1.msra.mxu0 %v5320
        %5465 = vmatprep.subr.mxu0 0.0
        %5466 = vmatpush1.msra.mxu0 %v5321
        %5467 = vmatprep.subr.mxu0 0.0
        %5468 = vmatpush1.msra.mxu0 0.0
        %5469 = vmatprep.subr.mxu0 0.0
        %5470 = vmatpush1.msra.mxu0 0.0
        %5471 = vmatprep.subr.mxu0 0.0
        %5472 = vmatpush1.msra.mxu0 0.0
        %5473 = vmatprep.subr.mxu0 0.0
        %5474 = vmatpush1.msra.mxu0 0.0
        %5475 = vmatprep.subr.mxu0 0.0
        %5476 = vmatpush1.msra.mxu0 0.0
        %5477 = vmatprep.subr.mxu0 0.0
        %5478 = vmatpush1.msra.mxu0 0.0
        %5479 = vmatprep.subr.mxu0 0.0
        %5480 = vmatpush1.msra.mxu0 0.0
        %5481 = vmatprep.subr.mxu0 0.0
        %5482 = vmatpush1.msra.mxu0 0.0
        %5483 = vmatprep.subr.mxu0 0.0
        %5484 = vmatpush1.msra.mxu0 0.0
        %5485 = vmatprep.subr.mxu0 0.0
        %5486 = vmatpush1.msra.mxu0 0.0
        %5487 = vmatprep.subr.mxu0 0.0
        %5488 = vmatpush1.msra.mxu0 0.0
        %5489 = vmatprep.subr.mxu0 0.0
        %5490 = vmatpush1.msra.mxu0 0.0
        %5491 = vmatprep.subr.mxu0 0.0
        %5492 = vmatpush1.msra.mxu0 0.0
        %5493 = vmatprep.subr.mxu0 0.0
        %5494 = vmatpush1.msra.mxu0 0.0
        %5495 = vmatprep.subr.mxu0 0.0
        %5496 = vmatpush1.msra.mxu0 0.0
        %5497 = vmatprep.subr.mxu0 0.0
        %5498 = vmatpush1.msra.mxu0 0.0
        %5499 = vmatprep.subr.mxu0 0.0
        %5500 = vmatpush1.msra.mxu0 0.0
        %5501 = vmatprep.subr.mxu0 0.0
        %5502 = vmatpush1.msra.mxu0 0.0
        %5503 = vmatprep.subr.mxu0 0.0
        %5504 = vmatpush1.msra.mxu0 0.0
        %5505 = vmatprep.subr.mxu0 0.0
        %5506 = vmatpush1.msra.mxu0 0.0
        %5507 = vmatprep.subr.mxu0 0.0
        %5508 = vmatpush1.msra.mxu0 0.0
        %5509 = vmatprep.subr.mxu0 0.0
        %5510 = vmatpush1.msra.mxu0 0.0
        %5511 = vmatprep.subr.mxu0 0.0
        %5512 = vmatpush1.msra.mxu0 0.0
        %5513 = vmatprep.subr.mxu0 0.0
        %5514 = vmatpush1.msra.mxu0 0.0
        %5515 = vmatprep.subr.mxu0 0.0
        %5516 = vmatpush1.msra.mxu0 0.0
        %5517 = vmatprep.subr.mxu0 0.0
        %5518 = vmatpush1.msra.mxu0 0.0
        %5519 = vmatprep.subr.mxu0 0.0
        %5520 = vmatpush1.msra.mxu0 0.0
        %5521 = vmatprep.subr.mxu0 0.0
        %5522 = vmatpush1.msra.mxu0 0.0
        %5523 = vmatprep.mubr.f32.mxu0 0.0
        %5524 = vmatmul.mubr.f32.gmra.mrb[0].mxu0 %v5331
        %v5525 = vpop.f32.mrb[0].mxu0
        %v5526 = vadd.f32 %v5421, %v5525
        %v5527 = vpop.f32.mrb[0].mxu0
        %5528 = vmatprep.mubr.f32.mxu0 0.0
        %5529 = vmatmul.mubr.f32.gmra.mrb[0].mxu0 %v5334
        %v5530 = vpop.f32.mrb[0].mxu0
        %v5531 = vadd.f32 %v5426, %v5530
        %v5532 = vpop.f32.mrb[0].mxu0
        %5533 = vmatprep.mubr.f32.mxu0 0.0
        %5534 = vmatmul.mubr.f32.gmra.mrb[0].mxu0 %v5337
        %v5535 = vpop.f32.mrb[0].mxu0
        %v5536 = vadd.f32 %v5431, %v5535
        %v5537 = vpop.f32.mrb[0].mxu0
        %5538 = vmatprep.mubr.f32.mxu0 0.0
        %5539 = vmatmul.mubr.f32.gmra.mrb[0].mxu0 %v5340
        %v5540 = vpop.f32.mrb[0].mxu0
        %v5541 = vadd.f32 %v5436, %v5540
        %v5542 = vpop.f32.mrb[0].mxu0
        %5543 = vmatprep.mubr.f32.mxu0 0.0
        %5544 = vmatmul.mubr.f32.gmra.mrb[0].mxu0 %v5343
        %v5545 = vpop.f32.mrb[0].mxu0
        %v5546 = vadd.f32 %v5441, %v5545
        %v5547 = vpop.f32.mrb[0].mxu0
        %5548 = vmatprep.mubr.f32.mxu0 0.0
        %5549 = vmatmul.mubr.f32.gmra.mrb[0].mxu0 %v5346
        %v5550 = vpop.f32.mrb[0].mxu0
        %v5551 = vadd.f32 %v5446, %v5550
        %v5552 = vpop.f32.mrb[0].mxu0
        %5553 = vmatprep.mubr.f32.mxu0 0.0
        %5554 = vmatmul.mubr.f32.gmra.mrb[0].mxu0 %v5349
        %v5555 = vpop.f32.mrb[0].mxu0
        %v5556 = vadd.f32 %v5451, %v5555
        %v5557 = vpop.f32.mrb[0].mxu0
        %5558 = vmatprep.mubr.f32.mxu0 0.0
        %5559 = vmatmul.mubr.f32.gmra.mrb[0].mxu0 %v5352
        %v5560 = vpop.f32.mrb[0].mxu0
        %v5561 = vadd.f32 %v5456, %v5560
        %v5562 = vpop.f32.mrb[0].mxu0
        %5563 = vdwg.mxu0
        %v5564 = vadd.f32 %v5526, %v3806
        %v5565 = vadd.f32 %v5531, %v3807
        %v5566 = vadd.f32 %v5536, %v3808
        %v5567 = vadd.f32 %v5541, %v3809
        %v5568 = vadd.f32 %v5546, %v3810
        %v5569 = vadd.f32 %v5551, %v3811
        %v5570 = vadd.f32 %v5556, %v3812
        %v5571 = vadd.f32 %v5561, %v3813
        %s5572 = scalar_lea.vmem %s14, 1
        %v5573 = vld [vmem:[%s5572] sm:$0x1]
        %v5575 = vlaneseq
        %v5576 = vshrl.u32 %v5575, 7
        %v5577 = vsub.s32 0, %v5576
        %v5578 = vrot.slane %v5573, %v5577
        %v5580 = vmul.f32 %v5564, %v5578
        %v5581 = vmul.f32 %v5565, %v5578
        %v5582 = vmul.f32 %v5566, %v5578
        %v5583 = vmul.f32 %v5567, %v5578
        %v5584 = vmul.f32 %v5568, %v5578
        %v5585 = vmul.f32 %v5569, %v5578
        %v5586 = vmul.f32 %v5570, %v5578
        %v5587 = vmul.f32 %v5571, %v5578
        %s5588 = scalar_lea.vmem %s15, 1
        %v5589 = vld [vmem:[%s5588] sm:$0x1]
        %v5591 = vlaneseq
        %v5592 = vshrl.u32 %v5591, 7
        %v5593 = vsub.s32 0, %v5592
        %v5594 = vrot.slane %v5589, %v5593
        %v5596 = vadd.f32 %v5580, %v5594
        %v5597 = vadd.f32 %v5581, %v5594
        %v5598 = vadd.f32 %v5582, %v5594
        %v5599 = vadd.f32 %v5583, %v5594
        %v5600 = vadd.f32 %v5584, %v5594
        %v5601 = vadd.f32 %v5585, %v5594
        %v5602 = vadd.f32 %v5586, %v5594
        %v5603 = vadd.f32 %v5587, %v5594
        %5610 = vrot.lane.b32.xlu0 %v5598, 32
        %v5611 = vpop.permute.xlu0 %5610
        %5612 = vrot.lane.b32.xlu0 %v5599, 32
        %v5613 = vpop.permute.xlu0 %5612
        %5614 = vrot.lane.b32.xlu0 %v5600, 32
        %v5615 = vpop.permute.xlu0 %5614
        %5616 = vrot.lane.b32.xlu0 %v5601, 32
        %v5617 = vpop.permute.xlu0 %5616
        %5618 = vrot.lane.b32.xlu0 %v5602, 32
        %v5619 = vpop.permute.xlu0 %5618
        %5620 = vrot.lane.b32.xlu0 %v5603, 32
        %v5621 = vpop.permute.xlu0 %5620
        %v5628 = vsel %vm1043, %v5596, %v5611
        %v5629 = vsel %vm1043, %v5597, %v5613
        %v5630 = vsel %vm1043, %v5598, %v5615
        %v5631 = vsel %vm1043, %v5599, %v5617
        %v5632 = vsel %vm1043, %v5600, %v5619
        %v5633 = vsel %vm1043, %v5601, %v5621
        %s5634 = scalar_lea.vmem %s8, 128
        %v5635 = vld [vmem:[%s5634] sm:$0xff]
        %v5636 = vld [vmem:[%s5634 + $0x8] sm:$0xff]
        %v5637 = vld [vmem:[%s5634 + $0x10] sm:$0xff]
        %v5638 = vld [vmem:[%s5634 + $0x18] sm:$0xff]
        %v5639 = vld [vmem:[%s5634 + $0x20] sm:$0xff]
        %v5640 = vld [vmem:[%s5634 + $0x28] sm:$0xff]
        %v5641 = vld [vmem:[%s5634 + $0x30] sm:$0xff]
        %v5642 = vld [vmem:[%s5634 + $0x38] sm:$0xff]
        %s5643 = scalar_lea.vmem [#allocation4], 2
        %v5644 = vld [vmem:[%s5643] sm:$0x1]
        %v5646 = vlaneseq
        %v5647 = vshrl.u32 %v5646, 7
        %v5648 = vsub.s32 0, %v5647
        %v5649 = vrot.slane %v5644, %v5648
        %v5652 = vsel %vm1363, %v5628, 0
        %v5655 = vsel %vm1363, %v5629, 0
        %v5658 = vsel %vm1363, %v5630, 0
        %v5661 = vsel %vm1363, %v5631, 0
        %v5664 = vsel %vm1363, %v5632, 0
        %v5667 = vsel %vm1363, %v5633, 0
        %5669 = vmatprep.subr.mxu0 0.0
        %5670 = vmatpush1.msra.mxu0 %v5635
        %5671 = vmatprep.subr.mxu0 0.0
        %5672 = vmatpush1.msra.mxu0 %v5636
        %5673 = vmatprep.subr.mxu0 0.0
        %5674 = vmatpush1.msra.mxu0 %v5637
        %5675 = vmatprep.subr.mxu0 0.0
        %5676 = vmatpush1.msra.mxu0 %v5638
        %5677 = vmatprep.subr.mxu0 0.0
        %5678 = vmatpush1.msra.mxu0 %v5639
        %5679 = vmatprep.subr.mxu0 0.0
        %5680 = vmatpush1.msra.mxu0 %v5640
        %5681 = vmatprep.subr.mxu0 0.0
        %5682 = vmatpush1.msra.mxu0 %v5641
        %5683 = vmatprep.subr.mxu0 0.0
        %5684 = vmatpush1.msra.mxu0 %v5642
        %5685 = vmatprep.subr.mxu0 0.0
        %5686 = vmatpush1.msra.mxu0 0.0
        %5687 = vmatprep.subr.mxu0 0.0
        %5688 = vmatpush1.msra.mxu0 0.0
        %5689 = vmatprep.subr.mxu0 0.0
        %5690 = vmatpush1.msra.mxu0 0.0
        %5691 = vmatprep.subr.mxu0 0.0
        %5692 = vmatpush1.msra.mxu0 0.0
        %5693 = vmatprep.subr.mxu0 0.0
        %5694 = vmatpush1.msra.mxu0 0.0
        %5695 = vmatprep.subr.mxu0 0.0
        %5696 = vmatpush1.msra.mxu0 0.0
        %5697 = vmatprep.subr.mxu0 0.0
        %5698 = vmatpush1.msra.mxu0 0.0
        %5699 = vmatprep.subr.mxu0 0.0
        %5700 = vmatpush1.msra.mxu0 0.0
        %5701 = vmatprep.subr.mxu0 0.0
        %5702 = vmatpush1.msra.mxu0 0.0
        %5703 = vmatprep.subr.mxu0 0.0
        %5704 = vmatpush1.msra.mxu0 0.0
        %5705 = vmatprep.subr.mxu0 0.0
        %5706 = vmatpush1.msra.mxu0 0.0
        %5707 = vmatprep.subr.mxu0 0.0
        %5708 = vmatpush1.msra.mxu0 0.0
        %5709 = vmatprep.subr.mxu0 0.0
        %5710 = vmatpush1.msra.mxu0 0.0
        %5711 = vmatprep.subr.mxu0 0.0
        %5712 = vmatpush1.msra.mxu0 0.0
        %5713 = vmatprep.subr.mxu0 0.0
        %5714 = vmatpush1.msra.mxu0 0.0
        %5715 = vmatprep.subr.mxu0 0.0
        %5716 = vmatpush1.msra.mxu0 0.0
        %5717 = vmatprep.subr.mxu0 0.0
        %5718 = vmatpush1.msra.mxu0 0.0
        %5719 = vmatprep.subr.mxu0 0.0
        %5720 = vmatpush1.msra.mxu0 0.0
        %5721 = vmatprep.subr.mxu0 0.0
        %5722 = vmatpush1.msra.mxu0 0.0
        %5723 = vmatprep.subr.mxu0 0.0
        %5724 = vmatpush1.msra.mxu0 0.0
        %5725 = vmatprep.subr.mxu0 0.0
        %5726 = vmatpush1.msra.mxu0 0.0
        %5727 = vmatprep.subr.mxu0 0.0
        %5728 = vmatpush1.msra.mxu0 0.0
        %5729 = vmatprep.subr.mxu0 0.0
        %5730 = vmatpush1.msra.mxu0 0.0
        %5731 = vmatprep.subr.mxu0 0.0
        %5732 = vmatpush1.msra.mxu0 0.0
        %5733 = vmatprep.mubr.f32.mxu0 0.0
        %5734 = vmatmul.mubr.f32.gmra.mrb[0].mxu0 %v5652
        %v5735 = vpop.f32.mrb[0].mxu0
        %v5736 = vadd.f32 %v5649, %v5735
        %v5737 = vpop.f32.mrb[0].mxu0
        %5738 = vmatprep.mubr.f32.mxu0 0.0
        %5739 = vmatmul.mubr.f32.gmra.mrb[0].mxu0 %v5655
        %v5740 = vpop.f32.mrb[0].mxu0
        %v5741 = vadd.f32 %v5649, %v5740
        %v5742 = vpop.f32.mrb[0].mxu0
        %5743 = vmatprep.mubr.f32.mxu0 0.0
        %5744 = vmatmul.mubr.f32.gmra.mrb[0].mxu0 %v5658
        %v5745 = vpop.f32.mrb[0].mxu0
        %v5746 = vadd.f32 %v5649, %v5745
        %v5747 = vpop.f32.mrb[0].mxu0
        %5748 = vmatprep.mubr.f32.mxu0 0.0
        %5749 = vmatmul.mubr.f32.gmra.mrb[0].mxu0 %v5661
        %v5750 = vpop.f32.mrb[0].mxu0
        %v5751 = vadd.f32 %v5649, %v5750
        %v5752 = vpop.f32.mrb[0].mxu0
        %5753 = vmatprep.mubr.f32.mxu0 0.0
        %5754 = vmatmul.mubr.f32.gmra.mrb[0].mxu0 %v5664
        %v5755 = vpop.f32.mrb[0].mxu0
        %v5756 = vadd.f32 %v5649, %v5755
        %v5757 = vpop.f32.mrb[0].mxu0
        %5758 = vmatprep.mubr.f32.mxu0 0.0
        %5759 = vmatmul.mubr.f32.gmra.mrb[0].mxu0 %v5667
        %v5760 = vpop.f32.mrb[0].mxu0
        %v5761 = vadd.f32 %v5649, %v5760
        %v5762 = vpop.f32.mrb[0].mxu0
        %5763 = vdwg.mxu0
        %v5764 = vtanh.pop %v5736
        %v5765 = vtanh.pop %v5741
        %v5766 = vtanh.pop %v5746
        %v5767 = vtanh.pop %v5751
        %v5768 = vtanh.pop %v5756
        %v5769 = vtanh.pop %v5761
        %v5770 = vxor.u32 %v5736, 2147483648
        %v5771 = vxor.u32 %v5741, 2147483648
        %v5772 = vxor.u32 %v5746, 2147483648
        %v5773 = vxor.u32 %v5751, 2147483648
        %v5774 = vxor.u32 %v5756, 2147483648
        %v5775 = vxor.u32 %v5761, 2147483648
        %v5776 = vmul.f32 %v5770, 1.442695
        %v5777 = vpow.pop %v5776
        %v5778 = vmul.f32 %v5771, 1.442695
        %v5779 = vpow.pop %v5778
        %v5780 = vmul.f32 %v5772, 1.442695
        %v5781 = vpow.pop %v5780
        %v5782 = vmul.f32 %v5773, 1.442695
        %v5783 = vpow.pop %v5782
        %v5784 = vmul.f32 %v5774, 1.442695
        %v5785 = vpow.pop %v5784
        %v5786 = vmul.f32 %v5775, 1.442695
        %v5787 = vpow.pop %v5786
        %v5788 = vadd.f32 %v5777, 1.0
        %v5789 = vadd.f32 %v5779, 1.0
        %v5790 = vadd.f32 %v5781, 1.0
        %v5791 = vadd.f32 %v5783, 1.0
        %v5792 = vadd.f32 %v5785, 1.0
        %v5793 = vadd.f32 %v5787, 1.0
        %v5794 = vrcp.pop %v5788
        %v5795 = vmul.f32 1.0, %v5794
        %v5796 = vrcp.pop %v5789
        %v5797 = vmul.f32 1.0, %v5796
        %v5798 = vrcp.pop %v5790
        %v5799 = vmul.f32 1.0, %v5798
        %v5800 = vrcp.pop %v5791
        %v5801 = vmul.f32 1.0, %v5800
        %v5802 = vrcp.pop %v5792
        %v5803 = vmul.f32 1.0, %v5802
        %v5804 = vrcp.pop %v5793
        %v5805 = vmul.f32 1.0, %v5804
        %5812 = vrot.lane.b32.xlu0 %v5795, 96
        %v5813 = vpop.permute.xlu0 %5812
        %5814 = vrot.lane.b32.xlu0 %v5797, 96
        %v5815 = vpop.permute.xlu0 %5814
        %5816 = vrot.lane.b32.xlu0 %v5799, 96
        %v5817 = vpop.permute.xlu0 %5816
        %5818 = vrot.lane.b32.xlu0 %v5801, 96
        %v5819 = vpop.permute.xlu0 %5818
        %5820 = vrot.lane.b32.xlu0 %v5803, 96
        %v5821 = vpop.permute.xlu0 %5820
        %5822 = vrot.lane.b32.xlu0 %v5805, 96
        %v5823 = vpop.permute.xlu0 %5822
        %v5830 = vmul.f32 %v5764, %v5813
        %v5831 = vmul.f32 %v5765, %v5815
        %v5832 = vmul.f32 %v5766, %v5817
        %v5833 = vmul.f32 %v5767, %v5819
        %v5834 = vmul.f32 %v5768, %v5821
        %v5835 = vmul.f32 %v5769, %v5823
        %s5836 = scalar_lea.vmem %s10, 128
        %v5837 = vld [vmem:[%s5836] sm:$0xff]
        %v5838 = vld [vmem:[%s5836 + $0x8] sm:$0xff]
        %v5839 = vld [vmem:[%s5836 + $0x10] sm:$0xff]
        %v5840 = vld [vmem:[%s5836 + $0x18] sm:$0xff]
        %v5841 = vld [vmem:[%s5836 + $0x20] sm:$0xff]
        %v5842 = vld [vmem:[%s5836 + $0x28] sm:$0xff]
        %v5843 = vld [vmem:[%s5836 + $0x30] sm:$0xff]
        %v5844 = vld [vmem:[%s5836 + $0x38] sm:$0xff]
        %s5845 = scalar_lea.vmem [#allocation6], 4
        %v5846 = vld [vmem:[%s5845] sm:$0x3]
        %v5848 = vlaneseq
        %v5849 = vshrl.u32 %v5848, 7
        %v5850 = vsub.s32 0, %v5849
        %v5851 = vrot.slane %v5846, %v5850
        %v5852 = vlaneseq
        %v5853 = vshrl.u32 %v5852, 7
        %v5854 = vsub.s32 1, %v5853
        %v5855 = vrot.slane %v5846, %v5854
        %v5859 = vsel %vm1043, %v5834, 0
        %v5862 = vsel %vm1043, %v5835, 0
        %5864 = vmatprep.subr.mxu0 %v5838
        %5865 = vmatpush1.msra.mxu0 %v5837
        %5866 = vmatprep.subr.mxu0 %v5840
        %5867 = vmatpush1.msra.mxu0 %v5839
        %5868 = vmatprep.subr.mxu0 %v5842
        %5869 = vmatpush1.msra.mxu0 %v5841
        %5870 = vmatprep.subr.mxu0 %v5844
        %5871 = vmatpush1.msra.mxu0 %v5843
        %5872 = vmatprep.subr.mxu0 0.0
        %5873 = vmatpush1.msra.mxu0 0.0
        %5874 = vmatprep.subr.mxu0 0.0
        %5875 = vmatpush1.msra.mxu0 0.0
        %5876 = vmatprep.subr.mxu0 0.0
        %5877 = vmatpush1.msra.mxu0 0.0
        %5878 = vmatprep.subr.mxu0 0.0
        %5879 = vmatpush1.msra.mxu0 0.0
        %5880 = vmatprep.subr.mxu0 0.0
        %5881 = vmatpush1.msra.mxu0 0.0
        %5882 = vmatprep.subr.mxu0 0.0
        %5883 = vmatpush1.msra.mxu0 0.0
        %5884 = vmatprep.subr.mxu0 0.0
        %5885 = vmatpush1.msra.mxu0 0.0
        %5886 = vmatprep.subr.mxu0 0.0
        %5887 = vmatpush1.msra.mxu0 0.0
        %5888 = vmatprep.subr.mxu0 0.0
        %5889 = vmatpush1.msra.mxu0 0.0
        %5890 = vmatprep.subr.mxu0 0.0
        %5891 = vmatpush1.msra.mxu0 0.0
        %5892 = vmatprep.subr.mxu0 0.0
        %5893 = vmatpush1.msra.mxu0 0.0
        %5894 = vmatprep.subr.mxu0 0.0
        %5895 = vmatpush1.msra.mxu0 0.0
        %5896 = vmatprep.subr.mxu0 0.0
        %5897 = vmatpush1.msra.mxu0 0.0
        %5898 = vmatprep.subr.mxu0 0.0
        %5899 = vmatpush1.msra.mxu0 0.0
        %5900 = vmatprep.subr.mxu0 0.0
        %5901 = vmatpush1.msra.mxu0 0.0
        %5902 = vmatprep.subr.mxu0 0.0
        %5903 = vmatpush1.msra.mxu0 0.0
        %5904 = vmatprep.subr.mxu0 0.0
        %5905 = vmatpush1.msra.mxu0 0.0
        %5906 = vmatprep.subr.mxu0 0.0
        %5907 = vmatpush1.msra.mxu0 0.0
        %5908 = vmatprep.subr.mxu0 0.0
        %5909 = vmatpush1.msra.mxu0 0.0
        %5910 = vmatprep.subr.mxu0 0.0
        %5911 = vmatpush1.msra.mxu0 0.0
        %5912 = vmatprep.subr.mxu0 0.0
        %5913 = vmatpush1.msra.mxu0 0.0
        %5914 = vmatprep.subr.mxu0 0.0
        %5915 = vmatpush1.msra.mxu0 0.0
        %5916 = vmatprep.subr.mxu0 0.0
        %5917 = vmatpush1.msra.mxu0 0.0
        %5918 = vmatprep.subr.mxu0 0.0
        %5919 = vmatpush1.msra.mxu0 0.0
        %5920 = vmatprep.subr.mxu0 0.0
        %5921 = vmatpush1.msra.mxu0 0.0
        %5922 = vmatprep.subr.mxu0 0.0
        %5923 = vmatpush1.msra.mxu0 0.0
        %5924 = vmatprep.subr.mxu0 0.0
        %5925 = vmatpush1.msra.mxu0 0.0
        %5926 = vmatprep.subr.mxu0 0.0
        %5927 = vmatpush1.msra.mxu0 0.0
        %5928 = vmatprep.mubr.f32.mxu0 0.0
        %5929 = vmatmul.mubr.f32.gmra.mrb[0].mxu0 %v5859
        %v5930 = vpop.f32.mrb[0].mxu0
        %v5931 = vadd.f32 %v5851, %v5930
        %v5932 = vpop.f32.mrb[0].mxu0
        %v5933 = vadd.f32 %v5855, %v5932
        %5934 = vmatprep.mubr.f32.mxu0 0.0
        %5935 = vmatmul.mubr.f32.gmra.mrb[0].mxu0 %v5862
        %v5936 = vpop.f32.mrb[0].mxu0
        %v5937 = vadd.f32 %v5851, %v5936
        %v5938 = vpop.f32.mrb[0].mxu0
        %v5939 = vadd.f32 %v5855, %v5938
        %5940 = vdwg.mxu0
        %v5941 = vadd.f32 %v4201, %v5931
        %v5942 = vadd.f32 %v4202, %v5933
        %v5943 = vadd.f32 %v4203, %v5937
        %v5944 = vadd.f32 %v4204, %v5939
        %5945 = vmatprep.subr.mxu0 0.0
        %5946 = vmatpush1.msra.mxu0 %v5830
        %5947 = vmatprep.subr.mxu0 0.0
        %5948 = vmatpush1.msra.mxu0 %v5831
        %5949 = vmatprep.subr.mxu0 0.0
        %5950 = vmatpush1.msra.mxu0 0.0
        %5951 = vmatprep.subr.mxu0 0.0
        %5952 = vmatpush1.msra.mxu0 0.0
        %5953 = vmatprep.subr.mxu0 0.0
        %5954 = vmatpush1.msra.mxu0 0.0
        %5955 = vmatprep.subr.mxu0 0.0
        %5956 = vmatpush1.msra.mxu0 0.0
        %5957 = vmatprep.subr.mxu0 0.0
        %5958 = vmatpush1.msra.mxu0 0.0
        %5959 = vmatprep.subr.mxu0 0.0
        %5960 = vmatpush1.msra.mxu0 0.0
        %5961 = vmatprep.subr.mxu0 0.0
        %5962 = vmatpush1.msra.mxu0 0.0
        %5963 = vmatprep.subr.mxu0 0.0
        %5964 = vmatpush1.msra.mxu0 0.0
        %5965 = vmatprep.subr.mxu0 0.0
        %5966 = vmatpush1.msra.mxu0 0.0
        %5967 = vmatprep.subr.mxu0 0.0
        %5968 = vmatpush1.msra.mxu0 0.0
        %5969 = vmatprep.subr.mxu0 0.0
        %5970 = vmatpush1.msra.mxu0 0.0
        %5971 = vmatprep.subr.mxu0 0.0
        %5972 = vmatpush1.msra.mxu0 0.0
        %5973 = vmatprep.subr.mxu0 0.0
        %5974 = vmatpush1.msra.mxu0 0.0
        %5975 = vmatprep.subr.mxu0 0.0
        %5976 = vmatpush1.msra.mxu0 0.0
        %5977 = vmatprep.subr.mxu0 0.0
        %5978 = vmatpush1.msra.mxu0 0.0
        %5979 = vmatprep.subr.mxu0 0.0
        %5980 = vmatpush1.msra.mxu0 0.0
        %5981 = vmatprep.subr.mxu0 0.0
        %5982 = vmatpush1.msra.mxu0 0.0
        %5983 = vmatprep.subr.mxu0 0.0
        %5984 = vmatpush1.msra.mxu0 0.0
        %5985 = vmatprep.subr.mxu0 0.0
        %5986 = vmatpush1.msra.mxu0 0.0
        %5987 = vmatprep.subr.mxu0 0.0
        %5988 = vmatpush1.msra.mxu0 0.0
        %5989 = vmatprep.subr.mxu0 0.0
        %5990 = vmatpush1.msra.mxu0 0.0
        %5991 = vmatprep.subr.mxu0 0.0
        %5992 = vmatpush1.msra.mxu0 0.0
        %5993 = vmatprep.subr.mxu0 0.0
        %5994 = vmatpush1.msra.mxu0 0.0
        %5995 = vmatprep.subr.mxu0 0.0
        %5996 = vmatpush1.msra.mxu0 0.0
        %5997 = vmatprep.subr.mxu0 0.0
        %5998 = vmatpush1.msra.mxu0 0.0
        %5999 = vmatprep.subr.mxu0 0.0
        %6000 = vmatpush1.msra.mxu0 0.0
        %6001 = vmatprep.subr.mxu0 0.0
        %6002 = vmatpush1.msra.mxu0 0.0
        %6003 = vmatprep.subr.mxu0 0.0
        %6004 = vmatpush1.msra.mxu0 0.0
        %6005 = vmatprep.subr.mxu0 0.0
        %6006 = vmatpush1.msra.mxu0 0.0
        %6007 = vmatprep.subr.mxu0 0.0
        %6008 = vmatpush1.msra.mxu0 0.0
        %6009 = vmatprep.mubr.f32.mxu0 0.0
        %6010 = vmatmul.mubr.f32.gmra.mrb[0].mxu0 %v1773
        %v6011 = vpop.f32.mrb[0].mxu0
        %v6012 = vadd.f32 0.0, %v6011
        %v6013 = vpop.f32.mrb[0].mxu0
        %6014 = vmatprep.mubr.f32.mxu0 0.0
        %6015 = vmatmul.mubr.f32.gmra.mrb[0].mxu0 %v1776
        %v6016 = vpop.f32.mrb[0].mxu0
        %v6017 = vadd.f32 0.0, %v6016
        %v6018 = vpop.f32.mrb[0].mxu0
        %6019 = vmatprep.mubr.f32.mxu0 0.0
        %6020 = vmatmul.mubr.f32.gmra.mrb[0].mxu0 %v1778
        %v6021 = vpop.f32.mrb[0].mxu0
        %v6022 = vadd.f32 0.0, %v6021
        %v6023 = vpop.f32.mrb[0].mxu0
        %6024 = vmatprep.mubr.f32.mxu0 0.0
        %6025 = vmatmul.mubr.f32.gmra.mrb[0].mxu0 %v1780
        %v6026 = vpop.f32.mrb[0].mxu0
        %v6027 = vadd.f32 0.0, %v6026
        %v6028 = vpop.f32.mrb[0].mxu0
        %6029 = vmatprep.mubr.f32.mxu0 0.0
        %6030 = vmatmul.mubr.f32.gmra.mrb[0].mxu0 %v1782
        %v6031 = vpop.f32.mrb[0].mxu0
        %v6032 = vadd.f32 0.0, %v6031
        %v6033 = vpop.f32.mrb[0].mxu0
        %6034 = vmatprep.mubr.f32.mxu0 0.0
        %6035 = vmatmul.mubr.f32.gmra.mrb[0].mxu0 %v1784
        %v6036 = vpop.f32.mrb[0].mxu0
        %v6037 = vadd.f32 0.0, %v6036
        %v6038 = vpop.f32.mrb[0].mxu0
        %6039 = vmatprep.mubr.f32.mxu0 0.0
        %6040 = vmatmul.mubr.f32.gmra.mrb[0].mxu0 %v1786
        %v6041 = vpop.f32.mrb[0].mxu0
        %v6042 = vadd.f32 0.0, %v6041
        %v6043 = vpop.f32.mrb[0].mxu0
        %6044 = vmatprep.mubr.f32.mxu0 0.0
        %6045 = vmatmul.mubr.f32.gmra.mrb[0].mxu0 %v1788
        %v6046 = vpop.f32.mrb[0].mxu0
        %v6047 = vadd.f32 0.0, %v6046
        %v6048 = vpop.f32.mrb[0].mxu0
        %6049 = vdwg.mxu0
        %6050 = vmatprep.subr.mxu0 0.0
        %6051 = vmatpush1.msra.mxu0 %v6012
        %6052 = vmatprep.subr.mxu0 0.0
        %6053 = vmatpush1.msra.mxu0 %v6017
        %6054 = vmatprep.subr.mxu0 0.0
        %6055 = vmatpush1.msra.mxu0 %v6022
        %6056 = vmatprep.subr.mxu0 0.0
        %6057 = vmatpush1.msra.mxu0 %v6027
        %6058 = vmatprep.subr.mxu0 0.0
        %6059 = vmatpush1.msra.mxu0 %v6032
        %6060 = vmatprep.subr.mxu0 0.0
        %6061 = vmatpush1.msra.mxu0 %v6037
        %6062 = vmatprep.subr.mxu0 0.0
        %6063 = vmatpush1.msra.mxu0 %v6042
        %6064 = vmatprep.subr.mxu0 0.0
        %6065 = vmatpush1.msra.mxu0 %v6047
        %6066 = vmatprep.subr.mxu0 0.0
        %6067 = vmatpush1.msra.mxu0 0.0
        %6068 = vmatprep.subr.mxu0 0.0
        %6069 = vmatpush1.msra.mxu0 0.0
        %6070 = vmatprep.subr.mxu0 0.0
        %6071 = vmatpush1.msra.mxu0 0.0
        %6072 = vmatprep.subr.mxu0 0.0
        %6073 = vmatpush1.msra.mxu0 0.0
        %6074 = vmatprep.subr.mxu0 0.0
        %6075 = vmatpush1.msra.mxu0 0.0
        %6076 = vmatprep.subr.mxu0 0.0
        %6077 = vmatpush1.msra.mxu0 0.0
        %6078 = vmatprep.subr.mxu0 0.0
        %6079 = vmatpush1.msra.mxu0 0.0
        %6080 = vmatprep.subr.mxu0 0.0
        %6081 = vmatpush1.msra.mxu0 0.0
        %6082 = vmatprep.subr.mxu0 0.0
        %6083 = vmatpush1.msra.mxu0 0.0
        %6084 = vmatprep.subr.mxu0 0.0
        %6085 = vmatpush1.msra.mxu0 0.0
        %6086 = vmatprep.subr.mxu0 0.0
        %6087 = vmatpush1.msra.mxu0 0.0
        %6088 = vmatprep.subr.mxu0 0.0
        %6089 = vmatpush1.msra.mxu0 0.0
        %6090 = vmatprep.subr.mxu0 0.0
        %6091 = vmatpush1.msra.mxu0 0.0
        %6092 = vmatprep.subr.mxu0 0.0
        %6093 = vmatpush1.msra.mxu0 0.0
        %6094 = vmatprep.subr.mxu0 0.0
        %6095 = vmatpush1.msra.mxu0 0.0
        %6096 = vmatprep.subr.mxu0 0.0
        %6097 = vmatpush1.msra.mxu0 0.0
        %6098 = vmatprep.subr.mxu0 0.0
        %6099 = vmatpush1.msra.mxu0 0.0
        %6100 = vmatprep.subr.mxu0 0.0
        %6101 = vmatpush1.msra.mxu0 0.0
        %6102 = vmatprep.subr.mxu0 0.0
        %6103 = vmatpush1.msra.mxu0 0.0
        %6104 = vmatprep.subr.mxu0 0.0
        %6105 = vmatpush1.msra.mxu0 0.0
        %6106 = vmatprep.subr.mxu0 0.0
        %6107 = vmatpush1.msra.mxu0 0.0
        %6108 = vmatprep.subr.mxu0 0.0
        %6109 = vmatpush1.msra.mxu0 0.0
        %6110 = vmatprep.subr.mxu0 0.0
        %6111 = vmatpush1.msra.mxu0 0.0
        %6112 = vmatprep.subr.mxu0 0.0
        %6113 = vmatpush1.msra.mxu0 0.0
        %6114 = vmatprep.mubr.f32.mxu0 0.0
        %6115 = vmatmul.mubr.f32.gmra.mrb[0].mxu0 %v1896
        %v6116 = vpop.f32.mrb[0].mxu0
        %v6117 = vadd.f32 0.0, %v6116
        %v6118 = vpop.f32.mrb[0].mxu0
        %6119 = vmatprep.mubr.f32.mxu0 0.0
        %6120 = vmatmul.mubr.f32.gmra.mrb[0].mxu0 %v1899
        %v6121 = vpop.f32.mrb[0].mxu0
        %v6122 = vadd.f32 0.0, %v6121
        %v6123 = vpop.f32.mrb[0].mxu0
        %6124 = vmatprep.mubr.f32.mxu0 0.0
        %6125 = vmatmul.mubr.f32.gmra.mrb[0].mxu0 %v1902
        %v6126 = vpop.f32.mrb[0].mxu0
        %v6127 = vadd.f32 0.0, %v6126
        %v6128 = vpop.f32.mrb[0].mxu0
        %6129 = vmatprep.mubr.f32.mxu0 0.0
        %6130 = vmatmul.mubr.f32.gmra.mrb[0].mxu0 %v1905
        %v6131 = vpop.f32.mrb[0].mxu0
        %v6132 = vadd.f32 0.0, %v6131
        %v6133 = vpop.f32.mrb[0].mxu0
        %6134 = vmatprep.mubr.f32.mxu0 0.0
        %6135 = vmatmul.mubr.f32.gmra.mrb[0].mxu0 %v1908
        %v6136 = vpop.f32.mrb[0].mxu0
        %v6137 = vadd.f32 0.0, %v6136
        %v6138 = vpop.f32.mrb[0].mxu0
        %6139 = vmatprep.mubr.f32.mxu0 0.0
        %6140 = vmatmul.mubr.f32.gmra.mrb[0].mxu0 %v1911
        %v6141 = vpop.f32.mrb[0].mxu0
        %v6142 = vadd.f32 0.0, %v6141
        %v6143 = vpop.f32.mrb[0].mxu0
        %6144 = vmatprep.mubr.f32.mxu0 0.0
        %6145 = vmatmul.mubr.f32.gmra.mrb[0].mxu0 %v1914
        %v6146 = vpop.f32.mrb[0].mxu0
        %v6147 = vadd.f32 0.0, %v6146
        %v6148 = vpop.f32.mrb[0].mxu0
        %6149 = vmatprep.mubr.f32.mxu0 0.0
        %6150 = vmatmul.mubr.f32.gmra.mrb[0].mxu0 %v1917
        %v6151 = vpop.f32.mrb[0].mxu0
        %v6152 = vadd.f32 0.0, %v6151
        %v6153 = vpop.f32.mrb[0].mxu0
        %6154 = vdwg.mxu0
        %6157 = vrot.lane.b32.xlu0 %v6012, 32
        %v6158 = vpop.permute.xlu0 %6157
        %6159 = vrot.lane.b32.xlu0 %v6017, 32
        %v6160 = vpop.permute.xlu0 %6159
        %6165 = vrot.lane.b32.xlu0 %v6117, 64
        %v6166 = vpop.permute.xlu0 %6165
        %6167 = vrot.lane.b32.xlu0 %v6122, 64
        %v6168 = vpop.permute.xlu0 %6167
        %6173 = vrot.lane.b32.xlu0 %v6022, 96
        %v6174 = vpop.permute.xlu0 %6173
        %6175 = vrot.lane.b32.xlu0 %v6027, 96
        %v6176 = vpop.permute.xlu0 %6175
        %6181 = vrot.lane.b32.xlu0 %v6032, 32
        %v6182 = vpop.permute.xlu0 %6181
        %6183 = vrot.lane.b32.xlu0 %v6037, 32
        %v6184 = vpop.permute.xlu0 %6183
        %6189 = vrot.lane.b32.xlu0 %v6137, 64
        %v6190 = vpop.permute.xlu0 %6189
        %6191 = vrot.lane.b32.xlu0 %v6142, 64
        %v6192 = vpop.permute.xlu0 %6191
        %6197 = vrot.lane.b32.xlu0 %v6042, 96
        %v6198 = vpop.permute.xlu0 %6197
        %6199 = vrot.lane.b32.xlu0 %v6047, 96
        %v6200 = vpop.permute.xlu0 %6199
        %v6203 = vsel %vm1043, %v5830, %v6158
        %v6204 = vsel %vm1043, %v5831, %v6160
        %v6205 = vsel %vm1363, %v6203, %v6166
        %v6206 = vsel %vm1363, %v6204, %v6168
        %v6207 = vsel %vm2076, %v6205, %v6174
        %v6208 = vsel %vm2076, %v6206, %v6176
        %v6209 = vsel %vm1043, %v6127, %v6182
        %v6210 = vsel %vm1043, %v6132, %v6184
        %v6211 = vsel %vm1363, %v6209, %v6190
        %v6212 = vsel %vm1363, %v6210, %v6192
        %v6213 = vsel %vm2076, %v6211, %v6198
        %v6214 = vsel %vm2076, %v6212, %v6200
        %6215 = vmatprep.subr.mxu0 0.0
        %6216 = vmatpush1.msra.mxu0 %v5832
        %6217 = vmatprep.subr.mxu0 0.0
        %6218 = vmatpush1.msra.mxu0 %v5833
        %6219 = vmatprep.subr.mxu0 0.0
        %6220 = vmatpush1.msra.mxu0 0.0
        %6221 = vmatprep.subr.mxu0 0.0
        %6222 = vmatpush1.msra.mxu0 0.0
        %6223 = vmatprep.subr.mxu0 0.0
        %6224 = vmatpush1.msra.mxu0 0.0
        %6225 = vmatprep.subr.mxu0 0.0
        %6226 = vmatpush1.msra.mxu0 0.0
        %6227 = vmatprep.subr.mxu0 0.0
        %6228 = vmatpush1.msra.mxu0 0.0
        %6229 = vmatprep.subr.mxu0 0.0
        %6230 = vmatpush1.msra.mxu0 0.0
        %6231 = vmatprep.subr.mxu0 0.0
        %6232 = vmatpush1.msra.mxu0 0.0
        %6233 = vmatprep.subr.mxu0 0.0
        %6234 = vmatpush1.msra.mxu0 0.0
        %6235 = vmatprep.subr.mxu0 0.0
        %6236 = vmatpush1.msra.mxu0 0.0
        %6237 = vmatprep.subr.mxu0 0.0
        %6238 = vmatpush1.msra.mxu0 0.0
        %6239 = vmatprep.subr.mxu0 0.0
        %6240 = vmatpush1.msra.mxu0 0.0
        %6241 = vmatprep.subr.mxu0 0.0
        %6242 = vmatpush1.msra.mxu0 0.0
        %6243 = vmatprep.subr.mxu0 0.0
        %6244 = vmatpush1.msra.mxu0 0.0
        %6245 = vmatprep.subr.mxu0 0.0
        %6246 = vmatpush1.msra.mxu0 0.0
        %6247 = vmatprep.subr.mxu0 0.0
        %6248 = vmatpush1.msra.mxu0 0.0
        %6249 = vmatprep.subr.mxu0 0.0
        %6250 = vmatpush1.msra.mxu0 0.0
        %6251 = vmatprep.subr.mxu0 0.0
        %6252 = vmatpush1.msra.mxu0 0.0
        %6253 = vmatprep.subr.mxu0 0.0
        %6254 = vmatpush1.msra.mxu0 0.0
        %6255 = vmatprep.subr.mxu0 0.0
        %6256 = vmatpush1.msra.mxu0 0.0
        %6257 = vmatprep.subr.mxu0 0.0
        %6258 = vmatpush1.msra.mxu0 0.0
        %6259 = vmatprep.subr.mxu0 0.0
        %6260 = vmatpush1.msra.mxu0 0.0
        %6261 = vmatprep.subr.mxu0 0.0
        %6262 = vmatpush1.msra.mxu0 0.0
        %6263 = vmatprep.subr.mxu0 0.0
        %6264 = vmatpush1.msra.mxu0 0.0
        %6265 = vmatprep.subr.mxu0 0.0
        %6266 = vmatpush1.msra.mxu0 0.0
        %6267 = vmatprep.subr.mxu0 0.0
        %6268 = vmatpush1.msra.mxu0 0.0
        %6269 = vmatprep.subr.mxu0 0.0
        %6270 = vmatpush1.msra.mxu0 0.0
        %6271 = vmatprep.subr.mxu0 0.0
        %6272 = vmatpush1.msra.mxu0 0.0
        %6273 = vmatprep.subr.mxu0 0.0
        %6274 = vmatpush1.msra.mxu0 0.0
        %6275 = vmatprep.subr.mxu0 0.0
        %6276 = vmatpush1.msra.mxu0 0.0
        %6277 = vmatprep.subr.mxu0 0.0
        %6278 = vmatpush1.msra.mxu0 0.0
        %6279 = vmatprep.mubr.f32.mxu0 0.0
        %6280 = vmatmul.mubr.f32.gmra.mrb[0].mxu0 %v1773
        %v6281 = vpop.f32.mrb[0].mxu0
        %v6282 = vadd.f32 0.0, %v6281
        %v6283 = vpop.f32.mrb[0].mxu0
        %6284 = vmatprep.mubr.f32.mxu0 0.0
        %6285 = vmatmul.mubr.f32.gmra.mrb[0].mxu0 %v1776
        %v6286 = vpop.f32.mrb[0].mxu0
        %v6287 = vadd.f32 0.0, %v6286
        %v6288 = vpop.f32.mrb[0].mxu0
        %6289 = vmatprep.mubr.f32.mxu0 0.0
        %6290 = vmatmul.mubr.f32.gmra.mrb[0].mxu0 %v1778
        %v6291 = vpop.f32.mrb[0].mxu0
        %v6292 = vadd.f32 0.0, %v6291
        %v6293 = vpop.f32.mrb[0].mxu0
        %6294 = vmatprep.mubr.f32.mxu0 0.0
        %6295 = vmatmul.mubr.f32.gmra.mrb[0].mxu0 %v1780
        %v6296 = vpop.f32.mrb[0].mxu0
        %v6297 = vadd.f32 0.0, %v6296
        %v6298 = vpop.f32.mrb[0].mxu0
        %6299 = vmatprep.mubr.f32.mxu0 0.0
        %6300 = vmatmul.mubr.f32.gmra.mrb[0].mxu0 %v1782
        %v6301 = vpop.f32.mrb[0].mxu0
        %v6302 = vadd.f32 0.0, %v6301
        %v6303 = vpop.f32.mrb[0].mxu0
        %6304 = vmatprep.mubr.f32.mxu0 0.0
        %6305 = vmatmul.mubr.f32.gmra.mrb[0].mxu0 %v1784
        %v6306 = vpop.f32.mrb[0].mxu0
        %v6307 = vadd.f32 0.0, %v6306
        %v6308 = vpop.f32.mrb[0].mxu0
        %6309 = vmatprep.mubr.f32.mxu0 0.0
        %6310 = vmatmul.mubr.f32.gmra.mrb[0].mxu0 %v1786
        %v6311 = vpop.f32.mrb[0].mxu0
        %v6312 = vadd.f32 0.0, %v6311
        %v6313 = vpop.f32.mrb[0].mxu0
        %6314 = vmatprep.mubr.f32.mxu0 0.0
        %6315 = vmatmul.mubr.f32.gmra.mrb[0].mxu0 %v1788
        %v6316 = vpop.f32.mrb[0].mxu0
        %v6317 = vadd.f32 0.0, %v6316
        %v6318 = vpop.f32.mrb[0].mxu0
        %6319 = vdwg.mxu0
        %6320 = vmatprep.subr.mxu0 0.0
        %6321 = vmatpush1.msra.mxu0 %v6282
        %6322 = vmatprep.subr.mxu0 0.0
        %6323 = vmatpush1.msra.mxu0 %v6287
        %6324 = vmatprep.subr.mxu0 0.0
        %6325 = vmatpush1.msra.mxu0 %v6292
        %6326 = vmatprep.subr.mxu0 0.0
        %6327 = vmatpush1.msra.mxu0 %v6297
        %6328 = vmatprep.subr.mxu0 0.0
        %6329 = vmatpush1.msra.mxu0 %v6302
        %6330 = vmatprep.subr.mxu0 0.0
        %6331 = vmatpush1.msra.mxu0 %v6307
        %6332 = vmatprep.subr.mxu0 0.0
        %6333 = vmatpush1.msra.mxu0 %v6312
        %6334 = vmatprep.subr.mxu0 0.0
        %6335 = vmatpush1.msra.mxu0 %v6317
        %6336 = vmatprep.subr.mxu0 0.0
        %6337 = vmatpush1.msra.mxu0 0.0
        %6338 = vmatprep.subr.mxu0 0.0
        %6339 = vmatpush1.msra.mxu0 0.0
        %6340 = vmatprep.subr.mxu0 0.0
        %6341 = vmatpush1.msra.mxu0 0.0
        %6342 = vmatprep.subr.mxu0 0.0
        %6343 = vmatpush1.msra.mxu0 0.0
        %6344 = vmatprep.subr.mxu0 0.0
        %6345 = vmatpush1.msra.mxu0 0.0
        %6346 = vmatprep.subr.mxu0 0.0
        %6347 = vmatpush1.msra.mxu0 0.0
        %6348 = vmatprep.subr.mxu0 0.0
        %6349 = vmatpush1.msra.mxu0 0.0
        %6350 = vmatprep.subr.mxu0 0.0
        %6351 = vmatpush1.msra.mxu0 0.0
        %6352 = vmatprep.subr.mxu0 0.0
        %6353 = vmatpush1.msra.mxu0 0.0
        %6354 = vmatprep.subr.mxu0 0.0
        %6355 = vmatpush1.msra.mxu0 0.0
        %6356 = vmatprep.subr.mxu0 0.0
        %6357 = vmatpush1.msra.mxu0 0.0
        %6358 = vmatprep.subr.mxu0 0.0
        %6359 = vmatpush1.msra.mxu0 0.0
        %6360 = vmatprep.subr.mxu0 0.0
        %6361 = vmatpush1.msra.mxu0 0.0
        %6362 = vmatprep.subr.mxu0 0.0
        %6363 = vmatpush1.msra.mxu0 0.0
        %6364 = vmatprep.subr.mxu0 0.0
        %6365 = vmatpush1.msra.mxu0 0.0
        %6366 = vmatprep.subr.mxu0 0.0
        %6367 = vmatpush1.msra.mxu0 0.0
        %6368 = vmatprep.subr.mxu0 0.0
        %6369 = vmatpush1.msra.mxu0 0.0
        %6370 = vmatprep.subr.mxu0 0.0
        %6371 = vmatpush1.msra.mxu0 0.0
        %6372 = vmatprep.subr.mxu0 0.0
        %6373 = vmatpush1.msra.mxu0 0.0
        %6374 = vmatprep.subr.mxu0 0.0
        %6375 = vmatpush1.msra.mxu0 0.0
        %6376 = vmatprep.subr.mxu0 0.0
        %6377 = vmatpush1.msra.mxu0 0.0
        %6378 = vmatprep.subr.mxu0 0.0
        %6379 = vmatpush1.msra.mxu0 0.0
        %6380 = vmatprep.subr.mxu0 0.0
        %6381 = vmatpush1.msra.mxu0 0.0
        %6382 = vmatprep.subr.mxu0 0.0
        %6383 = vmatpush1.msra.mxu0 0.0
        %6384 = vmatprep.mubr.f32.mxu0 0.0
        %6385 = vmatmul.mubr.f32.gmra.mrb[0].mxu0 %v1896
        %v6386 = vpop.f32.mrb[0].mxu0
        %v6387 = vadd.f32 0.0, %v6386
        %v6388 = vpop.f32.mrb[0].mxu0
        %6389 = vmatprep.mubr.f32.mxu0 0.0
        %6390 = vmatmul.mubr.f32.gmra.mrb[0].mxu0 %v1899
        %v6391 = vpop.f32.mrb[0].mxu0
        %v6392 = vadd.f32 0.0, %v6391
        %v6393 = vpop.f32.mrb[0].mxu0
        %6394 = vmatprep.mubr.f32.mxu0 0.0
        %6395 = vmatmul.mubr.f32.gmra.mrb[0].mxu0 %v1902
        %v6396 = vpop.f32.mrb[0].mxu0
        %v6397 = vadd.f32 0.0, %v6396
        %v6398 = vpop.f32.mrb[0].mxu0
        %6399 = vmatprep.mubr.f32.mxu0 0.0
        %6400 = vmatmul.mubr.f32.gmra.mrb[0].mxu0 %v1905
        %v6401 = vpop.f32.mrb[0].mxu0
        %v6402 = vadd.f32 0.0, %v6401
        %v6403 = vpop.f32.mrb[0].mxu0
        %6404 = vmatprep.mubr.f32.mxu0 0.0
        %6405 = vmatmul.mubr.f32.gmra.mrb[0].mxu0 %v1908
        %v6406 = vpop.f32.mrb[0].mxu0
        %v6407 = vadd.f32 0.0, %v6406
        %v6408 = vpop.f32.mrb[0].mxu0
        %6409 = vmatprep.mubr.f32.mxu0 0.0
        %6410 = vmatmul.mubr.f32.gmra.mrb[0].mxu0 %v1911
        %v6411 = vpop.f32.mrb[0].mxu0
        %v6412 = vadd.f32 0.0, %v6411
        %v6413 = vpop.f32.mrb[0].mxu0
        %6414 = vmatprep.mubr.f32.mxu0 0.0
        %6415 = vmatmul.mubr.f32.gmra.mrb[0].mxu0 %v1914
        %v6416 = vpop.f32.mrb[0].mxu0
        %v6417 = vadd.f32 0.0, %v6416
        %v6418 = vpop.f32.mrb[0].mxu0
        %6419 = vmatprep.mubr.f32.mxu0 0.0
        %6420 = vmatmul.mubr.f32.gmra.mrb[0].mxu0 %v1917
        %v6421 = vpop.f32.mrb[0].mxu0
        %v6422 = vadd.f32 0.0, %v6421
        %v6423 = vpop.f32.mrb[0].mxu0
        %6424 = vdwg.mxu0
        %6427 = vrot.lane.b32.xlu0 %v6282, 32
        %v6428 = vpop.permute.xlu0 %6427
        %6429 = vrot.lane.b32.xlu0 %v6287, 32
        %v6430 = vpop.permute.xlu0 %6429
        %6435 = vrot.lane.b32.xlu0 %v6387, 64
        %v6436 = vpop.permute.xlu0 %6435
        %6437 = vrot.lane.b32.xlu0 %v6392, 64
        %v6438 = vpop.permute.xlu0 %6437
        %6443 = vrot.lane.b32.xlu0 %v6292, 96
        %v6444 = vpop.permute.xlu0 %6443
        %6445 = vrot.lane.b32.xlu0 %v6297, 96
        %v6446 = vpop.permute.xlu0 %6445
        %6451 = vrot.lane.b32.xlu0 %v6302, 32
        %v6452 = vpop.permute.xlu0 %6451
        %6453 = vrot.lane.b32.xlu0 %v6307, 32
        %v6454 = vpop.permute.xlu0 %6453
        %6459 = vrot.lane.b32.xlu0 %v6407, 64
        %v6460 = vpop.permute.xlu0 %6459
        %6461 = vrot.lane.b32.xlu0 %v6412, 64
        %v6462 = vpop.permute.xlu0 %6461
        %6467 = vrot.lane.b32.xlu0 %v6312, 96
        %v6468 = vpop.permute.xlu0 %6467
        %6469 = vrot.lane.b32.xlu0 %v6317, 96
        %v6470 = vpop.permute.xlu0 %6469
        %v6473 = vsel %vm1043, %v5832, %v6428
        %v6474 = vsel %vm1043, %v5833, %v6430
        %v6475 = vsel %vm1363, %v6473, %v6436
        %v6476 = vsel %vm1363, %v6474, %v6438
        %v6477 = vsel %vm2076, %v6475, %v6444
        %v6478 = vsel %vm2076, %v6476, %v6446
        %v6479 = vsel %vm1043, %v6397, %v6452
        %v6480 = vsel %vm1043, %v6402, %v6454
        %v6481 = vsel %vm1363, %v6479, %v6460
        %v6482 = vsel %vm1363, %v6480, %v6462
        %v6483 = vsel %vm2076, %v6481, %v6468
        %v6484 = vsel %vm2076, %v6482, %v6470
        %6485 = vmatprep.subr.mxu0 0.0
        %6486 = vmatpush1.msra.mxu0 %v5834
        %6487 = vmatprep.subr.mxu0 0.0
        %6488 = vmatpush1.msra.mxu0 %v5835
        %6489 = vmatprep.subr.mxu0 0.0
        %6490 = vmatpush1.msra.mxu0 0.0
        %6491 = vmatprep.subr.mxu0 0.0
        %6492 = vmatpush1.msra.mxu0 0.0
        %6493 = vmatprep.subr.mxu0 0.0
        %6494 = vmatpush1.msra.mxu0 0.0
        %6495 = vmatprep.subr.mxu0 0.0
        %6496 = vmatpush1.msra.mxu0 0.0
        %6497 = vmatprep.subr.mxu0 0.0
        %6498 = vmatpush1.msra.mxu0 0.0
        %6499 = vmatprep.subr.mxu0 0.0
        %6500 = vmatpush1.msra.mxu0 0.0
        %6501 = vmatprep.subr.mxu0 0.0
        %6502 = vmatpush1.msra.mxu0 0.0
        %6503 = vmatprep.subr.mxu0 0.0
        %6504 = vmatpush1.msra.mxu0 0.0
        %6505 = vmatprep.subr.mxu0 0.0
        %6506 = vmatpush1.msra.mxu0 0.0
        %6507 = vmatprep.subr.mxu0 0.0
        %6508 = vmatpush1.msra.mxu0 0.0
        %6509 = vmatprep.subr.mxu0 0.0
        %6510 = vmatpush1.msra.mxu0 0.0
        %6511 = vmatprep.subr.mxu0 0.0
        %6512 = vmatpush1.msra.mxu0 0.0
        %6513 = vmatprep.subr.mxu0 0.0
        %6514 = vmatpush1.msra.mxu0 0.0
        %6515 = vmatprep.subr.mxu0 0.0
        %6516 = vmatpush1.msra.mxu0 0.0
        %6517 = vmatprep.subr.mxu0 0.0
        %6518 = vmatpush1.msra.mxu0 0.0
        %6519 = vmatprep.subr.mxu0 0.0
        %6520 = vmatpush1.msra.mxu0 0.0
        %6521 = vmatprep.subr.mxu0 0.0
        %6522 = vmatpush1.msra.mxu0 0.0
        %6523 = vmatprep.subr.mxu0 0.0
        %6524 = vmatpush1.msra.mxu0 0.0
        %6525 = vmatprep.subr.mxu0 0.0
        %6526 = vmatpush1.msra.mxu0 0.0
        %6527 = vmatprep.subr.mxu0 0.0
        %6528 = vmatpush1.msra.mxu0 0.0
        %6529 = vmatprep.subr.mxu0 0.0
        %6530 = vmatpush1.msra.mxu0 0.0
        %6531 = vmatprep.subr.mxu0 0.0
        %6532 = vmatpush1.msra.mxu0 0.0
        %6533 = vmatprep.subr.mxu0 0.0
        %6534 = vmatpush1.msra.mxu0 0.0
        %6535 = vmatprep.subr.mxu0 0.0
        %6536 = vmatpush1.msra.mxu0 0.0
        %6537 = vmatprep.subr.mxu0 0.0
        %6538 = vmatpush1.msra.mxu0 0.0
        %6539 = vmatprep.subr.mxu0 0.0
        %6540 = vmatpush1.msra.mxu0 0.0
        %6541 = vmatprep.subr.mxu0 0.0
        %6542 = vmatpush1.msra.mxu0 0.0
        %6543 = vmatprep.subr.mxu0 0.0
        %6544 = vmatpush1.msra.mxu0 0.0
        %6545 = vmatprep.subr.mxu0 0.0
        %6546 = vmatpush1.msra.mxu0 0.0
        %6547 = vmatprep.subr.mxu0 0.0
        %6548 = vmatpush1.msra.mxu0 0.0
        %6549 = vmatprep.mubr.f32.mxu0 0.0
        %6550 = vmatmul.mubr.f32.gmra.mrb[0].mxu0 %v1773
        %v6551 = vpop.f32.mrb[0].mxu0
        %v6552 = vadd.f32 0.0, %v6551
        %v6553 = vpop.f32.mrb[0].mxu0
        %6554 = vmatprep.mubr.f32.mxu0 0.0
        %6555 = vmatmul.mubr.f32.gmra.mrb[0].mxu0 %v1776
        %v6556 = vpop.f32.mrb[0].mxu0
        %v6557 = vadd.f32 0.0, %v6556
        %v6558 = vpop.f32.mrb[0].mxu0
        %6559 = vmatprep.mubr.f32.mxu0 0.0
        %6560 = vmatmul.mubr.f32.gmra.mrb[0].mxu0 %v1778
        %v6561 = vpop.f32.mrb[0].mxu0
        %v6562 = vadd.f32 0.0, %v6561
        %v6563 = vpop.f32.mrb[0].mxu0
        %6564 = vmatprep.mubr.f32.mxu0 0.0
        %6565 = vmatmul.mubr.f32.gmra.mrb[0].mxu0 %v1780
        %v6566 = vpop.f32.mrb[0].mxu0
        %v6567 = vadd.f32 0.0, %v6566
        %v6568 = vpop.f32.mrb[0].mxu0
        %6569 = vmatprep.mubr.f32.mxu0 0.0
        %6570 = vmatmul.mubr.f32.gmra.mrb[0].mxu0 %v1782
        %v6571 = vpop.f32.mrb[0].mxu0
        %v6572 = vadd.f32 0.0, %v6571
        %v6573 = vpop.f32.mrb[0].mxu0
        %6574 = vmatprep.mubr.f32.mxu0 0.0
        %6575 = vmatmul.mubr.f32.gmra.mrb[0].mxu0 %v1784
        %v6576 = vpop.f32.mrb[0].mxu0
        %v6577 = vadd.f32 0.0, %v6576
        %v6578 = vpop.f32.mrb[0].mxu0
        %6579 = vmatprep.mubr.f32.mxu0 0.0
        %6580 = vmatmul.mubr.f32.gmra.mrb[0].mxu0 %v1786
        %v6581 = vpop.f32.mrb[0].mxu0
        %v6582 = vadd.f32 0.0, %v6581
        %v6583 = vpop.f32.mrb[0].mxu0
        %6584 = vmatprep.mubr.f32.mxu0 0.0
        %6585 = vmatmul.mubr.f32.gmra.mrb[0].mxu0 %v1788
        %v6586 = vpop.f32.mrb[0].mxu0
        %v6587 = vadd.f32 0.0, %v6586
        %v6588 = vpop.f32.mrb[0].mxu0
        %6589 = vdwg.mxu0
        %6590 = vmatprep.subr.mxu0 0.0
        %6591 = vmatpush1.msra.mxu0 %v6552
        %6592 = vmatprep.subr.mxu0 0.0
        %6593 = vmatpush1.msra.mxu0 %v6557
        %6594 = vmatprep.subr.mxu0 0.0
        %6595 = vmatpush1.msra.mxu0 %v6562
        %6596 = vmatprep.subr.mxu0 0.0
        %6597 = vmatpush1.msra.mxu0 %v6567
        %6598 = vmatprep.subr.mxu0 0.0
        %6599 = vmatpush1.msra.mxu0 %v6572
        %6600 = vmatprep.subr.mxu0 0.0
        %6601 = vmatpush1.msra.mxu0 %v6577
        %6602 = vmatprep.subr.mxu0 0.0
        %6603 = vmatpush1.msra.mxu0 %v6582
        %6604 = vmatprep.subr.mxu0 0.0
        %6605 = vmatpush1.msra.mxu0 %v6587
        %6606 = vmatprep.subr.mxu0 0.0
        %6607 = vmatpush1.msra.mxu0 0.0
        %6608 = vmatprep.subr.mxu0 0.0
        %6609 = vmatpush1.msra.mxu0 0.0
        %6610 = vmatprep.subr.mxu0 0.0
        %6611 = vmatpush1.msra.mxu0 0.0
        %6612 = vmatprep.subr.mxu0 0.0
        %6613 = vmatpush1.msra.mxu0 0.0
        %6614 = vmatprep.subr.mxu0 0.0
        %6615 = vmatpush1.msra.mxu0 0.0
        %6616 = vmatprep.subr.mxu0 0.0
        %6617 = vmatpush1.msra.mxu0 0.0
        %6618 = vmatprep.subr.mxu0 0.0
        %6619 = vmatpush1.msra.mxu0 0.0
        %6620 = vmatprep.subr.mxu0 0.0
        %6621 = vmatpush1.msra.mxu0 0.0
        %6622 = vmatprep.subr.mxu0 0.0
        %6623 = vmatpush1.msra.mxu0 0.0
        %6624 = vmatprep.subr.mxu0 0.0
        %6625 = vmatpush1.msra.mxu0 0.0
        %6626 = vmatprep.subr.mxu0 0.0
        %6627 = vmatpush1.msra.mxu0 0.0
        %6628 = vmatprep.subr.mxu0 0.0
        %6629 = vmatpush1.msra.mxu0 0.0
        %6630 = vmatprep.subr.mxu0 0.0
        %6631 = vmatpush1.msra.mxu0 0.0
        %6632 = vmatprep.subr.mxu0 0.0
        %6633 = vmatpush1.msra.mxu0 0.0
        %6634 = vmatprep.subr.mxu0 0.0
        %6635 = vmatpush1.msra.mxu0 0.0
        %6636 = vmatprep.subr.mxu0 0.0
        %6637 = vmatpush1.msra.mxu0 0.0
        %6638 = vmatprep.subr.mxu0 0.0
        %6639 = vmatpush1.msra.mxu0 0.0
        %6640 = vmatprep.subr.mxu0 0.0
        %6641 = vmatpush1.msra.mxu0 0.0
        %6642 = vmatprep.subr.mxu0 0.0
        %6643 = vmatpush1.msra.mxu0 0.0
        %6644 = vmatprep.subr.mxu0 0.0
        %6645 = vmatpush1.msra.mxu0 0.0
        %6646 = vmatprep.subr.mxu0 0.0
        %6647 = vmatpush1.msra.mxu0 0.0
        %6648 = vmatprep.subr.mxu0 0.0
        %6649 = vmatpush1.msra.mxu0 0.0
        %6650 = vmatprep.subr.mxu0 0.0
        %6651 = vmatpush1.msra.mxu0 0.0
        %6652 = vmatprep.subr.mxu0 0.0
        %6653 = vmatpush1.msra.mxu0 0.0
        %6654 = vmatprep.mubr.f32.mxu0 0.0
        %6655 = vmatmul.mubr.f32.gmra.mrb[0].mxu0 %v1896
        %v6656 = vpop.f32.mrb[0].mxu0
        %v6657 = vadd.f32 0.0, %v6656
        %v6658 = vpop.f32.mrb[0].mxu0
        %6659 = vmatprep.mubr.f32.mxu0 0.0
        %6660 = vmatmul.mubr.f32.gmra.mrb[0].mxu0 %v1899
        %v6661 = vpop.f32.mrb[0].mxu0
        %v6662 = vadd.f32 0.0, %v6661
        %v6663 = vpop.f32.mrb[0].mxu0
        %6664 = vmatprep.mubr.f32.mxu0 0.0
        %6665 = vmatmul.mubr.f32.gmra.mrb[0].mxu0 %v1902
        %v6666 = vpop.f32.mrb[0].mxu0
        %v6667 = vadd.f32 0.0, %v6666
        %v6668 = vpop.f32.mrb[0].mxu0
        %6669 = vmatprep.mubr.f32.mxu0 0.0
        %6670 = vmatmul.mubr.f32.gmra.mrb[0].mxu0 %v1905
        %v6671 = vpop.f32.mrb[0].mxu0
        %v6672 = vadd.f32 0.0, %v6671
        %v6673 = vpop.f32.mrb[0].mxu0
        %6674 = vmatprep.mubr.f32.mxu0 0.0
        %6675 = vmatmul.mubr.f32.gmra.mrb[0].mxu0 %v1908
        %v6676 = vpop.f32.mrb[0].mxu0
        %v6677 = vadd.f32 0.0, %v6676
        %v6678 = vpop.f32.mrb[0].mxu0
        %6679 = vmatprep.mubr.f32.mxu0 0.0
        %6680 = vmatmul.mubr.f32.gmra.mrb[0].mxu0 %v1911
        %v6681 = vpop.f32.mrb[0].mxu0
        %v6682 = vadd.f32 0.0, %v6681
        %v6683 = vpop.f32.mrb[0].mxu0
        %6684 = vmatprep.mubr.f32.mxu0 0.0
        %6685 = vmatmul.mubr.f32.gmra.mrb[0].mxu0 %v1914
        %v6686 = vpop.f32.mrb[0].mxu0
        %v6687 = vadd.f32 0.0, %v6686
        %v6688 = vpop.f32.mrb[0].mxu0
        %6689 = vmatprep.mubr.f32.mxu0 0.0
        %6690 = vmatmul.mubr.f32.gmra.mrb[0].mxu0 %v1917
        %v6691 = vpop.f32.mrb[0].mxu0
        %v6692 = vadd.f32 0.0, %v6691
        %v6693 = vpop.f32.mrb[0].mxu0
        %6694 = vdwg.mxu0
        %6697 = vrot.lane.b32.xlu0 %v6552, 32
        %v6698 = vpop.permute.xlu0 %6697
        %6699 = vrot.lane.b32.xlu0 %v6557, 32
        %v6700 = vpop.permute.xlu0 %6699
        %6705 = vrot.lane.b32.xlu0 %v6657, 64
        %v6706 = vpop.permute.xlu0 %6705
        %6707 = vrot.lane.b32.xlu0 %v6662, 64
        %v6708 = vpop.permute.xlu0 %6707
        %6713 = vrot.lane.b32.xlu0 %v6562, 96
        %v6714 = vpop.permute.xlu0 %6713
        %6715 = vrot.lane.b32.xlu0 %v6567, 96
        %v6716 = vpop.permute.xlu0 %6715
        %6721 = vrot.lane.b32.xlu0 %v6572, 32
        %v6722 = vpop.permute.xlu0 %6721
        %6723 = vrot.lane.b32.xlu0 %v6577, 32
        %v6724 = vpop.permute.xlu0 %6723
        %6729 = vrot.lane.b32.xlu0 %v6677, 64
        %v6730 = vpop.permute.xlu0 %6729
        %6731 = vrot.lane.b32.xlu0 %v6682, 64
        %v6732 = vpop.permute.xlu0 %6731
        %6737 = vrot.lane.b32.xlu0 %v6582, 96
        %v6738 = vpop.permute.xlu0 %6737
        %6739 = vrot.lane.b32.xlu0 %v6587, 96
        %v6740 = vpop.permute.xlu0 %6739
        %v6743 = vsel %vm1043, %v5834, %v6698
        %v6744 = vsel %vm1043, %v5835, %v6700
        %v6745 = vsel %vm1363, %v6743, %v6706
        %v6746 = vsel %vm1363, %v6744, %v6708
        %v6747 = vsel %vm2076, %v6745, %v6714
        %v6748 = vsel %vm2076, %v6746, %v6716
        %v6749 = vsel %vm1043, %v6667, %v6722
        %v6750 = vsel %vm1043, %v6672, %v6724
        %v6751 = vsel %vm1363, %v6749, %v6730
        %v6752 = vsel %vm1363, %v6750, %v6732
        %v6753 = vsel %vm2076, %v6751, %v6738
        %v6754 = vsel %vm2076, %v6752, %v6740
        %s6755 = scalar_lea.vmem %s12, 576
        %v6756 = vld [vmem:[%s6755] sm:$0xff]
        %v6757 = vld [vmem:[%s6755 + $0x8] sm:$0xff]
        %v6758 = vld [vmem:[%s6755 + $0x10] sm:$0xff]
        %v6759 = vld [vmem:[%s6755 + $0x18] sm:$0xff]
        %v6760 = vld [vmem:[%s6755 + $0x20] sm:$0xff]
        %v6761 = vld [vmem:[%s6755 + $0x28] sm:$0xff]
        %v6762 = vld [vmem:[%s6755 + $0x30] sm:$0xff]
        %v6763 = vld [vmem:[%s6755 + $0x38] sm:$0xff]
        %v6764 = vld [vmem:[%s6755 + $0x40] sm:$0xff]
        %v6765 = vld [vmem:[%s6755 + $0x48] sm:$0xff]
        %v6766 = vld [vmem:[%s6755 + $0x50] sm:$0xff]
        %v6767 = vld [vmem:[%s6755 + $0x58] sm:$0xff]
        %v6768 = vld [vmem:[%s6755 + $0x60] sm:$0xff]
        %v6769 = vld [vmem:[%s6755 + $0x68] sm:$0xff]
        %v6770 = vld [vmem:[%s6755 + $0x70] sm:$0xff]
        %v6771 = vld [vmem:[%s6755 + $0x78] sm:$0xff]
        %v6772 = vld [vmem:[%s6755 + $0x80] sm:$0xff]
        %v6773 = vld [vmem:[%s6755 + $0x88] sm:$0xff]
        %v6774 = vld [vmem:[%s6755 + $0x90] sm:$0xff]
        %v6775 = vld [vmem:[%s6755 + $0x98] sm:$0xff]
        %v6776 = vld [vmem:[%s6755 + $0xa0] sm:$0xff]
        %v6777 = vld [vmem:[%s6755 + $0xa8] sm:$0xff]
        %v6778 = vld [vmem:[%s6755 + $0xb0] sm:$0xff]
        %v6779 = vld [vmem:[%s6755 + $0xb8] sm:$0xff]
        %v6780 = vld [vmem:[%s6755 + $0xc0] sm:$0xff]
        %v6781 = vld [vmem:[%s6755 + $0xc8] sm:$0xff]
        %v6782 = vld [vmem:[%s6755 + $0xd0] sm:$0xff]
        %v6783 = vld [vmem:[%s6755 + $0xd8] sm:$0xff]
        %v6784 = vld [vmem:[%s6755 + $0xe0] sm:$0xff]
        %v6785 = vld [vmem:[%s6755 + $0xe8] sm:$0xff]
        %v6786 = vld [vmem:[%s6755 + $0xf0] sm:$0xff]
        %v6787 = vld [vmem:[%s6755 + $0xf8] sm:$0xff]
        %v6788 = vld [vmem:[%s6755 + $0x100] sm:$0xff]
        %v6789 = vld [vmem:[%s6755 + $0x108] sm:$0xff]
        %v6790 = vld [vmem:[%s6755 + $0x110] sm:$0xff]
        %v6791 = vld [vmem:[%s6755 + $0x118] sm:$0xff]
        %s6792 = scalar_lea.vmem [#allocation7], 2
        %v6793 = vld [vmem:[%s6792] sm:$0x1]
        %v6795 = vlaneseq
        %v6796 = vshrl.u32 %v6795, 7
        %v6797 = vsub.s32 0, %v6796
        %v6798 = vrot.slane %v6793, %v6797
        %v6801 = vsel %vm1043, %v6147, 0
        %v6804 = vsel %vm1043, %v6152, 0
        %v6807 = vsel %vm1043, %v6417, 0
        %v6810 = vsel %vm1043, %v6422, 0
        %v6813 = vsel %vm1043, %v6687, 0
        %v6816 = vsel %vm1043, %v6692, 0
        %6818 = vmatprep.subr.mxu0 0.0
        %6819 = vmatpush1.msra.mxu0 %v6756
        %6820 = vmatprep.subr.mxu0 0.0
        %6821 = vmatpush1.msra.mxu0 %v6757
        %6822 = vmatprep.subr.mxu0 0.0
        %6823 = vmatpush1.msra.mxu0 %v6758
        %6824 = vmatprep.subr.mxu0 0.0
        %6825 = vmatpush1.msra.mxu0 %v6759
        %6826 = vmatprep.subr.mxu0 0.0
        %6827 = vmatpush1.msra.mxu0 %v6760
        %6828 = vmatprep.subr.mxu0 0.0
        %6829 = vmatpush1.msra.mxu0 %v6761
        %6830 = vmatprep.subr.mxu0 0.0
        %6831 = vmatpush1.msra.mxu0 %v6762
        %6832 = vmatprep.subr.mxu0 0.0
        %6833 = vmatpush1.msra.mxu0 %v6763
        %6834 = vmatprep.subr.mxu0 0.0
        %6835 = vmatpush1.msra.mxu0 %v6764
        %6836 = vmatprep.subr.mxu0 0.0
        %6837 = vmatpush1.msra.mxu0 %v6765
        %6838 = vmatprep.subr.mxu0 0.0
        %6839 = vmatpush1.msra.mxu0 %v6766
        %6840 = vmatprep.subr.mxu0 0.0
        %6841 = vmatpush1.msra.mxu0 %v6767
        %6842 = vmatprep.subr.mxu0 0.0
        %6843 = vmatpush1.msra.mxu0 %v6768
        %6844 = vmatprep.subr.mxu0 0.0
        %6845 = vmatpush1.msra.mxu0 %v6769
        %6846 = vmatprep.subr.mxu0 0.0
        %6847 = vmatpush1.msra.mxu0 %v6770
        %6848 = vmatprep.subr.mxu0 0.0
        %6849 = vmatpush1.msra.mxu0 %v6771
        %6850 = vmatprep.subr.mxu0 0.0
        %6851 = vmatpush1.msra.mxu0 %v6772
        %6852 = vmatprep.subr.mxu0 0.0
        %6853 = vmatpush1.msra.mxu0 %v6773
        %6854 = vmatprep.subr.mxu0 0.0
        %6855 = vmatpush1.msra.mxu0 %v6774
        %6856 = vmatprep.subr.mxu0 0.0
        %6857 = vmatpush1.msra.mxu0 %v6775
        %6858 = vmatprep.subr.mxu0 0.0
        %6859 = vmatpush1.msra.mxu0 %v6776
        %6860 = vmatprep.subr.mxu0 0.0
        %6861 = vmatpush1.msra.mxu0 %v6777
        %6862 = vmatprep.subr.mxu0 0.0
        %6863 = vmatpush1.msra.mxu0 %v6778
        %6864 = vmatprep.subr.mxu0 0.0
        %6865 = vmatpush1.msra.mxu0 %v6779
        %6866 = vmatprep.subr.mxu0 0.0
        %6867 = vmatpush1.msra.mxu0 %v6780
        %6868 = vmatprep.subr.mxu0 0.0
        %6869 = vmatpush1.msra.mxu0 %v6781
        %6870 = vmatprep.subr.mxu0 0.0
        %6871 = vmatpush1.msra.mxu0 %v6782
        %6872 = vmatprep.subr.mxu0 0.0
        %6873 = vmatpush1.msra.mxu0 %v6783
        %6874 = vmatprep.subr.mxu0 0.0
        %6875 = vmatpush1.msra.mxu0 %v6784
        %6876 = vmatprep.subr.mxu0 0.0
        %6877 = vmatpush1.msra.mxu0 %v6785
        %6878 = vmatprep.subr.mxu0 0.0
        %6879 = vmatpush1.msra.mxu0 %v6786
        %6880 = vmatprep.subr.mxu0 0.0
        %6881 = vmatpush1.msra.mxu0 %v6787
        %6882 = vmatprep.mubr.f32.mxu0 %v6213
        %6883 = vmatmul.mubr.f32.gmra.mrb[0].mxu0 %v6207
        %v6884 = vpop.f32.mrb[0].mxu0
        %v6885 = vadd.f32 %v6798, %v6884
        %v6886 = vpop.f32.mrb[0].mxu0
        %6887 = vmatprep.mubr.f32.mxu0 %v6214
        %6888 = vmatmul.mubr.f32.gmra.mrb[0].mxu0 %v6208
        %v6889 = vpop.f32.mrb[0].mxu0
        %v6890 = vadd.f32 %v6798, %v6889
        %v6891 = vpop.f32.mrb[0].mxu0
        %6892 = vmatprep.mubr.f32.mxu0 %v6483
        %6893 = vmatmul.mubr.f32.gmra.mrb[0].mxu0 %v6477
        %v6894 = vpop.f32.mrb[0].mxu0
        %v6895 = vpop.f32.mrb[0].mxu0
        %6896 = vmatprep.mubr.f32.mxu0 %v6484
        %6897 = vmatmul.mubr.f32.gmra.mrb[0].mxu0 %v6478
        %v6898 = vpop.f32.mrb[0].mxu0
        %v6899 = vpop.f32.mrb[0].mxu0
        %6900 = vmatprep.mubr.f32.mxu0 %v6753
        %6901 = vmatmul.mubr.f32.gmra.mrb[0].mxu0 %v6747
        %v6902 = vpop.f32.mrb[0].mxu0
        %v6903 = vadd.f32 %v6798, %v6902
        %v6904 = vpop.f32.mrb[0].mxu0
        %6905 = vmatprep.mubr.f32.mxu0 %v6754
        %6906 = vmatmul.mubr.f32.gmra.mrb[0].mxu0 %v6748
        %v6907 = vpop.f32.mrb[0].mxu0
        %v6908 = vadd.f32 %v6798, %v6907
        %v6909 = vpop.f32.mrb[0].mxu0
        %6910 = vdwg.mxu0
        %6911 = vmatprep.subr.mxu0 0.0
        %6912 = vmatpush1.msra.mxu0 %v6788
        %6913 = vmatprep.subr.mxu0 0.0
        %6914 = vmatpush1.msra.mxu0 %v6789
        %6915 = vmatprep.subr.mxu0 0.0
        %6916 = vmatpush1.msra.mxu0 %v6790
        %6917 = vmatprep.subr.mxu0 0.0
        %6918 = vmatpush1.msra.mxu0 %v6791
        %6919 = vmatprep.subr.mxu0 0.0
        %6920 = vmatpush1.msra.mxu0 0.0
        %6921 = vmatprep.subr.mxu0 0.0
        %6922 = vmatpush1.msra.mxu0 0.0
        %6923 = vmatprep.subr.mxu0 0.0
        %6924 = vmatpush1.msra.mxu0 0.0
        %6925 = vmatprep.subr.mxu0 0.0
        %6926 = vmatpush1.msra.mxu0 0.0
        %6927 = vmatprep.subr.mxu0 0.0
        %6928 = vmatpush1.msra.mxu0 0.0
        %6929 = vmatprep.subr.mxu0 0.0
        %6930 = vmatpush1.msra.mxu0 0.0
        %6931 = vmatprep.subr.mxu0 0.0
        %6932 = vmatpush1.msra.mxu0 0.0
        %6933 = vmatprep.subr.mxu0 0.0
        %6934 = vmatpush1.msra.mxu0 0.0
        %6935 = vmatprep.subr.mxu0 0.0
        %6936 = vmatpush1.msra.mxu0 0.0
        %6937 = vmatprep.subr.mxu0 0.0
        %6938 = vmatpush1.msra.mxu0 0.0
        %6939 = vmatprep.subr.mxu0 0.0
        %6940 = vmatpush1.msra.mxu0 0.0
        %6941 = vmatprep.subr.mxu0 0.0
        %6942 = vmatpush1.msra.mxu0 0.0
        %6943 = vmatprep.subr.mxu0 0.0
        %6944 = vmatpush1.msra.mxu0 0.0
        %6945 = vmatprep.subr.mxu0 0.0
        %6946 = vmatpush1.msra.mxu0 0.0
        %6947 = vmatprep.subr.mxu0 0.0
        %6948 = vmatpush1.msra.mxu0 0.0
        %6949 = vmatprep.subr.mxu0 0.0
        %6950 = vmatpush1.msra.mxu0 0.0
        %6951 = vmatprep.subr.mxu0 0.0
        %6952 = vmatpush1.msra.mxu0 0.0
        %6953 = vmatprep.subr.mxu0 0.0
        %6954 = vmatpush1.msra.mxu0 0.0
        %6955 = vmatprep.subr.mxu0 0.0
        %6956 = vmatpush1.msra.mxu0 0.0
        %6957 = vmatprep.subr.mxu0 0.0
        %6958 = vmatpush1.msra.mxu0 0.0
        %6959 = vmatprep.subr.mxu0 0.0
        %6960 = vmatpush1.msra.mxu0 0.0
        %6961 = vmatprep.subr.mxu0 0.0
        %6962 = vmatpush1.msra.mxu0 0.0
        %6963 = vmatprep.subr.mxu0 0.0
        %6964 = vmatpush1.msra.mxu0 0.0
        %6965 = vmatprep.subr.mxu0 0.0
        %6966 = vmatpush1.msra.mxu0 0.0
        %6967 = vmatprep.subr.mxu0 0.0
        %6968 = vmatpush1.msra.mxu0 0.0
        %6969 = vmatprep.subr.mxu0 0.0
        %6970 = vmatpush1.msra.mxu0 0.0
        %6971 = vmatprep.subr.mxu0 0.0
        %6972 = vmatpush1.msra.mxu0 0.0
        %6973 = vmatprep.subr.mxu0 0.0
        %6974 = vmatpush1.msra.mxu0 0.0
        %6975 = vmatprep.mubr.f32.mxu0 0.0
        %6976 = vmatmul.mubr.f32.gmra.mrb[0].mxu0 %v6801
        %v6977 = vpop.f32.mrb[0].mxu0
        %v6978 = vadd.f32 %v6885, %v6977
        %v6979 = vpop.f32.mrb[0].mxu0
        %6980 = vmatprep.mubr.f32.mxu0 0.0
        %6981 = vmatmul.mubr.f32.gmra.mrb[0].mxu0 %v6804
        %v6982 = vpop.f32.mrb[0].mxu0
        %v6983 = vadd.f32 %v6890, %v6982
        %v6984 = vpop.f32.mrb[0].mxu0
        %6985 = vmatprep.mubr.f32.mxu0 0.0
        %6986 = vmatmul.mubr.f32.gmra.mrb[0].mxu0 %v6807
        %v6987 = vpop.f32.mrb[0].mxu0
        %v6988 = vpop.f32.mrb[0].mxu0
        %6989 = vmatprep.mubr.f32.mxu0 0.0
        %6990 = vmatmul.mubr.f32.gmra.mrb[0].mxu0 %v6810
        %v6991 = vpop.f32.mrb[0].mxu0
        %v6992 = vpop.f32.mrb[0].mxu0
        %6993 = vmatprep.mubr.f32.mxu0 0.0
        %6994 = vmatmul.mubr.f32.gmra.mrb[0].mxu0 %v6813
        %v6995 = vpop.f32.mrb[0].mxu0
        %v6996 = vadd.f32 %v6903, %v6995
        %v6997 = vpop.f32.mrb[0].mxu0
        %6998 = vmatprep.mubr.f32.mxu0 0.0
        %6999 = vmatmul.mubr.f32.gmra.mrb[0].mxu0 %v6816
        %v7000 = vpop.f32.mrb[0].mxu0
        %v7001 = vadd.f32 %v6908, %v7000
        %v7002 = vpop.f32.mrb[0].mxu0
        %7003 = vdwg.mxu0
        %v7004 = vadd.f32 %v6978, %v5598
        %v7005 = vadd.f32 %v6983, %v5599
        %v7006 = vadd.f32 %v6996, %v5602
        %v7007 = vadd.f32 %v7001, %v5603
        %s7008 = scalar_lea.vmem %s14, 2
        %v7009 = vld [vmem:[%s7008] sm:$0x1]
        %v7011 = vlaneseq
        %v7012 = vshrl.u32 %v7011, 7
        %v7013 = vsub.s32 0, %v7012
        %v7014 = vrot.slane %v7009, %v7013
        %v7016 = vmul.f32 %v7004, %v7014
        %v7017 = vmul.f32 %v7005, %v7014
        %v7018 = vmul.f32 %v7006, %v7014
        %v7019 = vmul.f32 %v7007, %v7014
        %s7020 = scalar_lea.vmem %s15, 2
        %v7021 = vld [vmem:[%s7020] sm:$0x1]
        %v7023 = vlaneseq
        %v7024 = vshrl.u32 %v7023, 7
        %v7025 = vsub.s32 0, %v7024
        %v7026 = vrot.slane %v7021, %v7025
        %v7028 = vadd.f32 %v7016, %v7026
        %v7029 = vadd.f32 %v7017, %v7026
        %v7030 = vadd.f32 %v7018, %v7026
        %v7031 = vadd.f32 %v7019, %v7026
        %7034 = vrot.lane.b32.xlu0 %v7030, 32
        %v7035 = vpop.permute.xlu0 %7034
        %7036 = vrot.lane.b32.xlu0 %v7031, 32
        %v7037 = vpop.permute.xlu0 %7036
        %v7040 = vsel %vm1043, %v7028, %v7035
        %v7041 = vsel %vm1043, %v7029, %v7037
        %s7042 = scalar_lea.vmem %s8, 192
        %v7043 = vld [vmem:[%s7042] sm:$0xff]
        %v7044 = vld [vmem:[%s7042 + $0x8] sm:$0xff]
        %v7045 = vld [vmem:[%s7042 + $0x10] sm:$0xff]
        %v7046 = vld [vmem:[%s7042 + $0x18] sm:$0xff]
        %v7047 = vld [vmem:[%s7042 + $0x20] sm:$0xff]
        %v7048 = vld [vmem:[%s7042 + $0x28] sm:$0xff]
        %v7049 = vld [vmem:[%s7042 + $0x30] sm:$0xff]
        %v7050 = vld [vmem:[%s7042 + $0x38] sm:$0xff]
        %s7051 = scalar_lea.vmem [#allocation4], 3
        %v7052 = vld [vmem:[%s7051] sm:$0x1]
        %v7054 = vlaneseq
        %v7055 = vshrl.u32 %v7054, 7
        %v7056 = vsub.s32 0, %v7055
        %v7057 = vrot.slane %v7052, %v7056
        %v7060 = vsel %vm1363, %v7040, 0
        %v7063 = vsel %vm1363, %v7041, 0
        %7065 = vmatprep.subr.mxu0 0.0
        %7066 = vmatpush1.msra.mxu0 %v7043
        %7067 = vmatprep.subr.mxu0 0.0
        %7068 = vmatpush1.msra.mxu0 %v7044
        %7069 = vmatprep.subr.mxu0 0.0
        %7070 = vmatpush1.msra.mxu0 %v7045
        %7071 = vmatprep.subr.mxu0 0.0
        %7072 = vmatpush1.msra.mxu0 %v7046
        %7073 = vmatprep.subr.mxu0 0.0
        %7074 = vmatpush1.msra.mxu0 %v7047
        %7075 = vmatprep.subr.mxu0 0.0
        %7076 = vmatpush1.msra.mxu0 %v7048
        %7077 = vmatprep.subr.mxu0 0.0
        %7078 = vmatpush1.msra.mxu0 %v7049
        %7079 = vmatprep.subr.mxu0 0.0
        %7080 = vmatpush1.msra.mxu0 %v7050
        %7081 = vmatprep.subr.mxu0 0.0
        %7082 = vmatpush1.msra.mxu0 0.0
        %7083 = vmatprep.subr.mxu0 0.0
        %7084 = vmatpush1.msra.mxu0 0.0
        %7085 = vmatprep.subr.mxu0 0.0
        %7086 = vmatpush1.msra.mxu0 0.0
        %7087 = vmatprep.subr.mxu0 0.0
        %7088 = vmatpush1.msra.mxu0 0.0
        %7089 = vmatprep.subr.mxu0 0.0
        %7090 = vmatpush1.msra.mxu0 0.0
        %7091 = vmatprep.subr.mxu0 0.0
        %7092 = vmatpush1.msra.mxu0 0.0
        %7093 = vmatprep.subr.mxu0 0.0
        %7094 = vmatpush1.msra.mxu0 0.0
        %7095 = vmatprep.subr.mxu0 0.0
        %7096 = vmatpush1.msra.mxu0 0.0
        %7097 = vmatprep.subr.mxu0 0.0
        %7098 = vmatpush1.msra.mxu0 0.0
        %7099 = vmatprep.subr.mxu0 0.0
        %7100 = vmatpush1.msra.mxu0 0.0
        %7101 = vmatprep.subr.mxu0 0.0
        %7102 = vmatpush1.msra.mxu0 0.0
        %7103 = vmatprep.subr.mxu0 0.0
        %7104 = vmatpush1.msra.mxu0 0.0
        %7105 = vmatprep.subr.mxu0 0.0
        %7106 = vmatpush1.msra.mxu0 0.0
        %7107 = vmatprep.subr.mxu0 0.0
        %7108 = vmatpush1.msra.mxu0 0.0
        %7109 = vmatprep.subr.mxu0 0.0
        %7110 = vmatpush1.msra.mxu0 0.0
        %7111 = vmatprep.subr.mxu0 0.0
        %7112 = vmatpush1.msra.mxu0 0.0
        %7113 = vmatprep.subr.mxu0 0.0
        %7114 = vmatpush1.msra.mxu0 0.0
        %7115 = vmatprep.subr.mxu0 0.0
        %7116 = vmatpush1.msra.mxu0 0.0
        %7117 = vmatprep.subr.mxu0 0.0
        %7118 = vmatpush1.msra.mxu0 0.0
        %7119 = vmatprep.subr.mxu0 0.0
        %7120 = vmatpush1.msra.mxu0 0.0
        %7121 = vmatprep.subr.mxu0 0.0
        %7122 = vmatpush1.msra.mxu0 0.0
        %7123 = vmatprep.subr.mxu0 0.0
        %7124 = vmatpush1.msra.mxu0 0.0
        %7125 = vmatprep.subr.mxu0 0.0
        %7126 = vmatpush1.msra.mxu0 0.0
        %7127 = vmatprep.subr.mxu0 0.0
        %7128 = vmatpush1.msra.mxu0 0.0
        %7129 = vmatprep.mubr.f32.mxu0 0.0
        %7130 = vmatmul.mubr.f32.gmra.mrb[0].mxu0 %v7060
        %v7131 = vpop.f32.mrb[0].mxu0
        %v7132 = vadd.f32 %v7057, %v7131
        %v7133 = vpop.f32.mrb[0].mxu0
        %7134 = vmatprep.mubr.f32.mxu0 0.0
        %7135 = vmatmul.mubr.f32.gmra.mrb[0].mxu0 %v7063
        %v7136 = vpop.f32.mrb[0].mxu0
        %v7137 = vadd.f32 %v7057, %v7136
        %v7138 = vpop.f32.mrb[0].mxu0
        %7139 = vdwg.mxu0
        %v7140 = vtanh.pop %v7132
        %v7141 = vtanh.pop %v7137
        %v7142 = vxor.u32 %v7132, 2147483648
        %v7143 = vxor.u32 %v7137, 2147483648
        %v7144 = vmul.f32 %v7142, 1.442695
        %v7145 = vpow.pop %v7144
        %v7146 = vmul.f32 %v7143, 1.442695
        %v7147 = vpow.pop %v7146
        %v7148 = vadd.f32 %v7145, 1.0
        %v7149 = vadd.f32 %v7147, 1.0
        %v7150 = vrcp.pop %v7148
        %v7151 = vmul.f32 1.0, %v7150
        %v7152 = vrcp.pop %v7149
        %v7153 = vmul.f32 1.0, %v7152
        %7156 = vrot.lane.b32.xlu0 %v7151, 96
        %v7157 = vpop.permute.xlu0 %7156
        %7158 = vrot.lane.b32.xlu0 %v7153, 96
        %v7159 = vpop.permute.xlu0 %7158
        %v7162 = vmul.f32 %v7140, %v7157
        %v7163 = vmul.f32 %v7141, %v7159
        %s7164 = scalar_lea.vmem %s10, 192
        %v7165 = vld [vmem:[%s7164] sm:$0xff]
        %v7166 = vld [vmem:[%s7164 + $0x8] sm:$0xff]
        %v7167 = vld [vmem:[%s7164 + $0x10] sm:$0xff]
        %v7168 = vld [vmem:[%s7164 + $0x18] sm:$0xff]
        %v7169 = vld [vmem:[%s7164 + $0x20] sm:$0xff]
        %v7170 = vld [vmem:[%s7164 + $0x28] sm:$0xff]
        %v7171 = vld [vmem:[%s7164 + $0x30] sm:$0xff]
        %v7172 = vld [vmem:[%s7164 + $0x38] sm:$0xff]
        %s7173 = scalar_lea.vmem [#allocation6], 6
        %v7174 = vld [vmem:[%s7173] sm:$0x3]
        %v7176 = vlaneseq
        %v7177 = vshrl.u32 %v7176, 7
        %v7178 = vsub.s32 0, %v7177
        %v7179 = vrot.slane %v7174, %v7178
        %v7180 = vlaneseq
        %v7181 = vshrl.u32 %v7180, 7
        %v7182 = vsub.s32 1, %v7181
        %v7183 = vrot.slane %v7174, %v7182
        %v7187 = vsel %vm1043, %v7162, 0
        %v7190 = vsel %vm1043, %v7163, 0
        %7192 = vmatprep.subr.mxu0 %v7166
        %7193 = vmatpush1.msra.mxu0 %v7165
        %7194 = vmatprep.subr.mxu0 %v7168
        %7195 = vmatpush1.msra.mxu0 %v7167
        %7196 = vmatprep.subr.mxu0 %v7170
        %7197 = vmatpush1.msra.mxu0 %v7169
        %7198 = vmatprep.subr.mxu0 %v7172
        %7199 = vmatpush1.msra.mxu0 %v7171
        %7200 = vmatprep.subr.mxu0 0.0
        %7201 = vmatpush1.msra.mxu0 0.0
        %7202 = vmatprep.subr.mxu0 0.0
        %7203 = vmatpush1.msra.mxu0 0.0
        %7204 = vmatprep.subr.mxu0 0.0
        %7205 = vmatpush1.msra.mxu0 0.0
        %7206 = vmatprep.subr.mxu0 0.0
        %7207 = vmatpush1.msra.mxu0 0.0
        %7208 = vmatprep.subr.mxu0 0.0
        %7209 = vmatpush1.msra.mxu0 0.0
        %7210 = vmatprep.subr.mxu0 0.0
        %7211 = vmatpush1.msra.mxu0 0.0
        %7212 = vmatprep.subr.mxu0 0.0
        %7213 = vmatpush1.msra.mxu0 0.0
        %7214 = vmatprep.subr.mxu0 0.0
        %7215 = vmatpush1.msra.mxu0 0.0
        %7216 = vmatprep.subr.mxu0 0.0
        %7217 = vmatpush1.msra.mxu0 0.0
        %7218 = vmatprep.subr.mxu0 0.0
        %7219 = vmatpush1.msra.mxu0 0.0
        %7220 = vmatprep.subr.mxu0 0.0
        %7221 = vmatpush1.msra.mxu0 0.0
        %7222 = vmatprep.subr.mxu0 0.0
        %7223 = vmatpush1.msra.mxu0 0.0
        %7224 = vmatprep.subr.mxu0 0.0
        %7225 = vmatpush1.msra.mxu0 0.0
        %7226 = vmatprep.subr.mxu0 0.0
        %7227 = vmatpush1.msra.mxu0 0.0
        %7228 = vmatprep.subr.mxu0 0.0
        %7229 = vmatpush1.msra.mxu0 0.0
        %7230 = vmatprep.subr.mxu0 0.0
        %7231 = vmatpush1.msra.mxu0 0.0
        %7232 = vmatprep.subr.mxu0 0.0
        %7233 = vmatpush1.msra.mxu0 0.0
        %7234 = vmatprep.subr.mxu0 0.0
        %7235 = vmatpush1.msra.mxu0 0.0
        %7236 = vmatprep.subr.mxu0 0.0
        %7237 = vmatpush1.msra.mxu0 0.0
        %7238 = vmatprep.subr.mxu0 0.0
        %7239 = vmatpush1.msra.mxu0 0.0
        %7240 = vmatprep.subr.mxu0 0.0
        %7241 = vmatpush1.msra.mxu0 0.0
        %7242 = vmatprep.subr.mxu0 0.0
        %7243 = vmatpush1.msra.mxu0 0.0
        %7244 = vmatprep.subr.mxu0 0.0
        %7245 = vmatpush1.msra.mxu0 0.0
        %7246 = vmatprep.subr.mxu0 0.0
        %7247 = vmatpush1.msra.mxu0 0.0
        %7248 = vmatprep.subr.mxu0 0.0
        %7249 = vmatpush1.msra.mxu0 0.0
        %7250 = vmatprep.subr.mxu0 0.0
        %7251 = vmatpush1.msra.mxu0 0.0
        %7252 = vmatprep.subr.mxu0 0.0
        %7253 = vmatpush1.msra.mxu0 0.0
        %7254 = vmatprep.subr.mxu0 0.0
        %7255 = vmatpush1.msra.mxu0 0.0
        %7256 = vmatprep.mubr.f32.mxu0 0.0
        %7257 = vmatmul.mubr.f32.gmra.mrb[0].mxu0 %v7187
        %v7258 = vpop.f32.mrb[0].mxu0
        %v7259 = vadd.f32 %v7179, %v7258
        %v7260 = vpop.f32.mrb[0].mxu0
        %v7261 = vadd.f32 %v7183, %v7260
        %7262 = vmatprep.mubr.f32.mxu0 0.0
        %7263 = vmatmul.mubr.f32.gmra.mrb[0].mxu0 %v7190
        %v7264 = vpop.f32.mrb[0].mxu0
        %v7265 = vadd.f32 %v7179, %v7264
        %v7266 = vpop.f32.mrb[0].mxu0
        %v7267 = vadd.f32 %v7183, %v7266
        %7268 = vdwg.mxu0
        %v7269 = vadd.f32 %v5941, %v7259
        %v7270 = vadd.f32 %v5942, %v7261
        %v7271 = vadd.f32 %v5943, %v7265
        %v7272 = vadd.f32 %v5944, %v7267
        %v7273 = vld [vmem:[%s879] sm:$0xff]
        %v7274 = vld [vmem:[%s879 + $0x8] sm:$0xff]
        %v7275 = vld [vmem:[%s16] sm:$0xff]
        %v7276 = vld [vmem:[%s16 + $0x8] sm:$0xff]
        %v7277 = vld [vmem:[%s16 + $0x10] sm:$0xff]
        %v7278 = vld [vmem:[%s16 + $0x18] sm:$0xff]
        %v7279 = vld [vmem:[%s16 + $0x20] sm:$0xff]
        %v7280 = vld [vmem:[%s16 + $0x28] sm:$0xff]
        %v7281 = vld [vmem:[%s16 + $0x30] sm:$0xff]
        %v7282 = vld [vmem:[%s16 + $0x38] sm:$0xff]
        %v7283 = vld [vmem:[#allocation9] sm:$0xf]
        %v7285 = vlaneseq
        %v7286 = vshrl.u32 %v7285, 7
        %v7287 = vsub.s32 0, %v7286
        %v7288 = vrot.slane %v7283, %v7287
        %v7289 = vlaneseq
        %v7290 = vshrl.u32 %v7289, 7
        %v7291 = vsub.s32 1, %v7290
        %v7292 = vrot.slane %v7283, %v7291
        %v7293 = vlaneseq
        %v7294 = vshrl.u32 %v7293, 7
        %v7295 = vsub.s32 2, %v7294
        %v7296 = vrot.slane %v7283, %v7295
        %v7297 = vlaneseq
        %v7298 = vshrl.u32 %v7297, 7
        %v7299 = vsub.s32 3, %v7298
        %v7300 = vrot.slane %v7283, %v7299
        %v7306 = vsel %vm900, %v7273, 0
        %v7309 = vsel %vm900, %v7274, 0
        %7311 = vmatprep.subr.mxu0 %v7276
        %7312 = vmatpush1.msra.mxu0 %v7275
        %7313 = vmatprep.subr.mxu0 %v7280
        %7314 = vmatpush1.msra.mxu0 %v7279
        %7315 = vmatprep.subr.mxu0 0.0
        %7316 = vmatpush1.msra.mxu0 0.0
        %7317 = vmatprep.subr.mxu0 0.0
        %7318 = vmatpush1.msra.mxu0 0.0
        %7319 = vmatprep.subr.mxu0 0.0
        %7320 = vmatpush1.msra.mxu0 0.0
        %7321 = vmatprep.subr.mxu0 0.0
        %7322 = vmatpush1.msra.mxu0 0.0
        %7323 = vmatprep.subr.mxu0 0.0
        %7324 = vmatpush1.msra.mxu0 0.0
        %7325 = vmatprep.subr.mxu0 0.0
        %7326 = vmatpush1.msra.mxu0 0.0
        %7327 = vmatprep.subr.mxu0 0.0
        %7328 = vmatpush1.msra.mxu0 0.0
        %7329 = vmatprep.subr.mxu0 0.0
        %7330 = vmatpush1.msra.mxu0 0.0
        %7331 = vmatprep.subr.mxu0 0.0
        %7332 = vmatpush1.msra.mxu0 0.0
        %7333 = vmatprep.subr.mxu0 0.0
        %7334 = vmatpush1.msra.mxu0 0.0
        %7335 = vmatprep.subr.mxu0 0.0
        %7336 = vmatpush1.msra.mxu0 0.0
        %7337 = vmatprep.subr.mxu0 0.0
        %7338 = vmatpush1.msra.mxu0 0.0
        %7339 = vmatprep.subr.mxu0 0.0
        %7340 = vmatpush1.msra.mxu0 0.0
        %7341 = vmatprep.subr.mxu0 0.0
        %7342 = vmatpush1.msra.mxu0 0.0
        %7343 = vmatprep.subr.mxu0 0.0
        %7344 = vmatpush1.msra.mxu0 0.0
        %7345 = vmatprep.subr.mxu0 0.0
        %7346 = vmatpush1.msra.mxu0 0.0
        %7347 = vmatprep.subr.mxu0 0.0
        %7348 = vmatpush1.msra.mxu0 0.0
        %7349 = vmatprep.subr.mxu0 0.0
        %7350 = vmatpush1.msra.mxu0 0.0
        %7351 = vmatprep.subr.mxu0 0.0
        %7352 = vmatpush1.msra.mxu0 0.0
        %7353 = vmatprep.subr.mxu0 0.0
        %7354 = vmatpush1.msra.mxu0 0.0
        %7355 = vmatprep.subr.mxu0 0.0
        %7356 = vmatpush1.msra.mxu0 0.0
        %7357 = vmatprep.subr.mxu0 0.0
        %7358 = vmatpush1.msra.mxu0 0.0
        %7359 = vmatprep.subr.mxu0 0.0
        %7360 = vmatpush1.msra.mxu0 0.0
        %7361 = vmatprep.subr.mxu0 0.0
        %7362 = vmatpush1.msra.mxu0 0.0
        %7363 = vmatprep.subr.mxu0 0.0
        %7364 = vmatpush1.msra.mxu0 0.0
        %7365 = vmatprep.subr.mxu0 0.0
        %7366 = vmatpush1.msra.mxu0 0.0
        %7367 = vmatprep.subr.mxu0 0.0
        %7368 = vmatpush1.msra.mxu0 0.0
        %7369 = vmatprep.subr.mxu0 0.0
        %7370 = vmatpush1.msra.mxu0 0.0
        %7371 = vmatprep.subr.mxu0 0.0
        %7372 = vmatpush1.msra.mxu0 0.0
        %7373 = vmatprep.subr.mxu0 0.0
        %7374 = vmatpush1.msra.mxu0 0.0
        %7375 = vmatprep.mubr.f32.mxu0 0.0
        %7376 = vmatmul.mubr.f32.gmra.mrb[0].mxu0 %v7306
        %v7377 = vpop.f32.mrb[0].mxu0
        %v7378 = vadd.f32 %v7288, %v7377
        %v7379 = vpop.f32.mrb[0].mxu0
        %v7380 = vadd.f32 %v7292, %v7379
        %7381 = vmatprep.mubr.f32.mxu0 0.0
        %7382 = vmatmul.mubr.f32.gmra.mrb[0].mxu0 %v7309
        %v7383 = vpop.f32.mrb[0].mxu0
        %v7384 = vadd.f32 %v7288, %v7383
        %v7385 = vpop.f32.mrb[0].mxu0
        %v7386 = vadd.f32 %v7292, %v7385
        %7387 = vdwg.mxu0
        %7388 = vmatprep.subr.mxu0 %v7278
        %7389 = vmatpush1.msra.mxu0 %v7277
        %7390 = vmatprep.subr.mxu0 %v7282
        %7391 = vmatpush1.msra.mxu0 %v7281
        %7392 = vmatprep.subr.mxu0 0.0
        %7393 = vmatpush1.msra.mxu0 0.0
        %7394 = vmatprep.subr.mxu0 0.0
        %7395 = vmatpush1.msra.mxu0 0.0
        %7396 = vmatprep.subr.mxu0 0.0
        %7397 = vmatpush1.msra.mxu0 0.0
        %7398 = vmatprep.subr.mxu0 0.0
        %7399 = vmatpush1.msra.mxu0 0.0
        %7400 = vmatprep.subr.mxu0 0.0
        %7401 = vmatpush1.msra.mxu0 0.0
        %7402 = vmatprep.subr.mxu0 0.0
        %7403 = vmatpush1.msra.mxu0 0.0
        %7404 = vmatprep.subr.mxu0 0.0
        %7405 = vmatpush1.msra.mxu0 0.0
        %7406 = vmatprep.subr.mxu0 0.0
        %7407 = vmatpush1.msra.mxu0 0.0
        %7408 = vmatprep.subr.mxu0 0.0
        %7409 = vmatpush1.msra.mxu0 0.0
        %7410 = vmatprep.subr.mxu0 0.0
        %7411 = vmatpush1.msra.mxu0 0.0
        %7412 = vmatprep.subr.mxu0 0.0
        %7413 = vmatpush1.msra.mxu0 0.0
        %7414 = vmatprep.subr.mxu0 0.0
        %7415 = vmatpush1.msra.mxu0 0.0
        %7416 = vmatprep.subr.mxu0 0.0
        %7417 = vmatpush1.msra.mxu0 0.0
        %7418 = vmatprep.subr.mxu0 0.0
        %7419 = vmatpush1.msra.mxu0 0.0
        %7420 = vmatprep.subr.mxu0 0.0
        %7421 = vmatpush1.msra.mxu0 0.0
        %7422 = vmatprep.subr.mxu0 0.0
        %7423 = vmatpush1.msra.mxu0 0.0
        %7424 = vmatprep.subr.mxu0 0.0
        %7425 = vmatpush1.msra.mxu0 0.0
        %7426 = vmatprep.subr.mxu0 0.0
        %7427 = vmatpush1.msra.mxu0 0.0
        %7428 = vmatprep.subr.mxu0 0.0
        %7429 = vmatpush1.msra.mxu0 0.0
        %7430 = vmatprep.subr.mxu0 0.0
        %7431 = vmatpush1.msra.mxu0 0.0
        %7432 = vmatprep.subr.mxu0 0.0
        %7433 = vmatpush1.msra.mxu0 0.0
        %7434 = vmatprep.subr.mxu0 0.0
        %7435 = vmatpush1.msra.mxu0 0.0
        %7436 = vmatprep.subr.mxu0 0.0
        %7437 = vmatpush1.msra.mxu0 0.0
        %7438 = vmatprep.subr.mxu0 0.0
        %7439 = vmatpush1.msra.mxu0 0.0
        %7440 = vmatprep.subr.mxu0 0.0
        %7441 = vmatpush1.msra.mxu0 0.0
        %7442 = vmatprep.subr.mxu0 0.0
        %7443 = vmatpush1.msra.mxu0 0.0
        %7444 = vmatprep.subr.mxu0 0.0
        %7445 = vmatpush1.msra.mxu0 0.0
        %7446 = vmatprep.subr.mxu0 0.0
        %7447 = vmatpush1.msra.mxu0 0.0
        %7448 = vmatprep.subr.mxu0 0.0
        %7449 = vmatpush1.msra.mxu0 0.0
        %7450 = vmatprep.subr.mxu0 0.0
        %7451 = vmatpush1.msra.mxu0 0.0
        %7452 = vmatprep.mubr.f32.mxu0 0.0
        %7453 = vmatmul.mubr.f32.gmra.mrb[0].mxu0 %v7306
        %v7454 = vpop.f32.mrb[0].mxu0
        %v7455 = vadd.f32 %v7296, %v7454
        %v7456 = vpop.f32.mrb[0].mxu0
        %v7457 = vadd.f32 %v7300, %v7456
        %7458 = vmatprep.mubr.f32.mxu0 0.0
        %7459 = vmatmul.mubr.f32.gmra.mrb[0].mxu0 %v7309
        %v7460 = vpop.f32.mrb[0].mxu0
        %v7461 = vadd.f32 %v7296, %v7460
        %v7462 = vpop.f32.mrb[0].mxu0
        %v7463 = vadd.f32 %v7300, %v7462
        %7464 = vdwg.mxu0
        %v7465 = vmax.f32 %v7378, 0.0
        %v7466 = vmax.f32 %v7380, 0.0
        %v7467 = vmax.f32 %v7455, 0.0
        %v7468 = vmax.f32 %v7457, 0.0
        %v7469 = vmax.f32 %v7384, 0.0
        %v7470 = vmax.f32 %v7386, 0.0
        %v7471 = vmax.f32 %v7461, 0.0
        %v7472 = vmax.f32 %v7463, 0.0
        %v7473 = vld [vmem:[%s18] sm:$0xff]
        %v7474 = vld [vmem:[%s18 + $0x8] sm:$0xff]
        %v7475 = vld [vmem:[%s18 + $0x10] sm:$0xff]
        %v7476 = vld [vmem:[%s18 + $0x18] sm:$0xff]
        %v7477 = vld [vmem:[%s18 + $0x20] sm:$0xff]
        %v7478 = vld [vmem:[%s18 + $0x28] sm:$0xff]
        %v7479 = vld [vmem:[%s18 + $0x30] sm:$0xff]
        %v7480 = vld [vmem:[%s18 + $0x38] sm:$0xff]
        %v7481 = vld [vmem:[%s18 + $0x40] sm:$0xff]
        %v7482 = vld [vmem:[%s18 + $0x48] sm:$0xff]
        %v7483 = vld [vmem:[%s18 + $0x50] sm:$0xff]
        %v7484 = vld [vmem:[%s18 + $0x58] sm:$0xff]
        %v7485 = vld [vmem:[%s18 + $0x60] sm:$0xff]
        %v7486 = vld [vmem:[%s18 + $0x68] sm:$0xff]
        %v7487 = vld [vmem:[%s18 + $0x70] sm:$0xff]
        %v7488 = vld [vmem:[%s18 + $0x78] sm:$0xff]
        %v7489 = vld [vmem:[%s18 + $0x80] sm:$0xff]
        %v7490 = vld [vmem:[%s18 + $0x88] sm:$0xff]
        %v7491 = vld [vmem:[%s18 + $0x90] sm:$0xff]
        %v7492 = vld [vmem:[%s18 + $0x98] sm:$0xff]
        %v7493 = vld [vmem:[%s18 + $0xa0] sm:$0xff]
        %v7494 = vld [vmem:[%s18 + $0xa8] sm:$0xff]
        %v7495 = vld [vmem:[%s18 + $0xb0] sm:$0xff]
        %v7496 = vld [vmem:[%s18 + $0xb8] sm:$0xff]
        %v7497 = vld [vmem:[%s18 + $0xc0] sm:$0xff]
        %v7498 = vld [vmem:[%s18 + $0xc8] sm:$0xff]
        %v7499 = vld [vmem:[%s18 + $0xd0] sm:$0xff]
        %v7500 = vld [vmem:[%s18 + $0xd8] sm:$0xff]
        %v7501 = vld [vmem:[%s18 + $0xe0] sm:$0xff]
        %v7502 = vld [vmem:[%s18 + $0xe8] sm:$0xff]
        %v7503 = vld [vmem:[%s18 + $0xf0] sm:$0xff]
        %v7504 = vld [vmem:[%s18 + $0xf8] sm:$0xff]
        %v7505 = vld [vmem:[%s18 + $0x100] sm:$0xff]
        %v7506 = vld [vmem:[%s18 + $0x108] sm:$0xff]
        %v7507 = vld [vmem:[%s18 + $0x110] sm:$0xff]
        %v7508 = vld [vmem:[%s18 + $0x118] sm:$0xff]
        %v7509 = vld [vmem:[%s18 + $0x120] sm:$0xff]
        %v7510 = vld [vmem:[%s18 + $0x128] sm:$0xff]
        %v7511 = vld [vmem:[%s18 + $0x130] sm:$0xff]
        %v7512 = vld [vmem:[%s18 + $0x138] sm:$0xff]
        %v7513 = vld [vmem:[%s18 + $0x140] sm:$0xff]
        %v7514 = vld [vmem:[%s18 + $0x148] sm:$0xff]
        %v7515 = vld [vmem:[%s18 + $0x150] sm:$0xff]
        %v7516 = vld [vmem:[%s18 + $0x158] sm:$0xff]
        %v7517 = vld [vmem:[%s18 + $0x160] sm:$0xff]
        %v7518 = vld [vmem:[%s18 + $0x168] sm:$0xff]
        %v7519 = vld [vmem:[%s18 + $0x170] sm:$0xff]
        %v7520 = vld [vmem:[%s18 + $0x178] sm:$0xff]
        %v7521 = vld [vmem:[%s18 + $0x180] sm:$0xff]
        %v7522 = vld [vmem:[%s18 + $0x188] sm:$0xff]
        %v7523 = vld [vmem:[%s18 + $0x190] sm:$0xff]
        %v7524 = vld [vmem:[%s18 + $0x198] sm:$0xff]
        %v7525 = vld [vmem:[%s18 + $0x1a0] sm:$0xff]
        %v7526 = vld [vmem:[%s18 + $0x1a8] sm:$0xff]
        %v7527 = vld [vmem:[%s18 + $0x1b0] sm:$0xff]
        %v7528 = vld [vmem:[%s18 + $0x1b8] sm:$0xff]
        %v7529 = vld [vmem:[%s18 + $0x1c0] sm:$0xff]
        %v7530 = vld [vmem:[%s18 + $0x1c8] sm:$0xff]
        %v7531 = vld [vmem:[%s18 + $0x1d0] sm:$0xff]
        %v7532 = vld [vmem:[%s18 + $0x1d8] sm:$0xff]
        %v7533 = vld [vmem:[%s18 + $0x1e0] sm:$0xff]
        %v7534 = vld [vmem:[%s18 + $0x1e8] sm:$0xff]
        %v7535 = vld [vmem:[%s18 + $0x1f0] sm:$0xff]
        %v7536 = vld [vmem:[%s18 + $0x1f8] sm:$0xff]
        %v7537 = vld [vmem:[%s18 + $0x200] sm:$0xff]
        %v7538 = vld [vmem:[%s18 + $0x208] sm:$0xff]
        %v7539 = vld [vmem:[%s18 + $0x210] sm:$0xff]
        %v7540 = vld [vmem:[%s18 + $0x218] sm:$0xff]
        %v7541 = vld [vmem:[%s18 + $0x220] sm:$0xff]
        %v7542 = vld [vmem:[%s18 + $0x228] sm:$0xff]
        %v7543 = vld [vmem:[%s18 + $0x230] sm:$0xff]
        %v7544 = vld [vmem:[%s18 + $0x238] sm:$0xff]
        %v7545 = vld [vmem:[%s18 + $0x240] sm:$0xff]
        %v7546 = vld [vmem:[%s18 + $0x248] sm:$0xff]
        %v7547 = vld [vmem:[%s18 + $0x250] sm:$0xff]
        %v7548 = vld [vmem:[%s18 + $0x258] sm:$0xff]
        %v7549 = vld [vmem:[%s18 + $0x260] sm:$0xff]
        %v7550 = vld [vmem:[%s18 + $0x268] sm:$0xff]
        %v7551 = vld [vmem:[%s18 + $0x270] sm:$0xff]
        %v7552 = vld [vmem:[%s18 + $0x278] sm:$0xff]
        %v7553 = vld [vmem:[%s18 + $0x280] sm:$0xff]
        %v7554 = vld [vmem:[%s18 + $0x288] sm:$0xff]
        %v7555 = vld [vmem:[%s18 + $0x290] sm:$0xff]
        %v7556 = vld [vmem:[%s18 + $0x298] sm:$0xff]
        %v7557 = vld [vmem:[%s18 + $0x2a0] sm:$0xff]
        %v7558 = vld [vmem:[%s18 + $0x2a8] sm:$0xff]
        %v7559 = vld [vmem:[%s18 + $0x2b0] sm:$0xff]
        %v7560 = vld [vmem:[%s18 + $0x2b8] sm:$0xff]
        %v7561 = vld [vmem:[%s18 + $0x2c0] sm:$0xff]
        %v7562 = vld [vmem:[%s18 + $0x2c8] sm:$0xff]
        %v7563 = vld [vmem:[%s18 + $0x2d0] sm:$0xff]
        %v7564 = vld [vmem:[%s18 + $0x2d8] sm:$0xff]
        %v7565 = vld [vmem:[%s18 + $0x2e0] sm:$0xff]
        %v7566 = vld [vmem:[%s18 + $0x2e8] sm:$0xff]
        %v7567 = vld [vmem:[%s18 + $0x2f0] sm:$0xff]
        %v7568 = vld [vmem:[%s18 + $0x2f8] sm:$0xff]
        %v7569 = vld [vmem:[%s18 + $0x300] sm:$0xff]
        %v7570 = vld [vmem:[%s18 + $0x308] sm:$0xff]
        %v7571 = vld [vmem:[%s18 + $0x310] sm:$0xff]
        %v7572 = vld [vmem:[%s18 + $0x318] sm:$0xff]
        %v7573 = vld [vmem:[%s18 + $0x320] sm:$0xff]
        %v7574 = vld [vmem:[%s18 + $0x328] sm:$0xff]
        %v7575 = vld [vmem:[%s18 + $0x330] sm:$0xff]
        %v7576 = vld [vmem:[%s18 + $0x338] sm:$0xff]
        %v7577 = vld [vmem:[%s18 + $0x340] sm:$0xff]
        %v7578 = vld [vmem:[%s18 + $0x348] sm:$0xff]
        %v7579 = vld [vmem:[%s18 + $0x350] sm:$0xff]
        %v7580 = vld [vmem:[%s18 + $0x358] sm:$0xff]
        %v7581 = vld [vmem:[%s18 + $0x360] sm:$0xff]
        %v7582 = vld [vmem:[%s18 + $0x368] sm:$0xff]
        %v7583 = vld [vmem:[%s18 + $0x370] sm:$0xff]
        %v7584 = vld [vmem:[%s18 + $0x378] sm:$0xff]
        %v7585 = vld [vmem:[%s18 + $0x380] sm:$0xff]
        %v7586 = vld [vmem:[%s18 + $0x388] sm:$0xff]
        %v7587 = vld [vmem:[%s18 + $0x390] sm:$0xff]
        %v7588 = vld [vmem:[%s18 + $0x398] sm:$0xff]
        %v7589 = vld [vmem:[%s18 + $0x3a0] sm:$0xff]
        %v7590 = vld [vmem:[%s18 + $0x3a8] sm:$0xff]
        %v7591 = vld [vmem:[%s18 + $0x3b0] sm:$0xff]
        %v7592 = vld [vmem:[%s18 + $0x3b8] sm:$0xff]
        %v7593 = vld [vmem:[%s18 + $0x3c0] sm:$0xff]
        %v7594 = vld [vmem:[%s18 + $0x3c8] sm:$0xff]
        %v7595 = vld [vmem:[%s18 + $0x3d0] sm:$0xff]
        %v7596 = vld [vmem:[%s18 + $0x3d8] sm:$0xff]
        %v7597 = vld [vmem:[%s18 + $0x3e0] sm:$0xff]
        %v7598 = vld [vmem:[%s18 + $0x3e8] sm:$0xff]
        %v7599 = vld [vmem:[%s18 + $0x3f0] sm:$0xff]
        %v7600 = vld [vmem:[%s18 + $0x3f8] sm:$0xff]
        %v7601 = vld [vmem:[#allocation10] sm:$0x3]
        %v7603 = vlaneseq
        %v7604 = vshrl.u32 %v7603, 7
        %v7605 = vsub.s32 0, %v7604
        %v7606 = vrot.slane %v7601, %v7605
        %v7607 = vlaneseq
        %v7608 = vshrl.u32 %v7607, 7
        %v7609 = vsub.s32 1, %v7608
        %v7610 = vrot.slane %v7601, %v7609
        %7613 = vmatprep.subr.mxu0 %v7474
        %7614 = vmatpush1.msra.mxu0 %v7473
        %7615 = vmatprep.subr.mxu0 %v7476
        %7616 = vmatpush1.msra.mxu0 %v7475
        %7617 = vmatprep.subr.mxu0 %v7478
        %7618 = vmatpush1.msra.mxu0 %v7477
        %7619 = vmatprep.subr.mxu0 %v7480
        %7620 = vmatpush1.msra.mxu0 %v7479
        %7621 = vmatprep.subr.mxu0 %v7482
        %7622 = vmatpush1.msra.mxu0 %v7481
        %7623 = vmatprep.subr.mxu0 %v7484
        %7624 = vmatpush1.msra.mxu0 %v7483
        %7625 = vmatprep.subr.mxu0 %v7486
        %7626 = vmatpush1.msra.mxu0 %v7485
        %7627 = vmatprep.subr.mxu0 %v7488
        %7628 = vmatpush1.msra.mxu0 %v7487
        %7629 = vmatprep.subr.mxu0 %v7490
        %7630 = vmatpush1.msra.mxu0 %v7489
        %7631 = vmatprep.subr.mxu0 %v7492
        %7632 = vmatpush1.msra.mxu0 %v7491
        %7633 = vmatprep.subr.mxu0 %v7494
        %7634 = vmatpush1.msra.mxu0 %v7493
        %7635 = vmatprep.subr.mxu0 %v7496
        %7636 = vmatpush1.msra.mxu0 %v7495
        %7637 = vmatprep.subr.mxu0 %v7498
        %7638 = vmatpush1.msra.mxu0 %v7497
        %7639 = vmatprep.subr.mxu0 %v7500
        %7640 = vmatpush1.msra.mxu0 %v7499
        %7641 = vmatprep.subr.mxu0 %v7502
        %7642 = vmatpush1.msra.mxu0 %v7501
        %7643 = vmatprep.subr.mxu0 %v7504
        %7644 = vmatpush1.msra.mxu0 %v7503
        %7645 = vmatprep.subr.mxu0 %v7506
        %7646 = vmatpush1.msra.mxu0 %v7505
        %7647 = vmatprep.subr.mxu0 %v7508
        %7648 = vmatpush1.msra.mxu0 %v7507
        %7649 = vmatprep.subr.mxu0 %v7510
        %7650 = vmatpush1.msra.mxu0 %v7509
        %7651 = vmatprep.subr.mxu0 %v7512
        %7652 = vmatpush1.msra.mxu0 %v7511
        %7653 = vmatprep.subr.mxu0 %v7514
        %7654 = vmatpush1.msra.mxu0 %v7513
        %7655 = vmatprep.subr.mxu0 %v7516
        %7656 = vmatpush1.msra.mxu0 %v7515
        %7657 = vmatprep.subr.mxu0 %v7518
        %7658 = vmatpush1.msra.mxu0 %v7517
        %7659 = vmatprep.subr.mxu0 %v7520
        %7660 = vmatpush1.msra.mxu0 %v7519
        %7661 = vmatprep.subr.mxu0 %v7522
        %7662 = vmatpush1.msra.mxu0 %v7521
        %7663 = vmatprep.subr.mxu0 %v7524
        %7664 = vmatpush1.msra.mxu0 %v7523
        %7665 = vmatprep.subr.mxu0 %v7526
        %7666 = vmatpush1.msra.mxu0 %v7525
        %7667 = vmatprep.subr.mxu0 %v7528
        %7668 = vmatpush1.msra.mxu0 %v7527
        %7669 = vmatprep.subr.mxu0 %v7530
        %7670 = vmatpush1.msra.mxu0 %v7529
        %7671 = vmatprep.subr.mxu0 %v7532
        %7672 = vmatpush1.msra.mxu0 %v7531
        %7673 = vmatprep.subr.mxu0 %v7534
        %7674 = vmatpush1.msra.mxu0 %v7533
        %7675 = vmatprep.subr.mxu0 %v7536
        %7676 = vmatpush1.msra.mxu0 %v7535
        %7677 = vmatprep.mubr.f32.mxu0 %v7466
        %7678 = vmatmul.mubr.f32.gmra.mrb[0].mxu0 %v7465
        %v7679 = vpop.f32.mrb[0].mxu0
        %v7680 = vadd.f32 %v7606, %v7679
        %v7681 = vpop.f32.mrb[0].mxu0
        %v7682 = vadd.f32 %v7610, %v7681
        %7683 = vmatprep.mubr.f32.mxu0 %v7470
        %7684 = vmatmul.mubr.f32.gmra.mrb[0].mxu0 %v7469
        %v7685 = vpop.f32.mrb[0].mxu0
        %v7686 = vadd.f32 %v7606, %v7685
        %v7687 = vpop.f32.mrb[0].mxu0
        %v7688 = vadd.f32 %v7610, %v7687
        %7689 = vdwg.mxu0
        %7690 = vmatprep.subr.mxu0 %v7538
        %7691 = vmatpush1.msra.mxu0 %v7537
        %7692 = vmatprep.subr.mxu0 %v7540
        %7693 = vmatpush1.msra.mxu0 %v7539
        %7694 = vmatprep.subr.mxu0 %v7542
        %7695 = vmatpush1.msra.mxu0 %v7541
        %7696 = vmatprep.subr.mxu0 %v7544
        %7697 = vmatpush1.msra.mxu0 %v7543
        %7698 = vmatprep.subr.mxu0 %v7546
        %7699 = vmatpush1.msra.mxu0 %v7545
        %7700 = vmatprep.subr.mxu0 %v7548
        %7701 = vmatpush1.msra.mxu0 %v7547
        %7702 = vmatprep.subr.mxu0 %v7550
        %7703 = vmatpush1.msra.mxu0 %v7549
        %7704 = vmatprep.subr.mxu0 %v7552
        %7705 = vmatpush1.msra.mxu0 %v7551
        %7706 = vmatprep.subr.mxu0 %v7554
        %7707 = vmatpush1.msra.mxu0 %v7553
        %7708 = vmatprep.subr.mxu0 %v7556
        %7709 = vmatpush1.msra.mxu0 %v7555
        %7710 = vmatprep.subr.mxu0 %v7558
        %7711 = vmatpush1.msra.mxu0 %v7557
        %7712 = vmatprep.subr.mxu0 %v7560
        %7713 = vmatpush1.msra.mxu0 %v7559
        %7714 = vmatprep.subr.mxu0 %v7562
        %7715 = vmatpush1.msra.mxu0 %v7561
        %7716 = vmatprep.subr.mxu0 %v7564
        %7717 = vmatpush1.msra.mxu0 %v7563
        %7718 = vmatprep.subr.mxu0 %v7566
        %7719 = vmatpush1.msra.mxu0 %v7565
        %7720 = vmatprep.subr.mxu0 %v7568
        %7721 = vmatpush1.msra.mxu0 %v7567
        %7722 = vmatprep.subr.mxu0 %v7570
        %7723 = vmatpush1.msra.mxu0 %v7569
        %7724 = vmatprep.subr.mxu0 %v7572
        %7725 = vmatpush1.msra.mxu0 %v7571
        %7726 = vmatprep.subr.mxu0 %v7574
        %7727 = vmatpush1.msra.mxu0 %v7573
        %7728 = vmatprep.subr.mxu0 %v7576
        %7729 = vmatpush1.msra.mxu0 %v7575
        %7730 = vmatprep.subr.mxu0 %v7578
        %7731 = vmatpush1.msra.mxu0 %v7577
        %7732 = vmatprep.subr.mxu0 %v7580
        %7733 = vmatpush1.msra.mxu0 %v7579
        %7734 = vmatprep.subr.mxu0 %v7582
        %7735 = vmatpush1.msra.mxu0 %v7581
        %7736 = vmatprep.subr.mxu0 %v7584
        %7737 = vmatpush1.msra.mxu0 %v7583
        %7738 = vmatprep.subr.mxu0 %v7586
        %7739 = vmatpush1.msra.mxu0 %v7585
        %7740 = vmatprep.subr.mxu0 %v7588
        %7741 = vmatpush1.msra.mxu0 %v7587
        %7742 = vmatprep.subr.mxu0 %v7590
        %7743 = vmatpush1.msra.mxu0 %v7589
        %7744 = vmatprep.subr.mxu0 %v7592
        %7745 = vmatpush1.msra.mxu0 %v7591
        %7746 = vmatprep.subr.mxu0 %v7594
        %7747 = vmatpush1.msra.mxu0 %v7593
        %7748 = vmatprep.subr.mxu0 %v7596
        %7749 = vmatpush1.msra.mxu0 %v7595
        %7750 = vmatprep.subr.mxu0 %v7598
        %7751 = vmatpush1.msra.mxu0 %v7597
        %7752 = vmatprep.subr.mxu0 %v7600
        %7753 = vmatpush1.msra.mxu0 %v7599
        %7754 = vmatprep.mubr.f32.mxu0 %v7468
        %7755 = vmatmul.mubr.f32.gmra.mrb[0].mxu0 %v7467
        %v7756 = vpop.f32.mrb[0].mxu0
        %v7757 = vadd.f32 %v7680, %v7756
        %v7758 = vpop.f32.mrb[0].mxu0
        %v7759 = vadd.f32 %v7682, %v7758
        %7760 = vmatprep.mubr.f32.mxu0 %v7472
        %7761 = vmatmul.mubr.f32.gmra.mrb[0].mxu0 %v7471
        %v7762 = vpop.f32.mrb[0].mxu0
        %v7763 = vadd.f32 %v7686, %v7762
        %v7764 = vpop.f32.mrb[0].mxu0
        %v7765 = vadd.f32 %v7688, %v7764
        %7766 = vdwg.mxu0
        %v7767 = vmax.f32 %v7757, 0.0
        %v7768 = vmax.f32 %v7759, 0.0
        %v7769 = vmax.f32 %v7763, 0.0
        %v7770 = vmax.f32 %v7765, 0.0
        %v7771 = vadd.f32 %v7269, %v7767
        %v7772 = vadd.f32 %v7270, %v7768
        %v7773 = vadd.f32 %v7271, %v7769
        %v7774 = vadd.f32 %v7272, %v7770
        %v7775 = vmax.f32 %v7771, 0.0
        %v7776 = vmax.f32 %v7772, 0.0
        %v7777 = vmax.f32 %v7773, 0.0
        %v7778 = vmax.f32 %v7774, 0.0
        %v7779 = vld [vmem:[%s20] sm:$0xff]
        %v7780 = vld [vmem:[%s20 + $0x8] sm:$0xff]
        %v7781 = vld [vmem:[%s20 + $0x10] sm:$0xff]
        %v7782 = vld [vmem:[%s20 + $0x18] sm:$0xff]
        %v7783 = vld [vmem:[%s20 + $0x20] sm:$0xff]
        %v7784 = vld [vmem:[%s20 + $0x28] sm:$0xff]
        %v7785 = vld [vmem:[%s20 + $0x30] sm:$0xff]
        %v7786 = vld [vmem:[%s20 + $0x38] sm:$0xff]
        %v7787 = vld [vmem:[%s20 + $0x40] sm:$0xff]
        %v7788 = vld [vmem:[%s20 + $0x48] sm:$0xff]
        %v7789 = vld [vmem:[%s20 + $0x50] sm:$0xff]
        %v7790 = vld [vmem:[%s20 + $0x58] sm:$0xff]
        %v7791 = vld [vmem:[%s20 + $0x60] sm:$0xff]
        %v7792 = vld [vmem:[%s20 + $0x68] sm:$0xff]
        %v7793 = vld [vmem:[%s20 + $0x70] sm:$0xff]
        %v7794 = vld [vmem:[%s20 + $0x78] sm:$0xff]
        %v7795 = vld [vmem:[%s20 + $0x80] sm:$0xff]
        %v7796 = vld [vmem:[%s20 + $0x88] sm:$0xff]
        %v7797 = vld [vmem:[%s20 + $0x90] sm:$0xff]
        %v7798 = vld [vmem:[%s20 + $0x98] sm:$0xff]
        %v7799 = vld [vmem:[%s20 + $0xa0] sm:$0xff]
        %v7800 = vld [vmem:[%s20 + $0xa8] sm:$0xff]
        %v7801 = vld [vmem:[%s20 + $0xb0] sm:$0xff]
        %v7802 = vld [vmem:[%s20 + $0xb8] sm:$0xff]
        %v7803 = vld [vmem:[%s20 + $0xc0] sm:$0xff]
        %v7804 = vld [vmem:[%s20 + $0xc8] sm:$0xff]
        %v7805 = vld [vmem:[%s20 + $0xd0] sm:$0xff]
        %v7806 = vld [vmem:[%s20 + $0xd8] sm:$0xff]
        %v7807 = vld [vmem:[%s20 + $0xe0] sm:$0xff]
        %v7808 = vld [vmem:[%s20 + $0xe8] sm:$0xff]
        %v7809 = vld [vmem:[%s20 + $0xf0] sm:$0xff]
        %v7810 = vld [vmem:[%s20 + $0xf8] sm:$0xff]
        %v7811 = vld [vmem:[%s20 + $0x100] sm:$0xff]
        %v7812 = vld [vmem:[%s20 + $0x108] sm:$0xff]
        %v7813 = vld [vmem:[%s20 + $0x110] sm:$0xff]
        %v7814 = vld [vmem:[%s20 + $0x118] sm:$0xff]
        %v7815 = vld [vmem:[%s20 + $0x120] sm:$0xff]
        %v7816 = vld [vmem:[%s20 + $0x128] sm:$0xff]
        %v7817 = vld [vmem:[%s20 + $0x130] sm:$0xff]
        %v7818 = vld [vmem:[%s20 + $0x138] sm:$0xff]
        %v7819 = vld [vmem:[%s20 + $0x140] sm:$0xff]
        %v7820 = vld [vmem:[%s20 + $0x148] sm:$0xff]
        %v7821 = vld [vmem:[%s20 + $0x150] sm:$0xff]
        %v7822 = vld [vmem:[%s20 + $0x158] sm:$0xff]
        %v7823 = vld [vmem:[%s20 + $0x160] sm:$0xff]
        %v7824 = vld [vmem:[%s20 + $0x168] sm:$0xff]
        %v7825 = vld [vmem:[%s20 + $0x170] sm:$0xff]
        %v7826 = vld [vmem:[%s20 + $0x178] sm:$0xff]
        %v7827 = vld [vmem:[%s20 + $0x180] sm:$0xff]
        %v7828 = vld [vmem:[%s20 + $0x188] sm:$0xff]
        %v7829 = vld [vmem:[%s20 + $0x190] sm:$0xff]
        %v7830 = vld [vmem:[%s20 + $0x198] sm:$0xff]
        %v7831 = vld [vmem:[%s20 + $0x1a0] sm:$0xff]
        %v7832 = vld [vmem:[%s20 + $0x1a8] sm:$0xff]
        %v7833 = vld [vmem:[%s20 + $0x1b0] sm:$0xff]
        %v7834 = vld [vmem:[%s20 + $0x1b8] sm:$0xff]
        %v7835 = vld [vmem:[%s20 + $0x1c0] sm:$0xff]
        %v7836 = vld [vmem:[%s20 + $0x1c8] sm:$0xff]
        %v7837 = vld [vmem:[%s20 + $0x1d0] sm:$0xff]
        %v7838 = vld [vmem:[%s20 + $0x1d8] sm:$0xff]
        %v7839 = vld [vmem:[%s20 + $0x1e0] sm:$0xff]
        %v7840 = vld [vmem:[%s20 + $0x1e8] sm:$0xff]
        %v7841 = vld [vmem:[%s20 + $0x1f0] sm:$0xff]
        %v7842 = vld [vmem:[%s20 + $0x1f8] sm:$0xff]
        %v7843 = vld [vmem:[%s20 + $0x200] sm:$0xff]
        %v7844 = vld [vmem:[%s20 + $0x208] sm:$0xff]
        %v7845 = vld [vmem:[%s20 + $0x210] sm:$0xff]
        %v7846 = vld [vmem:[%s20 + $0x218] sm:$0xff]
        %v7847 = vld [vmem:[%s20 + $0x220] sm:$0xff]
        %v7848 = vld [vmem:[%s20 + $0x228] sm:$0xff]
        %v7849 = vld [vmem:[%s20 + $0x230] sm:$0xff]
        %v7850 = vld [vmem:[%s20 + $0x238] sm:$0xff]
        %v7851 = vld [vmem:[%s20 + $0x240] sm:$0xff]
        %v7852 = vld [vmem:[%s20 + $0x248] sm:$0xff]
        %v7853 = vld [vmem:[%s20 + $0x250] sm:$0xff]
        %v7854 = vld [vmem:[%s20 + $0x258] sm:$0xff]
        %v7855 = vld [vmem:[%s20 + $0x260] sm:$0xff]
        %v7856 = vld [vmem:[%s20 + $0x268] sm:$0xff]
        %v7857 = vld [vmem:[%s20 + $0x270] sm:$0xff]
        %v7858 = vld [vmem:[%s20 + $0x278] sm:$0xff]
        %v7859 = vld [vmem:[%s20 + $0x280] sm:$0xff]
        %v7860 = vld [vmem:[%s20 + $0x288] sm:$0xff]
        %v7861 = vld [vmem:[%s20 + $0x290] sm:$0xff]
        %v7862 = vld [vmem:[%s20 + $0x298] sm:$0xff]
        %v7863 = vld [vmem:[%s20 + $0x2a0] sm:$0xff]
        %v7864 = vld [vmem:[%s20 + $0x2a8] sm:$0xff]
        %v7865 = vld [vmem:[%s20 + $0x2b0] sm:$0xff]
        %v7866 = vld [vmem:[%s20 + $0x2b8] sm:$0xff]
        %v7867 = vld [vmem:[%s20 + $0x2c0] sm:$0xff]
        %v7868 = vld [vmem:[%s20 + $0x2c8] sm:$0xff]
        %v7869 = vld [vmem:[%s20 + $0x2d0] sm:$0xff]
        %v7870 = vld [vmem:[%s20 + $0x2d8] sm:$0xff]
        %v7871 = vld [vmem:[%s20 + $0x2e0] sm:$0xff]
        %v7872 = vld [vmem:[%s20 + $0x2e8] sm:$0xff]
        %v7873 = vld [vmem:[%s20 + $0x2f0] sm:$0xff]
        %v7874 = vld [vmem:[%s20 + $0x2f8] sm:$0xff]
        %v7875 = vld [vmem:[%s20 + $0x300] sm:$0xff]
        %v7876 = vld [vmem:[%s20 + $0x308] sm:$0xff]
        %v7877 = vld [vmem:[%s20 + $0x310] sm:$0xff]
        %v7878 = vld [vmem:[%s20 + $0x318] sm:$0xff]
        %v7879 = vld [vmem:[%s20 + $0x320] sm:$0xff]
        %v7880 = vld [vmem:[%s20 + $0x328] sm:$0xff]
        %v7881 = vld [vmem:[%s20 + $0x330] sm:$0xff]
        %v7882 = vld [vmem:[%s20 + $0x338] sm:$0xff]
        %v7883 = vld [vmem:[%s20 + $0x340] sm:$0xff]
        %v7884 = vld [vmem:[%s20 + $0x348] sm:$0xff]
        %v7885 = vld [vmem:[%s20 + $0x350] sm:$0xff]
        %v7886 = vld [vmem:[%s20 + $0x358] sm:$0xff]
        %v7887 = vld [vmem:[%s20 + $0x360] sm:$0xff]
        %v7888 = vld [vmem:[%s20 + $0x368] sm:$0xff]
        %v7889 = vld [vmem:[%s20 + $0x370] sm:$0xff]
        %v7890 = vld [vmem:[%s20 + $0x378] sm:$0xff]
        %v7891 = vld [vmem:[%s20 + $0x380] sm:$0xff]
        %v7892 = vld [vmem:[%s20 + $0x388] sm:$0xff]
        %v7893 = vld [vmem:[%s20 + $0x390] sm:$0xff]
        %v7894 = vld [vmem:[%s20 + $0x398] sm:$0xff]
        %v7895 = vld [vmem:[%s20 + $0x3a0] sm:$0xff]
        %v7896 = vld [vmem:[%s20 + $0x3a8] sm:$0xff]
        %v7897 = vld [vmem:[%s20 + $0x3b0] sm:$0xff]
        %v7898 = vld [vmem:[%s20 + $0x3b8] sm:$0xff]
        %v7899 = vld [vmem:[%s20 + $0x3c0] sm:$0xff]
        %v7900 = vld [vmem:[%s20 + $0x3c8] sm:$0xff]
        %v7901 = vld [vmem:[%s20 + $0x3d0] sm:$0xff]
        %v7902 = vld [vmem:[%s20 + $0x3d8] sm:$0xff]
        %v7903 = vld [vmem:[%s20 + $0x3e0] sm:$0xff]
        %v7904 = vld [vmem:[%s20 + $0x3e8] sm:$0xff]
        %v7905 = vld [vmem:[%s20 + $0x3f0] sm:$0xff]
        %v7906 = vld [vmem:[%s20 + $0x3f8] sm:$0xff]
        %v7907 = vld [vmem:[#allocation12] sm:$0xf]
        %v7909 = vlaneseq
        %v7910 = vshrl.u32 %v7909, 7
        %v7911 = vsub.s32 0, %v7910
        %v7912 = vrot.slane %v7907, %v7911
        %v7913 = vlaneseq
        %v7914 = vshrl.u32 %v7913, 7
        %v7915 = vsub.s32 1, %v7914
        %v7916 = vrot.slane %v7907, %v7915
        %v7917 = vlaneseq
        %v7918 = vshrl.u32 %v7917, 7
        %v7919 = vsub.s32 2, %v7918
        %v7920 = vrot.slane %v7907, %v7919
        %v7921 = vlaneseq
        %v7922 = vshrl.u32 %v7921, 7
        %v7923 = vsub.s32 3, %v7922
        %v7924 = vrot.slane %v7907, %v7923
        %7929 = vmatprep.subr.mxu0 %v7780
        %7930 = vmatpush1.msra.mxu0 %v7779
        %7931 = vmatprep.subr.mxu0 %v7784
        %7932 = vmatpush1.msra.mxu0 %v7783
        %7933 = vmatprep.subr.mxu0 %v7788
        %7934 = vmatpush1.msra.mxu0 %v7787
        %7935 = vmatprep.subr.mxu0 %v7792
        %7936 = vmatpush1.msra.mxu0 %v7791
        %7937 = vmatprep.subr.mxu0 %v7796
        %7938 = vmatpush1.msra.mxu0 %v7795
        %7939 = vmatprep.subr.mxu0 %v7800
        %7940 = vmatpush1.msra.mxu0 %v7799
        %7941 = vmatprep.subr.mxu0 %v7804
        %7942 = vmatpush1.msra.mxu0 %v7803
        %7943 = vmatprep.subr.mxu0 %v7808
        %7944 = vmatpush1.msra.mxu0 %v7807
        %7945 = vmatprep.subr.mxu0 %v7812
        %7946 = vmatpush1.msra.mxu0 %v7811
        %7947 = vmatprep.subr.mxu0 %v7816
        %7948 = vmatpush1.msra.mxu0 %v7815
        %7949 = vmatprep.subr.mxu0 %v7820
        %7950 = vmatpush1.msra.mxu0 %v7819
        %7951 = vmatprep.subr.mxu0 %v7824
        %7952 = vmatpush1.msra.mxu0 %v7823
        %7953 = vmatprep.subr.mxu0 %v7828
        %7954 = vmatpush1.msra.mxu0 %v7827
        %7955 = vmatprep.subr.mxu0 %v7832
        %7956 = vmatpush1.msra.mxu0 %v7831
        %7957 = vmatprep.subr.mxu0 %v7836
        %7958 = vmatpush1.msra.mxu0 %v7835
        %7959 = vmatprep.subr.mxu0 %v7840
        %7960 = vmatpush1.msra.mxu0 %v7839
        %7961 = vmatprep.subr.mxu0 %v7844
        %7962 = vmatpush1.msra.mxu0 %v7843
        %7963 = vmatprep.subr.mxu0 %v7848
        %7964 = vmatpush1.msra.mxu0 %v7847
        %7965 = vmatprep.subr.mxu0 %v7852
        %7966 = vmatpush1.msra.mxu0 %v7851
        %7967 = vmatprep.subr.mxu0 %v7856
        %7968 = vmatpush1.msra.mxu0 %v7855
        %7969 = vmatprep.subr.mxu0 %v7860
        %7970 = vmatpush1.msra.mxu0 %v7859
        %7971 = vmatprep.subr.mxu0 %v7864
        %7972 = vmatpush1.msra.mxu0 %v7863
        %7973 = vmatprep.subr.mxu0 %v7868
        %7974 = vmatpush1.msra.mxu0 %v7867
        %7975 = vmatprep.subr.mxu0 %v7872
        %7976 = vmatpush1.msra.mxu0 %v7871
        %7977 = vmatprep.subr.mxu0 %v7876
        %7978 = vmatpush1.msra.mxu0 %v7875
        %7979 = vmatprep.subr.mxu0 %v7880
        %7980 = vmatpush1.msra.mxu0 %v7879
        %7981 = vmatprep.subr.mxu0 %v7884
        %7982 = vmatpush1.msra.mxu0 %v7883
        %7983 = vmatprep.subr.mxu0 %v7888
        %7984 = vmatpush1.msra.mxu0 %v7887
        %7985 = vmatprep.subr.mxu0 %v7892
        %7986 = vmatpush1.msra.mxu0 %v7891
        %7987 = vmatprep.subr.mxu0 %v7896
        %7988 = vmatpush1.msra.mxu0 %v7895
        %7989 = vmatprep.subr.mxu0 %v7900
        %7990 = vmatpush1.msra.mxu0 %v7899
        %7991 = vmatprep.subr.mxu0 %v7904
        %7992 = vmatpush1.msra.mxu0 %v7903
        %7993 = vmatprep.mubr.f32.mxu0 %v7776
        %7994 = vmatmul.mubr.f32.gmra.mrb[0].mxu0 %v7775
        %v7995 = vpop.f32.mrb[0].mxu0
        %v7996 = vadd.f32 %v7912, %v7995
        %v7997 = vpop.f32.mrb[0].mxu0
        %v7998 = vadd.f32 %v7916, %v7997
        %7999 = vmatprep.mubr.f32.mxu0 %v7778
        %8000 = vmatmul.mubr.f32.gmra.mrb[0].mxu0 %v7777
        %v8001 = vpop.f32.mrb[0].mxu0
        %v8002 = vadd.f32 %v7912, %v8001
        %v8003 = vpop.f32.mrb[0].mxu0
        %v8004 = vadd.f32 %v7916, %v8003
        %8005 = vdwg.mxu0
        %8006 = vmatprep.subr.mxu0 %v7782
        %8007 = vmatpush1.msra.mxu0 %v7781
        %8008 = vmatprep.subr.mxu0 %v7786
        %8009 = vmatpush1.msra.mxu0 %v7785
        %8010 = vmatprep.subr.mxu0 %v7790
        %8011 = vmatpush1.msra.mxu0 %v7789
        %8012 = vmatprep.subr.mxu0 %v7794
        %8013 = vmatpush1.msra.mxu0 %v7793
        %8014 = vmatprep.subr.mxu0 %v7798
        %8015 = vmatpush1.msra.mxu0 %v7797
        %8016 = vmatprep.subr.mxu0 %v7802
        %8017 = vmatpush1.msra.mxu0 %v7801
        %8018 = vmatprep.subr.mxu0 %v7806
        %8019 = vmatpush1.msra.mxu0 %v7805
        %8020 = vmatprep.subr.mxu0 %v7810
        %8021 = vmatpush1.msra.mxu0 %v7809
        %8022 = vmatprep.subr.mxu0 %v7814
        %8023 = vmatpush1.msra.mxu0 %v7813
        %8024 = vmatprep.subr.mxu0 %v7818
        %8025 = vmatpush1.msra.mxu0 %v7817
        %8026 = vmatprep.subr.mxu0 %v7822
        %8027 = vmatpush1.msra.mxu0 %v7821
        %8028 = vmatprep.subr.mxu0 %v7826
        %8029 = vmatpush1.msra.mxu0 %v7825
        %8030 = vmatprep.subr.mxu0 %v7830
        %8031 = vmatpush1.msra.mxu0 %v7829
        %8032 = vmatprep.subr.mxu0 %v7834
        %8033 = vmatpush1.msra.mxu0 %v7833
        %8034 = vmatprep.subr.mxu0 %v7838
        %8035 = vmatpush1.msra.mxu0 %v7837
        %8036 = vmatprep.subr.mxu0 %v7842
        %8037 = vmatpush1.msra.mxu0 %v7841
        %8038 = vmatprep.subr.mxu0 %v7846
        %8039 = vmatpush1.msra.mxu0 %v7845
        %8040 = vmatprep.subr.mxu0 %v7850
        %8041 = vmatpush1.msra.mxu0 %v7849
        %8042 = vmatprep.subr.mxu0 %v7854
        %8043 = vmatpush1.msra.mxu0 %v7853
        %8044 = vmatprep.subr.mxu0 %v7858
        %8045 = vmatpush1.msra.mxu0 %v7857
        %8046 = vmatprep.subr.mxu0 %v7862
        %8047 = vmatpush1.msra.mxu0 %v7861
        %8048 = vmatprep.subr.mxu0 %v7866
        %8049 = vmatpush1.msra.mxu0 %v7865
        %8050 = vmatprep.subr.mxu0 %v7870
        %8051 = vmatpush1.msra.mxu0 %v7869
        %8052 = vmatprep.subr.mxu0 %v7874
        %8053 = vmatpush1.msra.mxu0 %v7873
        %8054 = vmatprep.subr.mxu0 %v7878
        %8055 = vmatpush1.msra.mxu0 %v7877
        %8056 = vmatprep.subr.mxu0 %v7882
        %8057 = vmatpush1.msra.mxu0 %v7881
        %8058 = vmatprep.subr.mxu0 %v7886
        %8059 = vmatpush1.msra.mxu0 %v7885
        %8060 = vmatprep.subr.mxu0 %v7890
        %8061 = vmatpush1.msra.mxu0 %v7889
        %8062 = vmatprep.subr.mxu0 %v7894
        %8063 = vmatpush1.msra.mxu0 %v7893
        %8064 = vmatprep.subr.mxu0 %v7898
        %8065 = vmatpush1.msra.mxu0 %v7897
        %8066 = vmatprep.subr.mxu0 %v7902
        %8067 = vmatpush1.msra.mxu0 %v7901
        %8068 = vmatprep.subr.mxu0 %v7906
        %8069 = vmatpush1.msra.mxu0 %v7905
        %8070 = vmatprep.mubr.f32.mxu0 %v7776
        %8071 = vmatmul.mubr.f32.gmra.mrb[0].mxu0 %v7775
        %v8072 = vpop.f32.mrb[0].mxu0
        %v8073 = vadd.f32 %v7920, %v8072
        %v8074 = vpop.f32.mrb[0].mxu0
        %v8075 = vadd.f32 %v7924, %v8074
        %8076 = vmatprep.mubr.f32.mxu0 %v7778
        %8077 = vmatmul.mubr.f32.gmra.mrb[0].mxu0 %v7777
        %v8078 = vpop.f32.mrb[0].mxu0
        %v8079 = vadd.f32 %v7920, %v8078
        %v8080 = vpop.f32.mrb[0].mxu0
        %v8081 = vadd.f32 %v7924, %v8080
        %8082 = vdwg.mxu0
        %v8083 = vmax.f32 %v7996, 0.0
        %v8084 = vmax.f32 %v7998, 0.0
        %v8085 = vmax.f32 %v8073, 0.0
        %v8086 = vmax.f32 %v8075, 0.0
        %v8087 = vmax.f32 %v8002, 0.0
        %v8088 = vmax.f32 %v8004, 0.0
        %v8089 = vmax.f32 %v8079, 0.0
        %v8090 = vmax.f32 %v8081, 0.0
        %v8091 = vld [vmem:[%s22] sm:$0xff]
        %v8092 = vld [vmem:[%s22 + $0x8] sm:$0xff]
        %v8093 = vld [vmem:[%s22 + $0x10] sm:$0xff]
        %v8094 = vld [vmem:[%s22 + $0x18] sm:$0xff]
        %v8095 = vld [vmem:[%s22 + $0x20] sm:$0xff]
        %v8096 = vld [vmem:[%s22 + $0x28] sm:$0xff]
        %v8097 = vld [vmem:[%s22 + $0x30] sm:$0xff]
        %v8098 = vld [vmem:[%s22 + $0x38] sm:$0xff]
        %v8099 = vld [vmem:[%s22 + $0x40] sm:$0xff]
        %v8100 = vld [vmem:[%s22 + $0x48] sm:$0xff]
        %v8101 = vld [vmem:[%s22 + $0x50] sm:$0xff]
        %v8102 = vld [vmem:[%s22 + $0x58] sm:$0xff]
        %v8103 = vld [vmem:[%s22 + $0x60] sm:$0xff]
        %v8104 = vld [vmem:[%s22 + $0x68] sm:$0xff]
        %v8105 = vld [vmem:[%s22 + $0x70] sm:$0xff]
        %v8106 = vld [vmem:[%s22 + $0x78] sm:$0xff]
        %v8107 = vld [vmem:[%s22 + $0x80] sm:$0xff]
        %v8108 = vld [vmem:[%s22 + $0x88] sm:$0xff]
        %v8109 = vld [vmem:[%s22 + $0x90] sm:$0xff]
        %v8110 = vld [vmem:[%s22 + $0x98] sm:$0xff]
        %v8111 = vld [vmem:[%s22 + $0xa0] sm:$0xff]
        %v8112 = vld [vmem:[%s22 + $0xa8] sm:$0xff]
        %v8113 = vld [vmem:[%s22 + $0xb0] sm:$0xff]
        %v8114 = vld [vmem:[%s22 + $0xb8] sm:$0xff]
        %v8115 = vld [vmem:[%s22 + $0xc0] sm:$0xff]
        %v8116 = vld [vmem:[%s22 + $0xc8] sm:$0xff]
        %v8117 = vld [vmem:[%s22 + $0xd0] sm:$0xff]
        %v8118 = vld [vmem:[%s22 + $0xd8] sm:$0xff]
        %v8119 = vld [vmem:[%s22 + $0xe0] sm:$0xff]
        %v8120 = vld [vmem:[%s22 + $0xe8] sm:$0xff]
        %v8121 = vld [vmem:[%s22 + $0xf0] sm:$0xff]
        %v8122 = vld [vmem:[%s22 + $0xf8] sm:$0xff]
        %v8123 = vld [vmem:[%s22 + $0x100] sm:$0xff]
        %v8124 = vld [vmem:[%s22 + $0x108] sm:$0xff]
        %v8125 = vld [vmem:[%s22 + $0x110] sm:$0xff]
        %v8126 = vld [vmem:[%s22 + $0x118] sm:$0xff]
        %v8127 = vld [vmem:[%s22 + $0x120] sm:$0xff]
        %v8128 = vld [vmem:[%s22 + $0x128] sm:$0xff]
        %v8129 = vld [vmem:[%s22 + $0x130] sm:$0xff]
        %v8130 = vld [vmem:[%s22 + $0x138] sm:$0xff]
        %v8131 = vld [vmem:[%s22 + $0x140] sm:$0xff]
        %v8132 = vld [vmem:[%s22 + $0x148] sm:$0xff]
        %v8133 = vld [vmem:[%s22 + $0x150] sm:$0xff]
        %v8134 = vld [vmem:[%s22 + $0x158] sm:$0xff]
        %v8135 = vld [vmem:[%s22 + $0x160] sm:$0xff]
        %v8136 = vld [vmem:[%s22 + $0x168] sm:$0xff]
        %v8137 = vld [vmem:[%s22 + $0x170] sm:$0xff]
        %v8138 = vld [vmem:[%s22 + $0x178] sm:$0xff]
        %v8139 = vld [vmem:[%s22 + $0x180] sm:$0xff]
        %v8140 = vld [vmem:[%s22 + $0x188] sm:$0xff]
        %v8141 = vld [vmem:[%s22 + $0x190] sm:$0xff]
        %v8142 = vld [vmem:[%s22 + $0x198] sm:$0xff]
        %v8143 = vld [vmem:[%s22 + $0x1a0] sm:$0xff]
        %v8144 = vld [vmem:[%s22 + $0x1a8] sm:$0xff]
        %v8145 = vld [vmem:[%s22 + $0x1b0] sm:$0xff]
        %v8146 = vld [vmem:[%s22 + $0x1b8] sm:$0xff]
        %v8147 = vld [vmem:[%s22 + $0x1c0] sm:$0xff]
        %v8148 = vld [vmem:[%s22 + $0x1c8] sm:$0xff]
        %v8149 = vld [vmem:[%s22 + $0x1d0] sm:$0xff]
        %v8150 = vld [vmem:[%s22 + $0x1d8] sm:$0xff]
        %v8151 = vld [vmem:[%s22 + $0x1e0] sm:$0xff]
        %v8152 = vld [vmem:[%s22 + $0x1e8] sm:$0xff]
        %v8153 = vld [vmem:[%s22 + $0x1f0] sm:$0xff]
        %v8154 = vld [vmem:[%s22 + $0x1f8] sm:$0xff]
        %v8155 = vld [vmem:[#allocation13] sm:$0x1]
        %v8157 = vlaneseq
        %v8158 = vshrl.u32 %v8157, 7
        %v8159 = vsub.s32 0, %v8158
        %v8160 = vrot.slane %v8155, %v8159
        %8162 = vmatprep.subr.mxu0 0.0
        %8163 = vmatpush1.msra.mxu0 %v8091
        %8164 = vmatprep.subr.mxu0 0.0
        %8165 = vmatpush1.msra.mxu0 %v8092
        %8166 = vmatprep.subr.mxu0 0.0
        %8167 = vmatpush1.msra.mxu0 %v8093
        %8168 = vmatprep.subr.mxu0 0.0
        %8169 = vmatpush1.msra.mxu0 %v8094
        %8170 = vmatprep.subr.mxu0 0.0
        %8171 = vmatpush1.msra.mxu0 %v8095
        %8172 = vmatprep.subr.mxu0 0.0
        %8173 = vmatpush1.msra.mxu0 %v8096
        %8174 = vmatprep.subr.mxu0 0.0
        %8175 = vmatpush1.msra.mxu0 %v8097
        %8176 = vmatprep.subr.mxu0 0.0
        %8177 = vmatpush1.msra.mxu0 %v8098
        %8178 = vmatprep.subr.mxu0 0.0
        %8179 = vmatpush1.msra.mxu0 %v8099
        %8180 = vmatprep.subr.mxu0 0.0
        %8181 = vmatpush1.msra.mxu0 %v8100
        %8182 = vmatprep.subr.mxu0 0.0
        %8183 = vmatpush1.msra.mxu0 %v8101
        %8184 = vmatprep.subr.mxu0 0.0
        %8185 = vmatpush1.msra.mxu0 %v8102
        %8186 = vmatprep.subr.mxu0 0.0
        %8187 = vmatpush1.msra.mxu0 %v8103
        %8188 = vmatprep.subr.mxu0 0.0
        %8189 = vmatpush1.msra.mxu0 %v8104
        %8190 = vmatprep.subr.mxu0 0.0
        %8191 = vmatpush1.msra.mxu0 %v8105
        %8192 = vmatprep.subr.mxu0 0.0
        %8193 = vmatpush1.msra.mxu0 %v8106
        %8194 = vmatprep.subr.mxu0 0.0
        %8195 = vmatpush1.msra.mxu0 %v8107
        %8196 = vmatprep.subr.mxu0 0.0
        %8197 = vmatpush1.msra.mxu0 %v8108
        %8198 = vmatprep.subr.mxu0 0.0
        %8199 = vmatpush1.msra.mxu0 %v8109
        %8200 = vmatprep.subr.mxu0 0.0
        %8201 = vmatpush1.msra.mxu0 %v8110
        %8202 = vmatprep.subr.mxu0 0.0
        %8203 = vmatpush1.msra.mxu0 %v8111
        %8204 = vmatprep.subr.mxu0 0.0
        %8205 = vmatpush1.msra.mxu0 %v8112
        %8206 = vmatprep.subr.mxu0 0.0
        %8207 = vmatpush1.msra.mxu0 %v8113
        %8208 = vmatprep.subr.mxu0 0.0
        %8209 = vmatpush1.msra.mxu0 %v8114
        %8210 = vmatprep.subr.mxu0 0.0
        %8211 = vmatpush1.msra.mxu0 %v8115
        %8212 = vmatprep.subr.mxu0 0.0
        %8213 = vmatpush1.msra.mxu0 %v8116
        %8214 = vmatprep.subr.mxu0 0.0
        %8215 = vmatpush1.msra.mxu0 %v8117
        %8216 = vmatprep.subr.mxu0 0.0
        %8217 = vmatpush1.msra.mxu0 %v8118
        %8218 = vmatprep.subr.mxu0 0.0
        %8219 = vmatpush1.msra.mxu0 %v8119
        %8220 = vmatprep.subr.mxu0 0.0
        %8221 = vmatpush1.msra.mxu0 %v8120
        %8222 = vmatprep.subr.mxu0 0.0
        %8223 = vmatpush1.msra.mxu0 %v8121
        %8224 = vmatprep.subr.mxu0 0.0
        %8225 = vmatpush1.msra.mxu0 %v8122
        %8226 = vmatprep.mubr.f32.mxu0 %v8084
        %8227 = vmatmul.mubr.f32.gmra.mrb[0].mxu0 %v8083
        %v8228 = vpop.f32.mrb[0].mxu0
        %v8229 = vadd.f32 %v8160, %v8228
        %v8230 = vpop.f32.mrb[0].mxu0
        %8231 = vmatprep.mubr.f32.mxu0 %v8088
        %8232 = vmatmul.mubr.f32.gmra.mrb[0].mxu0 %v8087
        %v8233 = vpop.f32.mrb[0].mxu0
        %v8234 = vadd.f32 %v8160, %v8233
        %v8235 = vpop.f32.mrb[0].mxu0
        %8236 = vdwg.mxu0
        %8237 = vmatprep.subr.mxu0 0.0
        %8238 = vmatpush1.msra.mxu0 %v8123
        %8239 = vmatprep.subr.mxu0 0.0
        %8240 = vmatpush1.msra.mxu0 %v8124
        %8241 = vmatprep.subr.mxu0 0.0
        %8242 = vmatpush1.msra.mxu0 %v8125
        %8243 = vmatprep.subr.mxu0 0.0
        %8244 = vmatpush1.msra.mxu0 %v8126
        %8245 = vmatprep.subr.mxu0 0.0
        %8246 = vmatpush1.msra.mxu0 %v8127
        %8247 = vmatprep.subr.mxu0 0.0
        %8248 = vmatpush1.msra.mxu0 %v8128
        %8249 = vmatprep.subr.mxu0 0.0
        %8250 = vmatpush1.msra.mxu0 %v8129
        %8251 = vmatprep.subr.mxu0 0.0
        %8252 = vmatpush1.msra.mxu0 %v8130
        %8253 = vmatprep.subr.mxu0 0.0
        %8254 = vmatpush1.msra.mxu0 %v8131
        %8255 = vmatprep.subr.mxu0 0.0
        %8256 = vmatpush1.msra.mxu0 %v8132
        %8257 = vmatprep.subr.mxu0 0.0
        %8258 = vmatpush1.msra.mxu0 %v8133
        %8259 = vmatprep.subr.mxu0 0.0
        %8260 = vmatpush1.msra.mxu0 %v8134
        %8261 = vmatprep.subr.mxu0 0.0
        %8262 = vmatpush1.msra.mxu0 %v8135
        %8263 = vmatprep.subr.mxu0 0.0
        %8264 = vmatpush1.msra.mxu0 %v8136
        %8265 = vmatprep.subr.mxu0 0.0
        %8266 = vmatpush1.msra.mxu0 %v8137
        %8267 = vmatprep.subr.mxu0 0.0
        %8268 = vmatpush1.msra.mxu0 %v8138
        %8269 = vmatprep.subr.mxu0 0.0
        %8270 = vmatpush1.msra.mxu0 %v8139
        %8271 = vmatprep.subr.mxu0 0.0
        %8272 = vmatpush1.msra.mxu0 %v8140
        %8273 = vmatprep.subr.mxu0 0.0
        %8274 = vmatpush1.msra.mxu0 %v8141
        %8275 = vmatprep.subr.mxu0 0.0
        %8276 = vmatpush1.msra.mxu0 %v8142
        %8277 = vmatprep.subr.mxu0 0.0
        %8278 = vmatpush1.msra.mxu0 %v8143
        %8279 = vmatprep.subr.mxu0 0.0
        %8280 = vmatpush1.msra.mxu0 %v8144
        %8281 = vmatprep.subr.mxu0 0.0
        %8282 = vmatpush1.msra.mxu0 %v8145
        %8283 = vmatprep.subr.mxu0 0.0
        %8284 = vmatpush1.msra.mxu0 %v8146
        %8285 = vmatprep.subr.mxu0 0.0
        %8286 = vmatpush1.msra.mxu0 %v8147
        %8287 = vmatprep.subr.mxu0 0.0
        %8288 = vmatpush1.msra.mxu0 %v8148
        %8289 = vmatprep.subr.mxu0 0.0
        %8290 = vmatpush1.msra.mxu0 %v8149
        %8291 = vmatprep.subr.mxu0 0.0
        %8292 = vmatpush1.msra.mxu0 %v8150
        %8293 = vmatprep.subr.mxu0 0.0
        %8294 = vmatpush1.msra.mxu0 %v8151
        %8295 = vmatprep.subr.mxu0 0.0
        %8296 = vmatpush1.msra.mxu0 %v8152
        %8297 = vmatprep.subr.mxu0 0.0
        %8298 = vmatpush1.msra.mxu0 %v8153
        %8299 = vmatprep.subr.mxu0 0.0
        %8300 = vmatpush1.msra.mxu0 %v8154
        %8301 = vmatprep.mubr.f32.mxu0 %v8086
        %8302 = vmatmul.mubr.f32.gmra.mrb[0].mxu0 %v8085
        %v8303 = vpop.f32.mrb[0].mxu0
        %v8304 = vadd.f32 %v8229, %v8303
        %v8305 = vpop.f32.mrb[0].mxu0
        %8306 = vmatprep.mubr.f32.mxu0 %v8090
        %8307 = vmatmul.mubr.f32.gmra.mrb[0].mxu0 %v8089
        %v8308 = vpop.f32.mrb[0].mxu0
        %v8309 = vadd.f32 %v8234, %v8308
        %v8310 = vpop.f32.mrb[0].mxu0
        %8311 = vdwg.mxu0
        %vm8312 = vcmask 97280
        %8313 = vst.msk [vmem:[%s884] sm:$0xff] %vm8312, %v8304
        %8314 = vst.msk [vmem:[%s884 + $0x8] sm:$0xff] %vm8312, %v8309
        %p8315 = scmp.lt.s32.totalorder %s40, 1
        %s8316 = scalar_select %p8315, %s40, 1
        %s8317 = smul.addr %s8316, 2
        %s8318 = smul.addr %s8317, 8
        %s8319 = scalar_lea.vmem %s24, %s8318
        // Predicated region
        $region149: #{graphwavenet_forward.1} parent=115 // pred_check
          %p8320 = pneg %p577
        $region150: #{graphwavenet_forward.1} parent=115 // pred_check_branch
          %8322 = sbr.rel (%p8320) target = $region152
        $region151: #{graphwavenet_forward.1} parent=115 // pred_region
          _
        $region152: #{graphwavenet_forward.1} parent=115 // pred_fallthru
          _
      $region116: #{graphwavenet_forward.1} parent=5 // pred_fallthru
        _
      %p8323 = scmp.le.s32.totalorder 2, %s35
      // Predicated region
      $region153: #{graphwavenet_forward.1} parent=5 // pred_check
        %p8324 = pneg %p8323
      $region154: #{graphwavenet_forward.1} parent=5 // pred_check_branch
        %8326 = sbr.rel (%p8324) target = $region156
      $region155: #{graphwavenet_forward.1} parent=5 // pred_region
        %s8327 = ssub.s32 %s35, 2
        // Predicated region
        $region157: #{graphwavenet_forward.1} parent=155 // pred_check
          %p8328 = pneg %p583
        $region158: #{graphwavenet_forward.1} parent=155 // pred_check_branch
          %8330 = sbr.rel (%p8328) target = $region160
        $region159: #{graphwavenet_forward.1} parent=155 // pred_region
          %p8331 = scmp.lt.s32.totalorder %s41, 1
          %s8332 = scalar_select %p8331, %s41, 1
          %s8333 = smul.addr %s8332, 2
          %s8334 = smul.addr %s8333, 8
          %s8335 = scalar_lea.vmem %s24, %s8334
        $region160: #{graphwavenet_forward.1} parent=155 // pred_fallthru
          _
      $region156: #{graphwavenet_forward.1} parent=5 // pred_fallthru
        _
    $region6: #{graphwavenet_forward.1} parent=1 // loop_footer
      %s39 = sadd.s32 1, %s35
    $region7: #{graphwavenet_forward.1} parent=1 // loop_footer_branch
      %34 = sbr.rel target = $region3
    $region8: #{graphwavenet_forward.1} parent=1 // loop_exit
      _
    %8336 = vsyncpa [#allocation3], 1
    %s8337 = scalar_lea.sflag [#allocation3], 1
    %8338 = vsyncpa %s8337, 1
    %8339 = vsyncpa [#allocation5], 1
    %8340 = vsyncpa [#allocation8], 1
    %8341 = vsyncpa [#allocation11], 1
    %8342 = vsyncpa [#allocation14], 1

</llo_original>
